<compile_context>
chip_gen: v5e
topology: v5e:2x2
jax: 0.10.0
libtpu: 0.0.40
codegen_flags: <defaults>
</compile_context>

<pallas_src>
import functools

import jax
import jax.numpy as jnp
from jax.experimental import pallas as pl
from jax.experimental.pallas import tpu as pltpu

EPS = 1e-5  # PyTorch LayerNorm default eps


# ----------------------------- in-kernel helpers -----------------------------

def _layernorm(x, gamma, beta):
    # x: (..., D), gamma/beta: (1, D)
    mu = jnp.mean(x, axis=-1, keepdims=True)
    var = jnp.mean((x - mu) ** 2, axis=-1, keepdims=True)
    return (x - mu) * jax.lax.rsqrt(var + EPS) * gamma + beta


def _mm(a, b):
    # contract last axis of a with first/second-to-last of b (jnp.dot semantics)
    return jnp.dot(a, b, preferred_element_type=jnp.float32)


def _mm_nt(a, b):
    # a @ b.T for 3-D a, 2-D b: contract last axes of both
    return jax.lax.dot_general(a, b, (((a.ndim - 1,), (1,)), ((), ())),
                               preferred_element_type=jnp.float32)


# --------------------------------- fused kernel --------------------------------

def crate_kernel(tok_ref,
                 pe_g1, pe_b1, pe_w, pe_b, pe_g2, pe_b2,
                 cls_ref, pos_ref,
                 ln_a_g, ln_a_b, wqkv_ref, wout_ref, bout_ref,
                 ln_f_g, ln_f_b, wff_ref,
                 hd_g, hd_b, hd_w1, hd_b1, hd_w2, hd_b2,
                 o_ref, x_scr,
                 *, depth, heads, dim_head, scale, step_size, lambd):
    B, n, _P = tok_ref.shape
    N = n + 1
    D = pe_w.shape[1]

    # ---- patch embedding: LayerNorm(patch_dim) -> Linear(patch_dim, dim) -> LayerNorm(dim)
    t = tok_ref[...]                                             # (B, n, P)
    tn = _layernorm(t, pe_g1[...], pe_b1[...])
    pe = _mm(tn, pe_w[...]) + pe_b[...]                          # (B, n, D)
    pe = _layernorm(pe, pe_g2[...], pe_b2[...])

    # ---- cls token + positional embedding, assembled in a VMEM scratch slab
    pos = pos_ref[...]                                           # (1, N, D)
    x_scr[:, 0:1, :] = jnp.broadcast_to(cls_ref[...] + pos[:, 0:1, :], (B, 1, D))
    x_scr[:, 1:, :] = pe + pos[:, 1:, :]
    x = x_scr[...]                                               # (B, N, D)
    # TODO(synk): nn.Dropout(emb_dropout) / attention dropout are identity in eval (p=0.0); skipped.

    # ---- transformer blocks (unrolled; weights stacked along leading depth axis)
    for l in range(depth):
        # --- PreNorm + shared-qkv Attention + residual
        xn = _layernorm(x, ln_a_g[l], ln_a_b[l])                 # (B, N, D)
        w = _mm(xn, wqkv_ref[l])                                 # (B, N, heads*dim_head)
        Wout = wout_ref[l]                                       # (heads*dim_head, D)
        proj = jnp.zeros((B, N, D), jnp.float32)
        for h in range(heads):
            lo = h * dim_head
            wh = w[:, :, lo:lo + dim_head]                       # (B, N, dim_head)
            dots = jnp.einsum('bnd,bmd->bnm', wh, wh,
                              preferred_element_type=jnp.float32) * scale
            m = jnp.max(dots, axis=-1, keepdims=True)
            p = jnp.exp(dots - m)
            attn = p * pl.reciprocal(jnp.sum(p, axis=-1, keepdims=True), approx=True)
            oh = jnp.einsum('bnm,bmd->bnd', attn, wh,
                            preferred_element_type=jnp.float32)  # (B, N, dim_head)
            # fold the head-concat into the output projection: sum_h oh @ Wout[h rows]
            proj = proj + _mm(oh, Wout[lo:lo + dim_head, :])
        x = proj + bout_ref[l] + x                               # to_out bias + residual

        # --- PreNorm + ISTA feed-forward (no outer residual, per reference)
        xn = _layernorm(x, ln_f_g[l], ln_f_b[l])
        Wd = wff_ref[l]                                          # (D, D), torch (out, in) layout
        x1 = _mm_nt(xn, Wd)                                      # F.linear(xn, W)  = xn @ W.T
        # grad2 - grad1 == (xn - x1) @ W  -> single matmul
        upd = step_size * _mm(xn - x1, Wd) - step_size * lambd
        x = jnp.maximum(xn + upd, 0.0)

    # ---- cls pool + mlp head (LN -> Linear(D,1000) -> Linear(1000, C_pad)) + sigmoid
    cls_tok = x[:, 0]                                            # (B, D)
    cn = _layernorm(cls_tok, hd_g[...], hd_b[...])
    h1 = _mm(cn, hd_w1[...]) + hd_b1[...]                        # (B, 1000)
    logits = _mm(h1, hd_w2[...]) + hd_b2[...]                    # (B, C_pad) lane-dense
    o_ref[...] = jax.nn.sigmoid(logits)


# --------------------------------- CRATE model --------------------------------

class CrateConfig:
    image_size = 8
    patch_size = 4
    frames = 4
    frame_patch_size = 2
    channels = 1
    num_classes = 10
    dim = 32
    depth = 2
    heads = 4
    dim_head = 8            # heads * dim_head == dim (inner_dim == dim)
    ista = 0.1
    lambd = 0.1
    pool = "cls"

    @property
    def patch_dim(self):
        return self.channels * self.patch_size * self.patch_size * self.frame_patch_size

    @property
    def num_patches(self):
        return ((self.image_size // self.patch_size) ** 2) * (self.frames // self.frame_patch_size)


def init_params(cfg, key):
    ks = iter(jax.random.split(key, 64))
    nrm = lambda shape, s=0.05: (s * jax.random.normal(next(ks), shape)).astype(jnp.float32)
    ones = lambda n: jnp.ones((1, n), jnp.float32)
    zeros = lambda n: jnp.zeros((1, n), jnp.float32)

    D, P, L = cfg.dim, cfg.patch_dim, cfg.depth
    inner = cfg.heads * cfg.dim_head

    return {
        # patch embedding: LN(P) -> Linear(P, D) -> LN(D)   (weights pre-transposed vs torch)
        "pe_g1": ones(P), "pe_b1": zeros(P),
        "pe_w": nrm((P, D)), "pe_b": zeros(D),
        "pe_g2": ones(D), "pe_b2": zeros(D),
        # tokens
        "pos": nrm((1, cfg.num_patches + 1, D), 1.0),
        "cls": nrm((1, 1, D), 1.0),
        # transformer layer weights, stacked along a leading depth axis
        "ln_a_g": jnp.ones((L, 1, D), jnp.float32), "ln_a_b": jnp.zeros((L, 1, D), jnp.float32),
        "wqkv": nrm((L, D, inner)),                       # qkv Linear, no bias (pre-transposed)
        "wout": nrm((L, inner, D)), "bout": jnp.zeros((L, 1, D), jnp.float32),
        "ln_f_g": jnp.ones((L, 1, D), jnp.float32), "ln_f_b": jnp.zeros((L, 1, D), jnp.float32),
        "wff": nrm((L, D, D)),                            # ISTA dictionary, torch (out,in) layout
        # head: LN(D) -> Linear(D,1000) -> Linear(1000, classes)
        "hd_g": ones(D), "hd_b": zeros(D),
        "hd_w1": nrm((D, 1000)), "hd_b1": zeros(1000),
        "hd_w2": nrm((1000, cfg.num_classes)), "hd_b2": zeros(cfg.num_classes),
    }


def patch_rearrange(img, cfg):
    # 'b c (h p1) (f pf) (w p2) -> b (h f w) (p1 pf p2 c)'
    b, c, H, F, W = img.shape
    p1 = p2 = cfg.patch_size
    pf = cfg.frame_patch_size
    h, f, w = H // p1, F // pf, W // p2
    x = img.reshape(b, c, h, p1, f, pf, w, p2)
    x = jnp.transpose(x, (0, 2, 4, 6, 3, 5, 7, 1))        # b h f w p1 pf p2 c
    return x.reshape(b, h * f * w, p1 * pf * p2 * c)


def crate_forward(img, params, cfg):
    tokens = patch_rearrange(img, cfg).astype(jnp.float32)          # (B, n, patch_dim)
    B, n, _ = tokens.shape
    N, D, C = n + 1, cfg.dim, cfg.num_classes
    C_pad = ((C + 127) // 128) * 128                                 # lane-dense head output

    # zero-pad the last head layer so the kernel writes an unmasked 128-lane output
    hd_w2 = jnp.pad(params["hd_w2"], ((0, 0), (0, C_pad - C)))
    hd_b2 = jnp.pad(params["hd_b2"], ((0, 0), (0, C_pad - C)))

    kernel = functools.partial(
        crate_kernel, depth=cfg.depth, heads=cfg.heads, dim_head=cfg.dim_head,
        scale=cfg.dim_head ** (-0.5), step_size=cfg.ista, lambd=cfg.lambd)

    vmem = pl.BlockSpec(memory_space=pltpu.MemorySpace.VMEM)
    args = (tokens,
            params["pe_g1"], params["pe_b1"], params["pe_w"], params["pe_b"],
            params["pe_g2"], params["pe_b2"],
            params["cls"], params["pos"],
            params["ln_a_g"], params["ln_a_b"], params["wqkv"],
            params["wout"], params["bout"],
            params["ln_f_g"], params["ln_f_b"], params["wff"],
            params["hd_g"], params["hd_b"],
            params["hd_w1"], params["hd_b1"], hd_w2, hd_b2)

    # Single fused kernel, whole batch resident in VMEM (<1 MiB total incl. head weights).
    # Note: bf16 operand casts (v6e/v7x) and a batch-parallel grid axis for v7x's 2nd
    # TensorCore are possible further tweaks, omitted here to keep f32 numerics exact.
    out_pad = pl.pallas_call(
        kernel,
        out_shape=jax.ShapeDtypeStruct((B, C_pad), jnp.float32),
        in_specs=[vmem] * len(args),
        out_specs=vmem,
        scratch_shapes=[pltpu.VMEM((B, N, D), jnp.float32)],
    )(*args)
    return out_pad[:, :C]                                            # (B, num_classes)


# ------------------------------------ main -------------------------------------

if __name__ == "__main__":
    cfg = CrateConfig()
    key = jax.random.PRNGKey(0)
    k_img, k_par = jax.random.split(key)

    # img: (batch, channels, image_h, frames, image_w)
    img = jax.random.normal(
        k_img, (2, cfg.channels, cfg.image_size, cfg.frames, cfg.image_size),
        dtype=jnp.float32)
    params = init_params(cfg, k_par)

    fwd = jax.jit(functools.partial(crate_forward, cfg=cfg))
    out = fwd(img, params)
    out = jax.block_until_ready(out)
    assert out.shape == (2, cfg.num_classes)
    assert bool(jnp.all((out >= 0.0) & (out <= 1.0)))
    print("KERNEL_OK")
</pallas_src>

<mosaic_0001>
module attributes {stable_mosaic.version = 11 : i64} {
  func.func @crate_kernel(%arg0: memref<2x8x32xf32, #tpu.memory_space<vmem>>, %arg1: memref<1x32xf32, #tpu.memory_space<vmem>>, %arg2: memref<1x32xf32, #tpu.memory_space<vmem>>, %arg3: memref<32x32xf32, #tpu.memory_space<vmem>>, %arg4: memref<1x32xf32, #tpu.memory_space<vmem>>, %arg5: memref<1x32xf32, #tpu.memory_space<vmem>>, %arg6: memref<1x32xf32, #tpu.memory_space<vmem>>, %arg7: memref<1x1x32xf32, #tpu.memory_space<vmem>>, %arg8: memref<1x9x32xf32, #tpu.memory_space<vmem>>, %arg9: memref<2x1x32xf32, #tpu.memory_space<vmem>>, %arg10: memref<2x1x32xf32, #tpu.memory_space<vmem>>, %arg11: memref<2x32x32xf32, #tpu.memory_space<vmem>>, %arg12: memref<2x32x32xf32, #tpu.memory_space<vmem>>, %arg13: memref<2x1x32xf32, #tpu.memory_space<vmem>>, %arg14: memref<2x1x32xf32, #tpu.memory_space<vmem>>, %arg15: memref<2x1x32xf32, #tpu.memory_space<vmem>>, %arg16: memref<2x32x32xf32, #tpu.memory_space<vmem>>, %arg17: memref<1x32xf32, #tpu.memory_space<vmem>>, %arg18: memref<1x32xf32, #tpu.memory_space<vmem>>, %arg19: memref<32x1000xf32, #tpu.memory_space<vmem>>, %arg20: memref<1x1000xf32, #tpu.memory_space<vmem>>, %arg21: memref<1000x128xf32, #tpu.memory_space<vmem>>, %arg22: memref<1x128xf32, #tpu.memory_space<vmem>>, %arg23: memref<2x128xf32, #tpu.memory_space<vmem>>, %arg24: memref<2x9x32xf32, #tpu.memory_space<vmem>>) attributes {dimension_semantics = [], scalar_prefetch = 0 : i64, scratch_operands = 1 : i64, tpu.core_type = #tpu.core_type<tc>} {
    %c0 = arith.constant 0 : index
    %c0_0 = arith.constant 0 : index
    %c0_1 = arith.constant 0 : index
    %0 = vector.load %arg0[%c0, %c0_0, %c0_1] : memref<2x8x32xf32, #tpu.memory_space<vmem>>, vector<2x8x32xf32>
    %c0_2 = arith.constant 0 : index
    %c0_3 = arith.constant 0 : index
    %1 = vector.load %arg1[%c0_2, %c0_3] : memref<1x32xf32, #tpu.memory_space<vmem>>, vector<1x32xf32>
    %c0_4 = arith.constant 0 : index
    %c0_5 = arith.constant 0 : index
    %2 = vector.load %arg2[%c0_4, %c0_5] : memref<1x32xf32, #tpu.memory_space<vmem>>, vector<1x32xf32>
    %cst = arith.constant dense<0.000000e+00> : vector<2x8xf32>
    %3 = vector.multi_reduction <add>, %0, %cst [2] : vector<2x8x32xf32> to vector<2x8xf32>
    %4 = vector.shape_cast %3 : vector<2x8xf32> to vector<2x8x1xf32>
    %cst_6 = arith.constant 3.200000e+01 : f32
    %5 = vector.broadcast %cst_6 : f32 to vector<2x8x1xf32>
    %6 = arith.divf %4, %5 : vector<2x8x1xf32>
    %7 = vector.broadcast %6 : vector<2x8x1xf32> to vector<2x8x32xf32>
    %8 = arith.subf %0, %7 : vector<2x8x32xf32>
    %9 = arith.mulf %8, %8 : vector<2x8x32xf32>
    %cst_7 = arith.constant dense<0.000000e+00> : vector<2x8xf32>
    %10 = vector.multi_reduction <add>, %9, %cst_7 [2] : vector<2x8x32xf32> to vector<2x8xf32>
    %11 = vector.shape_cast %10 : vector<2x8xf32> to vector<2x8x1xf32>
    %cst_8 = arith.constant 3.200000e+01 : f32
    %12 = vector.broadcast %cst_8 : f32 to vector<2x8x1xf32>
    %13 = arith.divf %11, %12 : vector<2x8x1xf32>
    %14 = vector.broadcast %6 : vector<2x8x1xf32> to vector<2x8x32xf32>
    %15 = arith.subf %0, %14 : vector<2x8x32xf32>
    %cst_9 = arith.constant 9.99999974E-6 : f32
    %16 = vector.broadcast %cst_9 : f32 to vector<2x8x1xf32>
    %17 = arith.addf %13, %16 : vector<2x8x1xf32>
    %18 = math.rsqrt %17 : vector<2x8x1xf32>
    %19 = vector.broadcast %18 : vector<2x8x1xf32> to vector<2x8x32xf32>
    %20 = arith.mulf %15, %19 : vector<2x8x32xf32>
    %21 = vector.shape_cast %1 : vector<1x32xf32> to vector<1x1x32xf32>
    %22 = vector.broadcast %21 : vector<1x1x32xf32> to vector<2x8x32xf32>
    %23 = arith.mulf %20, %22 : vector<2x8x32xf32>
    %24 = vector.shape_cast %2 : vector<1x32xf32> to vector<1x1x32xf32>
    %25 = vector.broadcast %24 : vector<1x1x32xf32> to vector<2x8x32xf32>
    %26 = arith.addf %23, %25 : vector<2x8x32xf32>
    %c0_10 = arith.constant 0 : index
    %c0_11 = arith.constant 0 : index
    %27 = vector.load %arg3[%c0_10, %c0_11] : memref<32x32xf32, #tpu.memory_space<vmem>>, vector<32x32xf32>
    %cst_12 = arith.constant dense<0.000000e+00> : vector<2x8x32xf32>
    %28 = tpu.matmul %26, %27, %cst_12 {dimension_numbers = #tpu.dot_dimension_numbers<[2], [0], [0, 1], [1], [0, 0, 0, 1, 1, 1], [], []>} : vector<2x8x32xf32>, vector<32x32xf32>, vector<2x8x32xf32> -> vector<2x8x32xf32>
    %c0_13 = arith.constant 0 : index
    %c0_14 = arith.constant 0 : index
    %29 = vector.load %arg4[%c0_13, %c0_14] : memref<1x32xf32, #tpu.memory_space<vmem>>, vector<1x32xf32>
    %30 = vector.shape_cast %29 : vector<1x32xf32> to vector<1x1x32xf32>
    %31 = vector.broadcast %30 : vector<1x1x32xf32> to vector<2x8x32xf32>
    %32 = arith.addf %28, %31 : vector<2x8x32xf32>
    %c0_15 = arith.constant 0 : index
    %c0_16 = arith.constant 0 : index
    %33 = vector.load %arg5[%c0_15, %c0_16] : memref<1x32xf32, #tpu.memory_space<vmem>>, vector<1x32xf32>
    %c0_17 = arith.constant 0 : index
    %c0_18 = arith.constant 0 : index
    %34 = vector.load %arg6[%c0_17, %c0_18] : memref<1x32xf32, #tpu.memory_space<vmem>>, vector<1x32xf32>
    %cst_19 = arith.constant dense<0.000000e+00> : vector<2x8xf32>
    %35 = vector.multi_reduction <add>, %32, %cst_19 [2] : vector<2x8x32xf32> to vector<2x8xf32>
    %36 = vector.shape_cast %35 : vector<2x8xf32> to vector<2x8x1xf32>
    %cst_20 = arith.constant 3.200000e+01 : f32
    %37 = vector.broadcast %cst_20 : f32 to vector<2x8x1xf32>
    %38 = arith.divf %36, %37 : vector<2x8x1xf32>
    %39 = vector.broadcast %38 : vector<2x8x1xf32> to vector<2x8x32xf32>
    %40 = arith.subf %32, %39 : vector<2x8x32xf32>
    %41 = arith.mulf %40, %40 : vector<2x8x32xf32>
    %cst_21 = arith.constant dense<0.000000e+00> : vector<2x8xf32>
    %42 = vector.multi_reduction <add>, %41, %cst_21 [2] : vector<2x8x32xf32> to vector<2x8xf32>
    %43 = vector.shape_cast %42 : vector<2x8xf32> to vector<2x8x1xf32>
    %cst_22 = arith.constant 3.200000e+01 : f32
    %44 = vector.broadcast %cst_22 : f32 to vector<2x8x1xf32>
    %45 = arith.divf %43, %44 : vector<2x8x1xf32>
    %46 = vector.broadcast %38 : vector<2x8x1xf32> to vector<2x8x32xf32>
    %47 = arith.subf %32, %46 : vector<2x8x32xf32>
    %cst_23 = arith.constant 9.99999974E-6 : f32
    %48 = vector.broadcast %cst_23 : f32 to vector<2x8x1xf32>
    %49 = arith.addf %45, %48 : vector<2x8x1xf32>
    %50 = math.rsqrt %49 : vector<2x8x1xf32>
    %51 = vector.broadcast %50 : vector<2x8x1xf32> to vector<2x8x32xf32>
    %52 = arith.mulf %47, %51 : vector<2x8x32xf32>
    %53 = vector.shape_cast %33 : vector<1x32xf32> to vector<1x1x32xf32>
    %54 = vector.broadcast %53 : vector<1x1x32xf32> to vector<2x8x32xf32>
    %55 = arith.mulf %52, %54 : vector<2x8x32xf32>
    %56 = vector.shape_cast %34 : vector<1x32xf32> to vector<1x1x32xf32>
    %57 = vector.broadcast %56 : vector<1x1x32xf32> to vector<2x8x32xf32>
    %58 = arith.addf %55, %57 : vector<2x8x32xf32>
    %c0_24 = arith.constant 0 : index
    %c0_25 = arith.constant 0 : index
    %c0_26 = arith.constant 0 : index
    %59 = vector.load %arg8[%c0_24, %c0_25, %c0_26] : memref<1x9x32xf32, #tpu.memory_space<vmem>>, vector<1x9x32xf32>
    %c0_27 = arith.constant 0 : index
    %c0_28 = arith.constant 0 : index
    %c0_29 = arith.constant 0 : index
    %60 = vector.load %arg7[%c0_27, %c0_28, %c0_29] : memref<1x1x32xf32, #tpu.memory_space<vmem>>, vector<1x1x32xf32>
    %61 = vector.extract_strided_slice %59 {offsets = [0, 0, 0], sizes = [1, 1, 32], strides = [1, 1, 1]} : vector<1x9x32xf32> to vector<1x1x32xf32>
    %62 = arith.addf %60, %61 : vector<1x1x32xf32>
    %63 = vector.shape_cast %62 : vector<1x1x32xf32> to vector<1x1x32xf32>
    %64 = vector.broadcast %63 : vector<1x1x32xf32> to vector<2x1x32xf32>
    %c0_30 = arith.constant 0 : index
    %c0_31 = arith.constant 0 : index
    %c0_32 = arith.constant 0 : index
    %65 = vector.load %arg24[%c0_30, %c0_31, %c0_32] : memref<2x9x32xf32, #tpu.memory_space<vmem>>, vector<2x1x32xf32>
    tpu.vector_store %arg24[%c0_30, %c0_31, %c0_32], %64 {strides = array<i32>} : memref<2x9x32xf32, #tpu.memory_space<vmem>>, vector<2x1x32xf32>,
    %66 = vector.extract_strided_slice %59 {offsets = [0, 1, 0], sizes = [1, 8, 32], strides = [1, 1, 1]} : vector<1x9x32xf32> to vector<1x8x32xf32>
    %67 = vector.broadcast %66 : vector<1x8x32xf32> to vector<2x8x32xf32>
    %68 = arith.addf %58, %67 : vector<2x8x32xf32>
    %c0_33 = arith.constant 0 : index
    %c1 = arith.constant 1 : index
    %c0_34 = arith.constant 0 : index
    %69 = vector.load %arg24[%c0_33, %c1, %c0_34] : memref<2x9x32xf32, #tpu.memory_space<vmem>>, vector<2x8x32xf32>
    tpu.vector_store %arg24[%c0_33, %c1, %c0_34], %68 {strides = array<i32>} : memref<2x9x32xf32, #tpu.memory_space<vmem>>, vector<2x8x32xf32>,
    %c0_35 = arith.constant 0 : index
    %c0_36 = arith.constant 0 : index
    %c0_37 = arith.constant 0 : index
    %70 = vector.load %arg24[%c0_35, %c0_36, %c0_37] : memref<2x9x32xf32, #tpu.memory_space<vmem>>, vector<2x9x32xf32>
    %c0_38 = arith.constant 0 : index
    %c0_39 = arith.constant 0 : index
    %c0_40 = arith.constant 0 : index
    %71 = vector.load %arg9[%c0_38, %c0_39, %c0_40] : memref<2x1x32xf32, #tpu.memory_space<vmem>>, vector<1x1x32xf32>
    %72 = vector.shape_cast %71 : vector<1x1x32xf32> to vector<1x32xf32>
    %c0_41 = arith.constant 0 : index
    %c0_42 = arith.constant 0 : index
    %c0_43 = arith.constant 0 : index
    %73 = vector.load %arg10[%c0_41, %c0_42, %c0_43] : memref<2x1x32xf32, #tpu.memory_space<vmem>>, vector<1x1x32xf32>
    %74 = vector.shape_cast %73 : vector<1x1x32xf32> to vector<1x32xf32>
    %cst_44 = arith.constant dense<0.000000e+00> : vector<2x9xf32>
    %75 = vector.multi_reduction <add>, %70, %cst_44 [2] : vector<2x9x32xf32> to vector<2x9xf32>
    %76 = vector.shape_cast %75 : vector<2x9xf32> to vector<2x9x1xf32>
    %cst_45 = arith.constant 3.200000e+01 : f32
    %77 = vector.broadcast %cst_45 : f32 to vector<2x9x1xf32>
    %78 = arith.divf %76, %77 : vector<2x9x1xf32>
    %79 = vector.broadcast %78 : vector<2x9x1xf32> to vector<2x9x32xf32>
    %80 = arith.subf %70, %79 : vector<2x9x32xf32>
    %81 = arith.mulf %80, %80 : vector<2x9x32xf32>
    %cst_46 = arith.constant dense<0.000000e+00> : vector<2x9xf32>
    %82 = vector.multi_reduction <add>, %81, %cst_46 [2] : vector<2x9x32xf32> to vector<2x9xf32>
    %83 = vector.shape_cast %82 : vector<2x9xf32> to vector<2x9x1xf32>
    %cst_47 = arith.constant 3.200000e+01 : f32
    %84 = vector.broadcast %cst_47 : f32 to vector<2x9x1xf32>
    %85 = arith.divf %83, %84 : vector<2x9x1xf32>
    %86 = vector.broadcast %78 : vector<2x9x1xf32> to vector<2x9x32xf32>
    %87 = arith.subf %70, %86 : vector<2x9x32xf32>
    %cst_48 = arith.constant 9.99999974E-6 : f32
    %88 = vector.broadcast %cst_48 : f32 to vector<2x9x1xf32>
    %89 = arith.addf %85, %88 : vector<2x9x1xf32>
    %90 = math.rsqrt %89 : vector<2x9x1xf32>
    %91 = vector.broadcast %90 : vector<2x9x1xf32> to vector<2x9x32xf32>
    %92 = arith.mulf %87, %91 : vector<2x9x32xf32>
    %93 = vector.shape_cast %72 : vector<1x32xf32> to vector<1x1x32xf32>
    %94 = vector.broadcast %93 : vector<1x1x32xf32> to vector<2x9x32xf32>
    %95 = arith.mulf %92, %94 : vector<2x9x32xf32>
    %96 = vector.shape_cast %74 : vector<1x32xf32> to vector<1x1x32xf32>
    %97 = vector.broadcast %96 : vector<1x1x32xf32> to vector<2x9x32xf32>
    %98 = arith.addf %95, %97 : vector<2x9x32xf32>
    %c0_49 = arith.constant 0 : index
    %c0_50 = arith.constant 0 : index
    %c0_51 = arith.constant 0 : index
    %99 = vector.load %arg11[%c0_49, %c0_50, %c0_51] : memref<2x32x32xf32, #tpu.memory_space<vmem>>, vector<1x32x32xf32>
    %100 = vector.shape_cast %99 : vector<1x32x32xf32> to vector<32x32xf32>
    %cst_52 = arith.constant dense<0.000000e+00> : vector<2x9x32xf32>
    %101 = tpu.matmul %98, %100, %cst_52 {dimension_numbers = #tpu.dot_dimension_numbers<[2], [0], [0, 1], [1], [0, 0, 0, 1, 1, 1], [], []>} : vector<2x9x32xf32>, vector<32x32xf32>, vector<2x9x32xf32> -> vector<2x9x32xf32>
    %c0_53 = arith.constant 0 : index
    %c0_54 = arith.constant 0 : index
    %c0_55 = arith.constant 0 : index
    %102 = vector.load %arg12[%c0_53, %c0_54, %c0_55] : memref<2x32x32xf32, #tpu.memory_space<vmem>>, vector<1x32x32xf32>
    %103 = vector.shape_cast %102 : vector<1x32x32xf32> to vector<32x32xf32>
    %cst_56 = arith.constant 0.000000e+00 : f32
    %104 = vector.broadcast %cst_56 : f32 to vector<2x9x32xf32>
    %105 = vector.extract_strided_slice %101 {offsets = [0, 0, 0], sizes = [2, 9, 8], strides = [1, 1, 1]} : vector<2x9x32xf32> to vector<2x9x8xf32>
    "tpu.trace_start"() <{level = 10 : i32, message = "bnd,bmd->bnm"}> : () -> ()
    %cst_57 = arith.constant dense<0.000000e+00> : vector<2x9x9xf32>
    %106 = tpu.matmul %105, %105, %cst_57 {dimension_numbers = #tpu.dot_dimension_numbers<[2], [2], [1], [1], [0, 0, 0, 1, 1, 1], [0], [0]>} : vector<2x9x8xf32>, vector<2x9x8xf32>, vector<2x9x9xf32> -> vector<2x9x9xf32>
    "tpu.trace_stop"() : () -> ()
    %cst_58 = arith.constant 0.353553385 : f32
    %107 = vector.broadcast %cst_58 : f32 to vector<2x9x9xf32>
    %108 = arith.mulf %106, %107 : vector<2x9x9xf32>
    %cst_59 = arith.constant dense<0xFF800000> : vector<2x9xf32>
    %109 = vector.multi_reduction <maximumf>, %108, %cst_59 [2] : vector<2x9x9xf32> to vector<2x9xf32>
    %110 = vector.shape_cast %109 : vector<2x9xf32> to vector<2x9x1xf32>
    %111 = vector.broadcast %110 : vector<2x9x1xf32> to vector<2x9x9xf32>
    %112 = arith.subf %108, %111 : vector<2x9x9xf32>
    %113 = math.exp %112 : vector<2x9x9xf32>
    %cst_60 = arith.constant dense<0.000000e+00> : vector<2x9xf32>
    %114 = vector.multi_reduction <add>, %113, %cst_60 [2] : vector<2x9x9xf32> to vector<2x9xf32>
    %115 = vector.shape_cast %114 : vector<2x9xf32> to vector<2x9x1xf32>
    %116 = tpu.reciprocal %115 {approx = true} : vector<2x9x1xf32> -> vector<2x9x1xf32>
    %117 = vector.broadcast %116 : vector<2x9x1xf32> to vector<2x9x9xf32>
    %118 = arith.mulf %113, %117 : vector<2x9x9xf32>
    "tpu.trace_start"() <{level = 10 : i32, message = "bnm,bmd->bnd"}> : () -> ()
    %cst_61 = arith.constant dense<0.000000e+00> : vector<2x9x8xf32>
    %119 = tpu.matmul %118, %105, %cst_61 {dimension_numbers = #tpu.dot_dimension_numbers<[2], [1], [1], [2], [0, 0, 0, 1, 1, 2], [0], [0]>} : vector<2x9x9xf32>, vector<2x9x8xf32>, vector<2x9x8xf32> -> vector<2x9x8xf32>
    "tpu.trace_stop"() : () -> ()
    %120 = vector.extract_strided_slice %103 {offsets = [0, 0], sizes = [8, 32], strides = [1, 1]} : vector<32x32xf32> to vector<8x32xf32>
    %cst_62 = arith.constant dense<0.000000e+00> : vector<2x9x32xf32>
    %121 = tpu.matmul %119, %120, %cst_62 {dimension_numbers = #tpu.dot_dimension_numbers<[2], [0], [0, 1], [1], [0, 0, 0, 1, 1, 1], [], []>} : vector<2x9x8xf32>, vector<8x32xf32>, vector<2x9x32xf32> -> vector<2x9x32xf32>
    %122 = arith.addf %104, %121 : vector<2x9x32xf32>
    %123 = vector.extract_strided_slice %101 {offsets = [0, 0, 8], sizes = [2, 9, 8], strides = [1, 1, 1]} : vector<2x9x32xf32> to vector<2x9x8xf32>
    "tpu.trace_start"() <{level = 10 : i32, message = "bnd,bmd->bnm"}> : () -> ()
    %cst_63 = arith.constant dense<0.000000e+00> : vector<2x9x9xf32>
    %124 = tpu.matmul %123, %123, %cst_63 {dimension_numbers = #tpu.dot_dimension_numbers<[2], [2], [1], [1], [0, 0, 0, 1, 1, 1], [0], [0]>} : vector<2x9x8xf32>, vector<2x9x8xf32>, vector<2x9x9xf32> -> vector<2x9x9xf32>
    "tpu.trace_stop"() : () -> ()
    %cst_64 = arith.constant 0.353553385 : f32
    %125 = vector.broadcast %cst_64 : f32 to vector<2x9x9xf32>
    %126 = arith.mulf %124, %125 : vector<2x9x9xf32>
    %cst_65 = arith.constant dense<0xFF800000> : vector<2x9xf32>
    %127 = vector.multi_reduction <maximumf>, %126, %cst_65 [2] : vector<2x9x9xf32> to vector<2x9xf32>
    %128 = vector.shape_cast %127 : vector<2x9xf32> to vector<2x9x1xf32>
    %129 = vector.broadcast %128 : vector<2x9x1xf32> to vector<2x9x9xf32>
    %130 = arith.subf %126, %129 : vector<2x9x9xf32>
    %131 = math.exp %130 : vector<2x9x9xf32>
    %cst_66 = arith.constant dense<0.000000e+00> : vector<2x9xf32>
    %132 = vector.multi_reduction <add>, %131, %cst_66 [2] : vector<2x9x9xf32> to vector<2x9xf32>
    %133 = vector.shape_cast %132 : vector<2x9xf32> to vector<2x9x1xf32>
    %134 = tpu.reciprocal %133 {approx = true} : vector<2x9x1xf32> -> vector<2x9x1xf32>
    %135 = vector.broadcast %134 : vector<2x9x1xf32> to vector<2x9x9xf32>
    %136 = arith.mulf %131, %135 : vector<2x9x9xf32>
    "tpu.trace_start"() <{level = 10 : i32, message = "bnm,bmd->bnd"}> : () -> ()
    %cst_67 = arith.constant dense<0.000000e+00> : vector<2x9x8xf32>
    %137 = tpu.matmul %136, %123, %cst_67 {dimension_numbers = #tpu.dot_dimension_numbers<[2], [1], [1], [2], [0, 0, 0, 1, 1, 2], [0], [0]>} : vector<2x9x9xf32>, vector<2x9x8xf32>, vector<2x9x8xf32> -> vector<2x9x8xf32>
    "tpu.trace_stop"() : () -> ()
    %138 = vector.extract_strided_slice %103 {offsets = [8, 0], sizes = [8, 32], strides = [1, 1]} : vector<32x32xf32> to vector<8x32xf32>
    %cst_68 = arith.constant dense<0.000000e+00> : vector<2x9x32xf32>
    %139 = tpu.matmul %137, %138, %cst_68 {dimension_numbers = #tpu.dot_dimension_numbers<[2], [0], [0, 1], [1], [0, 0, 0, 1, 1, 1], [], []>} : vector<2x9x8xf32>, vector<8x32xf32>, vector<2x9x32xf32> -> vector<2x9x32xf32>
    %140 = arith.addf %122, %139 : vector<2x9x32xf32>
    %141 = vector.extract_strided_slice %101 {offsets = [0, 0, 16], sizes = [2, 9, 8], strides = [1, 1, 1]} : vector<2x9x32xf32> to vector<2x9x8xf32>
    "tpu.trace_start"() <{level = 10 : i32, message = "bnd,bmd->bnm"}> : () -> ()
    %cst_69 = arith.constant dense<0.000000e+00> : vector<2x9x9xf32>
    %142 = tpu.matmul %141, %141, %cst_69 {dimension_numbers = #tpu.dot_dimension_numbers<[2], [2], [1], [1], [0, 0, 0, 1, 1, 1], [0], [0]>} : vector<2x9x8xf32>, vector<2x9x8xf32>, vector<2x9x9xf32> -> vector<2x9x9xf32>
    "tpu.trace_stop"() : () -> ()
    %cst_70 = arith.constant 0.353553385 : f32
    %143 = vector.broadcast %cst_70 : f32 to vector<2x9x9xf32>
    %144 = arith.mulf %142, %143 : vector<2x9x9xf32>
    %cst_71 = arith.constant dense<0xFF800000> : vector<2x9xf32>
    %145 = vector.multi_reduction <maximumf>, %144, %cst_71 [2] : vector<2x9x9xf32> to vector<2x9xf32>
    %146 = vector.shape_cast %145 : vector<2x9xf32> to vector<2x9x1xf32>
    %147 = vector.broadcast %146 : vector<2x9x1xf32> to vector<2x9x9xf32>
    %148 = arith.subf %144, %147 : vector<2x9x9xf32>
    %149 = math.exp %148 : vector<2x9x9xf32>
    %cst_72 = arith.constant dense<0.000000e+00> : vector<2x9xf32>
    %150 = vector.multi_reduction <add>, %149, %cst_72 [2] : vector<2x9x9xf32> to vector<2x9xf32>
    %151 = vector.shape_cast %150 : vector<2x9xf32> to vector<2x9x1xf32>
    %152 = tpu.reciprocal %151 {approx = true} : vector<2x9x1xf32> -> vector<2x9x1xf32>
    %153 = vector.broadcast %152 : vector<2x9x1xf32> to vector<2x9x9xf32>
    %154 = arith.mulf %149, %153 : vector<2x9x9xf32>
    "tpu.trace_start"() <{level = 10 : i32, message = "bnm,bmd->bnd"}> : () -> ()
    %cst_73 = arith.constant dense<0.000000e+00> : vector<2x9x8xf32>
    %155 = tpu.matmul %154, %141, %cst_73 {dimension_numbers = #tpu.dot_dimension_numbers<[2], [1], [1], [2], [0, 0, 0, 1, 1, 2], [0], [0]>} : vector<2x9x9xf32>, vector<2x9x8xf32>, vector<2x9x8xf32> -> vector<2x9x8xf32>
    "tpu.trace_stop"() : () -> ()
    %156 = vector.extract_strided_slice %103 {offsets = [16, 0], sizes = [8, 32], strides = [1, 1]} : vector<32x32xf32> to vector<8x32xf32>
    %cst_74 = arith.constant dense<0.000000e+00> : vector<2x9x32xf32>
    %157 = tpu.matmul %155, %156, %cst_74 {dimension_numbers = #tpu.dot_dimension_numbers<[2], [0], [0, 1], [1], [0, 0, 0, 1, 1, 1], [], []>} : vector<2x9x8xf32>, vector<8x32xf32>, vector<2x9x32xf32> -> vector<2x9x32xf32>
    %158 = arith.addf %140, %157 : vector<2x9x32xf32>
    %159 = vector.extract_strided_slice %101 {offsets = [0, 0, 24], sizes = [2, 9, 8], strides = [1, 1, 1]} : vector<2x9x32xf32> to vector<2x9x8xf32>
    "tpu.trace_start"() <{level = 10 : i32, message = "bnd,bmd->bnm"}> : () -> ()
    %cst_75 = arith.constant dense<0.000000e+00> : vector<2x9x9xf32>
    %160 = tpu.matmul %159, %159, %cst_75 {dimension_numbers = #tpu.dot_dimension_numbers<[2], [2], [1], [1], [0, 0, 0, 1, 1, 1], [0], [0]>} : vector<2x9x8xf32>, vector<2x9x8xf32>, vector<2x9x9xf32> -> vector<2x9x9xf32>
    "tpu.trace_stop"() : () -> ()
    %cst_76 = arith.constant 0.353553385 : f32
    %161 = vector.broadcast %cst_76 : f32 to vector<2x9x9xf32>
    %162 = arith.mulf %160, %161 : vector<2x9x9xf32>
    %cst_77 = arith.constant dense<0xFF800000> : vector<2x9xf32>
    %163 = vector.multi_reduction <maximumf>, %162, %cst_77 [2] : vector<2x9x9xf32> to vector<2x9xf32>
    %164 = vector.shape_cast %163 : vector<2x9xf32> to vector<2x9x1xf32>
    %165 = vector.broadcast %164 : vector<2x9x1xf32> to vector<2x9x9xf32>
    %166 = arith.subf %162, %165 : vector<2x9x9xf32>
    %167 = math.exp %166 : vector<2x9x9xf32>
    %cst_78 = arith.constant dense<0.000000e+00> : vector<2x9xf32>
    %168 = vector.multi_reduction <add>, %167, %cst_78 [2] : vector<2x9x9xf32> to vector<2x9xf32>
    %169 = vector.shape_cast %168 : vector<2x9xf32> to vector<2x9x1xf32>
    %170 = tpu.reciprocal %169 {approx = true} : vector<2x9x1xf32> -> vector<2x9x1xf32>
    %171 = vector.broadcast %170 : vector<2x9x1xf32> to vector<2x9x9xf32>
    %172 = arith.mulf %167, %171 : vector<2x9x9xf32>
    "tpu.trace_start"() <{level = 10 : i32, message = "bnm,bmd->bnd"}> : () -> ()
    %cst_79 = arith.constant dense<0.000000e+00> : vector<2x9x8xf32>
    %173 = tpu.matmul %172, %159, %cst_79 {dimension_numbers = #tpu.dot_dimension_numbers<[2], [1], [1], [2], [0, 0, 0, 1, 1, 2], [0], [0]>} : vector<2x9x9xf32>, vector<2x9x8xf32>, vector<2x9x8xf32> -> vector<2x9x8xf32>
    "tpu.trace_stop"() : () -> ()
    %174 = vector.extract_strided_slice %103 {offsets = [24, 0], sizes = [8, 32], strides = [1, 1]} : vector<32x32xf32> to vector<8x32xf32>
    %cst_80 = arith.constant dense<0.000000e+00> : vector<2x9x32xf32>
    %175 = tpu.matmul %173, %174, %cst_80 {dimension_numbers = #tpu.dot_dimension_numbers<[2], [0], [0, 1], [1], [0, 0, 0, 1, 1, 1], [], []>} : vector<2x9x8xf32>, vector<8x32xf32>, vector<2x9x32xf32> -> vector<2x9x32xf32>
    %176 = arith.addf %158, %175 : vector<2x9x32xf32>
    %c0_81 = arith.constant 0 : index
    %c0_82 = arith.constant 0 : index
    %c0_83 = arith.constant 0 : index
    %177 = vector.load %arg13[%c0_81, %c0_82, %c0_83] : memref<2x1x32xf32, #tpu.memory_space<vmem>>, vector<1x1x32xf32>
    %178 = vector.shape_cast %177 : vector<1x1x32xf32> to vector<1x32xf32>
    %179 = vector.shape_cast %178 : vector<1x32xf32> to vector<1x1x32xf32>
    %180 = vector.broadcast %179 : vector<1x1x32xf32> to vector<2x9x32xf32>
    %181 = arith.addf %176, %180 : vector<2x9x32xf32>
    %182 = arith.addf %181, %70 : vector<2x9x32xf32>
    %c0_84 = arith.constant 0 : index
    %c0_85 = arith.constant 0 : index
    %c0_86 = arith.constant 0 : index
    %183 = vector.load %arg14[%c0_84, %c0_85, %c0_86] : memref<2x1x32xf32, #tpu.memory_space<vmem>>, vector<1x1x32xf32>
    %184 = vector.shape_cast %183 : vector<1x1x32xf32> to vector<1x32xf32>
    %c0_87 = arith.constant 0 : index
    %c0_88 = arith.constant 0 : index
    %c0_89 = arith.constant 0 : index
    %185 = vector.load %arg15[%c0_87, %c0_88, %c0_89] : memref<2x1x32xf32, #tpu.memory_space<vmem>>, vector<1x1x32xf32>
    %186 = vector.shape_cast %185 : vector<1x1x32xf32> to vector<1x32xf32>
    %cst_90 = arith.constant dense<0.000000e+00> : vector<2x9xf32>
    %187 = vector.multi_reduction <add>, %182, %cst_90 [2] : vector<2x9x32xf32> to vector<2x9xf32>
    %188 = vector.shape_cast %187 : vector<2x9xf32> to vector<2x9x1xf32>
    %cst_91 = arith.constant 3.200000e+01 : f32
    %189 = vector.broadcast %cst_91 : f32 to vector<2x9x1xf32>
    %190 = arith.divf %188, %189 : vector<2x9x1xf32>
    %191 = vector.broadcast %190 : vector<2x9x1xf32> to vector<2x9x32xf32>
    %192 = arith.subf %182, %191 : vector<2x9x32xf32>
    %193 = arith.mulf %192, %192 : vector<2x9x32xf32>
    %cst_92 = arith.constant dense<0.000000e+00> : vector<2x9xf32>
    %194 = vector.multi_reduction <add>, %193, %cst_92 [2] : vector<2x9x32xf32> to vector<2x9xf32>
    %195 = vector.shape_cast %194 : vector<2x9xf32> to vector<2x9x1xf32>
    %cst_93 = arith.constant 3.200000e+01 : f32
    %196 = vector.broadcast %cst_93 : f32 to vector<2x9x1xf32>
    %197 = arith.divf %195, %196 : vector<2x9x1xf32>
    %198 = vector.broadcast %190 : vector<2x9x1xf32> to vector<2x9x32xf32>
    %199 = arith.subf %182, %198 : vector<2x9x32xf32>
    %cst_94 = arith.constant 9.99999974E-6 : f32
    %200 = vector.broadcast %cst_94 : f32 to vector<2x9x1xf32>
    %201 = arith.addf %197, %200 : vector<2x9x1xf32>
    %202 = math.rsqrt %201 : vector<2x9x1xf32>
    %203 = vector.broadcast %202 : vector<2x9x1xf32> to vector<2x9x32xf32>
    %204 = arith.mulf %199, %203 : vector<2x9x32xf32>
    %205 = vector.shape_cast %184 : vector<1x32xf32> to vector<1x1x32xf32>
    %206 = vector.broadcast %205 : vector<1x1x32xf32> to vector<2x9x32xf32>
    %207 = arith.mulf %204, %206 : vector<2x9x32xf32>
    %208 = vector.shape_cast %186 : vector<1x32xf32> to vector<1x1x32xf32>
    %209 = vector.broadcast %208 : vector<1x1x32xf32> to vector<2x9x32xf32>
    %210 = arith.addf %207, %209 : vector<2x9x32xf32>
    %c0_95 = arith.constant 0 : index
    %c0_96 = arith.constant 0 : index
    %c0_97 = arith.constant 0 : index
    %211 = vector.load %arg16[%c0_95, %c0_96, %c0_97] : memref<2x32x32xf32, #tpu.memory_space<vmem>>, vector<1x32x32xf32>
    %212 = vector.shape_cast %211 : vector<1x32x32xf32> to vector<32x32xf32>
    %cst_98 = arith.constant dense<0.000000e+00> : vector<2x9x32xf32>
    %213 = tpu.matmul %210, %212, %cst_98 {dimension_numbers = #tpu.dot_dimension_numbers<[2], [1], [0, 1], [0], [0, 0, 0, 1, 1, 0], [], []>} : vector<2x9x32xf32>, vector<32x32xf32>, vector<2x9x32xf32> -> vector<2x9x32xf32>
    %214 = arith.subf %210, %213 : vector<2x9x32xf32>
    %cst_99 = arith.constant dense<0.000000e+00> : vector<2x9x32xf32>
    %215 = tpu.matmul %214, %212, %cst_99 {dimension_numbers = #tpu.dot_dimension_numbers<[2], [0], [0, 1], [1], [0, 0, 0, 1, 1, 1], [], []>} : vector<2x9x32xf32>, vector<32x32xf32>, vector<2x9x32xf32> -> vector<2x9x32xf32>
    %cst_100 = arith.constant 1.000000e-01 : f32
    %216 = vector.broadcast %cst_100 : f32 to vector<2x9x32xf32>
    %217 = arith.mulf %216, %215 : vector<2x9x32xf32>
    %cst_101 = arith.constant 0.00999999977 : f32
    %218 = vector.broadcast %cst_101 : f32 to vector<2x9x32xf32>
    %219 = arith.subf %217, %218 : vector<2x9x32xf32>
    %220 = arith.addf %210, %219 : vector<2x9x32xf32>
    %cst_102 = arith.constant 0.000000e+00 : f32
    %221 = vector.broadcast %cst_102 : f32 to vector<2x9x32xf32>
    %222 = arith.maximumf %220, %221 : vector<2x9x32xf32>
    %c1_103 = arith.constant 1 : index
    %c0_104 = arith.constant 0 : index
    %c0_105 = arith.constant 0 : index
    %223 = vector.load %arg9[%c1_103, %c0_104, %c0_105] : memref<2x1x32xf32, #tpu.memory_space<vmem>>, vector<1x1x32xf32>
    %224 = vector.shape_cast %223 : vector<1x1x32xf32> to vector<1x32xf32>
    %c1_106 = arith.constant 1 : index
    %c0_107 = arith.constant 0 : index
    %c0_108 = arith.constant 0 : index
    %225 = vector.load %arg10[%c1_106, %c0_107, %c0_108] : memref<2x1x32xf32, #tpu.memory_space<vmem>>, vector<1x1x32xf32>
    %226 = vector.shape_cast %225 : vector<1x1x32xf32> to vector<1x32xf32>
    %cst_109 = arith.constant dense<0.000000e+00> : vector<2x9xf32>
    %227 = vector.multi_reduction <add>, %222, %cst_109 [2] : vector<2x9x32xf32> to vector<2x9xf32>
    %228 = vector.shape_cast %227 : vector<2x9xf32> to vector<2x9x1xf32>
    %cst_110 = arith.constant 3.200000e+01 : f32
    %229 = vector.broadcast %cst_110 : f32 to vector<2x9x1xf32>
    %230 = arith.divf %228, %229 : vector<2x9x1xf32>
    %231 = vector.broadcast %230 : vector<2x9x1xf32> to vector<2x9x32xf32>
    %232 = arith.subf %222, %231 : vector<2x9x32xf32>
    %233 = arith.mulf %232, %232 : vector<2x9x32xf32>
    %cst_111 = arith.constant dense<0.000000e+00> : vector<2x9xf32>
    %234 = vector.multi_reduction <add>, %233, %cst_111 [2] : vector<2x9x32xf32> to vector<2x9xf32>
    %235 = vector.shape_cast %234 : vector<2x9xf32> to vector<2x9x1xf32>
    %cst_112 = arith.constant 3.200000e+01 : f32
    %236 = vector.broadcast %cst_112 : f32 to vector<2x9x1xf32>
    %237 = arith.divf %235, %236 : vector<2x9x1xf32>
    %238 = vector.broadcast %230 : vector<2x9x1xf32> to vector<2x9x32xf32>
    %239 = arith.subf %222, %238 : vector<2x9x32xf32>
    %cst_113 = arith.constant 9.99999974E-6 : f32
    %240 = vector.broadcast %cst_113 : f32 to vector<2x9x1xf32>
    %241 = arith.addf %237, %240 : vector<2x9x1xf32>
    %242 = math.rsqrt %241 : vector<2x9x1xf32>
    %243 = vector.broadcast %242 : vector<2x9x1xf32> to vector<2x9x32xf32>
    %244 = arith.mulf %239, %243 : vector<2x9x32xf32>
    %245 = vector.shape_cast %224 : vector<1x32xf32> to vector<1x1x32xf32>
    %246 = vector.broadcast %245 : vector<1x1x32xf32> to vector<2x9x32xf32>
    %247 = arith.mulf %244, %246 : vector<2x9x32xf32>
    %248 = vector.shape_cast %226 : vector<1x32xf32> to vector<1x1x32xf32>
    %249 = vector.broadcast %248 : vector<1x1x32xf32> to vector<2x9x32xf32>
    %250 = arith.addf %247, %249 : vector<2x9x32xf32>
    %c1_114 = arith.constant 1 : index
    %c0_115 = arith.constant 0 : index
    %c0_116 = arith.constant 0 : index
    %251 = vector.load %arg11[%c1_114, %c0_115, %c0_116] : memref<2x32x32xf32, #tpu.memory_space<vmem>>, vector<1x32x32xf32>
    %252 = vector.shape_cast %251 : vector<1x32x32xf32> to vector<32x32xf32>
    %cst_117 = arith.constant dense<0.000000e+00> : vector<2x9x32xf32>
    %253 = tpu.matmul %250, %252, %cst_117 {dimension_numbers = #tpu.dot_dimension_numbers<[2], [0], [0, 1], [1], [0, 0, 0, 1, 1, 1], [], []>} : vector<2x9x32xf32>, vector<32x32xf32>, vector<2x9x32xf32> -> vector<2x9x32xf32>
    %c1_118 = arith.constant 1 : index
    %c0_119 = arith.constant 0 : index
    %c0_120 = arith.constant 0 : index
    %254 = vector.load %arg12[%c1_118, %c0_119, %c0_120] : memref<2x32x32xf32, #tpu.memory_space<vmem>>, vector<1x32x32xf32>
    %255 = vector.shape_cast %254 : vector<1x32x32xf32> to vector<32x32xf32>
    %cst_121 = arith.constant 0.000000e+00 : f32
    %256 = vector.broadcast %cst_121 : f32 to vector<2x9x32xf32>
    %257 = vector.extract_strided_slice %253 {offsets = [0, 0, 0], sizes = [2, 9, 8], strides = [1, 1, 1]} : vector<2x9x32xf32> to vector<2x9x8xf32>
    "tpu.trace_start"() <{level = 10 : i32, message = "bnd,bmd->bnm"}> : () -> ()
    %cst_122 = arith.constant dense<0.000000e+00> : vector<2x9x9xf32>
    %258 = tpu.matmul %257, %257, %cst_122 {dimension_numbers = #tpu.dot_dimension_numbers<[2], [2], [1], [1], [0, 0, 0, 1, 1, 1], [0], [0]>} : vector<2x9x8xf32>, vector<2x9x8xf32>, vector<2x9x9xf32> -> vector<2x9x9xf32>
    "tpu.trace_stop"() : () -> ()
    %cst_123 = arith.constant 0.353553385 : f32
    %259 = vector.broadcast %cst_123 : f32 to vector<2x9x9xf32>
    %260 = arith.mulf %258, %259 : vector<2x9x9xf32>
    %cst_124 = arith.constant dense<0xFF800000> : vector<2x9xf32>
    %261 = vector.multi_reduction <maximumf>, %260, %cst_124 [2] : vector<2x9x9xf32> to vector<2x9xf32>
    %262 = vector.shape_cast %261 : vector<2x9xf32> to vector<2x9x1xf32>
    %263 = vector.broadcast %262 : vector<2x9x1xf32> to vector<2x9x9xf32>
    %264 = arith.subf %260, %263 : vector<2x9x9xf32>
    %265 = math.exp %264 : vector<2x9x9xf32>
    %cst_125 = arith.constant dense<0.000000e+00> : vector<2x9xf32>
    %266 = vector.multi_reduction <add>, %265, %cst_125 [2] : vector<2x9x9xf32> to vector<2x9xf32>
    %267 = vector.shape_cast %266 : vector<2x9xf32> to vector<2x9x1xf32>
    %268 = tpu.reciprocal %267 {approx = true} : vector<2x9x1xf32> -> vector<2x9x1xf32>
    %269 = vector.broadcast %268 : vector<2x9x1xf32> to vector<2x9x9xf32>
    %270 = arith.mulf %265, %269 : vector<2x9x9xf32>
    "tpu.trace_start"() <{level = 10 : i32, message = "bnm,bmd->bnd"}> : () -> ()
    %cst_126 = arith.constant dense<0.000000e+00> : vector<2x9x8xf32>
    %271 = tpu.matmul %270, %257, %cst_126 {dimension_numbers = #tpu.dot_dimension_numbers<[2], [1], [1], [2], [0, 0, 0, 1, 1, 2], [0], [0]>} : vector<2x9x9xf32>, vector<2x9x8xf32>, vector<2x9x8xf32> -> vector<2x9x8xf32>
    "tpu.trace_stop"() : () -> ()
    %272 = vector.extract_strided_slice %255 {offsets = [0, 0], sizes = [8, 32], strides = [1, 1]} : vector<32x32xf32> to vector<8x32xf32>
    %cst_127 = arith.constant dense<0.000000e+00> : vector<2x9x32xf32>
    %273 = tpu.matmul %271, %272, %cst_127 {dimension_numbers = #tpu.dot_dimension_numbers<[2], [0], [0, 1], [1], [0, 0, 0, 1, 1, 1], [], []>} : vector<2x9x8xf32>, vector<8x32xf32>, vector<2x9x32xf32> -> vector<2x9x32xf32>
    %274 = arith.addf %256, %273 : vector<2x9x32xf32>
    %275 = vector.extract_strided_slice %253 {offsets = [0, 0, 8], sizes = [2, 9, 8], strides = [1, 1, 1]} : vector<2x9x32xf32> to vector<2x9x8xf32>
    "tpu.trace_start"() <{level = 10 : i32, message = "bnd,bmd->bnm"}> : () -> ()
    %cst_128 = arith.constant dense<0.000000e+00> : vector<2x9x9xf32>
    %276 = tpu.matmul %275, %275, %cst_128 {dimension_numbers = #tpu.dot_dimension_numbers<[2], [2], [1], [1], [0, 0, 0, 1, 1, 1], [0], [0]>} : vector<2x9x8xf32>, vector<2x9x8xf32>, vector<2x9x9xf32> -> vector<2x9x9xf32>
    "tpu.trace_stop"() : () -> ()
    %cst_129 = arith.constant 0.353553385 : f32
    %277 = vector.broadcast %cst_129 : f32 to vector<2x9x9xf32>
    %278 = arith.mulf %276, %277 : vector<2x9x9xf32>
    %cst_130 = arith.constant dense<0xFF800000> : vector<2x9xf32>
    %279 = vector.multi_reduction <maximumf>, %278, %cst_130 [2] : vector<2x9x9xf32> to vector<2x9xf32>
    %280 = vector.shape_cast %279 : vector<2x9xf32> to vector<2x9x1xf32>
    %281 = vector.broadcast %280 : vector<2x9x1xf32> to vector<2x9x9xf32>
    %282 = arith.subf %278, %281 : vector<2x9x9xf32>
    %283 = math.exp %282 : vector<2x9x9xf32>
    %cst_131 = arith.constant dense<0.000000e+00> : vector<2x9xf32>
    %284 = vector.multi_reduction <add>, %283, %cst_131 [2] : vector<2x9x9xf32> to vector<2x9xf32>
    %285 = vector.shape_cast %284 : vector<2x9xf32> to vector<2x9x1xf32>
    %286 = tpu.reciprocal %285 {approx = true} : vector<2x9x1xf32> -> vector<2x9x1xf32>
    %287 = vector.broadcast %286 : vector<2x9x1xf32> to vector<2x9x9xf32>
    %288 = arith.mulf %283, %287 : vector<2x9x9xf32>
    "tpu.trace_start"() <{level = 10 : i32, message = "bnm,bmd->bnd"}> : () -> ()
    %cst_132 = arith.constant dense<0.000000e+00> : vector<2x9x8xf32>
    %289 = tpu.matmul %288, %275, %cst_132 {dimension_numbers = #tpu.dot_dimension_numbers<[2], [1], [1], [2], [0, 0, 0, 1, 1, 2], [0], [0]>} : vector<2x9x9xf32>, vector<2x9x8xf32>, vector<2x9x8xf32> -> vector<2x9x8xf32>
    "tpu.trace_stop"() : () -> ()
    %290 = vector.extract_strided_slice %255 {offsets = [8, 0], sizes = [8, 32], strides = [1, 1]} : vector<32x32xf32> to vector<8x32xf32>
    %cst_133 = arith.constant dense<0.000000e+00> : vector<2x9x32xf32>
    %291 = tpu.matmul %289, %290, %cst_133 {dimension_numbers = #tpu.dot_dimension_numbers<[2], [0], [0, 1], [1], [0, 0, 0, 1, 1, 1], [], []>} : vector<2x9x8xf32>, vector<8x32xf32>, vector<2x9x32xf32> -> vector<2x9x32xf32>
    %292 = arith.addf %274, %291 : vector<2x9x32xf32>
    %293 = vector.extract_strided_slice %253 {offsets = [0, 0, 16], sizes = [2, 9, 8], strides = [1, 1, 1]} : vector<2x9x32xf32> to vector<2x9x8xf32>
    "tpu.trace_start"() <{level = 10 : i32, message = "bnd,bmd->bnm"}> : () -> ()
    %cst_134 = arith.constant dense<0.000000e+00> : vector<2x9x9xf32>
    %294 = tpu.matmul %293, %293, %cst_134 {dimension_numbers = #tpu.dot_dimension_numbers<[2], [2], [1], [1], [0, 0, 0, 1, 1, 1], [0], [0]>} : vector<2x9x8xf32>, vector<2x9x8xf32>, vector<2x9x9xf32> -> vector<2x9x9xf32>
    "tpu.trace_stop"() : () -> ()
    %cst_135 = arith.constant 0.353553385 : f32
    %295 = vector.broadcast %cst_135 : f32 to vector<2x9x9xf32>
    %296 = arith.mulf %294, %295 : vector<2x9x9xf32>
    %cst_136 = arith.constant dense<0xFF800000> : vector<2x9xf32>
    %297 = vector.multi_reduction <maximumf>, %296, %cst_136 [2] : vector<2x9x9xf32> to vector<2x9xf32>
    %298 = vector.shape_cast %297 : vector<2x9xf32> to vector<2x9x1xf32>
    %299 = vector.broadcast %298 : vector<2x9x1xf32> to vector<2x9x9xf32>
    %300 = arith.subf %296, %299 : vector<2x9x9xf32>
    %301 = math.exp %300 : vector<2x9x9xf32>
    %cst_137 = arith.constant dense<0.000000e+00> : vector<2x9xf32>
    %302 = vector.multi_reduction <add>, %301, %cst_137 [2] : vector<2x9x9xf32> to vector<2x9xf32>
    %303 = vector.shape_cast %302 : vector<2x9xf32> to vector<2x9x1xf32>
    %304 = tpu.reciprocal %303 {approx = true} : vector<2x9x1xf32> -> vector<2x9x1xf32>
    %305 = vector.broadcast %304 : vector<2x9x1xf32> to vector<2x9x9xf32>
    %306 = arith.mulf %301, %305 : vector<2x9x9xf32>
    "tpu.trace_start"() <{level = 10 : i32, message = "bnm,bmd->bnd"}> : () -> ()
    %cst_138 = arith.constant dense<0.000000e+00> : vector<2x9x8xf32>
    %307 = tpu.matmul %306, %293, %cst_138 {dimension_numbers = #tpu.dot_dimension_numbers<[2], [1], [1], [2], [0, 0, 0, 1, 1, 2], [0], [0]>} : vector<2x9x9xf32>, vector<2x9x8xf32>, vector<2x9x8xf32> -> vector<2x9x8xf32>
    "tpu.trace_stop"() : () -> ()
    %308 = vector.extract_strided_slice %255 {offsets = [16, 0], sizes = [8, 32], strides = [1, 1]} : vector<32x32xf32> to vector<8x32xf32>
    %cst_139 = arith.constant dense<0.000000e+00> : vector<2x9x32xf32>
    %309 = tpu.matmul %307, %308, %cst_139 {dimension_numbers = #tpu.dot_dimension_numbers<[2], [0], [0, 1], [1], [0, 0, 0, 1, 1, 1], [], []>} : vector<2x9x8xf32>, vector<8x32xf32>, vector<2x9x32xf32> -> vector<2x9x32xf32>
    %310 = arith.addf %292, %309 : vector<2x9x32xf32>
    %311 = vector.extract_strided_slice %253 {offsets = [0, 0, 24], sizes = [2, 9, 8], strides = [1, 1, 1]} : vector<2x9x32xf32> to vector<2x9x8xf32>
    "tpu.trace_start"() <{level = 10 : i32, message = "bnd,bmd->bnm"}> : () -> ()
    %cst_140 = arith.constant dense<0.000000e+00> : vector<2x9x9xf32>
    %312 = tpu.matmul %311, %311, %cst_140 {dimension_numbers = #tpu.dot_dimension_numbers<[2], [2], [1], [1], [0, 0, 0, 1, 1, 1], [0], [0]>} : vector<2x9x8xf32>, vector<2x9x8xf32>, vector<2x9x9xf32> -> vector<2x9x9xf32>
    "tpu.trace_stop"() : () -> ()
    %cst_141 = arith.constant 0.353553385 : f32
    %313 = vector.broadcast %cst_141 : f32 to vector<2x9x9xf32>
    %314 = arith.mulf %312, %313 : vector<2x9x9xf32>
    %cst_142 = arith.constant dense<0xFF800000> : vector<2x9xf32>
    %315 = vector.multi_reduction <maximumf>, %314, %cst_142 [2] : vector<2x9x9xf32> to vector<2x9xf32>
    %316 = vector.shape_cast %315 : vector<2x9xf32> to vector<2x9x1xf32>
    %317 = vector.broadcast %316 : vector<2x9x1xf32> to vector<2x9x9xf32>
    %318 = arith.subf %314, %317 : vector<2x9x9xf32>
    %319 = math.exp %318 : vector<2x9x9xf32>
    %cst_143 = arith.constant dense<0.000000e+00> : vector<2x9xf32>
    %320 = vector.multi_reduction <add>, %319, %cst_143 [2] : vector<2x9x9xf32> to vector<2x9xf32>
    %321 = vector.shape_cast %320 : vector<2x9xf32> to vector<2x9x1xf32>
    %322 = tpu.reciprocal %321 {approx = true} : vector<2x9x1xf32> -> vector<2x9x1xf32>
    %323 = vector.broadcast %322 : vector<2x9x1xf32> to vector<2x9x9xf32>
    %324 = arith.mulf %319, %323 : vector<2x9x9xf32>
    "tpu.trace_start"() <{level = 10 : i32, message = "bnm,bmd->bnd"}> : () -> ()
    %cst_144 = arith.constant dense<0.000000e+00> : vector<2x9x8xf32>
    %325 = tpu.matmul %324, %311, %cst_144 {dimension_numbers = #tpu.dot_dimension_numbers<[2], [1], [1], [2], [0, 0, 0, 1, 1, 2], [0], [0]>} : vector<2x9x9xf32>, vector<2x9x8xf32>, vector<2x9x8xf32> -> vector<2x9x8xf32>
    "tpu.trace_stop"() : () -> ()
    %326 = vector.extract_strided_slice %255 {offsets = [24, 0], sizes = [8, 32], strides = [1, 1]} : vector<32x32xf32> to vector<8x32xf32>
    %cst_145 = arith.constant dense<0.000000e+00> : vector<2x9x32xf32>
    %327 = tpu.matmul %325, %326, %cst_145 {dimension_numbers = #tpu.dot_dimension_numbers<[2], [0], [0, 1], [1], [0, 0, 0, 1, 1, 1], [], []>} : vector<2x9x8xf32>, vector<8x32xf32>, vector<2x9x32xf32> -> vector<2x9x32xf32>
    %328 = arith.addf %310, %327 : vector<2x9x32xf32>
    %c1_146 = arith.constant 1 : index
    %c0_147 = arith.constant 0 : index
    %c0_148 = arith.constant 0 : index
    %329 = vector.load %arg13[%c1_146, %c0_147, %c0_148] : memref<2x1x32xf32, #tpu.memory_space<vmem>>, vector<1x1x32xf32>
    %330 = vector.shape_cast %329 : vector<1x1x32xf32> to vector<1x32xf32>
    %331 = vector.shape_cast %330 : vector<1x32xf32> to vector<1x1x32xf32>
    %332 = vector.broadcast %331 : vector<1x1x32xf32> to vector<2x9x32xf32>
    %333 = arith.addf %328, %332 : vector<2x9x32xf32>
    %334 = arith.addf %333, %222 : vector<2x9x32xf32>
    %c1_149 = arith.constant 1 : index
    %c0_150 = arith.constant 0 : index
    %c0_151 = arith.constant 0 : index
    %335 = vector.load %arg14[%c1_149, %c0_150, %c0_151] : memref<2x1x32xf32, #tpu.memory_space<vmem>>, vector<1x1x32xf32>
    %336 = vector.shape_cast %335 : vector<1x1x32xf32> to vector<1x32xf32>
    %c1_152 = arith.constant 1 : index
    %c0_153 = arith.constant 0 : index
    %c0_154 = arith.constant 0 : index
    %337 = vector.load %arg15[%c1_152, %c0_153, %c0_154] : memref<2x1x32xf32, #tpu.memory_space<vmem>>, vector<1x1x32xf32>
    %338 = vector.shape_cast %337 : vector<1x1x32xf32> to vector<1x32xf32>
    %cst_155 = arith.constant dense<0.000000e+00> : vector<2x9xf32>
    %339 = vector.multi_reduction <add>, %334, %cst_155 [2] : vector<2x9x32xf32> to vector<2x9xf32>
    %340 = vector.shape_cast %339 : vector<2x9xf32> to vector<2x9x1xf32>
    %cst_156 = arith.constant 3.200000e+01 : f32
    %341 = vector.broadcast %cst_156 : f32 to vector<2x9x1xf32>
    %342 = arith.divf %340, %341 : vector<2x9x1xf32>
    %343 = vector.broadcast %342 : vector<2x9x1xf32> to vector<2x9x32xf32>
    %344 = arith.subf %334, %343 : vector<2x9x32xf32>
    %345 = arith.mulf %344, %344 : vector<2x9x32xf32>
    %cst_157 = arith.constant dense<0.000000e+00> : vector<2x9xf32>
    %346 = vector.multi_reduction <add>, %345, %cst_157 [2] : vector<2x9x32xf32> to vector<2x9xf32>
    %347 = vector.shape_cast %346 : vector<2x9xf32> to vector<2x9x1xf32>
    %cst_158 = arith.constant 3.200000e+01 : f32
    %348 = vector.broadcast %cst_158 : f32 to vector<2x9x1xf32>
    %349 = arith.divf %347, %348 : vector<2x9x1xf32>
    %350 = vector.broadcast %342 : vector<2x9x1xf32> to vector<2x9x32xf32>
    %351 = arith.subf %334, %350 : vector<2x9x32xf32>
    %cst_159 = arith.constant 9.99999974E-6 : f32
    %352 = vector.broadcast %cst_159 : f32 to vector<2x9x1xf32>
    %353 = arith.addf %349, %352 : vector<2x9x1xf32>
    %354 = math.rsqrt %353 : vector<2x9x1xf32>
    %355 = vector.broadcast %354 : vector<2x9x1xf32> to vector<2x9x32xf32>
    %356 = arith.mulf %351, %355 : vector<2x9x32xf32>
    %357 = vector.shape_cast %336 : vector<1x32xf32> to vector<1x1x32xf32>
    %358 = vector.broadcast %357 : vector<1x1x32xf32> to vector<2x9x32xf32>
    %359 = arith.mulf %356, %358 : vector<2x9x32xf32>
    %360 = vector.shape_cast %338 : vector<1x32xf32> to vector<1x1x32xf32>
    %361 = vector.broadcast %360 : vector<1x1x32xf32> to vector<2x9x32xf32>
    %362 = arith.addf %359, %361 : vector<2x9x32xf32>
    %c1_160 = arith.constant 1 : index
    %c0_161 = arith.constant 0 : index
    %c0_162 = arith.constant 0 : index
    %363 = vector.load %arg16[%c1_160, %c0_161, %c0_162] : memref<2x32x32xf32, #tpu.memory_space<vmem>>, vector<1x32x32xf32>
    %364 = vector.shape_cast %363 : vector<1x32x32xf32> to vector<32x32xf32>
    %cst_163 = arith.constant dense<0.000000e+00> : vector<2x9x32xf32>
    %365 = tpu.matmul %362, %364, %cst_163 {dimension_numbers = #tpu.dot_dimension_numbers<[2], [1], [0, 1], [0], [0, 0, 0, 1, 1, 0], [], []>} : vector<2x9x32xf32>, vector<32x32xf32>, vector<2x9x32xf32> -> vector<2x9x32xf32>
    %366 = arith.subf %362, %365 : vector<2x9x32xf32>
    %cst_164 = arith.constant dense<0.000000e+00> : vector<2x9x32xf32>
    %367 = tpu.matmul %366, %364, %cst_164 {dimension_numbers = #tpu.dot_dimension_numbers<[2], [0], [0, 1], [1], [0, 0, 0, 1, 1, 1], [], []>} : vector<2x9x32xf32>, vector<32x32xf32>, vector<2x9x32xf32> -> vector<2x9x32xf32>
    %cst_165 = arith.constant 1.000000e-01 : f32
    %368 = vector.broadcast %cst_165 : f32 to vector<2x9x32xf32>
    %369 = arith.mulf %368, %367 : vector<2x9x32xf32>
    %cst_166 = arith.constant 0.00999999977 : f32
    %370 = vector.broadcast %cst_166 : f32 to vector<2x9x32xf32>
    %371 = arith.subf %369, %370 : vector<2x9x32xf32>
    %372 = arith.addf %362, %371 : vector<2x9x32xf32>
    %cst_167 = arith.constant 0.000000e+00 : f32
    %373 = vector.broadcast %cst_167 : f32 to vector<2x9x32xf32>
    %374 = arith.maximumf %372, %373 : vector<2x9x32xf32>
    %375 = vector.extract_strided_slice %374 {offsets = [0, 0, 0], sizes = [2, 1, 32], strides = [1, 1, 1]} : vector<2x9x32xf32> to vector<2x1x32xf32>
    %376 = vector.shape_cast %375 : vector<2x1x32xf32> to vector<2x32xf32>
    %c0_168 = arith.constant 0 : index
    %c0_169 = arith.constant 0 : index
    %377 = vector.load %arg17[%c0_168, %c0_169] : memref<1x32xf32, #tpu.memory_space<vmem>>, vector<1x32xf32>
    %c0_170 = arith.constant 0 : index
    %c0_171 = arith.constant 0 : index
    %378 = vector.load %arg18[%c0_170, %c0_171] : memref<1x32xf32, #tpu.memory_space<vmem>>, vector<1x32xf32>
    %cst_172 = arith.constant dense<0.000000e+00> : vector<2xf32>
    %379 = vector.multi_reduction <add>, %376, %cst_172 [1] : vector<2x32xf32> to vector<2xf32>
    %380 = vector.shape_cast %379 : vector<2xf32> to vector<2x1xf32>
    %cst_173 = arith.constant 3.200000e+01 : f32
    %381 = vector.broadcast %cst_173 : f32 to vector<2x1xf32>
    %382 = arith.divf %380, %381 : vector<2x1xf32>
    %383 = vector.broadcast %382 : vector<2x1xf32> to vector<2x32xf32>
    %384 = arith.subf %376, %383 : vector<2x32xf32>
    %385 = arith.mulf %384, %384 : vector<2x32xf32>
    %cst_174 = arith.constant dense<0.000000e+00> : vector<2xf32>
    %386 = vector.multi_reduction <add>, %385, %cst_174 [1] : vector<2x32xf32> to vector<2xf32>
    %387 = vector.shape_cast %386 : vector<2xf32> to vector<2x1xf32>
    %cst_175 = arith.constant 3.200000e+01 : f32
    %388 = vector.broadcast %cst_175 : f32 to vector<2x1xf32>
    %389 = arith.divf %387, %388 : vector<2x1xf32>
    %390 = vector.broadcast %382 : vector<2x1xf32> to vector<2x32xf32>
    %391 = arith.subf %376, %390 : vector<2x32xf32>
    %cst_176 = arith.constant 9.99999974E-6 : f32
    %392 = vector.broadcast %cst_176 : f32 to vector<2x1xf32>
    %393 = arith.addf %389, %392 : vector<2x1xf32>
    %394 = math.rsqrt %393 : vector<2x1xf32>
    %395 = vector.broadcast %394 : vector<2x1xf32> to vector<2x32xf32>
    %396 = arith.mulf %391, %395 : vector<2x32xf32>
    %397 = vector.broadcast %377 : vector<1x32xf32> to vector<2x32xf32>
    %398 = arith.mulf %396, %397 : vector<2x32xf32>
    %399 = vector.broadcast %378 : vector<1x32xf32> to vector<2x32xf32>
    %400 = arith.addf %398, %399 : vector<2x32xf32>
    %c0_177 = arith.constant 0 : index
    %c0_178 = arith.constant 0 : index
    %401 = vector.load %arg19[%c0_177, %c0_178] : memref<32x1000xf32, #tpu.memory_space<vmem>>, vector<32x1000xf32>
    %cst_179 = arith.constant dense<0.000000e+00> : vector<2x1000xf32>
    %402 = tpu.matmul %400, %401, %cst_179 {dimension_numbers = #tpu.dot_dimension_numbers<[1], [0], [0], [1], [0, 0, 1, 1], [], []>} : vector<2x32xf32>, vector<32x1000xf32>, vector<2x1000xf32> -> vector<2x1000xf32>
    %c0_180 = arith.constant 0 : index
    %c0_181 = arith.constant 0 : index
    %403 = vector.load %arg20[%c0_180, %c0_181] : memref<1x1000xf32, #tpu.memory_space<vmem>>, vector<1x1000xf32>
    %404 = vector.broadcast %403 : vector<1x1000xf32> to vector<2x1000xf32>
    %405 = arith.addf %402, %404 : vector<2x1000xf32>
    %c0_182 = arith.constant 0 : index
    %c0_183 = arith.constant 0 : index
    %406 = vector.load %arg21[%c0_182, %c0_183] : memref<1000x128xf32, #tpu.memory_space<vmem>>, vector<1000x128xf32>
    %cst_184 = arith.constant dense<0.000000e+00> : vector<2x128xf32>
    %407 = tpu.matmul %405, %406, %cst_184 {dimension_numbers = #tpu.dot_dimension_numbers<[1], [0], [0], [1], [0, 0, 1, 1], [], []>} : vector<2x1000xf32>, vector<1000x128xf32>, vector<2x128xf32> -> vector<2x128xf32>
    %c0_185 = arith.constant 0 : index
    %c0_186 = arith.constant 0 : index
    %408 = vector.load %arg22[%c0_185, %c0_186] : memref<1x128xf32, #tpu.memory_space<vmem>>, vector<1x128xf32>
    %409 = vector.broadcast %408 : vector<1x128xf32> to vector<2x128xf32>
    %410 = arith.addf %407, %409 : vector<2x128xf32>
    %411 = arith.negf %410 : vector<2x128xf32>
    %412 = math.exp %411 : vector<2x128xf32>
    %cst_187 = arith.constant 1.000000e+00 : f32
    %413 = vector.broadcast %cst_187 : f32 to vector<2x128xf32>
    %414 = arith.addf %413, %412 : vector<2x128xf32>
    %415 = arith.divf %413, %414 : vector<2x128xf32>
    %c0_188 = arith.constant 0 : index
    %c0_189 = arith.constant 0 : index
    %416 = vector.load %arg23[%c0_188, %c0_189] : memref<2x128xf32, #tpu.memory_space<vmem>>, vector<2x128xf32>
    tpu.vector_store %arg23[%c0_188, %c0_189], %415 {strides = array<i32>} : memref<2x128xf32, #tpu.memory_space<vmem>>, vector<2x128xf32>,
    return
  }
}

</mosaic_0001>

<llo_original>
// kernel: crate_forward.1
$region0: #{crate_forward.1}
  #allocation0 [shape = 'u32[]', space=smem, size = 0x4, offset = 0x4, fixed_abs, tag = 'smem constant byte address 0x4 - core index']
  #allocation1 [shape = 'u32[72,128]{1,0:T(1,128)}', space=vmem, size = 0x9000, scoped, tag = 'internal scratch']
  #allocation2 [shape = 'f32[2,9,32]{2,1,0:T(8,128)}', space=vmem, size = 0x4000, scoped, tag = 'scratch operand']
  %s0 = inlined_call_operand.vmem [shape: f32[2,8,32], index: 0, kind: input, shape index: {}]
  %s1 = inlined_call_operand.vmem [shape: f32[1,32], index: 1, kind: input, shape index: {}]
  %s2 = inlined_call_operand.vmem [shape: f32[1,32], index: 2, kind: input, shape index: {}]
  %s3 = inlined_call_operand.vmem [shape: f32[32,32], index: 3, kind: input, shape index: {}]
  %s4 = inlined_call_operand.vmem [shape: f32[1,32], index: 4, kind: input, shape index: {}]
  %s5 = inlined_call_operand.vmem [shape: f32[1,32], index: 5, kind: input, shape index: {}]
  %s6 = inlined_call_operand.vmem [shape: f32[1,32], index: 6, kind: input, shape index: {}]
  %s7 = inlined_call_operand.vmem [shape: f32[1,1,32], index: 7, kind: input, shape index: {}]
  %s8 = inlined_call_operand.vmem [shape: f32[1,9,32], index: 8, kind: input, shape index: {}]
  %s9 = inlined_call_operand.vmem [shape: f32[2,1,32], index: 9, kind: input, shape index: {}]
  %s10 = inlined_call_operand.vmem [shape: f32[2,1,32], index: 10, kind: input, shape index: {}]
  %s11 = inlined_call_operand.vmem [shape: f32[2,32,32], index: 11, kind: input, shape index: {}]
  %s12 = inlined_call_operand.vmem [shape: f32[2,32,32], index: 12, kind: input, shape index: {}]
  %s13 = inlined_call_operand.vmem [shape: f32[2,1,32], index: 13, kind: input, shape index: {}]
  %s14 = inlined_call_operand.vmem [shape: f32[2,1,32], index: 14, kind: input, shape index: {}]
  %s15 = inlined_call_operand.vmem [shape: f32[2,1,32], index: 15, kind: input, shape index: {}]
  %s16 = inlined_call_operand.vmem [shape: f32[2,32,32], index: 16, kind: input, shape index: {}]
  %s17 = inlined_call_operand.vmem [shape: f32[1,32], index: 17, kind: input, shape index: {}]
  %s18 = inlined_call_operand.vmem [shape: f32[1,32], index: 18, kind: input, shape index: {}]
  %s19 = inlined_call_operand.vmem [shape: f32[32,1000], index: 19, kind: input, shape index: {}]
  %s20 = inlined_call_operand.vmem [shape: f32[1,1000], index: 20, kind: input, shape index: {}]
  %s21 = inlined_call_operand.vmem [shape: f32[1000,128], index: 21, kind: input, shape index: {}]
  %s22 = inlined_call_operand.vmem [shape: f32[1,128], index: 22, kind: input, shape index: {}]
  %s23 = inlined_call_operand.hbm [shape: f32[2,128], index: 23, kind: output, shape index: {}]
  %s24 = sld [smem:[#allocation0]]
  $region102: #{crate_forward.1} parent=0
    _
  %s26 = ssub.s32 1, %s24
  %s27 = scalar_select 0, %s26, %s24
  $region1: #{crate_forward.1} parent=0
    #allocation3 [shape = 'u8[1024]{0}', space=vmem, size = 0x400, scoped, tag = 'output window, operand 0, single buffered']
    #allocation4 [shape = 's32[1]{0}', space=sflag, size = 0x4, scoped, tag = 'scoped memory for crate_forward.1']
    %28 = vsyncpa [#allocation4], 0
    // Predicated region
    $region2: #{crate_forward.1} parent=1 // pred_check
      _
    $region3: #{crate_forward.1} parent=1 // pred_check_branch
      %30 = sbr.rel (0) target = $region5
    $region4: #{crate_forward.1} parent=1 // pred_region
      _
    $region5: #{crate_forward.1} parent=1 // pred_fallthru
      _
    // Predicated region
    $region6: #{crate_forward.1} parent=1 // pred_check
      _
    $region7: #{crate_forward.1} parent=1 // pred_check_branch
      %32 = sbr.rel (0) target = $region9
    $region8: #{crate_forward.1} parent=1 // pred_region
      _
    $region9: #{crate_forward.1} parent=1 // pred_fallthru
      _
    // Predicated region
    $region10: #{crate_forward.1} parent=1 // pred_check
      _
    $region11: #{crate_forward.1} parent=1 // pred_check_branch
      %34 = sbr.rel (0) target = $region13
    $region12: #{crate_forward.1} parent=1 // pred_region
      _
    $region13: #{crate_forward.1} parent=1 // pred_fallthru
      _
    // Predicated region
    $region14: #{crate_forward.1} parent=1 // pred_check
      _
    $region15: #{crate_forward.1} parent=1 // pred_check_branch
      %36 = sbr.rel (0) target = $region17
    $region16: #{crate_forward.1} parent=1 // pred_region
      _
    $region17: #{crate_forward.1} parent=1 // pred_fallthru
      _
    // Predicated region
    $region18: #{crate_forward.1} parent=1 // pred_check
      _
    $region19: #{crate_forward.1} parent=1 // pred_check_branch
      %38 = sbr.rel (0) target = $region21
    $region20: #{crate_forward.1} parent=1 // pred_region
      _
    $region21: #{crate_forward.1} parent=1 // pred_fallthru
      _
    // Predicated region
    $region22: #{crate_forward.1} parent=1 // pred_check
      _
    $region23: #{crate_forward.1} parent=1 // pred_check_branch
      %40 = sbr.rel (0) target = $region25
    $region24: #{crate_forward.1} parent=1 // pred_region
      _
    $region25: #{crate_forward.1} parent=1 // pred_fallthru
      _
    // Predicated region
    $region26: #{crate_forward.1} parent=1 // pred_check
      _
    $region27: #{crate_forward.1} parent=1 // pred_check_branch
      %42 = sbr.rel (0) target = $region29
    $region28: #{crate_forward.1} parent=1 // pred_region
      _
    $region29: #{crate_forward.1} parent=1 // pred_fallthru
      _
    // Predicated region
    $region30: #{crate_forward.1} parent=1 // pred_check
      _
    $region31: #{crate_forward.1} parent=1 // pred_check_branch
      %44 = sbr.rel (0) target = $region33
    $region32: #{crate_forward.1} parent=1 // pred_region
      _
    $region33: #{crate_forward.1} parent=1 // pred_fallthru
      _
    // Predicated region
    $region34: #{crate_forward.1} parent=1 // pred_check
      _
    $region35: #{crate_forward.1} parent=1 // pred_check_branch
      %46 = sbr.rel (0) target = $region37
    $region36: #{crate_forward.1} parent=1 // pred_region
      _
    $region37: #{crate_forward.1} parent=1 // pred_fallthru
      _
    // Predicated region
    $region38: #{crate_forward.1} parent=1 // pred_check
      _
    $region39: #{crate_forward.1} parent=1 // pred_check_branch
      %48 = sbr.rel (0) target = $region41
    $region40: #{crate_forward.1} parent=1 // pred_region
      _
    $region41: #{crate_forward.1} parent=1 // pred_fallthru
      _
    // Predicated region
    $region42: #{crate_forward.1} parent=1 // pred_check
      _
    $region43: #{crate_forward.1} parent=1 // pred_check_branch
      %50 = sbr.rel (0) target = $region45
    $region44: #{crate_forward.1} parent=1 // pred_region
      _
    $region45: #{crate_forward.1} parent=1 // pred_fallthru
      _
    // Predicated region
    $region46: #{crate_forward.1} parent=1 // pred_check
      _
    $region47: #{crate_forward.1} parent=1 // pred_check_branch
      %52 = sbr.rel (0) target = $region49
    $region48: #{crate_forward.1} parent=1 // pred_region
      _
    $region49: #{crate_forward.1} parent=1 // pred_fallthru
      _
    // Predicated region
    $region50: #{crate_forward.1} parent=1 // pred_check
      _
    $region51: #{crate_forward.1} parent=1 // pred_check_branch
      %54 = sbr.rel (0) target = $region53
    $region52: #{crate_forward.1} parent=1 // pred_region
      _
    $region53: #{crate_forward.1} parent=1 // pred_fallthru
      _
    // Predicated region
    $region54: #{crate_forward.1} parent=1 // pred_check
      _
    $region55: #{crate_forward.1} parent=1 // pred_check_branch
      %56 = sbr.rel (0) target = $region57
    $region56: #{crate_forward.1} parent=1 // pred_region
      _
    $region57: #{crate_forward.1} parent=1 // pred_fallthru
      _
    // Predicated region
    $region58: #{crate_forward.1} parent=1 // pred_check
      _
    $region59: #{crate_forward.1} parent=1 // pred_check_branch
      %58 = sbr.rel (0) target = $region61
    $region60: #{crate_forward.1} parent=1 // pred_region
      _
    $region61: #{crate_forward.1} parent=1 // pred_fallthru
      _
    // Predicated region
    $region62: #{crate_forward.1} parent=1 // pred_check
      _
    $region63: #{crate_forward.1} parent=1 // pred_check_branch
      %60 = sbr.rel (0) target = $region65
    $region64: #{crate_forward.1} parent=1 // pred_region
      _
    $region65: #{crate_forward.1} parent=1 // pred_fallthru
      _
    // Predicated region
    $region66: #{crate_forward.1} parent=1 // pred_check
      _
    $region67: #{crate_forward.1} parent=1 // pred_check_branch
      %62 = sbr.rel (0) target = $region69
    $region68: #{crate_forward.1} parent=1 // pred_region
      _
    $region69: #{crate_forward.1} parent=1 // pred_fallthru
      _
    // Predicated region
    $region70: #{crate_forward.1} parent=1 // pred_check
      _
    $region71: #{crate_forward.1} parent=1 // pred_check_branch
      %64 = sbr.rel (0) target = $region73
    $region72: #{crate_forward.1} parent=1 // pred_region
      _
    $region73: #{crate_forward.1} parent=1 // pred_fallthru
      _
    // Predicated region
    $region74: #{crate_forward.1} parent=1 // pred_check
      _
    $region75: #{crate_forward.1} parent=1 // pred_check_branch
      %66 = sbr.rel (0) target = $region77
    $region76: #{crate_forward.1} parent=1 // pred_region
      _
    $region77: #{crate_forward.1} parent=1 // pred_fallthru
      _
    // Predicated region
    $region78: #{crate_forward.1} parent=1 // pred_check
      _
    $region79: #{crate_forward.1} parent=1 // pred_check_branch
      %68 = sbr.rel (0) target = $region81
    $region80: #{crate_forward.1} parent=1 // pred_region
      _
    $region81: #{crate_forward.1} parent=1 // pred_fallthru
      _
    // Predicated region
    $region82: #{crate_forward.1} parent=1 // pred_check
      _
    $region83: #{crate_forward.1} parent=1 // pred_check_branch
      %70 = sbr.rel (0) target = $region85
    $region84: #{crate_forward.1} parent=1 // pred_region
      _
    $region85: #{crate_forward.1} parent=1 // pred_fallthru
      _
    // Predicated region
    $region86: #{crate_forward.1} parent=1 // pred_check
      _
    $region87: #{crate_forward.1} parent=1 // pred_check_branch
      %72 = sbr.rel (0) target = $region89
    $region88: #{crate_forward.1} parent=1 // pred_region
      _
    $region89: #{crate_forward.1} parent=1 // pred_fallthru
      _
    // Predicated region
    $region90: #{crate_forward.1} parent=1 // pred_check
      _
    $region91: #{crate_forward.1} parent=1 // pred_check_branch
      %74 = sbr.rel (0) target = $region93
    $region92: #{crate_forward.1} parent=1 // pred_region
      _
    $region93: #{crate_forward.1} parent=1 // pred_fallthru
      _
    %v75 = vld [vmem:[%s0] sm:$0xff]
    %v76 = vld [vmem:[%s0 + $0x8] sm:$0xff]
    %v77 = vld [vmem:[%s1] sm:$0x1]
    %v78 = vld [vmem:[%s2] sm:$0x1]
    %vm79 = vcmask 261120
    %v80 = vsel %vm79, %v75, 0.0
    %81 = vadd.xlane.f32.xlu0 %v80
    %v82 = vpop.xlane.xlu0 %81
    %v83 = vsel %vm79, %v76, 0.0
    %84 = vadd.xlane.f32.xlu0 %v83
    %v85 = vpop.xlane.xlu0 %84
    %v86 = vrcp.pop 32.0
    %v87 = vmul.f32 32.0, %v86
    %v88 = vsub.f32 1.0, %v87
    %v89 = vmul.f32 %v86, %v88
    %v90 = vadd.f32 %v86, %v89
    %vm91 = vweird.f32 %v86
    %v92 = vsel %vm91, %v86, %v90
    %v93 = vmul.f32 %v82, %v92
    %v94 = vmul.f32 %v85, %v92
    %v95 = vsub.f32 %v75, %v93
    %v96 = vsub.f32 %v76, %v94
    %v97 = vmul.f32 %v95, %v95
    %v98 = vmul.f32 %v96, %v96
    %v99 = vsel %vm79, %v97, 0.0
    %100 = vadd.xlane.f32.xlu0 %v99
    %v101 = vpop.xlane.xlu0 %100
    %v102 = vsel %vm79, %v98, 0.0
    %103 = vadd.xlane.f32.xlu0 %v102
    %v104 = vpop.xlane.xlu0 %103
    %v105 = vmul.f32 %v101, %v92
    %v106 = vmul.f32 %v104, %v92
    %v107 = vadd.f32 %v105, 1e-05
    %v108 = vadd.f32 %v106, 1e-05
    %v109 = vrsqrt.pop %v107
    %v110 = vmul.f32 %v109, %v107
    %v111 = vmul.f32 %v110, %v109
    %v112 = vmul.f32 0.5, %v111
    %v113 = vsub.f32 1.5, %v112
    %v114 = vmul.f32 %v109, %v113
    %vm115 = vweird.f32 %v107
    %vm116 = vweird.f32 %v109
    %vm117 = vmor %vm115, %vm116
    %v118 = vsel %vm117, %v109, %v114
    %v119 = vrsqrt.pop %v108
    %v120 = vmul.f32 %v119, %v108
    %v121 = vmul.f32 %v120, %v119
    %v122 = vmul.f32 0.5, %v121
    %v123 = vsub.f32 1.5, %v122
    %v124 = vmul.f32 %v119, %v123
    %vm125 = vweird.f32 %v108
    %vm126 = vweird.f32 %v119
    %vm127 = vmor %vm125, %vm126
    %v128 = vsel %vm127, %v119, %v124
    %v129 = vmul.f32 %v95, %v118
    %v130 = vmul.f32 %v96, %v128
    %v132 = vperm.slane %v77, 0
    %v134 = vmul.f32 %v129, %v132
    %v135 = vmul.f32 %v130, %v132
    %v137 = vperm.slane %v78, 0
    %v139 = vadd.f32 %v134, %v137
    %v140 = vadd.f32 %v135, %v137
    %v141 = vld [vmem:[%s3] sm:$0xff]
    %v142 = vld [vmem:[%s3 + $0x8] sm:$0xff]
    %v143 = vld [vmem:[%s3 + $0x10] sm:$0xff]
    %v144 = vld [vmem:[%s3 + $0x18] sm:$0xff]
    %v145 = vld [vmem:[%s4] sm:$0x1]
    %v147 = vperm.slane %v145, 0
    %v150 = vsel %vm79, %v139, 0
    %v153 = vsel %vm79, %v140, 0
    %155 = vmatpush.msra.mxu0 0.0
    %156 = vmatpush.msra.mxu0 0.0
    %157 = vmatpush.msra.mxu0 0.0
    %158 = vmatpush.msra.mxu0 0.0
    %159 = vmatpush.msra.mxu0 0.0
    %160 = vmatpush.msra.mxu0 0.0
    %161 = vmatpush.msra.mxu0 0.0
    %162 = vmatpush.msra.mxu0 0.0
    %163 = vmatpush.msra.mxu0 0.0
    %164 = vmatpush.msra.mxu0 0.0
    %165 = vmatpush.msra.mxu0 0.0
    %166 = vmatpush.msra.mxu0 0.0
    %167 = vmatpush.msra.mxu0 %v144
    %168 = vmatpush.msra.mxu0 %v143
    %169 = vmatpush.msra.mxu0 %v142
    %170 = vmatpush.msra.mxu0 %v141
    %171 = vmatmul.f32.gmra.mxu0 %v150
    %v172 = vpop.f32.mrf.mxu0
    %v173 = vadd.f32 %v147, %v172
    %174 = vmatmul.f32.gmra.mxu0 %v153
    %v175 = vpop.f32.mrf.mxu0
    %v176 = vadd.f32 %v147, %v175
    %177 = vdwg.mxu0
    %v178 = vld [vmem:[%s5] sm:$0x1]
    %v179 = vld [vmem:[%s6] sm:$0x1]
    %v180 = vsel %vm79, %v173, 0.0
    %181 = vadd.xlane.f32.xlu0 %v180
    %v182 = vpop.xlane.xlu0 %181
    %v183 = vsel %vm79, %v176, 0.0
    %184 = vadd.xlane.f32.xlu0 %v183
    %v185 = vpop.xlane.xlu0 %184
    %v186 = vmul.f32 %v182, %v92
    %v187 = vmul.f32 %v185, %v92
    %v188 = vsub.f32 %v173, %v186
    %v189 = vsub.f32 %v176, %v187
    %v190 = vmul.f32 %v188, %v188
    %v191 = vmul.f32 %v189, %v189
    %v192 = vsel %vm79, %v190, 0.0
    %193 = vadd.xlane.f32.xlu0 %v192
    %v194 = vpop.xlane.xlu0 %193
    %v195 = vsel %vm79, %v191, 0.0
    %196 = vadd.xlane.f32.xlu0 %v195
    %v197 = vpop.xlane.xlu0 %196
    %v198 = vmul.f32 %v194, %v92
    %v199 = vmul.f32 %v197, %v92
    %v200 = vadd.f32 %v198, 1e-05
    %v201 = vadd.f32 %v199, 1e-05
    %v202 = vrsqrt.pop %v200
    %v203 = vmul.f32 %v202, %v200
    %v204 = vmul.f32 %v203, %v202
    %v205 = vmul.f32 0.5, %v204
    %v206 = vsub.f32 1.5, %v205
    %v207 = vmul.f32 %v202, %v206
    %vm208 = vweird.f32 %v200
    %vm209 = vweird.f32 %v202
    %vm210 = vmor %vm208, %vm209
    %v211 = vsel %vm210, %v202, %v207
    %v212 = vrsqrt.pop %v201
    %v213 = vmul.f32 %v212, %v201
    %v214 = vmul.f32 %v213, %v212
    %v215 = vmul.f32 0.5, %v214
    %v216 = vsub.f32 1.5, %v215
    %v217 = vmul.f32 %v212, %v216
    %vm218 = vweird.f32 %v201
    %vm219 = vweird.f32 %v212
    %vm220 = vmor %vm218, %vm219
    %v221 = vsel %vm220, %v212, %v217
    %v222 = vmul.f32 %v188, %v211
    %v223 = vmul.f32 %v189, %v221
    %v225 = vperm.slane %v178, 0
    %v227 = vmul.f32 %v222, %v225
    %v228 = vmul.f32 %v223, %v225
    %v230 = vperm.slane %v179, 0
    %v232 = vadd.f32 %v227, %v230
    %v233 = vadd.f32 %v228, %v230
    %v234 = vld [vmem:[%s8] sm:$0xff]
    %v235 = vld [vmem:[%s8 + $0x8] sm:$0x1]
    %v236 = vld [vmem:[%s7] sm:$0x1]
    %v237 = vadd.f32 %v236, %v234
    %vm238 = vcmask 253952
    %239 = vst.msk [vmem:[#allocation2] sm:$0x1] %vm238, %v237
    %240 = vst.msk [vmem:[#allocation2 + $0x10] sm:$0x1] %vm238, %v237
    %vm243 = vcmask 1046528
    %v244 = vrot.slane %v234, 1
    %v245 = vrot.slane %v235, 1
    %v246 = vsel %vm243, %v244, %v245
    %v248 = vadd.f32 %v232, %v246
    %v249 = vadd.f32 %v233, %v246
    %250 = vst.msk [vmem:[#allocation2 + $0x1] sm:$0xff] %vm79, %v248
    %251 = vst.msk [vmem:[#allocation2 + $0x11] sm:$0xff] %vm79, %v249
    %v252 = vld [vmem:[#allocation2] sm:$0xff]
    %v253 = vld [vmem:[#allocation2 + $0x8] sm:$0x1]
    %v254 = vld [vmem:[#allocation2 + $0x10] sm:$0xff]
    %v255 = vld [vmem:[#allocation2 + $0x18] sm:$0x1]
    %v256 = vld [vmem:[%s9] sm:$0x1]
    %v257 = vld [vmem:[%s10] sm:$0x1]
    %v258 = vsel %vm79, %v252, 0.0
    %259 = vadd.xlane.f32.xlu0 %v258
    %v260 = vpop.xlane.xlu0 %259
    %v261 = vsel %vm238, %v253, 0.0
    %262 = vadd.xlane.f32.xlu0 %v261
    %v263 = vpop.xlane.xlu0 %262
    %v264 = vsel %vm79, %v254, 0.0
    %265 = vadd.xlane.f32.xlu0 %v264
    %v266 = vpop.xlane.xlu0 %265
    %v267 = vsel %vm238, %v255, 0.0
    %268 = vadd.xlane.f32.xlu0 %v267
    %v269 = vpop.xlane.xlu0 %268
    %v270 = vmul.f32 %v260, %v92
    %v271 = vmul.f32 %v263, %v92
    %v272 = vmul.f32 %v266, %v92
    %v273 = vmul.f32 %v269, %v92
    %v274 = vsub.f32 %v252, %v270
    %v275 = vsub.f32 %v253, %v271
    %v276 = vsub.f32 %v254, %v272
    %v277 = vsub.f32 %v255, %v273
    %v278 = vmul.f32 %v274, %v274
    %v279 = vmul.f32 %v275, %v275
    %v280 = vmul.f32 %v276, %v276
    %v281 = vmul.f32 %v277, %v277
    %v282 = vsel %vm79, %v278, 0.0
    %283 = vadd.xlane.f32.xlu0 %v282
    %v284 = vpop.xlane.xlu0 %283
    %v285 = vsel %vm238, %v279, 0.0
    %286 = vadd.xlane.f32.xlu0 %v285
    %v287 = vpop.xlane.xlu0 %286
    %v288 = vsel %vm79, %v280, 0.0
    %289 = vadd.xlane.f32.xlu0 %v288
    %v290 = vpop.xlane.xlu0 %289
    %v291 = vsel %vm238, %v281, 0.0
    %292 = vadd.xlane.f32.xlu0 %v291
    %v293 = vpop.xlane.xlu0 %292
    %v294 = vmul.f32 %v284, %v92
    %v295 = vmul.f32 %v287, %v92
    %v296 = vmul.f32 %v290, %v92
    %v297 = vmul.f32 %v293, %v92
    %v298 = vadd.f32 %v294, 1e-05
    %v299 = vadd.f32 %v295, 1e-05
    %v300 = vadd.f32 %v296, 1e-05
    %v301 = vadd.f32 %v297, 1e-05
    %v302 = vrsqrt.pop %v298
    %v303 = vmul.f32 %v302, %v298
    %v304 = vmul.f32 %v303, %v302
    %v305 = vmul.f32 0.5, %v304
    %v306 = vsub.f32 1.5, %v305
    %v307 = vmul.f32 %v302, %v306
    %vm308 = vweird.f32 %v298
    %vm309 = vweird.f32 %v302
    %vm310 = vmor %vm308, %vm309
    %v311 = vsel %vm310, %v302, %v307
    %v312 = vrsqrt.pop %v299
    %v313 = vmul.f32 %v312, %v299
    %v314 = vmul.f32 %v313, %v312
    %v315 = vmul.f32 0.5, %v314
    %v316 = vsub.f32 1.5, %v315
    %v317 = vmul.f32 %v312, %v316
    %vm318 = vweird.f32 %v299
    %vm319 = vweird.f32 %v312
    %vm320 = vmor %vm318, %vm319
    %v321 = vsel %vm320, %v312, %v317
    %v322 = vrsqrt.pop %v300
    %v323 = vmul.f32 %v322, %v300
    %v324 = vmul.f32 %v323, %v322
    %v325 = vmul.f32 0.5, %v324
    %v326 = vsub.f32 1.5, %v325
    %v327 = vmul.f32 %v322, %v326
    %vm328 = vweird.f32 %v300
    %vm329 = vweird.f32 %v322
    %vm330 = vmor %vm328, %vm329
    %v331 = vsel %vm330, %v322, %v327
    %v332 = vrsqrt.pop %v301
    %v333 = vmul.f32 %v332, %v301
    %v334 = vmul.f32 %v333, %v332
    %v335 = vmul.f32 0.5, %v334
    %v336 = vsub.f32 1.5, %v335
    %v337 = vmul.f32 %v332, %v336
    %vm338 = vweird.f32 %v301
    %vm339 = vweird.f32 %v332
    %vm340 = vmor %vm338, %vm339
    %v341 = vsel %vm340, %v332, %v337
    %v342 = vmul.f32 %v274, %v311
    %v343 = vmul.f32 %v275, %v321
    %v344 = vmul.f32 %v276, %v331
    %v345 = vmul.f32 %v277, %v341
    %v347 = vperm.slane %v256, 0
    %v349 = vmul.f32 %v342, %v347
    %v350 = vmul.f32 %v343, %v347
    %v351 = vmul.f32 %v344, %v347
    %v352 = vmul.f32 %v345, %v347
    %v354 = vperm.slane %v257, 0
    %v356 = vadd.f32 %v349, %v354
    %v357 = vadd.f32 %v350, %v354
    %v358 = vadd.f32 %v351, %v354
    %v359 = vadd.f32 %v352, %v354
    %v360 = vld [vmem:[%s11] sm:$0xff]
    %v361 = vld [vmem:[%s11 + $0x8] sm:$0xff]
    %v362 = vld [vmem:[%s11 + $0x10] sm:$0xff]
    %v363 = vld [vmem:[%s11 + $0x18] sm:$0xff]
    %v368 = vrot.slane %v356, 1
    %v369 = vrot.slane %v356, 2
    %v370 = vrot.slane %v356, 3
    %v371 = vrot.slane %v356, 4
    %v372 = vrot.slane %v356, 5
    %v373 = vrot.slane %v356, 6
    %v374 = vrot.slane %v356, 7
    %v375 = vrot.slane %v358, 1
    %v376 = vrot.slane %v358, 2
    %v377 = vrot.slane %v358, 3
    %v378 = vrot.slane %v358, 4
    %v379 = vrot.slane %v358, 5
    %v380 = vrot.slane %v358, 6
    %v381 = vrot.slane %v358, 7
    %382 = vst [vmem:[#allocation1] ss:$9 sm:$0xff] %v356
    %s383 = scalar_lea.vmem [#allocation1], 1
    %384 = vst [vmem:[%s383] ss:$9 sm:$0xff] %v368
    %s385 = scalar_lea.vmem [#allocation1], 2
    %386 = vst [vmem:[%s385] ss:$9 sm:$0xff] %v369
    %s387 = scalar_lea.vmem [#allocation1], 3
    %388 = vst [vmem:[%s387] ss:$9 sm:$0xff] %v370
    %s389 = scalar_lea.vmem [#allocation1], 4
    %390 = vst [vmem:[%s389] ss:$9 sm:$0xff] %v371
    %s391 = scalar_lea.vmem [#allocation1], 5
    %392 = vst [vmem:[%s391] ss:$9 sm:$0xff] %v372
    %s393 = scalar_lea.vmem [#allocation1], 6
    %394 = vst [vmem:[%s393] ss:$9 sm:$0xff] %v373
    %s395 = scalar_lea.vmem [#allocation1], 7
    %396 = vst [vmem:[%s395] ss:$9 sm:$0xff] %v374
    %v397 = vld [vmem:[#allocation1] sm:$0xff]
    %398 = vst [vmem:[#allocation1] ss:$9 sm:$0xff] %v357
    %399 = vst [vmem:[%s383] ss:$9 sm:$0xff] %v358
    %400 = vst [vmem:[%s385] ss:$9 sm:$0xff] %v375
    %401 = vst [vmem:[%s387] ss:$9 sm:$0xff] %v376
    %402 = vst [vmem:[%s389] ss:$9 sm:$0xff] %v377
    %403 = vst [vmem:[%s391] ss:$9 sm:$0xff] %v378
    %404 = vst [vmem:[%s393] ss:$9 sm:$0xff] %v379
    %405 = vst [vmem:[%s395] ss:$9 sm:$0xff] %v380
    %v406 = vld [vmem:[#allocation1] sm:$0xff]
    %407 = vst [vmem:[#allocation1] ss:$9 sm:$0xff] %v381
    %408 = vst [vmem:[%s383] ss:$9 sm:$0xff] %v359
    %v409 = vld [vmem:[#allocation1] sm:$0xff]
    %v410 = vsel %vm79, %v397, 0
    %v412 = vsel %vm79, %v406, 0
    %v414 = vsel %vm79, %v409, 0
    %416 = vmatpush.msra.mxu0 0.0
    %417 = vmatpush.msra.mxu0 0.0
    %418 = vmatpush.msra.mxu0 0.0
    %419 = vmatpush.msra.mxu0 0.0
    %420 = vmatpush.msra.mxu0 0.0
    %421 = vmatpush.msra.mxu0 0.0
    %422 = vmatpush.msra.mxu0 0.0
    %423 = vmatpush.msra.mxu0 0.0
    %424 = vmatpush.msra.mxu0 0.0
    %425 = vmatpush.msra.mxu0 0.0
    %426 = vmatpush.msra.mxu0 0.0
    %427 = vmatpush.msra.mxu0 0.0
    %428 = vmatpush.msra.mxu0 %v363
    %429 = vmatpush.msra.mxu0 %v362
    %430 = vmatpush.msra.mxu0 %v361
    %431 = vmatpush.msra.mxu0 %v360
    %432 = vmatmul.f32.gmra.mxu0 %v410
    %v433 = vpop.f32.mrf.mxu0
    %v434 = vadd.f32 0.0, %v433
    %435 = vmatmul.f32.gmra.mxu0 %v412
    %v436 = vpop.f32.mrf.mxu0
    %v437 = vadd.f32 0.0, %v436
    %438 = vmatmul.f32.gmra.mxu0 %v414
    %v439 = vpop.f32.mrf.mxu0
    %v440 = vadd.f32 0.0, %v439
    %441 = vdwg.mxu0
    %v445 = vrot.slane %v434, 1
    %v446 = vrot.slane %v434, 2
    %v447 = vrot.slane %v434, 3
    %v448 = vrot.slane %v434, 4
    %v449 = vrot.slane %v434, 5
    %v450 = vrot.slane %v434, 6
    %v451 = vrot.slane %v434, 7
    %v452 = vrot.slane %v437, 1
    %v453 = vrot.slane %v437, 2
    %v454 = vrot.slane %v437, 3
    %v455 = vrot.slane %v437, 4
    %v456 = vrot.slane %v437, 5
    %v457 = vrot.slane %v437, 6
    %v458 = vrot.slane %v437, 7
    %v459 = vrot.slane %v440, 1
    %v460 = vld [vmem:[%s12] sm:$0xff]
    %v461 = vld [vmem:[%s12 + $0x8] sm:$0xff]
    %v462 = vld [vmem:[%s12 + $0x10] sm:$0xff]
    %v463 = vld [vmem:[%s12 + $0x18] sm:$0xff]
    %464 = vst [vmem:[#allocation1] ss:$9 sm:$0xff] %v434
    %s465 = scalar_lea.vmem [#allocation1], 1
    %466 = vst [vmem:[%s465] ss:$9 sm:$0xff] %v445
    %s467 = scalar_lea.vmem [#allocation1], 2
    %468 = vst [vmem:[%s467] ss:$9 sm:$0xff] %v446
    %s469 = scalar_lea.vmem [#allocation1], 3
    %470 = vst [vmem:[%s469] ss:$9 sm:$0xff] %v447
    %s471 = scalar_lea.vmem [#allocation1], 4
    %472 = vst [vmem:[%s471] ss:$9 sm:$0xff] %v448
    %s473 = scalar_lea.vmem [#allocation1], 5
    %474 = vst [vmem:[%s473] ss:$9 sm:$0xff] %v449
    %s475 = scalar_lea.vmem [#allocation1], 6
    %476 = vst [vmem:[%s475] ss:$9 sm:$0xff] %v450
    %s477 = scalar_lea.vmem [#allocation1], 7
    %478 = vst [vmem:[%s477] ss:$9 sm:$0xff] %v451
    %v479 = vld [vmem:[#allocation1] sm:$0xff]
    %480 = vst [vmem:[#allocation1] ss:$9 sm:$0xff] %v437
    %v481 = vld [vmem:[#allocation1] sm:$0xff]
    %482 = vst [vmem:[#allocation1] ss:$9 sm:$0xff] %v434
    %s483 = scalar_lea.vmem [#allocation1], 1
    %484 = vst [vmem:[%s483] ss:$9 sm:$0xff] %v445
    %s485 = scalar_lea.vmem [#allocation1], 2
    %486 = vst [vmem:[%s485] ss:$9 sm:$0xff] %v446
    %s487 = scalar_lea.vmem [#allocation1], 3
    %488 = vst [vmem:[%s487] ss:$9 sm:$0xff] %v447
    %s489 = scalar_lea.vmem [#allocation1], 4
    %490 = vst [vmem:[%s489] ss:$9 sm:$0xff] %v448
    %s491 = scalar_lea.vmem [#allocation1], 5
    %492 = vst [vmem:[%s491] ss:$9 sm:$0xff] %v449
    %s493 = scalar_lea.vmem [#allocation1], 6
    %494 = vst [vmem:[%s493] ss:$9 sm:$0xff] %v450
    %s495 = scalar_lea.vmem [#allocation1], 7
    %496 = vst [vmem:[%s495] ss:$9 sm:$0xff] %v451
    %v497 = vld [vmem:[#allocation1] sm:$0xff]
    %498 = vst [vmem:[#allocation1] ss:$9 sm:$0xff] %v437
    %v499 = vld [vmem:[#allocation1] sm:$0xff]
    %vm500 = vcmask 64512
    %v501 = vsel %vm500, %v479, 0
    %v503 = vsel %vm500, %v481, 0
    %v505 = vsel %vm500, %v497, 0
    %v507 = vsel %vm500, %v499, 0
    %509 = vmatpush.xpose.msra.mxu0 0.0
    %510 = vmatpush.xpose.msra.mxu0 0.0
    %511 = vmatpush.xpose.msra.mxu0 0.0
    %512 = vmatpush.xpose.msra.mxu0 0.0
    %513 = vmatpush.xpose.msra.mxu0 0.0
    %514 = vmatpush.xpose.msra.mxu0 0.0
    %515 = vmatpush.xpose.msra.mxu0 0.0
    %516 = vmatpush.xpose.msra.mxu0 0.0
    %517 = vmatpush.xpose.msra.mxu0 0.0
    %518 = vmatpush.xpose.msra.mxu0 0.0
    %519 = vmatpush.xpose.msra.mxu0 0.0
    %520 = vmatpush.xpose.msra.mxu0 0.0
    %521 = vmatpush.xpose.msra.mxu0 0.0
    %522 = vmatpush.xpose.msra.mxu0 0.0
    %523 = vmatpush.xpose.msra.mxu0 %v507
    %524 = vmatpush.xpose.msra.mxu0 %v505
    %525 = vmatmul.f32.gmra.mxu0 %v501
    %v526 = vpop.f32.mrf.mxu0
    %v527 = vadd.f32 0.0, %v526
    %528 = vmatmul.f32.gmra.mxu0 %v503
    %v529 = vpop.f32.mrf.mxu0
    %v530 = vadd.f32 0.0, %v529
    %531 = vdwg.mxu0
    %532 = vst [vmem:[#allocation1] ss:$9 sm:$0xff] %v452
    %s533 = scalar_lea.vmem [#allocation1], 1
    %534 = vst [vmem:[%s533] ss:$9 sm:$0xff] %v453
    %s535 = scalar_lea.vmem [#allocation1], 2
    %536 = vst [vmem:[%s535] ss:$9 sm:$0xff] %v454
    %s537 = scalar_lea.vmem [#allocation1], 3
    %538 = vst [vmem:[%s537] ss:$9 sm:$0xff] %v455
    %s539 = scalar_lea.vmem [#allocation1], 4
    %540 = vst [vmem:[%s539] ss:$9 sm:$0xff] %v456
    %s541 = scalar_lea.vmem [#allocation1], 5
    %542 = vst [vmem:[%s541] ss:$9 sm:$0xff] %v457
    %s543 = scalar_lea.vmem [#allocation1], 6
    %544 = vst [vmem:[%s543] ss:$9 sm:$0xff] %v458
    %s545 = scalar_lea.vmem [#allocation1], 7
    %546 = vst [vmem:[%s545] ss:$9 sm:$0xff] %v440
    %v547 = vld [vmem:[#allocation1] sm:$0xff]
    %548 = vst [vmem:[#allocation1] ss:$9 sm:$0xff] %v459
    %v549 = vld [vmem:[#allocation1] sm:$0xff]
    %550 = vst [vmem:[#allocation1] ss:$9 sm:$0xff] %v452
    %s551 = scalar_lea.vmem [#allocation1], 1
    %552 = vst [vmem:[%s551] ss:$9 sm:$0xff] %v453
    %s553 = scalar_lea.vmem [#allocation1], 2
    %554 = vst [vmem:[%s553] ss:$9 sm:$0xff] %v454
    %s555 = scalar_lea.vmem [#allocation1], 3
    %556 = vst [vmem:[%s555] ss:$9 sm:$0xff] %v455
    %s557 = scalar_lea.vmem [#allocation1], 4
    %558 = vst [vmem:[%s557] ss:$9 sm:$0xff] %v456
    %s559 = scalar_lea.vmem [#allocation1], 5
    %560 = vst [vmem:[%s559] ss:$9 sm:$0xff] %v457
    %s561 = scalar_lea.vmem [#allocation1], 6
    %562 = vst [vmem:[%s561] ss:$9 sm:$0xff] %v458
    %s563 = scalar_lea.vmem [#allocation1], 7
    %564 = vst [vmem:[%s563] ss:$9 sm:$0xff] %v440
    %v565 = vld [vmem:[#allocation1] sm:$0xff]
    %566 = vst [vmem:[#allocation1] ss:$9 sm:$0xff] %v459
    %v567 = vld [vmem:[#allocation1] sm:$0xff]
    %v568 = vsel %vm500, %v547, 0
    %v570 = vsel %vm500, %v549, 0
    %v572 = vsel %vm500, %v565, 0
    %v574 = vsel %vm500, %v567, 0
    %576 = vmatpush.xpose.msra.mxu0 0.0
    %577 = vmatpush.xpose.msra.mxu0 0.0
    %578 = vmatpush.xpose.msra.mxu0 0.0
    %579 = vmatpush.xpose.msra.mxu0 0.0
    %580 = vmatpush.xpose.msra.mxu0 0.0
    %581 = vmatpush.xpose.msra.mxu0 0.0
    %582 = vmatpush.xpose.msra.mxu0 0.0
    %583 = vmatpush.xpose.msra.mxu0 0.0
    %584 = vmatpush.xpose.msra.mxu0 0.0
    %585 = vmatpush.xpose.msra.mxu0 0.0
    %586 = vmatpush.xpose.msra.mxu0 0.0
    %587 = vmatpush.xpose.msra.mxu0 0.0
    %588 = vmatpush.xpose.msra.mxu0 0.0
    %589 = vmatpush.xpose.msra.mxu0 0.0
    %590 = vmatpush.xpose.msra.mxu0 %v574
    %591 = vmatpush.xpose.msra.mxu0 %v572
    %592 = vmatmul.f32.gmra.mxu0 %v568
    %v593 = vpop.f32.mrf.mxu0
    %v594 = vadd.f32 0.0, %v593
    %595 = vmatmul.f32.gmra.mxu0 %v570
    %v596 = vpop.f32.mrf.mxu0
    %v597 = vadd.f32 0.0, %v596
    %598 = vdwg.mxu0
    %v599 = vmul.f32 %v527, 0.35355338
    %v600 = vmul.f32 %v530, 0.35355338
    %v601 = vmul.f32 %v594, 0.35355338
    %v602 = vmul.f32 %v597, 0.35355338
    %vm603 = vcmask 72704
    %v604 = vsel %vm603, %v599, -inf
    %605 = vmax.xlane.f32.xlu0 %v604
    %v606 = vpop.xlane.xlu0 %605
    %vm607 = vcmask 65536
    %v608 = vsel %vm607, %v600, -inf
    %609 = vmax.xlane.f32.xlu0 %v608
    %v610 = vpop.xlane.xlu0 %609
    %v611 = vsel %vm603, %v601, -inf
    %612 = vmax.xlane.f32.xlu0 %v611
    %v613 = vpop.xlane.xlu0 %612
    %v614 = vsel %vm607, %v602, -inf
    %615 = vmax.xlane.f32.xlu0 %v614
    %v616 = vpop.xlane.xlu0 %615
    %v617 = vsub.f32 %v599, %v606
    %v618 = vsub.f32 %v600, %v610
    %v619 = vsub.f32 %v601, %v613
    %v620 = vsub.f32 %v602, %v616
    %v621 = vmul.f32 %v617, 1.442695
    %v622 = vpow.pop %v621
    %v623 = vmul.f32 %v618, 1.442695
    %v624 = vpow.pop %v623
    %v625 = vmul.f32 %v619, 1.442695
    %v626 = vpow.pop %v625
    %v627 = vmul.f32 %v620, 1.442695
    %v628 = vpow.pop %v627
    %v629 = vsel %vm603, %v622, 0.0
    %630 = vadd.xlane.f32.xlu0 %v629
    %v631 = vpop.xlane.xlu0 %630
    %v632 = vsel %vm607, %v624, 0.0
    %633 = vadd.xlane.f32.xlu0 %v632
    %v634 = vpop.xlane.xlu0 %633
    %v635 = vsel %vm603, %v626, 0.0
    %636 = vadd.xlane.f32.xlu0 %v635
    %v637 = vpop.xlane.xlu0 %636
    %v638 = vsel %vm607, %v628, 0.0
    %639 = vadd.xlane.f32.xlu0 %v638
    %v640 = vpop.xlane.xlu0 %639
    %v641 = vrcp.pop %v631
    %v642 = vrcp.pop %v634
    %v643 = vrcp.pop %v637
    %v644 = vrcp.pop %v640
    %v645 = vmul.f32 %v622, %v641
    %v646 = vmul.f32 %v624, %v642
    %v647 = vmul.f32 %v626, %v643
    %v648 = vmul.f32 %v628, %v644
    %649 = vst [vmem:[#allocation1] ss:$9 sm:$0xff] %v434
    %s650 = scalar_lea.vmem [#allocation1], 1
    %651 = vst [vmem:[%s650] ss:$9 sm:$0xff] %v445
    %s652 = scalar_lea.vmem [#allocation1], 2
    %653 = vst [vmem:[%s652] ss:$9 sm:$0xff] %v446
    %s654 = scalar_lea.vmem [#allocation1], 3
    %655 = vst [vmem:[%s654] ss:$9 sm:$0xff] %v447
    %s656 = scalar_lea.vmem [#allocation1], 4
    %657 = vst [vmem:[%s656] ss:$9 sm:$0xff] %v448
    %s658 = scalar_lea.vmem [#allocation1], 5
    %659 = vst [vmem:[%s658] ss:$9 sm:$0xff] %v449
    %s660 = scalar_lea.vmem [#allocation1], 6
    %661 = vst [vmem:[%s660] ss:$9 sm:$0xff] %v450
    %s662 = scalar_lea.vmem [#allocation1], 7
    %663 = vst [vmem:[%s662] ss:$9 sm:$0xff] %v451
    %v664 = vld [vmem:[#allocation1] sm:$0xff]
    %665 = vst [vmem:[#allocation1] ss:$9 sm:$0xff] %v437
    %v666 = vld [vmem:[#allocation1] sm:$0xff]
    %v669 = vsel %vm603, %v645, 0
    %v672 = vsel %vm603, %v646, 0
    %vm674 = vcmask 1040384
    %v675 = vsel %vm674, %v666, 0
    %677 = vmatpush.msra.mxu0 0.0
    %678 = vmatpush.msra.mxu0 0.0
    %679 = vmatpush.msra.mxu0 0.0
    %680 = vmatpush.msra.mxu0 0.0
    %681 = vmatpush.msra.mxu0 0.0
    %682 = vmatpush.msra.mxu0 0.0
    %683 = vmatpush.msra.mxu0 0.0
    %684 = vmatpush.msra.mxu0 0.0
    %685 = vmatpush.msra.mxu0 0.0
    %686 = vmatpush.msra.mxu0 0.0
    %687 = vmatpush.msra.mxu0 0.0
    %688 = vmatpush.msra.mxu0 0.0
    %689 = vmatpush.msra.mxu0 0.0
    %690 = vmatpush.msra.mxu0 0.0
    %691 = vmatpush.msra.mxu0 %v675
    %692 = vmatpush.msra.mxu0 %v664
    %693 = vmatmul.f32.gmra.mxu0 %v669
    %v694 = vpop.f32.mrf.mxu0
    %v695 = vadd.f32 0.0, %v694
    %696 = vmatmul.f32.gmra.mxu0 %v672
    %v697 = vpop.f32.mrf.mxu0
    %v698 = vadd.f32 0.0, %v697
    %699 = vdwg.mxu0
    %700 = vst [vmem:[#allocation1] ss:$9 sm:$0xff] %v452
    %s701 = scalar_lea.vmem [#allocation1], 1
    %702 = vst [vmem:[%s701] ss:$9 sm:$0xff] %v453
    %s703 = scalar_lea.vmem [#allocation1], 2
    %704 = vst [vmem:[%s703] ss:$9 sm:$0xff] %v454
    %s705 = scalar_lea.vmem [#allocation1], 3
    %706 = vst [vmem:[%s705] ss:$9 sm:$0xff] %v455
    %s707 = scalar_lea.vmem [#allocation1], 4
    %708 = vst [vmem:[%s707] ss:$9 sm:$0xff] %v456
    %s709 = scalar_lea.vmem [#allocation1], 5
    %710 = vst [vmem:[%s709] ss:$9 sm:$0xff] %v457
    %s711 = scalar_lea.vmem [#allocation1], 6
    %712 = vst [vmem:[%s711] ss:$9 sm:$0xff] %v458
    %s713 = scalar_lea.vmem [#allocation1], 7
    %714 = vst [vmem:[%s713] ss:$9 sm:$0xff] %v440
    %v715 = vld [vmem:[#allocation1] sm:$0xff]
    %716 = vst [vmem:[#allocation1] ss:$9 sm:$0xff] %v459
    %v717 = vld [vmem:[#allocation1] sm:$0xff]
    %v720 = vsel %vm603, %v647, 0
    %v723 = vsel %vm603, %v648, 0
    %v725 = vsel %vm674, %v717, 0
    %727 = vmatpush.msra.mxu0 0.0
    %728 = vmatpush.msra.mxu0 0.0
    %729 = vmatpush.msra.mxu0 0.0
    %730 = vmatpush.msra.mxu0 0.0
    %731 = vmatpush.msra.mxu0 0.0
    %732 = vmatpush.msra.mxu0 0.0
    %733 = vmatpush.msra.mxu0 0.0
    %734 = vmatpush.msra.mxu0 0.0
    %735 = vmatpush.msra.mxu0 0.0
    %736 = vmatpush.msra.mxu0 0.0
    %737 = vmatpush.msra.mxu0 0.0
    %738 = vmatpush.msra.mxu0 0.0
    %739 = vmatpush.msra.mxu0 0.0
    %740 = vmatpush.msra.mxu0 0.0
    %741 = vmatpush.msra.mxu0 %v725
    %742 = vmatpush.msra.mxu0 %v715
    %743 = vmatmul.f32.gmra.mxu0 %v720
    %v744 = vpop.f32.mrf.mxu0
    %v745 = vadd.f32 0.0, %v744
    %746 = vmatmul.f32.gmra.mxu0 %v723
    %v747 = vpop.f32.mrf.mxu0
    %v748 = vadd.f32 0.0, %v747
    %749 = vdwg.mxu0
    %750 = vst [vmem:[#allocation1] ss:$9 sm:$0xff] %v434
    %s751 = scalar_lea.vmem [#allocation1], 1
    %752 = vst [vmem:[%s751] ss:$9 sm:$0xff] %v445
    %s753 = scalar_lea.vmem [#allocation1], 2
    %754 = vst [vmem:[%s753] ss:$9 sm:$0xff] %v446
    %s755 = scalar_lea.vmem [#allocation1], 3
    %756 = vst [vmem:[%s755] ss:$9 sm:$0xff] %v447
    %s757 = scalar_lea.vmem [#allocation1], 4
    %758 = vst [vmem:[%s757] ss:$9 sm:$0xff] %v448
    %s759 = scalar_lea.vmem [#allocation1], 5
    %760 = vst [vmem:[%s759] ss:$9 sm:$0xff] %v449
    %s761 = scalar_lea.vmem [#allocation1], 6
    %762 = vst [vmem:[%s761] ss:$9 sm:$0xff] %v450
    %s763 = scalar_lea.vmem [#allocation1], 7
    %764 = vst [vmem:[%s763] ss:$9 sm:$0xff] %v451
    %v765 = vld [vmem:[#allocation1] sm:$0xff]
    %766 = vst [vmem:[#allocation1] ss:$9 sm:$0xff] %v437
    %v767 = vld [vmem:[#allocation1] sm:$0xff]
    %768 = vrot.lane.b32.xlu0 %v765, 120
    %v769 = vpop.permute.xlu0 %768
    %770 = vrot.lane.b32.xlu0 %v767, 120
    %v771 = vpop.permute.xlu0 %770
    %772 = vst [vmem:[#allocation1] ss:$9 sm:$0xff] %v434
    %s773 = scalar_lea.vmem [#allocation1], 1
    %774 = vst [vmem:[%s773] ss:$9 sm:$0xff] %v445
    %s775 = scalar_lea.vmem [#allocation1], 2
    %776 = vst [vmem:[%s775] ss:$9 sm:$0xff] %v446
    %s777 = scalar_lea.vmem [#allocation1], 3
    %778 = vst [vmem:[%s777] ss:$9 sm:$0xff] %v447
    %s779 = scalar_lea.vmem [#allocation1], 4
    %780 = vst [vmem:[%s779] ss:$9 sm:$0xff] %v448
    %s781 = scalar_lea.vmem [#allocation1], 5
    %782 = vst [vmem:[%s781] ss:$9 sm:$0xff] %v449
    %s783 = scalar_lea.vmem [#allocation1], 6
    %784 = vst [vmem:[%s783] ss:$9 sm:$0xff] %v450
    %s785 = scalar_lea.vmem [#allocation1], 7
    %786 = vst [vmem:[%s785] ss:$9 sm:$0xff] %v451
    %v787 = vld [vmem:[#allocation1] sm:$0xff]
    %788 = vst [vmem:[#allocation1] ss:$9 sm:$0xff] %v437
    %v789 = vld [vmem:[#allocation1] sm:$0xff]
    %790 = vrot.lane.b32.xlu0 %v787, 120
    %v791 = vpop.permute.xlu0 %790
    %792 = vrot.lane.b32.xlu0 %v789, 120
    %v793 = vpop.permute.xlu0 %792
    %v794 = vsel %vm500, %v769, 0
    %v796 = vsel %vm500, %v771, 0
    %v798 = vsel %vm500, %v791, 0
    %v800 = vsel %vm500, %v793, 0
    %802 = vmatpush.xpose.msra.mxu0 0.0
    %803 = vmatpush.xpose.msra.mxu0 0.0
    %804 = vmatpush.xpose.msra.mxu0 0.0
    %805 = vmatpush.xpose.msra.mxu0 0.0
    %806 = vmatpush.xpose.msra.mxu0 0.0
    %807 = vmatpush.xpose.msra.mxu0 0.0
    %808 = vmatpush.xpose.msra.mxu0 0.0
    %809 = vmatpush.xpose.msra.mxu0 0.0
    %810 = vmatpush.xpose.msra.mxu0 0.0
    %811 = vmatpush.xpose.msra.mxu0 0.0
    %812 = vmatpush.xpose.msra.mxu0 0.0
    %813 = vmatpush.xpose.msra.mxu0 0.0
    %814 = vmatpush.xpose.msra.mxu0 0.0
    %815 = vmatpush.xpose.msra.mxu0 0.0
    %816 = vmatpush.xpose.msra.mxu0 %v800
    %817 = vmatpush.xpose.msra.mxu0 %v798
    %818 = vmatmul.f32.gmra.mxu0 %v794
    %v819 = vpop.f32.mrf.mxu0
    %v820 = vadd.f32 0.0, %v819
    %821 = vmatmul.f32.gmra.mxu0 %v796
    %v822 = vpop.f32.mrf.mxu0
    %v823 = vadd.f32 0.0, %v822
    %824 = vdwg.mxu0
    %825 = vst [vmem:[#allocation1] ss:$9 sm:$0xff] %v452
    %s826 = scalar_lea.vmem [#allocation1], 1
    %827 = vst [vmem:[%s826] ss:$9 sm:$0xff] %v453
    %s828 = scalar_lea.vmem [#allocation1], 2
    %829 = vst [vmem:[%s828] ss:$9 sm:$0xff] %v454
    %s830 = scalar_lea.vmem [#allocation1], 3
    %831 = vst [vmem:[%s830] ss:$9 sm:$0xff] %v455
    %s832 = scalar_lea.vmem [#allocation1], 4
    %833 = vst [vmem:[%s832] ss:$9 sm:$0xff] %v456
    %s834 = scalar_lea.vmem [#allocation1], 5
    %835 = vst [vmem:[%s834] ss:$9 sm:$0xff] %v457
    %s836 = scalar_lea.vmem [#allocation1], 6
    %837 = vst [vmem:[%s836] ss:$9 sm:$0xff] %v458
    %s838 = scalar_lea.vmem [#allocation1], 7
    %839 = vst [vmem:[%s838] ss:$9 sm:$0xff] %v440
    %v840 = vld [vmem:[#allocation1] sm:$0xff]
    %841 = vst [vmem:[#allocation1] ss:$9 sm:$0xff] %v459
    %v842 = vld [vmem:[#allocation1] sm:$0xff]
    %843 = vrot.lane.b32.xlu0 %v840, 120
    %v844 = vpop.permute.xlu0 %843
    %845 = vrot.lane.b32.xlu0 %v842, 120
    %v846 = vpop.permute.xlu0 %845
    %847 = vst [vmem:[#allocation1] ss:$9 sm:$0xff] %v452
    %s848 = scalar_lea.vmem [#allocation1], 1
    %849 = vst [vmem:[%s848] ss:$9 sm:$0xff] %v453
    %s850 = scalar_lea.vmem [#allocation1], 2
    %851 = vst [vmem:[%s850] ss:$9 sm:$0xff] %v454
    %s852 = scalar_lea.vmem [#allocation1], 3
    %853 = vst [vmem:[%s852] ss:$9 sm:$0xff] %v455
    %s854 = scalar_lea.vmem [#allocation1], 4
    %855 = vst [vmem:[%s854] ss:$9 sm:$0xff] %v456
    %s856 = scalar_lea.vmem [#allocation1], 5
    %857 = vst [vmem:[%s856] ss:$9 sm:$0xff] %v457
    %s858 = scalar_lea.vmem [#allocation1], 6
    %859 = vst [vmem:[%s858] ss:$9 sm:$0xff] %v458
    %s860 = scalar_lea.vmem [#allocation1], 7
    %861 = vst [vmem:[%s860] ss:$9 sm:$0xff] %v440
    %v862 = vld [vmem:[#allocation1] sm:$0xff]
    %863 = vst [vmem:[#allocation1] ss:$9 sm:$0xff] %v459
    %v864 = vld [vmem:[#allocation1] sm:$0xff]
    %865 = vrot.lane.b32.xlu0 %v862, 120
    %v866 = vpop.permute.xlu0 %865
    %867 = vrot.lane.b32.xlu0 %v864, 120
    %v868 = vpop.permute.xlu0 %867
    %v869 = vsel %vm500, %v844, 0
    %v871 = vsel %vm500, %v846, 0
    %v873 = vsel %vm500, %v866, 0
    %v875 = vsel %vm500, %v868, 0
    %877 = vmatpush.xpose.msra.mxu0 0.0
    %878 = vmatpush.xpose.msra.mxu0 0.0
    %879 = vmatpush.xpose.msra.mxu0 0.0
    %880 = vmatpush.xpose.msra.mxu0 0.0
    %881 = vmatpush.xpose.msra.mxu0 0.0
    %882 = vmatpush.xpose.msra.mxu0 0.0
    %883 = vmatpush.xpose.msra.mxu0 0.0
    %884 = vmatpush.xpose.msra.mxu0 0.0
    %885 = vmatpush.xpose.msra.mxu0 0.0
    %886 = vmatpush.xpose.msra.mxu0 0.0
    %887 = vmatpush.xpose.msra.mxu0 0.0
    %888 = vmatpush.xpose.msra.mxu0 0.0
    %889 = vmatpush.xpose.msra.mxu0 0.0
    %890 = vmatpush.xpose.msra.mxu0 0.0
    %891 = vmatpush.xpose.msra.mxu0 %v875
    %892 = vmatpush.xpose.msra.mxu0 %v873
    %893 = vmatmul.f32.gmra.mxu0 %v869
    %v894 = vpop.f32.mrf.mxu0
    %v895 = vadd.f32 0.0, %v894
    %896 = vmatmul.f32.gmra.mxu0 %v871
    %v897 = vpop.f32.mrf.mxu0
    %v898 = vadd.f32 0.0, %v897
    %899 = vdwg.mxu0
    %v900 = vmul.f32 %v820, 0.35355338
    %v901 = vmul.f32 %v823, 0.35355338
    %v902 = vmul.f32 %v895, 0.35355338
    %v903 = vmul.f32 %v898, 0.35355338
    %v904 = vsel %vm603, %v900, -inf
    %905 = vmax.xlane.f32.xlu0 %v904
    %v906 = vpop.xlane.xlu0 %905
    %v907 = vsel %vm607, %v901, -inf
    %908 = vmax.xlane.f32.xlu0 %v907
    %v909 = vpop.xlane.xlu0 %908
    %v910 = vsel %vm603, %v902, -inf
    %911 = vmax.xlane.f32.xlu0 %v910
    %v912 = vpop.xlane.xlu0 %911
    %v913 = vsel %vm607, %v903, -inf
    %914 = vmax.xlane.f32.xlu0 %v913
    %v915 = vpop.xlane.xlu0 %914
    %v916 = vsub.f32 %v900, %v906
    %v917 = vsub.f32 %v901, %v909
    %v918 = vsub.f32 %v902, %v912
    %v919 = vsub.f32 %v903, %v915
    %v920 = vmul.f32 %v916, 1.442695
    %v921 = vpow.pop %v920
    %v922 = vmul.f32 %v917, 1.442695
    %v923 = vpow.pop %v922
    %v924 = vmul.f32 %v918, 1.442695
    %v925 = vpow.pop %v924
    %v926 = vmul.f32 %v919, 1.442695
    %v927 = vpow.pop %v926
    %v928 = vsel %vm603, %v921, 0.0
    %929 = vadd.xlane.f32.xlu0 %v928
    %v930 = vpop.xlane.xlu0 %929
    %v931 = vsel %vm607, %v923, 0.0
    %932 = vadd.xlane.f32.xlu0 %v931
    %v933 = vpop.xlane.xlu0 %932
    %v934 = vsel %vm603, %v925, 0.0
    %935 = vadd.xlane.f32.xlu0 %v934
    %v936 = vpop.xlane.xlu0 %935
    %v937 = vsel %vm607, %v927, 0.0
    %938 = vadd.xlane.f32.xlu0 %v937
    %v939 = vpop.xlane.xlu0 %938
    %v940 = vrcp.pop %v930
    %v941 = vrcp.pop %v933
    %v942 = vrcp.pop %v936
    %v943 = vrcp.pop %v939
    %v944 = vmul.f32 %v921, %v940
    %v945 = vmul.f32 %v923, %v941
    %v946 = vmul.f32 %v925, %v942
    %v947 = vmul.f32 %v927, %v943
    %948 = vst [vmem:[#allocation1] ss:$9 sm:$0xff] %v434
    %s949 = scalar_lea.vmem [#allocation1], 1
    %950 = vst [vmem:[%s949] ss:$9 sm:$0xff] %v445
    %s951 = scalar_lea.vmem [#allocation1], 2
    %952 = vst [vmem:[%s951] ss:$9 sm:$0xff] %v446
    %s953 = scalar_lea.vmem [#allocation1], 3
    %954 = vst [vmem:[%s953] ss:$9 sm:$0xff] %v447
    %s955 = scalar_lea.vmem [#allocation1], 4
    %956 = vst [vmem:[%s955] ss:$9 sm:$0xff] %v448
    %s957 = scalar_lea.vmem [#allocation1], 5
    %958 = vst [vmem:[%s957] ss:$9 sm:$0xff] %v449
    %s959 = scalar_lea.vmem [#allocation1], 6
    %960 = vst [vmem:[%s959] ss:$9 sm:$0xff] %v450
    %s961 = scalar_lea.vmem [#allocation1], 7
    %962 = vst [vmem:[%s961] ss:$9 sm:$0xff] %v451
    %v963 = vld [vmem:[#allocation1] sm:$0xff]
    %964 = vst [vmem:[#allocation1] ss:$9 sm:$0xff] %v437
    %v965 = vld [vmem:[#allocation1] sm:$0xff]
    %966 = vrot.lane.b32.xlu0 %v963, 120
    %v967 = vpop.permute.xlu0 %966
    %968 = vrot.lane.b32.xlu0 %v965, 120
    %v969 = vpop.permute.xlu0 %968
    %v972 = vsel %vm603, %v944, 0
    %v975 = vsel %vm603, %v945, 0
    %v977 = vsel %vm674, %v969, 0
    %979 = vmatpush.msra.mxu0 0.0
    %980 = vmatpush.msra.mxu0 0.0
    %981 = vmatpush.msra.mxu0 0.0
    %982 = vmatpush.msra.mxu0 0.0
    %983 = vmatpush.msra.mxu0 0.0
    %984 = vmatpush.msra.mxu0 0.0
    %985 = vmatpush.msra.mxu0 0.0
    %986 = vmatpush.msra.mxu0 0.0
    %987 = vmatpush.msra.mxu0 0.0
    %988 = vmatpush.msra.mxu0 0.0
    %989 = vmatpush.msra.mxu0 0.0
    %990 = vmatpush.msra.mxu0 0.0
    %991 = vmatpush.msra.mxu0 0.0
    %992 = vmatpush.msra.mxu0 0.0
    %993 = vmatpush.msra.mxu0 %v977
    %994 = vmatpush.msra.mxu0 %v967
    %995 = vmatmul.f32.gmra.mxu0 %v972
    %v996 = vpop.f32.mrf.mxu0
    %v997 = vadd.f32 0.0, %v996
    %998 = vmatmul.f32.gmra.mxu0 %v975
    %v999 = vpop.f32.mrf.mxu0
    %v1000 = vadd.f32 0.0, %v999
    %1001 = vdwg.mxu0
    %1002 = vst [vmem:[#allocation1] ss:$9 sm:$0xff] %v452
    %s1003 = scalar_lea.vmem [#allocation1], 1
    %1004 = vst [vmem:[%s1003] ss:$9 sm:$0xff] %v453
    %s1005 = scalar_lea.vmem [#allocation1], 2
    %1006 = vst [vmem:[%s1005] ss:$9 sm:$0xff] %v454
    %s1007 = scalar_lea.vmem [#allocation1], 3
    %1008 = vst [vmem:[%s1007] ss:$9 sm:$0xff] %v455
    %s1009 = scalar_lea.vmem [#allocation1], 4
    %1010 = vst [vmem:[%s1009] ss:$9 sm:$0xff] %v456
    %s1011 = scalar_lea.vmem [#allocation1], 5
    %1012 = vst [vmem:[%s1011] ss:$9 sm:$0xff] %v457
    %s1013 = scalar_lea.vmem [#allocation1], 6
    %1014 = vst [vmem:[%s1013] ss:$9 sm:$0xff] %v458
    %s1015 = scalar_lea.vmem [#allocation1], 7
    %1016 = vst [vmem:[%s1015] ss:$9 sm:$0xff] %v440
    %v1017 = vld [vmem:[#allocation1] sm:$0xff]
    %1018 = vst [vmem:[#allocation1] ss:$9 sm:$0xff] %v459
    %v1019 = vld [vmem:[#allocation1] sm:$0xff]
    %1020 = vrot.lane.b32.xlu0 %v1017, 120
    %v1021 = vpop.permute.xlu0 %1020
    %1022 = vrot.lane.b32.xlu0 %v1019, 120
    %v1023 = vpop.permute.xlu0 %1022
    %v1026 = vsel %vm603, %v946, 0
    %v1029 = vsel %vm603, %v947, 0
    %v1031 = vsel %vm674, %v1023, 0
    %1033 = vmatpush.msra.mxu0 0.0
    %1034 = vmatpush.msra.mxu0 0.0
    %1035 = vmatpush.msra.mxu0 0.0
    %1036 = vmatpush.msra.mxu0 0.0
    %1037 = vmatpush.msra.mxu0 0.0
    %1038 = vmatpush.msra.mxu0 0.0
    %1039 = vmatpush.msra.mxu0 0.0
    %1040 = vmatpush.msra.mxu0 0.0
    %1041 = vmatpush.msra.mxu0 0.0
    %1042 = vmatpush.msra.mxu0 0.0
    %1043 = vmatpush.msra.mxu0 0.0
    %1044 = vmatpush.msra.mxu0 0.0
    %1045 = vmatpush.msra.mxu0 0.0
    %1046 = vmatpush.msra.mxu0 0.0
    %1047 = vmatpush.msra.mxu0 %v1031
    %1048 = vmatpush.msra.mxu0 %v1021
    %1049 = vmatmul.f32.gmra.mxu0 %v1026
    %v1050 = vpop.f32.mrf.mxu0
    %v1051 = vadd.f32 0.0, %v1050
    %1052 = vmatmul.f32.gmra.mxu0 %v1029
    %v1053 = vpop.f32.mrf.mxu0
    %v1054 = vadd.f32 0.0, %v1053
    %1055 = vdwg.mxu0
    %v1060 = vrot.slane %v997, 1
    %v1061 = vrot.slane %v997, 2
    %v1062 = vrot.slane %v997, 3
    %v1063 = vrot.slane %v997, 4
    %v1064 = vrot.slane %v997, 5
    %v1065 = vrot.slane %v997, 6
    %v1066 = vrot.slane %v997, 7
    %v1067 = vrot.slane %v1051, 1
    %v1068 = vrot.slane %v1051, 2
    %v1069 = vrot.slane %v1051, 3
    %v1070 = vrot.slane %v1051, 4
    %v1071 = vrot.slane %v1051, 5
    %v1072 = vrot.slane %v1051, 6
    %v1073 = vrot.slane %v1051, 7
    %1074 = vst [vmem:[#allocation1] ss:$9 sm:$0xff] %v997
    %s1075 = scalar_lea.vmem [#allocation1], 1
    %1076 = vst [vmem:[%s1075] ss:$9 sm:$0xff] %v1060
    %s1077 = scalar_lea.vmem [#allocation1], 2
    %1078 = vst [vmem:[%s1077] ss:$9 sm:$0xff] %v1061
    %s1079 = scalar_lea.vmem [#allocation1], 3
    %1080 = vst [vmem:[%s1079] ss:$9 sm:$0xff] %v1062
    %s1081 = scalar_lea.vmem [#allocation1], 4
    %1082 = vst [vmem:[%s1081] ss:$9 sm:$0xff] %v1063
    %s1083 = scalar_lea.vmem [#allocation1], 5
    %1084 = vst [vmem:[%s1083] ss:$9 sm:$0xff] %v1064
    %s1085 = scalar_lea.vmem [#allocation1], 6
    %1086 = vst [vmem:[%s1085] ss:$9 sm:$0xff] %v1065
    %s1087 = scalar_lea.vmem [#allocation1], 7
    %1088 = vst [vmem:[%s1087] ss:$9 sm:$0xff] %v1066
    %v1089 = vld [vmem:[#allocation1] sm:$0xff]
    %1090 = vst [vmem:[#allocation1] ss:$9 sm:$0xff] %v1000
    %1091 = vst [vmem:[%s1075] ss:$9 sm:$0xff] %v1051
    %1092 = vst [vmem:[%s1077] ss:$9 sm:$0xff] %v1067
    %1093 = vst [vmem:[%s1079] ss:$9 sm:$0xff] %v1068
    %1094 = vst [vmem:[%s1081] ss:$9 sm:$0xff] %v1069
    %1095 = vst [vmem:[%s1083] ss:$9 sm:$0xff] %v1070
    %1096 = vst [vmem:[%s1085] ss:$9 sm:$0xff] %v1071
    %1097 = vst [vmem:[%s1087] ss:$9 sm:$0xff] %v1072
    %v1098 = vld [vmem:[#allocation1] sm:$0xff]
    %1099 = vst [vmem:[#allocation1] ss:$9 sm:$0xff] %v1073
    %1100 = vst [vmem:[%s1075] ss:$9 sm:$0xff] %v1054
    %v1101 = vld [vmem:[#allocation1] sm:$0xff]
    %v1102 = vsel %vm500, %v1089, 0
    %v1104 = vsel %vm500, %v1098, 0
    %v1106 = vsel %vm500, %v1101, 0
    %1108 = vmatpush.msra.mxu0 0.0
    %1109 = vmatpush.msra.mxu0 0.0
    %1110 = vmatpush.msra.mxu0 0.0
    %1111 = vmatpush.msra.mxu0 0.0
    %1112 = vmatpush.msra.mxu0 0.0
    %1113 = vmatpush.msra.mxu0 0.0
    %1114 = vmatpush.msra.mxu0 0.0
    %1115 = vmatpush.msra.mxu0 0.0
    %1116 = vmatpush.msra.mxu0 0.0
    %1117 = vmatpush.msra.mxu0 0.0
    %1118 = vmatpush.msra.mxu0 0.0
    %1119 = vmatpush.msra.mxu0 0.0
    %1120 = vmatpush.msra.mxu0 0.0
    %1121 = vmatpush.msra.mxu0 0.0
    %1122 = vmatpush.msra.mxu0 0.0
    %1123 = vmatpush.msra.mxu0 %v461
    %1124 = vmatmul.f32.gmra.mxu0 %v1102
    %v1125 = vpop.f32.mrf.mxu0
    %v1126 = vadd.f32 0.0, %v1125
    %1127 = vmatmul.f32.gmra.mxu0 %v1104
    %v1128 = vpop.f32.mrf.mxu0
    %v1129 = vadd.f32 0.0, %v1128
    %1130 = vmatmul.f32.gmra.mxu0 %v1106
    %v1131 = vpop.f32.mrf.mxu0
    %v1132 = vadd.f32 0.0, %v1131
    %1133 = vdwg.mxu0
    %v1138 = vrot.slane %v695, 1
    %v1139 = vrot.slane %v695, 2
    %v1140 = vrot.slane %v695, 3
    %v1141 = vrot.slane %v695, 4
    %v1142 = vrot.slane %v695, 5
    %v1143 = vrot.slane %v695, 6
    %v1144 = vrot.slane %v695, 7
    %v1145 = vrot.slane %v745, 1
    %v1146 = vrot.slane %v745, 2
    %v1147 = vrot.slane %v745, 3
    %v1148 = vrot.slane %v745, 4
    %v1149 = vrot.slane %v745, 5
    %v1150 = vrot.slane %v745, 6
    %v1151 = vrot.slane %v745, 7
    %1152 = vst [vmem:[#allocation1] ss:$9 sm:$0xff] %v695
    %s1153 = scalar_lea.vmem [#allocation1], 1
    %1154 = vst [vmem:[%s1153] ss:$9 sm:$0xff] %v1138
    %s1155 = scalar_lea.vmem [#allocation1], 2
    %1156 = vst [vmem:[%s1155] ss:$9 sm:$0xff] %v1139
    %s1157 = scalar_lea.vmem [#allocation1], 3
    %1158 = vst [vmem:[%s1157] ss:$9 sm:$0xff] %v1140
    %s1159 = scalar_lea.vmem [#allocation1], 4
    %1160 = vst [vmem:[%s1159] ss:$9 sm:$0xff] %v1141
    %s1161 = scalar_lea.vmem [#allocation1], 5
    %1162 = vst [vmem:[%s1161] ss:$9 sm:$0xff] %v1142
    %s1163 = scalar_lea.vmem [#allocation1], 6
    %1164 = vst [vmem:[%s1163] ss:$9 sm:$0xff] %v1143
    %s1165 = scalar_lea.vmem [#allocation1], 7
    %1166 = vst [vmem:[%s1165] ss:$9 sm:$0xff] %v1144
    %v1167 = vld [vmem:[#allocation1] sm:$0xff]
    %1168 = vst [vmem:[#allocation1] ss:$9 sm:$0xff] %v698
    %1169 = vst [vmem:[%s1153] ss:$9 sm:$0xff] %v745
    %1170 = vst [vmem:[%s1155] ss:$9 sm:$0xff] %v1145
    %1171 = vst [vmem:[%s1157] ss:$9 sm:$0xff] %v1146
    %1172 = vst [vmem:[%s1159] ss:$9 sm:$0xff] %v1147
    %1173 = vst [vmem:[%s1161] ss:$9 sm:$0xff] %v1148
    %1174 = vst [vmem:[%s1163] ss:$9 sm:$0xff] %v1149
    %1175 = vst [vmem:[%s1165] ss:$9 sm:$0xff] %v1150
    %v1176 = vld [vmem:[#allocation1] sm:$0xff]
    %1177 = vst [vmem:[#allocation1] ss:$9 sm:$0xff] %v1151
    %1178 = vst [vmem:[%s1153] ss:$9 sm:$0xff] %v748
    %v1179 = vld [vmem:[#allocation1] sm:$0xff]
    %v1180 = vsel %vm500, %v1167, 0
    %v1182 = vsel %vm500, %v1176, 0
    %v1184 = vsel %vm500, %v1179, 0
    %1186 = vmatpush.msra.mxu0 0.0
    %1187 = vmatpush.msra.mxu0 0.0
    %1188 = vmatpush.msra.mxu0 0.0
    %1189 = vmatpush.msra.mxu0 0.0
    %1190 = vmatpush.msra.mxu0 0.0
    %1191 = vmatpush.msra.mxu0 0.0
    %1192 = vmatpush.msra.mxu0 0.0
    %1193 = vmatpush.msra.mxu0 0.0
    %1194 = vmatpush.msra.mxu0 0.0
    %1195 = vmatpush.msra.mxu0 0.0
    %1196 = vmatpush.msra.mxu0 0.0
    %1197 = vmatpush.msra.mxu0 0.0
    %1198 = vmatpush.msra.mxu0 0.0
    %1199 = vmatpush.msra.mxu0 0.0
    %1200 = vmatpush.msra.mxu0 0.0
    %1201 = vmatpush.msra.mxu0 %v460
    %1202 = vmatmul.f32.gmra.mxu0 %v1180
    %v1203 = vpop.f32.mrf.mxu0
    %v1204 = vadd.f32 %v1126, %v1203
    %1205 = vmatmul.f32.gmra.mxu0 %v1182
    %v1206 = vpop.f32.mrf.mxu0
    %v1207 = vadd.f32 %v1129, %v1206
    %1208 = vmatmul.f32.gmra.mxu0 %v1184
    %v1209 = vpop.f32.mrf.mxu0
    %v1210 = vadd.f32 %v1132, %v1209
    %1211 = vdwg.mxu0
    %v1215 = vrot.slane %v1204, 1
    %v1216 = vrot.slane %v1204, 2
    %v1217 = vrot.slane %v1204, 3
    %v1218 = vrot.slane %v1204, 4
    %v1219 = vrot.slane %v1204, 5
    %v1220 = vrot.slane %v1204, 6
    %v1221 = vrot.slane %v1204, 7
    %v1222 = vrot.slane %v1207, 1
    %v1223 = vrot.slane %v1207, 2
    %v1224 = vrot.slane %v1207, 3
    %v1225 = vrot.slane %v1207, 4
    %v1226 = vrot.slane %v1207, 5
    %v1227 = vrot.slane %v1207, 6
    %v1228 = vrot.slane %v1207, 7
    %v1229 = vrot.slane %v1210, 1
    %1245 = vst [vmem:[#allocation1] ss:$9 sm:$0xff] %v434
    %s1246 = scalar_lea.vmem [#allocation1], 1
    %1247 = vst [vmem:[%s1246] ss:$9 sm:$0xff] %v445
    %s1248 = scalar_lea.vmem [#allocation1], 2
    %1249 = vst [vmem:[%s1248] ss:$9 sm:$0xff] %v446
    %s1250 = scalar_lea.vmem [#allocation1], 3
    %1251 = vst [vmem:[%s1250] ss:$9 sm:$0xff] %v447
    %s1252 = scalar_lea.vmem [#allocation1], 4
    %1253 = vst [vmem:[%s1252] ss:$9 sm:$0xff] %v448
    %s1254 = scalar_lea.vmem [#allocation1], 5
    %1255 = vst [vmem:[%s1254] ss:$9 sm:$0xff] %v449
    %s1256 = scalar_lea.vmem [#allocation1], 6
    %1257 = vst [vmem:[%s1256] ss:$9 sm:$0xff] %v450
    %s1258 = scalar_lea.vmem [#allocation1], 7
    %1259 = vst [vmem:[%s1258] ss:$9 sm:$0xff] %v451
    %v1260 = vld [vmem:[#allocation1] sm:$0xff]
    %1261 = vst [vmem:[#allocation1] ss:$9 sm:$0xff] %v437
    %v1262 = vld [vmem:[#allocation1] sm:$0xff]
    %1263 = vrot.lane.b32.xlu0 %v1260, 112
    %v1264 = vpop.permute.xlu0 %1263
    %1265 = vrot.lane.b32.xlu0 %v1262, 112
    %v1266 = vpop.permute.xlu0 %1265
    %1267 = vst [vmem:[#allocation1] ss:$9 sm:$0xff] %v434
    %s1268 = scalar_lea.vmem [#allocation1], 1
    %1269 = vst [vmem:[%s1268] ss:$9 sm:$0xff] %v445
    %s1270 = scalar_lea.vmem [#allocation1], 2
    %1271 = vst [vmem:[%s1270] ss:$9 sm:$0xff] %v446
    %s1272 = scalar_lea.vmem [#allocation1], 3
    %1273 = vst [vmem:[%s1272] ss:$9 sm:$0xff] %v447
    %s1274 = scalar_lea.vmem [#allocation1], 4
    %1275 = vst [vmem:[%s1274] ss:$9 sm:$0xff] %v448
    %s1276 = scalar_lea.vmem [#allocation1], 5
    %1277 = vst [vmem:[%s1276] ss:$9 sm:$0xff] %v449
    %s1278 = scalar_lea.vmem [#allocation1], 6
    %1279 = vst [vmem:[%s1278] ss:$9 sm:$0xff] %v450
    %s1280 = scalar_lea.vmem [#allocation1], 7
    %1281 = vst [vmem:[%s1280] ss:$9 sm:$0xff] %v451
    %v1282 = vld [vmem:[#allocation1] sm:$0xff]
    %1283 = vst [vmem:[#allocation1] ss:$9 sm:$0xff] %v437
    %v1284 = vld [vmem:[#allocation1] sm:$0xff]
    %1285 = vrot.lane.b32.xlu0 %v1282, 112
    %v1286 = vpop.permute.xlu0 %1285
    %1287 = vrot.lane.b32.xlu0 %v1284, 112
    %v1288 = vpop.permute.xlu0 %1287
    %v1289 = vsel %vm500, %v1264, 0
    %v1291 = vsel %vm500, %v1266, 0
    %v1293 = vsel %vm500, %v1286, 0
    %v1295 = vsel %vm500, %v1288, 0
    %1297 = vmatpush.xpose.msra.mxu0 0.0
    %1298 = vmatpush.xpose.msra.mxu0 0.0
    %1299 = vmatpush.xpose.msra.mxu0 0.0
    %1300 = vmatpush.xpose.msra.mxu0 0.0
    %1301 = vmatpush.xpose.msra.mxu0 0.0
    %1302 = vmatpush.xpose.msra.mxu0 0.0
    %1303 = vmatpush.xpose.msra.mxu0 0.0
    %1304 = vmatpush.xpose.msra.mxu0 0.0
    %1305 = vmatpush.xpose.msra.mxu0 0.0
    %1306 = vmatpush.xpose.msra.mxu0 0.0
    %1307 = vmatpush.xpose.msra.mxu0 0.0
    %1308 = vmatpush.xpose.msra.mxu0 0.0
    %1309 = vmatpush.xpose.msra.mxu0 0.0
    %1310 = vmatpush.xpose.msra.mxu0 0.0
    %1311 = vmatpush.xpose.msra.mxu0 %v1295
    %1312 = vmatpush.xpose.msra.mxu0 %v1293
    %1313 = vmatmul.f32.gmra.mxu0 %v1289
    %v1314 = vpop.f32.mrf.mxu0
    %v1315 = vadd.f32 0.0, %v1314
    %1316 = vmatmul.f32.gmra.mxu0 %v1291
    %v1317 = vpop.f32.mrf.mxu0
    %v1318 = vadd.f32 0.0, %v1317
    %1319 = vdwg.mxu0
    %1320 = vst [vmem:[#allocation1] ss:$9 sm:$0xff] %v452
    %s1321 = scalar_lea.vmem [#allocation1], 1
    %1322 = vst [vmem:[%s1321] ss:$9 sm:$0xff] %v453
    %s1323 = scalar_lea.vmem [#allocation1], 2
    %1324 = vst [vmem:[%s1323] ss:$9 sm:$0xff] %v454
    %s1325 = scalar_lea.vmem [#allocation1], 3
    %1326 = vst [vmem:[%s1325] ss:$9 sm:$0xff] %v455
    %s1327 = scalar_lea.vmem [#allocation1], 4
    %1328 = vst [vmem:[%s1327] ss:$9 sm:$0xff] %v456
    %s1329 = scalar_lea.vmem [#allocation1], 5
    %1330 = vst [vmem:[%s1329] ss:$9 sm:$0xff] %v457
    %s1331 = scalar_lea.vmem [#allocation1], 6
    %1332 = vst [vmem:[%s1331] ss:$9 sm:$0xff] %v458
    %s1333 = scalar_lea.vmem [#allocation1], 7
    %1334 = vst [vmem:[%s1333] ss:$9 sm:$0xff] %v440
    %v1335 = vld [vmem:[#allocation1] sm:$0xff]
    %1336 = vst [vmem:[#allocation1] ss:$9 sm:$0xff] %v459
    %v1337 = vld [vmem:[#allocation1] sm:$0xff]
    %1338 = vrot.lane.b32.xlu0 %v1335, 112
    %v1339 = vpop.permute.xlu0 %1338
    %1340 = vrot.lane.b32.xlu0 %v1337, 112
    %v1341 = vpop.permute.xlu0 %1340
    %1342 = vst [vmem:[#allocation1] ss:$9 sm:$0xff] %v452
    %s1343 = scalar_lea.vmem [#allocation1], 1
    %1344 = vst [vmem:[%s1343] ss:$9 sm:$0xff] %v453
    %s1345 = scalar_lea.vmem [#allocation1], 2
    %1346 = vst [vmem:[%s1345] ss:$9 sm:$0xff] %v454
    %s1347 = scalar_lea.vmem [#allocation1], 3
    %1348 = vst [vmem:[%s1347] ss:$9 sm:$0xff] %v455
    %s1349 = scalar_lea.vmem [#allocation1], 4
    %1350 = vst [vmem:[%s1349] ss:$9 sm:$0xff] %v456
    %s1351 = scalar_lea.vmem [#allocation1], 5
    %1352 = vst [vmem:[%s1351] ss:$9 sm:$0xff] %v457
    %s1353 = scalar_lea.vmem [#allocation1], 6
    %1354 = vst [vmem:[%s1353] ss:$9 sm:$0xff] %v458
    %s1355 = scalar_lea.vmem [#allocation1], 7
    %1356 = vst [vmem:[%s1355] ss:$9 sm:$0xff] %v440
    %v1357 = vld [vmem:[#allocation1] sm:$0xff]
    %1358 = vst [vmem:[#allocation1] ss:$9 sm:$0xff] %v459
    %v1359 = vld [vmem:[#allocation1] sm:$0xff]
    %1360 = vrot.lane.b32.xlu0 %v1357, 112
    %v1361 = vpop.permute.xlu0 %1360
    %1362 = vrot.lane.b32.xlu0 %v1359, 112
    %v1363 = vpop.permute.xlu0 %1362
    %v1364 = vsel %vm500, %v1339, 0
    %v1366 = vsel %vm500, %v1341, 0
    %v1368 = vsel %vm500, %v1361, 0
    %v1370 = vsel %vm500, %v1363, 0
    %1372 = vmatpush.xpose.msra.mxu0 0.0
    %1373 = vmatpush.xpose.msra.mxu0 0.0
    %1374 = vmatpush.xpose.msra.mxu0 0.0
    %1375 = vmatpush.xpose.msra.mxu0 0.0
    %1376 = vmatpush.xpose.msra.mxu0 0.0
    %1377 = vmatpush.xpose.msra.mxu0 0.0
    %1378 = vmatpush.xpose.msra.mxu0 0.0
    %1379 = vmatpush.xpose.msra.mxu0 0.0
    %1380 = vmatpush.xpose.msra.mxu0 0.0
    %1381 = vmatpush.xpose.msra.mxu0 0.0
    %1382 = vmatpush.xpose.msra.mxu0 0.0
    %1383 = vmatpush.xpose.msra.mxu0 0.0
    %1384 = vmatpush.xpose.msra.mxu0 0.0
    %1385 = vmatpush.xpose.msra.mxu0 0.0
    %1386 = vmatpush.xpose.msra.mxu0 %v1370
    %1387 = vmatpush.xpose.msra.mxu0 %v1368
    %1388 = vmatmul.f32.gmra.mxu0 %v1364
    %v1389 = vpop.f32.mrf.mxu0
    %v1390 = vadd.f32 0.0, %v1389
    %1391 = vmatmul.f32.gmra.mxu0 %v1366
    %v1392 = vpop.f32.mrf.mxu0
    %v1393 = vadd.f32 0.0, %v1392
    %1394 = vdwg.mxu0
    %v1395 = vmul.f32 %v1315, 0.35355338
    %v1396 = vmul.f32 %v1318, 0.35355338
    %v1397 = vmul.f32 %v1390, 0.35355338
    %v1398 = vmul.f32 %v1393, 0.35355338
    %v1399 = vsel %vm603, %v1395, -inf
    %1400 = vmax.xlane.f32.xlu0 %v1399
    %v1401 = vpop.xlane.xlu0 %1400
    %v1402 = vsel %vm607, %v1396, -inf
    %1403 = vmax.xlane.f32.xlu0 %v1402
    %v1404 = vpop.xlane.xlu0 %1403
    %v1405 = vsel %vm603, %v1397, -inf
    %1406 = vmax.xlane.f32.xlu0 %v1405
    %v1407 = vpop.xlane.xlu0 %1406
    %v1408 = vsel %vm607, %v1398, -inf
    %1409 = vmax.xlane.f32.xlu0 %v1408
    %v1410 = vpop.xlane.xlu0 %1409
    %v1411 = vsub.f32 %v1395, %v1401
    %v1412 = vsub.f32 %v1396, %v1404
    %v1413 = vsub.f32 %v1397, %v1407
    %v1414 = vsub.f32 %v1398, %v1410
    %v1415 = vmul.f32 %v1411, 1.442695
    %v1416 = vpow.pop %v1415
    %v1417 = vmul.f32 %v1412, 1.442695
    %v1418 = vpow.pop %v1417
    %v1419 = vmul.f32 %v1413, 1.442695
    %v1420 = vpow.pop %v1419
    %v1421 = vmul.f32 %v1414, 1.442695
    %v1422 = vpow.pop %v1421
    %v1423 = vsel %vm603, %v1416, 0.0
    %1424 = vadd.xlane.f32.xlu0 %v1423
    %v1425 = vpop.xlane.xlu0 %1424
    %v1426 = vsel %vm607, %v1418, 0.0
    %1427 = vadd.xlane.f32.xlu0 %v1426
    %v1428 = vpop.xlane.xlu0 %1427
    %v1429 = vsel %vm603, %v1420, 0.0
    %1430 = vadd.xlane.f32.xlu0 %v1429
    %v1431 = vpop.xlane.xlu0 %1430
    %v1432 = vsel %vm607, %v1422, 0.0
    %1433 = vadd.xlane.f32.xlu0 %v1432
    %v1434 = vpop.xlane.xlu0 %1433
    %v1435 = vrcp.pop %v1425
    %v1436 = vrcp.pop %v1428
    %v1437 = vrcp.pop %v1431
    %v1438 = vrcp.pop %v1434
    %v1439 = vmul.f32 %v1416, %v1435
    %v1440 = vmul.f32 %v1418, %v1436
    %v1441 = vmul.f32 %v1420, %v1437
    %v1442 = vmul.f32 %v1422, %v1438
    %1443 = vst [vmem:[#allocation1] ss:$9 sm:$0xff] %v434
    %s1444 = scalar_lea.vmem [#allocation1], 1
    %1445 = vst [vmem:[%s1444] ss:$9 sm:$0xff] %v445
    %s1446 = scalar_lea.vmem [#allocation1], 2
    %1447 = vst [vmem:[%s1446] ss:$9 sm:$0xff] %v446
    %s1448 = scalar_lea.vmem [#allocation1], 3
    %1449 = vst [vmem:[%s1448] ss:$9 sm:$0xff] %v447
    %s1450 = scalar_lea.vmem [#allocation1], 4
    %1451 = vst [vmem:[%s1450] ss:$9 sm:$0xff] %v448
    %s1452 = scalar_lea.vmem [#allocation1], 5
    %1453 = vst [vmem:[%s1452] ss:$9 sm:$0xff] %v449
    %s1454 = scalar_lea.vmem [#allocation1], 6
    %1455 = vst [vmem:[%s1454] ss:$9 sm:$0xff] %v450
    %s1456 = scalar_lea.vmem [#allocation1], 7
    %1457 = vst [vmem:[%s1456] ss:$9 sm:$0xff] %v451
    %v1458 = vld [vmem:[#allocation1] sm:$0xff]
    %1459 = vst [vmem:[#allocation1] ss:$9 sm:$0xff] %v437
    %v1460 = vld [vmem:[#allocation1] sm:$0xff]
    %1461 = vrot.lane.b32.xlu0 %v1458, 112
    %v1462 = vpop.permute.xlu0 %1461
    %1463 = vrot.lane.b32.xlu0 %v1460, 112
    %v1464 = vpop.permute.xlu0 %1463
    %v1467 = vsel %vm603, %v1439, 0
    %v1470 = vsel %vm603, %v1440, 0
    %v1472 = vsel %vm674, %v1464, 0
    %1474 = vmatpush.msra.mxu0 0.0
    %1475 = vmatpush.msra.mxu0 0.0
    %1476 = vmatpush.msra.mxu0 0.0
    %1477 = vmatpush.msra.mxu0 0.0
    %1478 = vmatpush.msra.mxu0 0.0
    %1479 = vmatpush.msra.mxu0 0.0
    %1480 = vmatpush.msra.mxu0 0.0
    %1481 = vmatpush.msra.mxu0 0.0
    %1482 = vmatpush.msra.mxu0 0.0
    %1483 = vmatpush.msra.mxu0 0.0
    %1484 = vmatpush.msra.mxu0 0.0
    %1485 = vmatpush.msra.mxu0 0.0
    %1486 = vmatpush.msra.mxu0 0.0
    %1487 = vmatpush.msra.mxu0 0.0
    %1488 = vmatpush.msra.mxu0 %v1472
    %1489 = vmatpush.msra.mxu0 %v1462
    %1490 = vmatmul.f32.gmra.mxu0 %v1467
    %v1491 = vpop.f32.mrf.mxu0
    %v1492 = vadd.f32 0.0, %v1491
    %1493 = vmatmul.f32.gmra.mxu0 %v1470
    %v1494 = vpop.f32.mrf.mxu0
    %v1495 = vadd.f32 0.0, %v1494
    %1496 = vdwg.mxu0
    %1497 = vst [vmem:[#allocation1] ss:$9 sm:$0xff] %v452
    %s1498 = scalar_lea.vmem [#allocation1], 1
    %1499 = vst [vmem:[%s1498] ss:$9 sm:$0xff] %v453
    %s1500 = scalar_lea.vmem [#allocation1], 2
    %1501 = vst [vmem:[%s1500] ss:$9 sm:$0xff] %v454
    %s1502 = scalar_lea.vmem [#allocation1], 3
    %1503 = vst [vmem:[%s1502] ss:$9 sm:$0xff] %v455
    %s1504 = scalar_lea.vmem [#allocation1], 4
    %1505 = vst [vmem:[%s1504] ss:$9 sm:$0xff] %v456
    %s1506 = scalar_lea.vmem [#allocation1], 5
    %1507 = vst [vmem:[%s1506] ss:$9 sm:$0xff] %v457
    %s1508 = scalar_lea.vmem [#allocation1], 6
    %1509 = vst [vmem:[%s1508] ss:$9 sm:$0xff] %v458
    %s1510 = scalar_lea.vmem [#allocation1], 7
    %1511 = vst [vmem:[%s1510] ss:$9 sm:$0xff] %v440
    %v1512 = vld [vmem:[#allocation1] sm:$0xff]
    %1513 = vst [vmem:[#allocation1] ss:$9 sm:$0xff] %v459
    %v1514 = vld [vmem:[#allocation1] sm:$0xff]
    %1515 = vrot.lane.b32.xlu0 %v1512, 112
    %v1516 = vpop.permute.xlu0 %1515
    %1517 = vrot.lane.b32.xlu0 %v1514, 112
    %v1518 = vpop.permute.xlu0 %1517
    %v1521 = vsel %vm603, %v1441, 0
    %v1524 = vsel %vm603, %v1442, 0
    %v1526 = vsel %vm674, %v1518, 0
    %1528 = vmatpush.msra.mxu0 0.0
    %1529 = vmatpush.msra.mxu0 0.0
    %1530 = vmatpush.msra.mxu0 0.0
    %1531 = vmatpush.msra.mxu0 0.0
    %1532 = vmatpush.msra.mxu0 0.0
    %1533 = vmatpush.msra.mxu0 0.0
    %1534 = vmatpush.msra.mxu0 0.0
    %1535 = vmatpush.msra.mxu0 0.0
    %1536 = vmatpush.msra.mxu0 0.0
    %1537 = vmatpush.msra.mxu0 0.0
    %1538 = vmatpush.msra.mxu0 0.0
    %1539 = vmatpush.msra.mxu0 0.0
    %1540 = vmatpush.msra.mxu0 0.0
    %1541 = vmatpush.msra.mxu0 0.0
    %1542 = vmatpush.msra.mxu0 %v1526
    %1543 = vmatpush.msra.mxu0 %v1516
    %1544 = vmatmul.f32.gmra.mxu0 %v1521
    %v1545 = vpop.f32.mrf.mxu0
    %v1546 = vadd.f32 0.0, %v1545
    %1547 = vmatmul.f32.gmra.mxu0 %v1524
    %v1548 = vpop.f32.mrf.mxu0
    %v1549 = vadd.f32 0.0, %v1548
    %1550 = vdwg.mxu0
    %v1555 = vrot.slane %v1492, 1
    %v1556 = vrot.slane %v1492, 2
    %v1557 = vrot.slane %v1492, 3
    %v1558 = vrot.slane %v1492, 4
    %v1559 = vrot.slane %v1492, 5
    %v1560 = vrot.slane %v1492, 6
    %v1561 = vrot.slane %v1492, 7
    %v1562 = vrot.slane %v1546, 1
    %v1563 = vrot.slane %v1546, 2
    %v1564 = vrot.slane %v1546, 3
    %v1565 = vrot.slane %v1546, 4
    %v1566 = vrot.slane %v1546, 5
    %v1567 = vrot.slane %v1546, 6
    %v1568 = vrot.slane %v1546, 7
    %1569 = vst [vmem:[#allocation1] ss:$9 sm:$0xff] %v1492
    %s1570 = scalar_lea.vmem [#allocation1], 1
    %1571 = vst [vmem:[%s1570] ss:$9 sm:$0xff] %v1555
    %s1572 = scalar_lea.vmem [#allocation1], 2
    %1573 = vst [vmem:[%s1572] ss:$9 sm:$0xff] %v1556
    %s1574 = scalar_lea.vmem [#allocation1], 3
    %1575 = vst [vmem:[%s1574] ss:$9 sm:$0xff] %v1557
    %s1576 = scalar_lea.vmem [#allocation1], 4
    %1577 = vst [vmem:[%s1576] ss:$9 sm:$0xff] %v1558
    %s1578 = scalar_lea.vmem [#allocation1], 5
    %1579 = vst [vmem:[%s1578] ss:$9 sm:$0xff] %v1559
    %s1580 = scalar_lea.vmem [#allocation1], 6
    %1581 = vst [vmem:[%s1580] ss:$9 sm:$0xff] %v1560
    %s1582 = scalar_lea.vmem [#allocation1], 7
    %1583 = vst [vmem:[%s1582] ss:$9 sm:$0xff] %v1561
    %v1584 = vld [vmem:[#allocation1] sm:$0xff]
    %1585 = vst [vmem:[#allocation1] ss:$9 sm:$0xff] %v1495
    %1586 = vst [vmem:[%s1570] ss:$9 sm:$0xff] %v1546
    %1587 = vst [vmem:[%s1572] ss:$9 sm:$0xff] %v1562
    %1588 = vst [vmem:[%s1574] ss:$9 sm:$0xff] %v1563
    %1589 = vst [vmem:[%s1576] ss:$9 sm:$0xff] %v1564
    %1590 = vst [vmem:[%s1578] ss:$9 sm:$0xff] %v1565
    %1591 = vst [vmem:[%s1580] ss:$9 sm:$0xff] %v1566
    %1592 = vst [vmem:[%s1582] ss:$9 sm:$0xff] %v1567
    %v1593 = vld [vmem:[#allocation1] sm:$0xff]
    %1594 = vst [vmem:[#allocation1] ss:$9 sm:$0xff] %v1568
    %1595 = vst [vmem:[%s1570] ss:$9 sm:$0xff] %v1549
    %v1596 = vld [vmem:[#allocation1] sm:$0xff]
    %v1597 = vsel %vm500, %v1584, 0
    %v1599 = vsel %vm500, %v1593, 0
    %v1601 = vsel %vm500, %v1596, 0
    %1603 = vmatpush.msra.mxu0 0.0
    %1604 = vmatpush.msra.mxu0 0.0
    %1605 = vmatpush.msra.mxu0 0.0
    %1606 = vmatpush.msra.mxu0 0.0
    %1607 = vmatpush.msra.mxu0 0.0
    %1608 = vmatpush.msra.mxu0 0.0
    %1609 = vmatpush.msra.mxu0 0.0
    %1610 = vmatpush.msra.mxu0 0.0
    %1611 = vmatpush.msra.mxu0 0.0
    %1612 = vmatpush.msra.mxu0 0.0
    %1613 = vmatpush.msra.mxu0 0.0
    %1614 = vmatpush.msra.mxu0 0.0
    %1615 = vmatpush.msra.mxu0 0.0
    %1616 = vmatpush.msra.mxu0 0.0
    %1617 = vmatpush.msra.mxu0 0.0
    %1618 = vmatpush.msra.mxu0 %v462
    %1619 = vmatmul.f32.gmra.mxu0 %v1597
    %v1620 = vpop.f32.mrf.mxu0
    %v1621 = vadd.f32 0.0, %v1620
    %1622 = vmatmul.f32.gmra.mxu0 %v1599
    %v1623 = vpop.f32.mrf.mxu0
    %v1624 = vadd.f32 0.0, %v1623
    %1625 = vmatmul.f32.gmra.mxu0 %v1601
    %v1626 = vpop.f32.mrf.mxu0
    %v1627 = vadd.f32 0.0, %v1626
    %1628 = vdwg.mxu0
    %v1632 = vrot.slane %v1621, 1
    %v1633 = vrot.slane %v1621, 2
    %v1634 = vrot.slane %v1621, 3
    %v1635 = vrot.slane %v1621, 4
    %v1636 = vrot.slane %v1621, 5
    %v1637 = vrot.slane %v1621, 6
    %v1638 = vrot.slane %v1621, 7
    %v1639 = vrot.slane %v1624, 1
    %v1640 = vrot.slane %v1624, 2
    %v1641 = vrot.slane %v1624, 3
    %v1642 = vrot.slane %v1624, 4
    %v1643 = vrot.slane %v1624, 5
    %v1644 = vrot.slane %v1624, 6
    %v1645 = vrot.slane %v1624, 7
    %v1646 = vrot.slane %v1627, 1
    %v1662 = vadd.f32 %v1204, %v1621
    %v1663 = vadd.f32 %v1215, %v1632
    %v1664 = vadd.f32 %v1216, %v1633
    %v1665 = vadd.f32 %v1217, %v1634
    %v1666 = vadd.f32 %v1218, %v1635
    %v1667 = vadd.f32 %v1219, %v1636
    %v1668 = vadd.f32 %v1220, %v1637
    %v1669 = vadd.f32 %v1221, %v1638
    %v1670 = vadd.f32 %v1207, %v1624
    %v1671 = vadd.f32 %v1222, %v1639
    %v1672 = vadd.f32 %v1223, %v1640
    %v1673 = vadd.f32 %v1224, %v1641
    %v1674 = vadd.f32 %v1225, %v1642
    %v1675 = vadd.f32 %v1226, %v1643
    %v1676 = vadd.f32 %v1227, %v1644
    %v1677 = vadd.f32 %v1228, %v1645
    %v1678 = vadd.f32 %v1210, %v1627
    %v1679 = vadd.f32 %v1229, %v1646
    %1680 = vst [vmem:[#allocation1] ss:$9 sm:$0xff] %v434
    %s1681 = scalar_lea.vmem [#allocation1], 1
    %1682 = vst [vmem:[%s1681] ss:$9 sm:$0xff] %v445
    %s1683 = scalar_lea.vmem [#allocation1], 2
    %1684 = vst [vmem:[%s1683] ss:$9 sm:$0xff] %v446
    %s1685 = scalar_lea.vmem [#allocation1], 3
    %1686 = vst [vmem:[%s1685] ss:$9 sm:$0xff] %v447
    %s1687 = scalar_lea.vmem [#allocation1], 4
    %1688 = vst [vmem:[%s1687] ss:$9 sm:$0xff] %v448
    %s1689 = scalar_lea.vmem [#allocation1], 5
    %1690 = vst [vmem:[%s1689] ss:$9 sm:$0xff] %v449
    %s1691 = scalar_lea.vmem [#allocation1], 6
    %1692 = vst [vmem:[%s1691] ss:$9 sm:$0xff] %v450
    %s1693 = scalar_lea.vmem [#allocation1], 7
    %1694 = vst [vmem:[%s1693] ss:$9 sm:$0xff] %v451
    %v1695 = vld [vmem:[#allocation1] sm:$0xff]
    %1696 = vst [vmem:[#allocation1] ss:$9 sm:$0xff] %v437
    %v1697 = vld [vmem:[#allocation1] sm:$0xff]
    %1698 = vrot.lane.b32.xlu0 %v1695, 104
    %v1699 = vpop.permute.xlu0 %1698
    %1700 = vrot.lane.b32.xlu0 %v1697, 104
    %v1701 = vpop.permute.xlu0 %1700
    %1702 = vst [vmem:[#allocation1] ss:$9 sm:$0xff] %v434
    %s1703 = scalar_lea.vmem [#allocation1], 1
    %1704 = vst [vmem:[%s1703] ss:$9 sm:$0xff] %v445
    %s1705 = scalar_lea.vmem [#allocation1], 2
    %1706 = vst [vmem:[%s1705] ss:$9 sm:$0xff] %v446
    %s1707 = scalar_lea.vmem [#allocation1], 3
    %1708 = vst [vmem:[%s1707] ss:$9 sm:$0xff] %v447
    %s1709 = scalar_lea.vmem [#allocation1], 4
    %1710 = vst [vmem:[%s1709] ss:$9 sm:$0xff] %v448
    %s1711 = scalar_lea.vmem [#allocation1], 5
    %1712 = vst [vmem:[%s1711] ss:$9 sm:$0xff] %v449
    %s1713 = scalar_lea.vmem [#allocation1], 6
    %1714 = vst [vmem:[%s1713] ss:$9 sm:$0xff] %v450
    %s1715 = scalar_lea.vmem [#allocation1], 7
    %1716 = vst [vmem:[%s1715] ss:$9 sm:$0xff] %v451
    %v1717 = vld [vmem:[#allocation1] sm:$0xff]
    %1718 = vst [vmem:[#allocation1] ss:$9 sm:$0xff] %v437
    %v1719 = vld [vmem:[#allocation1] sm:$0xff]
    %1720 = vrot.lane.b32.xlu0 %v1717, 104
    %v1721 = vpop.permute.xlu0 %1720
    %1722 = vrot.lane.b32.xlu0 %v1719, 104
    %v1723 = vpop.permute.xlu0 %1722
    %v1724 = vsel %vm500, %v1699, 0
    %v1726 = vsel %vm500, %v1701, 0
    %v1728 = vsel %vm500, %v1721, 0
    %v1730 = vsel %vm500, %v1723, 0
    %1732 = vmatpush.xpose.msra.mxu0 0.0
    %1733 = vmatpush.xpose.msra.mxu0 0.0
    %1734 = vmatpush.xpose.msra.mxu0 0.0
    %1735 = vmatpush.xpose.msra.mxu0 0.0
    %1736 = vmatpush.xpose.msra.mxu0 0.0
    %1737 = vmatpush.xpose.msra.mxu0 0.0
    %1738 = vmatpush.xpose.msra.mxu0 0.0
    %1739 = vmatpush.xpose.msra.mxu0 0.0
    %1740 = vmatpush.xpose.msra.mxu0 0.0
    %1741 = vmatpush.xpose.msra.mxu0 0.0
    %1742 = vmatpush.xpose.msra.mxu0 0.0
    %1743 = vmatpush.xpose.msra.mxu0 0.0
    %1744 = vmatpush.xpose.msra.mxu0 0.0
    %1745 = vmatpush.xpose.msra.mxu0 0.0
    %1746 = vmatpush.xpose.msra.mxu0 %v1730
    %1747 = vmatpush.xpose.msra.mxu0 %v1728
    %1748 = vmatmul.f32.gmra.mxu0 %v1724
    %v1749 = vpop.f32.mrf.mxu0
    %v1750 = vadd.f32 0.0, %v1749
    %1751 = vmatmul.f32.gmra.mxu0 %v1726
    %v1752 = vpop.f32.mrf.mxu0
    %v1753 = vadd.f32 0.0, %v1752
    %1754 = vdwg.mxu0
    %1755 = vst [vmem:[#allocation1] ss:$9 sm:$0xff] %v452
    %s1756 = scalar_lea.vmem [#allocation1], 1
    %1757 = vst [vmem:[%s1756] ss:$9 sm:$0xff] %v453
    %s1758 = scalar_lea.vmem [#allocation1], 2
    %1759 = vst [vmem:[%s1758] ss:$9 sm:$0xff] %v454
    %s1760 = scalar_lea.vmem [#allocation1], 3
    %1761 = vst [vmem:[%s1760] ss:$9 sm:$0xff] %v455
    %s1762 = scalar_lea.vmem [#allocation1], 4
    %1763 = vst [vmem:[%s1762] ss:$9 sm:$0xff] %v456
    %s1764 = scalar_lea.vmem [#allocation1], 5
    %1765 = vst [vmem:[%s1764] ss:$9 sm:$0xff] %v457
    %s1766 = scalar_lea.vmem [#allocation1], 6
    %1767 = vst [vmem:[%s1766] ss:$9 sm:$0xff] %v458
    %s1768 = scalar_lea.vmem [#allocation1], 7
    %1769 = vst [vmem:[%s1768] ss:$9 sm:$0xff] %v440
    %v1770 = vld [vmem:[#allocation1] sm:$0xff]
    %1771 = vst [vmem:[#allocation1] ss:$9 sm:$0xff] %v459
    %v1772 = vld [vmem:[#allocation1] sm:$0xff]
    %1773 = vrot.lane.b32.xlu0 %v1770, 104
    %v1774 = vpop.permute.xlu0 %1773
    %1775 = vrot.lane.b32.xlu0 %v1772, 104
    %v1776 = vpop.permute.xlu0 %1775
    %1777 = vst [vmem:[#allocation1] ss:$9 sm:$0xff] %v452
    %s1778 = scalar_lea.vmem [#allocation1], 1
    %1779 = vst [vmem:[%s1778] ss:$9 sm:$0xff] %v453
    %s1780 = scalar_lea.vmem [#allocation1], 2
    %1781 = vst [vmem:[%s1780] ss:$9 sm:$0xff] %v454
    %s1782 = scalar_lea.vmem [#allocation1], 3
    %1783 = vst [vmem:[%s1782] ss:$9 sm:$0xff] %v455
    %s1784 = scalar_lea.vmem [#allocation1], 4
    %1785 = vst [vmem:[%s1784] ss:$9 sm:$0xff] %v456
    %s1786 = scalar_lea.vmem [#allocation1], 5
    %1787 = vst [vmem:[%s1786] ss:$9 sm:$0xff] %v457
    %s1788 = scalar_lea.vmem [#allocation1], 6
    %1789 = vst [vmem:[%s1788] ss:$9 sm:$0xff] %v458
    %s1790 = scalar_lea.vmem [#allocation1], 7
    %1791 = vst [vmem:[%s1790] ss:$9 sm:$0xff] %v440
    %v1792 = vld [vmem:[#allocation1] sm:$0xff]
    %1793 = vst [vmem:[#allocation1] ss:$9 sm:$0xff] %v459
    %v1794 = vld [vmem:[#allocation1] sm:$0xff]
    %1795 = vrot.lane.b32.xlu0 %v1792, 104
    %v1796 = vpop.permute.xlu0 %1795
    %1797 = vrot.lane.b32.xlu0 %v1794, 104
    %v1798 = vpop.permute.xlu0 %1797
    %v1799 = vsel %vm500, %v1774, 0
    %v1801 = vsel %vm500, %v1776, 0
    %v1803 = vsel %vm500, %v1796, 0
    %v1805 = vsel %vm500, %v1798, 0
    %1807 = vmatpush.xpose.msra.mxu0 0.0
    %1808 = vmatpush.xpose.msra.mxu0 0.0
    %1809 = vmatpush.xpose.msra.mxu0 0.0
    %1810 = vmatpush.xpose.msra.mxu0 0.0
    %1811 = vmatpush.xpose.msra.mxu0 0.0
    %1812 = vmatpush.xpose.msra.mxu0 0.0
    %1813 = vmatpush.xpose.msra.mxu0 0.0
    %1814 = vmatpush.xpose.msra.mxu0 0.0
    %1815 = vmatpush.xpose.msra.mxu0 0.0
    %1816 = vmatpush.xpose.msra.mxu0 0.0
    %1817 = vmatpush.xpose.msra.mxu0 0.0
    %1818 = vmatpush.xpose.msra.mxu0 0.0
    %1819 = vmatpush.xpose.msra.mxu0 0.0
    %1820 = vmatpush.xpose.msra.mxu0 0.0
    %1821 = vmatpush.xpose.msra.mxu0 %v1805
    %1822 = vmatpush.xpose.msra.mxu0 %v1803
    %1823 = vmatmul.f32.gmra.mxu0 %v1799
    %v1824 = vpop.f32.mrf.mxu0
    %v1825 = vadd.f32 0.0, %v1824
    %1826 = vmatmul.f32.gmra.mxu0 %v1801
    %v1827 = vpop.f32.mrf.mxu0
    %v1828 = vadd.f32 0.0, %v1827
    %1829 = vdwg.mxu0
    %v1830 = vmul.f32 %v1750, 0.35355338
    %v1831 = vmul.f32 %v1753, 0.35355338
    %v1832 = vmul.f32 %v1825, 0.35355338
    %v1833 = vmul.f32 %v1828, 0.35355338
    %v1834 = vsel %vm603, %v1830, -inf
    %1835 = vmax.xlane.f32.xlu0 %v1834
    %v1836 = vpop.xlane.xlu0 %1835
    %v1837 = vsel %vm607, %v1831, -inf
    %1838 = vmax.xlane.f32.xlu0 %v1837
    %v1839 = vpop.xlane.xlu0 %1838
    %v1840 = vsel %vm603, %v1832, -inf
    %1841 = vmax.xlane.f32.xlu0 %v1840
    %v1842 = vpop.xlane.xlu0 %1841
    %v1843 = vsel %vm607, %v1833, -inf
    %1844 = vmax.xlane.f32.xlu0 %v1843
    %v1845 = vpop.xlane.xlu0 %1844
    %v1846 = vsub.f32 %v1830, %v1836
    %v1847 = vsub.f32 %v1831, %v1839
    %v1848 = vsub.f32 %v1832, %v1842
    %v1849 = vsub.f32 %v1833, %v1845
    %v1850 = vmul.f32 %v1846, 1.442695
    %v1851 = vpow.pop %v1850
    %v1852 = vmul.f32 %v1847, 1.442695
    %v1853 = vpow.pop %v1852
    %v1854 = vmul.f32 %v1848, 1.442695
    %v1855 = vpow.pop %v1854
    %v1856 = vmul.f32 %v1849, 1.442695
    %v1857 = vpow.pop %v1856
    %v1858 = vsel %vm603, %v1851, 0.0
    %1859 = vadd.xlane.f32.xlu0 %v1858
    %v1860 = vpop.xlane.xlu0 %1859
    %v1861 = vsel %vm607, %v1853, 0.0
    %1862 = vadd.xlane.f32.xlu0 %v1861
    %v1863 = vpop.xlane.xlu0 %1862
    %v1864 = vsel %vm603, %v1855, 0.0
    %1865 = vadd.xlane.f32.xlu0 %v1864
    %v1866 = vpop.xlane.xlu0 %1865
    %v1867 = vsel %vm607, %v1857, 0.0
    %1868 = vadd.xlane.f32.xlu0 %v1867
    %v1869 = vpop.xlane.xlu0 %1868
    %v1870 = vrcp.pop %v1860
    %v1871 = vrcp.pop %v1863
    %v1872 = vrcp.pop %v1866
    %v1873 = vrcp.pop %v1869
    %v1874 = vmul.f32 %v1851, %v1870
    %v1875 = vmul.f32 %v1853, %v1871
    %v1876 = vmul.f32 %v1855, %v1872
    %v1877 = vmul.f32 %v1857, %v1873
    %1878 = vst [vmem:[#allocation1] ss:$9 sm:$0xff] %v434
    %s1879 = scalar_lea.vmem [#allocation1], 1
    %1880 = vst [vmem:[%s1879] ss:$9 sm:$0xff] %v445
    %s1881 = scalar_lea.vmem [#allocation1], 2
    %1882 = vst [vmem:[%s1881] ss:$9 sm:$0xff] %v446
    %s1883 = scalar_lea.vmem [#allocation1], 3
    %1884 = vst [vmem:[%s1883] ss:$9 sm:$0xff] %v447
    %s1885 = scalar_lea.vmem [#allocation1], 4
    %1886 = vst [vmem:[%s1885] ss:$9 sm:$0xff] %v448
    %s1887 = scalar_lea.vmem [#allocation1], 5
    %1888 = vst [vmem:[%s1887] ss:$9 sm:$0xff] %v449
    %s1889 = scalar_lea.vmem [#allocation1], 6
    %1890 = vst [vmem:[%s1889] ss:$9 sm:$0xff] %v450
    %s1891 = scalar_lea.vmem [#allocation1], 7
    %1892 = vst [vmem:[%s1891] ss:$9 sm:$0xff] %v451
    %v1893 = vld [vmem:[#allocation1] sm:$0xff]
    %1894 = vst [vmem:[#allocation1] ss:$9 sm:$0xff] %v437
    %v1895 = vld [vmem:[#allocation1] sm:$0xff]
    %1896 = vrot.lane.b32.xlu0 %v1893, 104
    %v1897 = vpop.permute.xlu0 %1896
    %1898 = vrot.lane.b32.xlu0 %v1895, 104
    %v1899 = vpop.permute.xlu0 %1898
    %v1902 = vsel %vm603, %v1874, 0
    %v1905 = vsel %vm603, %v1875, 0
    %v1907 = vsel %vm674, %v1899, 0
    %1909 = vmatpush.msra.mxu0 0.0
    %1910 = vmatpush.msra.mxu0 0.0
    %1911 = vmatpush.msra.mxu0 0.0
    %1912 = vmatpush.msra.mxu0 0.0
    %1913 = vmatpush.msra.mxu0 0.0
    %1914 = vmatpush.msra.mxu0 0.0
    %1915 = vmatpush.msra.mxu0 0.0
    %1916 = vmatpush.msra.mxu0 0.0
    %1917 = vmatpush.msra.mxu0 0.0
    %1918 = vmatpush.msra.mxu0 0.0
    %1919 = vmatpush.msra.mxu0 0.0
    %1920 = vmatpush.msra.mxu0 0.0
    %1921 = vmatpush.msra.mxu0 0.0
    %1922 = vmatpush.msra.mxu0 0.0
    %1923 = vmatpush.msra.mxu0 %v1907
    %1924 = vmatpush.msra.mxu0 %v1897
    %1925 = vmatmul.f32.gmra.mxu0 %v1902
    %v1926 = vpop.f32.mrf.mxu0
    %v1927 = vadd.f32 0.0, %v1926
    %1928 = vmatmul.f32.gmra.mxu0 %v1905
    %v1929 = vpop.f32.mrf.mxu0
    %v1930 = vadd.f32 0.0, %v1929
    %1931 = vdwg.mxu0
    %1932 = vst [vmem:[#allocation1] ss:$9 sm:$0xff] %v452
    %s1933 = scalar_lea.vmem [#allocation1], 1
    %1934 = vst [vmem:[%s1933] ss:$9 sm:$0xff] %v453
    %s1935 = scalar_lea.vmem [#allocation1], 2
    %1936 = vst [vmem:[%s1935] ss:$9 sm:$0xff] %v454
    %s1937 = scalar_lea.vmem [#allocation1], 3
    %1938 = vst [vmem:[%s1937] ss:$9 sm:$0xff] %v455
    %s1939 = scalar_lea.vmem [#allocation1], 4
    %1940 = vst [vmem:[%s1939] ss:$9 sm:$0xff] %v456
    %s1941 = scalar_lea.vmem [#allocation1], 5
    %1942 = vst [vmem:[%s1941] ss:$9 sm:$0xff] %v457
    %s1943 = scalar_lea.vmem [#allocation1], 6
    %1944 = vst [vmem:[%s1943] ss:$9 sm:$0xff] %v458
    %s1945 = scalar_lea.vmem [#allocation1], 7
    %1946 = vst [vmem:[%s1945] ss:$9 sm:$0xff] %v440
    %v1947 = vld [vmem:[#allocation1] sm:$0xff]
    %1948 = vst [vmem:[#allocation1] ss:$9 sm:$0xff] %v459
    %v1949 = vld [vmem:[#allocation1] sm:$0xff]
    %1950 = vrot.lane.b32.xlu0 %v1947, 104
    %v1951 = vpop.permute.xlu0 %1950
    %1952 = vrot.lane.b32.xlu0 %v1949, 104
    %v1953 = vpop.permute.xlu0 %1952
    %v1956 = vsel %vm603, %v1876, 0
    %v1959 = vsel %vm603, %v1877, 0
    %v1961 = vsel %vm674, %v1953, 0
    %1963 = vmatpush.msra.mxu0 0.0
    %1964 = vmatpush.msra.mxu0 0.0
    %1965 = vmatpush.msra.mxu0 0.0
    %1966 = vmatpush.msra.mxu0 0.0
    %1967 = vmatpush.msra.mxu0 0.0
    %1968 = vmatpush.msra.mxu0 0.0
    %1969 = vmatpush.msra.mxu0 0.0
    %1970 = vmatpush.msra.mxu0 0.0
    %1971 = vmatpush.msra.mxu0 0.0
    %1972 = vmatpush.msra.mxu0 0.0
    %1973 = vmatpush.msra.mxu0 0.0
    %1974 = vmatpush.msra.mxu0 0.0
    %1975 = vmatpush.msra.mxu0 0.0
    %1976 = vmatpush.msra.mxu0 0.0
    %1977 = vmatpush.msra.mxu0 %v1961
    %1978 = vmatpush.msra.mxu0 %v1951
    %1979 = vmatmul.f32.gmra.mxu0 %v1956
    %v1980 = vpop.f32.mrf.mxu0
    %v1981 = vadd.f32 0.0, %v1980
    %1982 = vmatmul.f32.gmra.mxu0 %v1959
    %v1983 = vpop.f32.mrf.mxu0
    %v1984 = vadd.f32 0.0, %v1983
    %1985 = vdwg.mxu0
    %v1990 = vrot.slane %v1927, 1
    %v1991 = vrot.slane %v1927, 2
    %v1992 = vrot.slane %v1927, 3
    %v1993 = vrot.slane %v1927, 4
    %v1994 = vrot.slane %v1927, 5
    %v1995 = vrot.slane %v1927, 6
    %v1996 = vrot.slane %v1927, 7
    %v1997 = vrot.slane %v1981, 1
    %v1998 = vrot.slane %v1981, 2
    %v1999 = vrot.slane %v1981, 3
    %v2000 = vrot.slane %v1981, 4
    %v2001 = vrot.slane %v1981, 5
    %v2002 = vrot.slane %v1981, 6
    %v2003 = vrot.slane %v1981, 7
    %2004 = vst [vmem:[#allocation1] ss:$9 sm:$0xff] %v1927
    %s2005 = scalar_lea.vmem [#allocation1], 1
    %2006 = vst [vmem:[%s2005] ss:$9 sm:$0xff] %v1990
    %s2007 = scalar_lea.vmem [#allocation1], 2
    %2008 = vst [vmem:[%s2007] ss:$9 sm:$0xff] %v1991
    %s2009 = scalar_lea.vmem [#allocation1], 3
    %2010 = vst [vmem:[%s2009] ss:$9 sm:$0xff] %v1992
    %s2011 = scalar_lea.vmem [#allocation1], 4
    %2012 = vst [vmem:[%s2011] ss:$9 sm:$0xff] %v1993
    %s2013 = scalar_lea.vmem [#allocation1], 5
    %2014 = vst [vmem:[%s2013] ss:$9 sm:$0xff] %v1994
    %s2015 = scalar_lea.vmem [#allocation1], 6
    %2016 = vst [vmem:[%s2015] ss:$9 sm:$0xff] %v1995
    %s2017 = scalar_lea.vmem [#allocation1], 7
    %2018 = vst [vmem:[%s2017] ss:$9 sm:$0xff] %v1996
    %v2019 = vld [vmem:[#allocation1] sm:$0xff]
    %2020 = vst [vmem:[#allocation1] ss:$9 sm:$0xff] %v1930
    %2021 = vst [vmem:[%s2005] ss:$9 sm:$0xff] %v1981
    %2022 = vst [vmem:[%s2007] ss:$9 sm:$0xff] %v1997
    %2023 = vst [vmem:[%s2009] ss:$9 sm:$0xff] %v1998
    %2024 = vst [vmem:[%s2011] ss:$9 sm:$0xff] %v1999
    %2025 = vst [vmem:[%s2013] ss:$9 sm:$0xff] %v2000
    %2026 = vst [vmem:[%s2015] ss:$9 sm:$0xff] %v2001
    %2027 = vst [vmem:[%s2017] ss:$9 sm:$0xff] %v2002
    %v2028 = vld [vmem:[#allocation1] sm:$0xff]
    %2029 = vst [vmem:[#allocation1] ss:$9 sm:$0xff] %v2003
    %2030 = vst [vmem:[%s2005] ss:$9 sm:$0xff] %v1984
    %v2031 = vld [vmem:[#allocation1] sm:$0xff]
    %v2032 = vsel %vm500, %v2019, 0
    %v2034 = vsel %vm500, %v2028, 0
    %v2036 = vsel %vm500, %v2031, 0
    %2038 = vmatpush.msra.mxu0 0.0
    %2039 = vmatpush.msra.mxu0 0.0
    %2040 = vmatpush.msra.mxu0 0.0
    %2041 = vmatpush.msra.mxu0 0.0
    %2042 = vmatpush.msra.mxu0 0.0
    %2043 = vmatpush.msra.mxu0 0.0
    %2044 = vmatpush.msra.mxu0 0.0
    %2045 = vmatpush.msra.mxu0 0.0
    %2046 = vmatpush.msra.mxu0 0.0
    %2047 = vmatpush.msra.mxu0 0.0
    %2048 = vmatpush.msra.mxu0 0.0
    %2049 = vmatpush.msra.mxu0 0.0
    %2050 = vmatpush.msra.mxu0 0.0
    %2051 = vmatpush.msra.mxu0 0.0
    %2052 = vmatpush.msra.mxu0 0.0
    %2053 = vmatpush.msra.mxu0 %v463
    %2054 = vmatmul.f32.gmra.mxu0 %v2032
    %v2055 = vpop.f32.mrf.mxu0
    %v2056 = vadd.f32 0.0, %v2055
    %2057 = vmatmul.f32.gmra.mxu0 %v2034
    %v2058 = vpop.f32.mrf.mxu0
    %v2059 = vadd.f32 0.0, %v2058
    %2060 = vmatmul.f32.gmra.mxu0 %v2036
    %v2061 = vpop.f32.mrf.mxu0
    %v2062 = vadd.f32 0.0, %v2061
    %2063 = vdwg.mxu0
    %v2067 = vrot.slane %v2056, 1
    %v2068 = vrot.slane %v2056, 2
    %v2069 = vrot.slane %v2056, 3
    %v2070 = vrot.slane %v2056, 4
    %v2071 = vrot.slane %v2056, 5
    %v2072 = vrot.slane %v2056, 6
    %v2073 = vrot.slane %v2056, 7
    %v2074 = vrot.slane %v2059, 1
    %v2075 = vrot.slane %v2059, 2
    %v2076 = vrot.slane %v2059, 3
    %v2077 = vrot.slane %v2059, 4
    %v2078 = vrot.slane %v2059, 5
    %v2079 = vrot.slane %v2059, 6
    %v2080 = vrot.slane %v2059, 7
    %v2081 = vrot.slane %v2062, 1
    %v2097 = vadd.f32 %v1662, %v2056
    %v2098 = vadd.f32 %v1663, %v2067
    %v2099 = vadd.f32 %v1664, %v2068
    %v2100 = vadd.f32 %v1665, %v2069
    %v2101 = vadd.f32 %v1666, %v2070
    %v2102 = vadd.f32 %v1667, %v2071
    %v2103 = vadd.f32 %v1668, %v2072
    %v2104 = vadd.f32 %v1669, %v2073
    %v2105 = vadd.f32 %v1670, %v2059
    %v2106 = vadd.f32 %v1671, %v2074
    %v2107 = vadd.f32 %v1672, %v2075
    %v2108 = vadd.f32 %v1673, %v2076
    %v2109 = vadd.f32 %v1674, %v2077
    %v2110 = vadd.f32 %v1675, %v2078
    %v2111 = vadd.f32 %v1676, %v2079
    %v2112 = vadd.f32 %v1677, %v2080
    %v2113 = vadd.f32 %v1678, %v2062
    %v2114 = vadd.f32 %v1679, %v2081
    %v2115 = vld [vmem:[%s13] sm:$0x1]
    %v2117 = vperm.slane %v2115, 0
    %v2119 = vrot.slane %v2117, 1
    %v2120 = vrot.slane %v2117, 2
    %v2121 = vrot.slane %v2117, 3
    %v2122 = vrot.slane %v2117, 4
    %v2123 = vrot.slane %v2117, 5
    %v2124 = vrot.slane %v2117, 6
    %v2125 = vrot.slane %v2117, 7
    %v2133 = vadd.f32 %v2097, %v2117
    %v2134 = vadd.f32 %v2098, %v2119
    %v2135 = vadd.f32 %v2099, %v2120
    %v2136 = vadd.f32 %v2100, %v2121
    %v2137 = vadd.f32 %v2101, %v2122
    %v2138 = vadd.f32 %v2102, %v2123
    %v2139 = vadd.f32 %v2103, %v2124
    %v2140 = vadd.f32 %v2104, %v2125
    %v2141 = vadd.f32 %v2105, %v2117
    %v2142 = vadd.f32 %v2106, %v2117
    %v2143 = vadd.f32 %v2107, %v2119
    %v2144 = vadd.f32 %v2108, %v2120
    %v2145 = vadd.f32 %v2109, %v2121
    %v2146 = vadd.f32 %v2110, %v2122
    %v2147 = vadd.f32 %v2111, %v2123
    %v2148 = vadd.f32 %v2112, %v2124
    %v2149 = vadd.f32 %v2113, %v2125
    %v2150 = vadd.f32 %v2114, %v2117
    %v2153 = vrot.slane %v252, 1
    %v2154 = vrot.slane %v252, 2
    %v2155 = vrot.slane %v252, 3
    %v2156 = vrot.slane %v252, 4
    %v2157 = vrot.slane %v252, 5
    %v2158 = vrot.slane %v252, 6
    %v2159 = vrot.slane %v252, 7
    %v2160 = vrot.slane %v254, 1
    %v2161 = vrot.slane %v254, 2
    %v2162 = vrot.slane %v254, 3
    %v2163 = vrot.slane %v254, 4
    %v2164 = vrot.slane %v254, 5
    %v2165 = vrot.slane %v254, 6
    %v2166 = vrot.slane %v254, 7
    %v2181 = vadd.f32 %v2133, %v252
    %v2182 = vadd.f32 %v2134, %v2153
    %v2183 = vadd.f32 %v2135, %v2154
    %v2184 = vadd.f32 %v2136, %v2155
    %v2185 = vadd.f32 %v2137, %v2156
    %v2186 = vadd.f32 %v2138, %v2157
    %v2187 = vadd.f32 %v2139, %v2158
    %v2188 = vadd.f32 %v2140, %v2159
    %v2189 = vadd.f32 %v2141, %v253
    %v2190 = vadd.f32 %v2142, %v254
    %v2191 = vadd.f32 %v2143, %v2160
    %v2192 = vadd.f32 %v2144, %v2161
    %v2193 = vadd.f32 %v2145, %v2162
    %v2194 = vadd.f32 %v2146, %v2163
    %v2195 = vadd.f32 %v2147, %v2164
    %v2196 = vadd.f32 %v2148, %v2165
    %v2197 = vadd.f32 %v2149, %v2166
    %v2198 = vadd.f32 %v2150, %v255
    %v2199 = vld [vmem:[%s14] sm:$0x1]
    %v2200 = vld [vmem:[%s15] sm:$0x1]
    %2219 = vst [vmem:[#allocation1] ss:$9 sm:$0xff] %v2181
    %s2220 = scalar_lea.vmem [#allocation1], 1
    %2221 = vst [vmem:[%s2220] ss:$9 sm:$0xff] %v2182
    %s2222 = scalar_lea.vmem [#allocation1], 2
    %2223 = vst [vmem:[%s2222] ss:$9 sm:$0xff] %v2183
    %s2224 = scalar_lea.vmem [#allocation1], 3
    %2225 = vst [vmem:[%s2224] ss:$9 sm:$0xff] %v2184
    %s2226 = scalar_lea.vmem [#allocation1], 4
    %2227 = vst [vmem:[%s2226] ss:$9 sm:$0xff] %v2185
    %s2228 = scalar_lea.vmem [#allocation1], 5
    %2229 = vst [vmem:[%s2228] ss:$9 sm:$0xff] %v2186
    %s2230 = scalar_lea.vmem [#allocation1], 6
    %2231 = vst [vmem:[%s2230] ss:$9 sm:$0xff] %v2187
    %s2232 = scalar_lea.vmem [#allocation1], 7
    %2233 = vst [vmem:[%s2232] ss:$9 sm:$0xff] %v2188
    %v2234 = vld [vmem:[#allocation1] sm:$0xff]
    %2235 = vst [vmem:[#allocation1] ss:$9 sm:$0xff] %v2189
    %v2236 = vld [vmem:[#allocation1] sm:$0xff]
    %2237 = vst [vmem:[#allocation1] ss:$9 sm:$0xff] %v2190
    %2238 = vst [vmem:[%s2220] ss:$9 sm:$0xff] %v2191
    %2239 = vst [vmem:[%s2222] ss:$9 sm:$0xff] %v2192
    %2240 = vst [vmem:[%s2224] ss:$9 sm:$0xff] %v2193
    %2241 = vst [vmem:[%s2226] ss:$9 sm:$0xff] %v2194
    %2242 = vst [vmem:[%s2228] ss:$9 sm:$0xff] %v2195
    %2243 = vst [vmem:[%s2230] ss:$9 sm:$0xff] %v2196
    %2244 = vst [vmem:[%s2232] ss:$9 sm:$0xff] %v2197
    %v2245 = vld [vmem:[#allocation1] sm:$0xff]
    %2246 = vst [vmem:[#allocation1] ss:$9 sm:$0xff] %v2198
    %v2247 = vld [vmem:[#allocation1] sm:$0xff]
    %v2252 = vsel %vm79, %v2234, 0.0
    %2253 = vadd.xlane.f32.xlu0 %v2252
    %v2254 = vpop.xlane.xlu0 %2253
    %v2255 = vsel %vm238, %v2236, 0.0
    %2256 = vadd.xlane.f32.xlu0 %v2255
    %v2257 = vpop.xlane.xlu0 %2256
    %v2258 = vsel %vm79, %v2245, 0.0
    %2259 = vadd.xlane.f32.xlu0 %v2258
    %v2260 = vpop.xlane.xlu0 %2259
    %v2261 = vsel %vm238, %v2247, 0.0
    %2262 = vadd.xlane.f32.xlu0 %v2261
    %v2263 = vpop.xlane.xlu0 %2262
    %v2264 = vmul.f32 %v2254, %v92
    %v2265 = vmul.f32 %v2257, %v92
    %v2266 = vmul.f32 %v2260, %v92
    %v2267 = vmul.f32 %v2263, %v92
    %v2272 = vperm.slane %v2264, 0
    %v2273 = vperm.slane %v2264, 1
    %v2274 = vperm.slane %v2264, 2
    %v2275 = vperm.slane %v2264, 3
    %v2276 = vperm.slane %v2264, 4
    %v2277 = vperm.slane %v2264, 5
    %v2278 = vperm.slane %v2264, 6
    %v2279 = vperm.slane %v2264, 7
    %v2280 = vperm.slane %v2265, 0
    %v2281 = vperm.slane %v2266, 0
    %v2282 = vperm.slane %v2266, 1
    %v2283 = vperm.slane %v2266, 2
    %v2284 = vperm.slane %v2266, 3
    %v2285 = vperm.slane %v2266, 4
    %v2286 = vperm.slane %v2266, 5
    %v2287 = vperm.slane %v2266, 6
    %v2288 = vperm.slane %v2266, 7
    %v2289 = vperm.slane %v2267, 0
    %v2308 = vsub.f32 %v2181, %v2272
    %v2309 = vsub.f32 %v2182, %v2273
    %v2310 = vsub.f32 %v2183, %v2274
    %v2311 = vsub.f32 %v2184, %v2275
    %v2312 = vsub.f32 %v2185, %v2276
    %v2313 = vsub.f32 %v2186, %v2277
    %v2314 = vsub.f32 %v2187, %v2278
    %v2315 = vsub.f32 %v2188, %v2279
    %v2316 = vsub.f32 %v2189, %v2280
    %v2317 = vsub.f32 %v2190, %v2281
    %v2318 = vsub.f32 %v2191, %v2282
    %v2319 = vsub.f32 %v2192, %v2283
    %v2320 = vsub.f32 %v2193, %v2284
    %v2321 = vsub.f32 %v2194, %v2285
    %v2322 = vsub.f32 %v2195, %v2286
    %v2323 = vsub.f32 %v2196, %v2287
    %v2324 = vsub.f32 %v2197, %v2288
    %v2325 = vsub.f32 %v2198, %v2289
    %v2326 = vmul.f32 %v2308, %v2308
    %v2327 = vmul.f32 %v2309, %v2309
    %v2328 = vmul.f32 %v2310, %v2310
    %v2329 = vmul.f32 %v2311, %v2311
    %v2330 = vmul.f32 %v2312, %v2312
    %v2331 = vmul.f32 %v2313, %v2313
    %v2332 = vmul.f32 %v2314, %v2314
    %v2333 = vmul.f32 %v2315, %v2315
    %v2334 = vmul.f32 %v2316, %v2316
    %v2335 = vmul.f32 %v2317, %v2317
    %v2336 = vmul.f32 %v2318, %v2318
    %v2337 = vmul.f32 %v2319, %v2319
    %v2338 = vmul.f32 %v2320, %v2320
    %v2339 = vmul.f32 %v2321, %v2321
    %v2340 = vmul.f32 %v2322, %v2322
    %v2341 = vmul.f32 %v2323, %v2323
    %v2342 = vmul.f32 %v2324, %v2324
    %v2343 = vmul.f32 %v2325, %v2325
    %2362 = vst [vmem:[#allocation1] ss:$9 sm:$0xff] %v2326
    %s2363 = scalar_lea.vmem [#allocation1], 1
    %2364 = vst [vmem:[%s2363] ss:$9 sm:$0xff] %v2327
    %s2365 = scalar_lea.vmem [#allocation1], 2
    %2366 = vst [vmem:[%s2365] ss:$9 sm:$0xff] %v2328
    %s2367 = scalar_lea.vmem [#allocation1], 3
    %2368 = vst [vmem:[%s2367] ss:$9 sm:$0xff] %v2329
    %s2369 = scalar_lea.vmem [#allocation1], 4
    %2370 = vst [vmem:[%s2369] ss:$9 sm:$0xff] %v2330
    %s2371 = scalar_lea.vmem [#allocation1], 5
    %2372 = vst [vmem:[%s2371] ss:$9 sm:$0xff] %v2331
    %s2373 = scalar_lea.vmem [#allocation1], 6
    %2374 = vst [vmem:[%s2373] ss:$9 sm:$0xff] %v2332
    %s2375 = scalar_lea.vmem [#allocation1], 7
    %2376 = vst [vmem:[%s2375] ss:$9 sm:$0xff] %v2333
    %v2377 = vld [vmem:[#allocation1] sm:$0xff]
    %2378 = vst [vmem:[#allocation1] ss:$9 sm:$0xff] %v2334
    %v2379 = vld [vmem:[#allocation1] sm:$0xff]
    %2380 = vst [vmem:[#allocation1] ss:$9 sm:$0xff] %v2335
    %2381 = vst [vmem:[%s2363] ss:$9 sm:$0xff] %v2336
    %2382 = vst [vmem:[%s2365] ss:$9 sm:$0xff] %v2337
    %2383 = vst [vmem:[%s2367] ss:$9 sm:$0xff] %v2338
    %2384 = vst [vmem:[%s2369] ss:$9 sm:$0xff] %v2339
    %2385 = vst [vmem:[%s2371] ss:$9 sm:$0xff] %v2340
    %2386 = vst [vmem:[%s2373] ss:$9 sm:$0xff] %v2341
    %2387 = vst [vmem:[%s2375] ss:$9 sm:$0xff] %v2342
    %v2388 = vld [vmem:[#allocation1] sm:$0xff]
    %2389 = vst [vmem:[#allocation1] ss:$9 sm:$0xff] %v2343
    %v2390 = vld [vmem:[#allocation1] sm:$0xff]
    %v2395 = vsel %vm79, %v2377, 0.0
    %2396 = vadd.xlane.f32.xlu0 %v2395
    %v2397 = vpop.xlane.xlu0 %2396
    %v2398 = vsel %vm238, %v2379, 0.0
    %2399 = vadd.xlane.f32.xlu0 %v2398
    %v2400 = vpop.xlane.xlu0 %2399
    %v2401 = vsel %vm79, %v2388, 0.0
    %2402 = vadd.xlane.f32.xlu0 %v2401
    %v2403 = vpop.xlane.xlu0 %2402
    %v2404 = vsel %vm238, %v2390, 0.0
    %2405 = vadd.xlane.f32.xlu0 %v2404
    %v2406 = vpop.xlane.xlu0 %2405
    %v2407 = vmul.f32 %v2397, %v92
    %v2408 = vmul.f32 %v2400, %v92
    %v2409 = vmul.f32 %v2403, %v92
    %v2410 = vmul.f32 %v2406, %v92
    %v2411 = vadd.f32 %v2407, 1e-05
    %v2412 = vadd.f32 %v2408, 1e-05
    %v2413 = vadd.f32 %v2409, 1e-05
    %v2414 = vadd.f32 %v2410, 1e-05
    %v2415 = vrsqrt.pop %v2411
    %v2416 = vmul.f32 %v2415, %v2411
    %v2417 = vmul.f32 %v2416, %v2415
    %v2418 = vmul.f32 0.5, %v2417
    %v2419 = vsub.f32 1.5, %v2418
    %v2420 = vmul.f32 %v2415, %v2419
    %vm2421 = vweird.f32 %v2411
    %vm2422 = vweird.f32 %v2415
    %vm2423 = vmor %vm2421, %vm2422
    %v2424 = vsel %vm2423, %v2415, %v2420
    %v2425 = vrsqrt.pop %v2412
    %v2426 = vmul.f32 %v2425, %v2412
    %v2427 = vmul.f32 %v2426, %v2425
    %v2428 = vmul.f32 0.5, %v2427
    %v2429 = vsub.f32 1.5, %v2428
    %v2430 = vmul.f32 %v2425, %v2429
    %vm2431 = vweird.f32 %v2412
    %vm2432 = vweird.f32 %v2425
    %vm2433 = vmor %vm2431, %vm2432
    %v2434 = vsel %vm2433, %v2425, %v2430
    %v2435 = vrsqrt.pop %v2413
    %v2436 = vmul.f32 %v2435, %v2413
    %v2437 = vmul.f32 %v2436, %v2435
    %v2438 = vmul.f32 0.5, %v2437
    %v2439 = vsub.f32 1.5, %v2438
    %v2440 = vmul.f32 %v2435, %v2439
    %vm2441 = vweird.f32 %v2413
    %vm2442 = vweird.f32 %v2435
    %vm2443 = vmor %vm2441, %vm2442
    %v2444 = vsel %vm2443, %v2435, %v2440
    %v2445 = vrsqrt.pop %v2414
    %v2446 = vmul.f32 %v2445, %v2414
    %v2447 = vmul.f32 %v2446, %v2445
    %v2448 = vmul.f32 0.5, %v2447
    %v2449 = vsub.f32 1.5, %v2448
    %v2450 = vmul.f32 %v2445, %v2449
    %vm2451 = vweird.f32 %v2414
    %vm2452 = vweird.f32 %v2445
    %vm2453 = vmor %vm2451, %vm2452
    %v2454 = vsel %vm2453, %v2445, %v2450
    %v2459 = vperm.slane %v2424, 0
    %v2460 = vperm.slane %v2424, 1
    %v2461 = vperm.slane %v2424, 2
    %v2462 = vperm.slane %v2424, 3
    %v2463 = vperm.slane %v2424, 4
    %v2464 = vperm.slane %v2424, 5
    %v2465 = vperm.slane %v2424, 6
    %v2466 = vperm.slane %v2424, 7
    %v2467 = vperm.slane %v2434, 0
    %v2468 = vperm.slane %v2444, 0
    %v2469 = vperm.slane %v2444, 1
    %v2470 = vperm.slane %v2444, 2
    %v2471 = vperm.slane %v2444, 3
    %v2472 = vperm.slane %v2444, 4
    %v2473 = vperm.slane %v2444, 5
    %v2474 = vperm.slane %v2444, 6
    %v2475 = vperm.slane %v2444, 7
    %v2476 = vperm.slane %v2454, 0
    %v2495 = vmul.f32 %v2308, %v2459
    %v2496 = vmul.f32 %v2309, %v2460
    %v2497 = vmul.f32 %v2310, %v2461
    %v2498 = vmul.f32 %v2311, %v2462
    %v2499 = vmul.f32 %v2312, %v2463
    %v2500 = vmul.f32 %v2313, %v2464
    %v2501 = vmul.f32 %v2314, %v2465
    %v2502 = vmul.f32 %v2315, %v2466
    %v2503 = vmul.f32 %v2316, %v2467
    %v2504 = vmul.f32 %v2317, %v2468
    %v2505 = vmul.f32 %v2318, %v2469
    %v2506 = vmul.f32 %v2319, %v2470
    %v2507 = vmul.f32 %v2320, %v2471
    %v2508 = vmul.f32 %v2321, %v2472
    %v2509 = vmul.f32 %v2322, %v2473
    %v2510 = vmul.f32 %v2323, %v2474
    %v2511 = vmul.f32 %v2324, %v2475
    %v2512 = vmul.f32 %v2325, %v2476
    %v2514 = vperm.slane %v2199, 0
    %v2516 = vrot.slane %v2514, 1
    %v2517 = vrot.slane %v2514, 2
    %v2518 = vrot.slane %v2514, 3
    %v2519 = vrot.slane %v2514, 4
    %v2520 = vrot.slane %v2514, 5
    %v2521 = vrot.slane %v2514, 6
    %v2522 = vrot.slane %v2514, 7
    %v2530 = vmul.f32 %v2495, %v2514
    %v2531 = vmul.f32 %v2496, %v2516
    %v2532 = vmul.f32 %v2497, %v2517
    %v2533 = vmul.f32 %v2498, %v2518
    %v2534 = vmul.f32 %v2499, %v2519
    %v2535 = vmul.f32 %v2500, %v2520
    %v2536 = vmul.f32 %v2501, %v2521
    %v2537 = vmul.f32 %v2502, %v2522
    %v2538 = vmul.f32 %v2503, %v2514
    %v2539 = vmul.f32 %v2504, %v2514
    %v2540 = vmul.f32 %v2505, %v2516
    %v2541 = vmul.f32 %v2506, %v2517
    %v2542 = vmul.f32 %v2507, %v2518
    %v2543 = vmul.f32 %v2508, %v2519
    %v2544 = vmul.f32 %v2509, %v2520
    %v2545 = vmul.f32 %v2510, %v2521
    %v2546 = vmul.f32 %v2511, %v2522
    %v2547 = vmul.f32 %v2512, %v2514
    %v2549 = vperm.slane %v2200, 0
    %v2551 = vrot.slane %v2549, 1
    %v2552 = vrot.slane %v2549, 2
    %v2553 = vrot.slane %v2549, 3
    %v2554 = vrot.slane %v2549, 4
    %v2555 = vrot.slane %v2549, 5
    %v2556 = vrot.slane %v2549, 6
    %v2557 = vrot.slane %v2549, 7
    %v2565 = vadd.f32 %v2530, %v2549
    %v2566 = vadd.f32 %v2531, %v2551
    %v2567 = vadd.f32 %v2532, %v2552
    %v2568 = vadd.f32 %v2533, %v2553
    %v2569 = vadd.f32 %v2534, %v2554
    %v2570 = vadd.f32 %v2535, %v2555
    %v2571 = vadd.f32 %v2536, %v2556
    %v2572 = vadd.f32 %v2537, %v2557
    %v2573 = vadd.f32 %v2538, %v2549
    %v2574 = vadd.f32 %v2539, %v2549
    %v2575 = vadd.f32 %v2540, %v2551
    %v2576 = vadd.f32 %v2541, %v2552
    %v2577 = vadd.f32 %v2542, %v2553
    %v2578 = vadd.f32 %v2543, %v2554
    %v2579 = vadd.f32 %v2544, %v2555
    %v2580 = vadd.f32 %v2545, %v2556
    %v2581 = vadd.f32 %v2546, %v2557
    %v2582 = vadd.f32 %v2547, %v2549
    %v2583 = vld [vmem:[%s16] sm:$0xff]
    %v2584 = vld [vmem:[%s16 + $0x8] sm:$0xff]
    %v2585 = vld [vmem:[%s16 + $0x10] sm:$0xff]
    %v2586 = vld [vmem:[%s16 + $0x18] sm:$0xff]
    %2605 = vst [vmem:[#allocation1] ss:$9 sm:$0xff] %v2565
    %s2606 = scalar_lea.vmem [#allocation1], 1
    %2607 = vst [vmem:[%s2606] ss:$9 sm:$0xff] %v2566
    %s2608 = scalar_lea.vmem [#allocation1], 2
    %2609 = vst [vmem:[%s2608] ss:$9 sm:$0xff] %v2567
    %s2610 = scalar_lea.vmem [#allocation1], 3
    %2611 = vst [vmem:[%s2610] ss:$9 sm:$0xff] %v2568
    %s2612 = scalar_lea.vmem [#allocation1], 4
    %2613 = vst [vmem:[%s2612] ss:$9 sm:$0xff] %v2569
    %s2614 = scalar_lea.vmem [#allocation1], 5
    %2615 = vst [vmem:[%s2614] ss:$9 sm:$0xff] %v2570
    %s2616 = scalar_lea.vmem [#allocation1], 6
    %2617 = vst [vmem:[%s2616] ss:$9 sm:$0xff] %v2571
    %s2618 = scalar_lea.vmem [#allocation1], 7
    %2619 = vst [vmem:[%s2618] ss:$9 sm:$0xff] %v2572
    %v2620 = vld [vmem:[#allocation1] sm:$0xff]
    %2621 = vst [vmem:[#allocation1] ss:$9 sm:$0xff] %v2573
    %2622 = vst [vmem:[%s2606] ss:$9 sm:$0xff] %v2574
    %2623 = vst [vmem:[%s2608] ss:$9 sm:$0xff] %v2575
    %2624 = vst [vmem:[%s2610] ss:$9 sm:$0xff] %v2576
    %2625 = vst [vmem:[%s2612] ss:$9 sm:$0xff] %v2577
    %2626 = vst [vmem:[%s2614] ss:$9 sm:$0xff] %v2578
    %2627 = vst [vmem:[%s2616] ss:$9 sm:$0xff] %v2579
    %2628 = vst [vmem:[%s2618] ss:$9 sm:$0xff] %v2580
    %v2629 = vld [vmem:[#allocation1] sm:$0xff]
    %2630 = vst [vmem:[#allocation1] ss:$9 sm:$0xff] %v2581
    %2631 = vst [vmem:[%s2606] ss:$9 sm:$0xff] %v2582
    %v2632 = vld [vmem:[#allocation1] sm:$0xff]
    %v2633 = vsel %vm79, %v2620, 0
    %v2635 = vsel %vm79, %v2629, 0
    %v2637 = vsel %vm79, %v2632, 0
    %v2640 = vsel %vm79, %v2583, 0
    %v2643 = vsel %vm79, %v2584, 0
    %v2646 = vsel %vm79, %v2585, 0
    %v2649 = vsel %vm79, %v2586, 0
    %2651 = vmatpush.xpose.msra.mxu0 0.0
    %2652 = vmatpush.xpose.msra.mxu0 0.0
    %2653 = vmatpush.xpose.msra.mxu0 0.0
    %2654 = vmatpush.xpose.msra.mxu0 0.0
    %2655 = vmatpush.xpose.msra.mxu0 0.0
    %2656 = vmatpush.xpose.msra.mxu0 0.0
    %2657 = vmatpush.xpose.msra.mxu0 0.0
    %2658 = vmatpush.xpose.msra.mxu0 0.0
    %2659 = vmatpush.xpose.msra.mxu0 0.0
    %2660 = vmatpush.xpose.msra.mxu0 0.0
    %2661 = vmatpush.xpose.msra.mxu0 0.0
    %2662 = vmatpush.xpose.msra.mxu0 0.0
    %2663 = vmatpush.xpose.msra.mxu0 %v2649
    %2664 = vmatpush.xpose.msra.mxu0 %v2646
    %2665 = vmatpush.xpose.msra.mxu0 %v2643
    %2666 = vmatpush.xpose.msra.mxu0 %v2640
    %2667 = vmatmul.f32.gmra.mxu0 %v2633
    %v2668 = vpop.f32.mrf.mxu0
    %v2669 = vadd.f32 0.0, %v2668
    %2670 = vmatmul.f32.gmra.mxu0 %v2635
    %v2671 = vpop.f32.mrf.mxu0
    %v2672 = vadd.f32 0.0, %v2671
    %2673 = vmatmul.f32.gmra.mxu0 %v2637
    %v2674 = vpop.f32.mrf.mxu0
    %v2675 = vadd.f32 0.0, %v2674
    %2676 = vdwg.mxu0
    %v2680 = vrot.slane %v2669, 1
    %v2681 = vrot.slane %v2669, 2
    %v2682 = vrot.slane %v2669, 3
    %v2683 = vrot.slane %v2669, 4
    %v2684 = vrot.slane %v2669, 5
    %v2685 = vrot.slane %v2669, 6
    %v2686 = vrot.slane %v2669, 7
    %v2687 = vrot.slane %v2672, 1
    %v2688 = vrot.slane %v2672, 2
    %v2689 = vrot.slane %v2672, 3
    %v2690 = vrot.slane %v2672, 4
    %v2691 = vrot.slane %v2672, 5
    %v2692 = vrot.slane %v2672, 6
    %v2693 = vrot.slane %v2672, 7
    %v2694 = vrot.slane %v2675, 1
    %v2710 = vsub.f32 %v2565, %v2669
    %v2711 = vsub.f32 %v2566, %v2680
    %v2712 = vsub.f32 %v2567, %v2681
    %v2713 = vsub.f32 %v2568, %v2682
    %v2714 = vsub.f32 %v2569, %v2683
    %v2715 = vsub.f32 %v2570, %v2684
    %v2716 = vsub.f32 %v2571, %v2685
    %v2717 = vsub.f32 %v2572, %v2686
    %v2718 = vsub.f32 %v2573, %v2672
    %v2719 = vsub.f32 %v2574, %v2687
    %v2720 = vsub.f32 %v2575, %v2688
    %v2721 = vsub.f32 %v2576, %v2689
    %v2722 = vsub.f32 %v2577, %v2690
    %v2723 = vsub.f32 %v2578, %v2691
    %v2724 = vsub.f32 %v2579, %v2692
    %v2725 = vsub.f32 %v2580, %v2693
    %v2726 = vsub.f32 %v2581, %v2675
    %v2727 = vsub.f32 %v2582, %v2694
    %2746 = vst [vmem:[#allocation1] ss:$9 sm:$0xff] %v2710
    %s2747 = scalar_lea.vmem [#allocation1], 1
    %2748 = vst [vmem:[%s2747] ss:$9 sm:$0xff] %v2711
    %s2749 = scalar_lea.vmem [#allocation1], 2
    %2750 = vst [vmem:[%s2749] ss:$9 sm:$0xff] %v2712
    %s2751 = scalar_lea.vmem [#allocation1], 3
    %2752 = vst [vmem:[%s2751] ss:$9 sm:$0xff] %v2713
    %s2753 = scalar_lea.vmem [#allocation1], 4
    %2754 = vst [vmem:[%s2753] ss:$9 sm:$0xff] %v2714
    %s2755 = scalar_lea.vmem [#allocation1], 5
    %2756 = vst [vmem:[%s2755] ss:$9 sm:$0xff] %v2715
    %s2757 = scalar_lea.vmem [#allocation1], 6
    %2758 = vst [vmem:[%s2757] ss:$9 sm:$0xff] %v2716
    %s2759 = scalar_lea.vmem [#allocation1], 7
    %2760 = vst [vmem:[%s2759] ss:$9 sm:$0xff] %v2717
    %v2761 = vld [vmem:[#allocation1] sm:$0xff]
    %2762 = vst [vmem:[#allocation1] ss:$9 sm:$0xff] %v2718
    %2763 = vst [vmem:[%s2747] ss:$9 sm:$0xff] %v2719
    %2764 = vst [vmem:[%s2749] ss:$9 sm:$0xff] %v2720
    %2765 = vst [vmem:[%s2751] ss:$9 sm:$0xff] %v2721
    %2766 = vst [vmem:[%s2753] ss:$9 sm:$0xff] %v2722
    %2767 = vst [vmem:[%s2755] ss:$9 sm:$0xff] %v2723
    %2768 = vst [vmem:[%s2757] ss:$9 sm:$0xff] %v2724
    %2769 = vst [vmem:[%s2759] ss:$9 sm:$0xff] %v2725
    %v2770 = vld [vmem:[#allocation1] sm:$0xff]
    %2771 = vst [vmem:[#allocation1] ss:$9 sm:$0xff] %v2726
    %2772 = vst [vmem:[%s2747] ss:$9 sm:$0xff] %v2727
    %v2773 = vld [vmem:[#allocation1] sm:$0xff]
    %v2774 = vsel %vm79, %v2761, 0
    %v2776 = vsel %vm79, %v2770, 0
    %v2778 = vsel %vm79, %v2773, 0
    %2780 = vmatpush.msra.mxu0 0.0
    %2781 = vmatpush.msra.mxu0 0.0
    %2782 = vmatpush.msra.mxu0 0.0
    %2783 = vmatpush.msra.mxu0 0.0
    %2784 = vmatpush.msra.mxu0 0.0
    %2785 = vmatpush.msra.mxu0 0.0
    %2786 = vmatpush.msra.mxu0 0.0
    %2787 = vmatpush.msra.mxu0 0.0
    %2788 = vmatpush.msra.mxu0 0.0
    %2789 = vmatpush.msra.mxu0 0.0
    %2790 = vmatpush.msra.mxu0 0.0
    %2791 = vmatpush.msra.mxu0 0.0
    %2792 = vmatpush.msra.mxu0 %v2586
    %2793 = vmatpush.msra.mxu0 %v2585
    %2794 = vmatpush.msra.mxu0 %v2584
    %2795 = vmatpush.msra.mxu0 %v2583
    %2796 = vmatmul.f32.gmra.mxu0 %v2774
    %v2797 = vpop.f32.mrf.mxu0
    %v2798 = vadd.f32 0.0, %v2797
    %2799 = vmatmul.f32.gmra.mxu0 %v2776
    %v2800 = vpop.f32.mrf.mxu0
    %v2801 = vadd.f32 0.0, %v2800
    %2802 = vmatmul.f32.gmra.mxu0 %v2778
    %v2803 = vpop.f32.mrf.mxu0
    %v2804 = vadd.f32 0.0, %v2803
    %2805 = vdwg.mxu0
    %v2809 = vrot.slane %v2798, 1
    %v2810 = vrot.slane %v2798, 2
    %v2811 = vrot.slane %v2798, 3
    %v2812 = vrot.slane %v2798, 4
    %v2813 = vrot.slane %v2798, 5
    %v2814 = vrot.slane %v2798, 6
    %v2815 = vrot.slane %v2798, 7
    %v2816 = vrot.slane %v2801, 1
    %v2817 = vrot.slane %v2801, 2
    %v2818 = vrot.slane %v2801, 3
    %v2819 = vrot.slane %v2801, 4
    %v2820 = vrot.slane %v2801, 5
    %v2821 = vrot.slane %v2801, 6
    %v2822 = vrot.slane %v2801, 7
    %v2823 = vrot.slane %v2804, 1
    %v2839 = vmul.f32 %v2798, 0.1
    %v2840 = vmul.f32 %v2809, 0.1
    %v2841 = vmul.f32 %v2810, 0.1
    %v2842 = vmul.f32 %v2811, 0.1
    %v2843 = vmul.f32 %v2812, 0.1
    %v2844 = vmul.f32 %v2813, 0.1
    %v2845 = vmul.f32 %v2814, 0.1
    %v2846 = vmul.f32 %v2815, 0.1
    %v2847 = vmul.f32 %v2801, 0.1
    %v2848 = vmul.f32 %v2816, 0.1
    %v2849 = vmul.f32 %v2817, 0.1
    %v2850 = vmul.f32 %v2818, 0.1
    %v2851 = vmul.f32 %v2819, 0.1
    %v2852 = vmul.f32 %v2820, 0.1
    %v2853 = vmul.f32 %v2821, 0.1
    %v2854 = vmul.f32 %v2822, 0.1
    %v2855 = vmul.f32 %v2804, 0.1
    %v2856 = vmul.f32 %v2823, 0.1
    %v2857 = vsub.f32 %v2839, 0.01
    %v2858 = vsub.f32 %v2840, 0.01
    %v2859 = vsub.f32 %v2841, 0.01
    %v2860 = vsub.f32 %v2842, 0.01
    %v2861 = vsub.f32 %v2843, 0.01
    %v2862 = vsub.f32 %v2844, 0.01
    %v2863 = vsub.f32 %v2845, 0.01
    %v2864 = vsub.f32 %v2846, 0.01
    %v2865 = vsub.f32 %v2847, 0.01
    %v2866 = vsub.f32 %v2848, 0.01
    %v2867 = vsub.f32 %v2849, 0.01
    %v2868 = vsub.f32 %v2850, 0.01
    %v2869 = vsub.f32 %v2851, 0.01
    %v2870 = vsub.f32 %v2852, 0.01
    %v2871 = vsub.f32 %v2853, 0.01
    %v2872 = vsub.f32 %v2854, 0.01
    %v2873 = vsub.f32 %v2855, 0.01
    %v2874 = vsub.f32 %v2856, 0.01
    %v2875 = vadd.f32 %v2565, %v2857
    %v2876 = vadd.f32 %v2566, %v2858
    %v2877 = vadd.f32 %v2567, %v2859
    %v2878 = vadd.f32 %v2568, %v2860
    %v2879 = vadd.f32 %v2569, %v2861
    %v2880 = vadd.f32 %v2570, %v2862
    %v2881 = vadd.f32 %v2571, %v2863
    %v2882 = vadd.f32 %v2572, %v2864
    %v2883 = vadd.f32 %v2573, %v2865
    %v2884 = vadd.f32 %v2574, %v2866
    %v2885 = vadd.f32 %v2575, %v2867
    %v2886 = vadd.f32 %v2576, %v2868
    %v2887 = vadd.f32 %v2577, %v2869
    %v2888 = vadd.f32 %v2578, %v2870
    %v2889 = vadd.f32 %v2579, %v2871
    %v2890 = vadd.f32 %v2580, %v2872
    %v2891 = vadd.f32 %v2581, %v2873
    %v2892 = vadd.f32 %v2582, %v2874
    %v2893 = vmax.f32 %v2875, 0.0
    %v2894 = vmax.f32 %v2876, 0.0
    %v2895 = vmax.f32 %v2877, 0.0
    %v2896 = vmax.f32 %v2878, 0.0
    %v2897 = vmax.f32 %v2879, 0.0
    %v2898 = vmax.f32 %v2880, 0.0
    %v2899 = vmax.f32 %v2881, 0.0
    %v2900 = vmax.f32 %v2882, 0.0
    %v2901 = vmax.f32 %v2883, 0.0
    %v2902 = vmax.f32 %v2884, 0.0
    %v2903 = vmax.f32 %v2885, 0.0
    %v2904 = vmax.f32 %v2886, 0.0
    %v2905 = vmax.f32 %v2887, 0.0
    %v2906 = vmax.f32 %v2888, 0.0
    %v2907 = vmax.f32 %v2889, 0.0
    %v2908 = vmax.f32 %v2890, 0.0
    %v2909 = vmax.f32 %v2891, 0.0
    %v2910 = vmax.f32 %v2892, 0.0
    %s2911 = scalar_lea.vmem %s9, 1
    %v2912 = vld [vmem:[%s2911] sm:$0x1]
    %s2913 = scalar_lea.vmem %s10, 1
    %v2914 = vld [vmem:[%s2913] sm:$0x1]
    %2933 = vst [vmem:[#allocation1] ss:$9 sm:$0xff] %v2893
    %s2934 = scalar_lea.vmem [#allocation1], 1
    %2935 = vst [vmem:[%s2934] ss:$9 sm:$0xff] %v2894
    %s2936 = scalar_lea.vmem [#allocation1], 2
    %2937 = vst [vmem:[%s2936] ss:$9 sm:$0xff] %v2895
    %s2938 = scalar_lea.vmem [#allocation1], 3
    %2939 = vst [vmem:[%s2938] ss:$9 sm:$0xff] %v2896
    %s2940 = scalar_lea.vmem [#allocation1], 4
    %2941 = vst [vmem:[%s2940] ss:$9 sm:$0xff] %v2897
    %s2942 = scalar_lea.vmem [#allocation1], 5
    %2943 = vst [vmem:[%s2942] ss:$9 sm:$0xff] %v2898
    %s2944 = scalar_lea.vmem [#allocation1], 6
    %2945 = vst [vmem:[%s2944] ss:$9 sm:$0xff] %v2899
    %s2946 = scalar_lea.vmem [#allocation1], 7
    %2947 = vst [vmem:[%s2946] ss:$9 sm:$0xff] %v2900
    %v2948 = vld [vmem:[#allocation1] sm:$0xff]
    %2949 = vst [vmem:[#allocation1] ss:$9 sm:$0xff] %v2901
    %v2950 = vld [vmem:[#allocation1] sm:$0xff]
    %2951 = vst [vmem:[#allocation1] ss:$9 sm:$0xff] %v2902
    %2952 = vst [vmem:[%s2934] ss:$9 sm:$0xff] %v2903
    %2953 = vst [vmem:[%s2936] ss:$9 sm:$0xff] %v2904
    %2954 = vst [vmem:[%s2938] ss:$9 sm:$0xff] %v2905
    %2955 = vst [vmem:[%s2940] ss:$9 sm:$0xff] %v2906
    %2956 = vst [vmem:[%s2942] ss:$9 sm:$0xff] %v2907
    %2957 = vst [vmem:[%s2944] ss:$9 sm:$0xff] %v2908
    %2958 = vst [vmem:[%s2946] ss:$9 sm:$0xff] %v2909
    %v2959 = vld [vmem:[#allocation1] sm:$0xff]
    %2960 = vst [vmem:[#allocation1] ss:$9 sm:$0xff] %v2910
    %v2961 = vld [vmem:[#allocation1] sm:$0xff]
    %v2966 = vsel %vm79, %v2948, 0.0
    %2967 = vadd.xlane.f32.xlu0 %v2966
    %v2968 = vpop.xlane.xlu0 %2967
    %v2969 = vsel %vm238, %v2950, 0.0
    %2970 = vadd.xlane.f32.xlu0 %v2969
    %v2971 = vpop.xlane.xlu0 %2970
    %v2972 = vsel %vm79, %v2959, 0.0
    %2973 = vadd.xlane.f32.xlu0 %v2972
    %v2974 = vpop.xlane.xlu0 %2973
    %v2975 = vsel %vm238, %v2961, 0.0
    %2976 = vadd.xlane.f32.xlu0 %v2975
    %v2977 = vpop.xlane.xlu0 %2976
    %v2978 = vmul.f32 %v2968, %v92
    %v2979 = vmul.f32 %v2971, %v92
    %v2980 = vmul.f32 %v2974, %v92
    %v2981 = vmul.f32 %v2977, %v92
    %v2986 = vperm.slane %v2978, 0
    %v2987 = vperm.slane %v2978, 1
    %v2988 = vperm.slane %v2978, 2
    %v2989 = vperm.slane %v2978, 3
    %v2990 = vperm.slane %v2978, 4
    %v2991 = vperm.slane %v2978, 5
    %v2992 = vperm.slane %v2978, 6
    %v2993 = vperm.slane %v2978, 7
    %v2994 = vperm.slane %v2979, 0
    %v2995 = vperm.slane %v2980, 0
    %v2996 = vperm.slane %v2980, 1
    %v2997 = vperm.slane %v2980, 2
    %v2998 = vperm.slane %v2980, 3
    %v2999 = vperm.slane %v2980, 4
    %v3000 = vperm.slane %v2980, 5
    %v3001 = vperm.slane %v2980, 6
    %v3002 = vperm.slane %v2980, 7
    %v3003 = vperm.slane %v2981, 0
    %v3022 = vsub.f32 %v2893, %v2986
    %v3023 = vsub.f32 %v2894, %v2987
    %v3024 = vsub.f32 %v2895, %v2988
    %v3025 = vsub.f32 %v2896, %v2989
    %v3026 = vsub.f32 %v2897, %v2990
    %v3027 = vsub.f32 %v2898, %v2991
    %v3028 = vsub.f32 %v2899, %v2992
    %v3029 = vsub.f32 %v2900, %v2993
    %v3030 = vsub.f32 %v2901, %v2994
    %v3031 = vsub.f32 %v2902, %v2995
    %v3032 = vsub.f32 %v2903, %v2996
    %v3033 = vsub.f32 %v2904, %v2997
    %v3034 = vsub.f32 %v2905, %v2998
    %v3035 = vsub.f32 %v2906, %v2999
    %v3036 = vsub.f32 %v2907, %v3000
    %v3037 = vsub.f32 %v2908, %v3001
    %v3038 = vsub.f32 %v2909, %v3002
    %v3039 = vsub.f32 %v2910, %v3003
    %v3040 = vmul.f32 %v3022, %v3022
    %v3041 = vmul.f32 %v3023, %v3023
    %v3042 = vmul.f32 %v3024, %v3024
    %v3043 = vmul.f32 %v3025, %v3025
    %v3044 = vmul.f32 %v3026, %v3026
    %v3045 = vmul.f32 %v3027, %v3027
    %v3046 = vmul.f32 %v3028, %v3028
    %v3047 = vmul.f32 %v3029, %v3029
    %v3048 = vmul.f32 %v3030, %v3030
    %v3049 = vmul.f32 %v3031, %v3031
    %v3050 = vmul.f32 %v3032, %v3032
    %v3051 = vmul.f32 %v3033, %v3033
    %v3052 = vmul.f32 %v3034, %v3034
    %v3053 = vmul.f32 %v3035, %v3035
    %v3054 = vmul.f32 %v3036, %v3036
    %v3055 = vmul.f32 %v3037, %v3037
    %v3056 = vmul.f32 %v3038, %v3038
    %v3057 = vmul.f32 %v3039, %v3039
    %3076 = vst [vmem:[#allocation1] ss:$9 sm:$0xff] %v3040
    %s3077 = scalar_lea.vmem [#allocation1], 1
    %3078 = vst [vmem:[%s3077] ss:$9 sm:$0xff] %v3041
    %s3079 = scalar_lea.vmem [#allocation1], 2
    %3080 = vst [vmem:[%s3079] ss:$9 sm:$0xff] %v3042
    %s3081 = scalar_lea.vmem [#allocation1], 3
    %3082 = vst [vmem:[%s3081] ss:$9 sm:$0xff] %v3043
    %s3083 = scalar_lea.vmem [#allocation1], 4
    %3084 = vst [vmem:[%s3083] ss:$9 sm:$0xff] %v3044
    %s3085 = scalar_lea.vmem [#allocation1], 5
    %3086 = vst [vmem:[%s3085] ss:$9 sm:$0xff] %v3045
    %s3087 = scalar_lea.vmem [#allocation1], 6
    %3088 = vst [vmem:[%s3087] ss:$9 sm:$0xff] %v3046
    %s3089 = scalar_lea.vmem [#allocation1], 7
    %3090 = vst [vmem:[%s3089] ss:$9 sm:$0xff] %v3047
    %v3091 = vld [vmem:[#allocation1] sm:$0xff]
    %3092 = vst [vmem:[#allocation1] ss:$9 sm:$0xff] %v3048
    %v3093 = vld [vmem:[#allocation1] sm:$0xff]
    %3094 = vst [vmem:[#allocation1] ss:$9 sm:$0xff] %v3049
    %3095 = vst [vmem:[%s3077] ss:$9 sm:$0xff] %v3050
    %3096 = vst [vmem:[%s3079] ss:$9 sm:$0xff] %v3051
    %3097 = vst [vmem:[%s3081] ss:$9 sm:$0xff] %v3052
    %3098 = vst [vmem:[%s3083] ss:$9 sm:$0xff] %v3053
    %3099 = vst [vmem:[%s3085] ss:$9 sm:$0xff] %v3054
    %3100 = vst [vmem:[%s3087] ss:$9 sm:$0xff] %v3055
    %3101 = vst [vmem:[%s3089] ss:$9 sm:$0xff] %v3056
    %v3102 = vld [vmem:[#allocation1] sm:$0xff]
    %3103 = vst [vmem:[#allocation1] ss:$9 sm:$0xff] %v3057
    %v3104 = vld [vmem:[#allocation1] sm:$0xff]
    %v3109 = vsel %vm79, %v3091, 0.0
    %3110 = vadd.xlane.f32.xlu0 %v3109
    %v3111 = vpop.xlane.xlu0 %3110
    %v3112 = vsel %vm238, %v3093, 0.0
    %3113 = vadd.xlane.f32.xlu0 %v3112
    %v3114 = vpop.xlane.xlu0 %3113
    %v3115 = vsel %vm79, %v3102, 0.0
    %3116 = vadd.xlane.f32.xlu0 %v3115
    %v3117 = vpop.xlane.xlu0 %3116
    %v3118 = vsel %vm238, %v3104, 0.0
    %3119 = vadd.xlane.f32.xlu0 %v3118
    %v3120 = vpop.xlane.xlu0 %3119
    %v3121 = vmul.f32 %v3111, %v92
    %v3122 = vmul.f32 %v3114, %v92
    %v3123 = vmul.f32 %v3117, %v92
    %v3124 = vmul.f32 %v3120, %v92
    %v3125 = vadd.f32 %v3121, 1e-05
    %v3126 = vadd.f32 %v3122, 1e-05
    %v3127 = vadd.f32 %v3123, 1e-05
    %v3128 = vadd.f32 %v3124, 1e-05
    %v3129 = vrsqrt.pop %v3125
    %v3130 = vmul.f32 %v3129, %v3125
    %v3131 = vmul.f32 %v3130, %v3129
    %v3132 = vmul.f32 0.5, %v3131
    %v3133 = vsub.f32 1.5, %v3132
    %v3134 = vmul.f32 %v3129, %v3133
    %vm3135 = vweird.f32 %v3125
    %vm3136 = vweird.f32 %v3129
    %vm3137 = vmor %vm3135, %vm3136
    %v3138 = vsel %vm3137, %v3129, %v3134
    %v3139 = vrsqrt.pop %v3126
    %v3140 = vmul.f32 %v3139, %v3126
    %v3141 = vmul.f32 %v3140, %v3139
    %v3142 = vmul.f32 0.5, %v3141
    %v3143 = vsub.f32 1.5, %v3142
    %v3144 = vmul.f32 %v3139, %v3143
    %vm3145 = vweird.f32 %v3126
    %vm3146 = vweird.f32 %v3139
    %vm3147 = vmor %vm3145, %vm3146
    %v3148 = vsel %vm3147, %v3139, %v3144
    %v3149 = vrsqrt.pop %v3127
    %v3150 = vmul.f32 %v3149, %v3127
    %v3151 = vmul.f32 %v3150, %v3149
    %v3152 = vmul.f32 0.5, %v3151
    %v3153 = vsub.f32 1.5, %v3152
    %v3154 = vmul.f32 %v3149, %v3153
    %vm3155 = vweird.f32 %v3127
    %vm3156 = vweird.f32 %v3149
    %vm3157 = vmor %vm3155, %vm3156
    %v3158 = vsel %vm3157, %v3149, %v3154
    %v3159 = vrsqrt.pop %v3128
    %v3160 = vmul.f32 %v3159, %v3128
    %v3161 = vmul.f32 %v3160, %v3159
    %v3162 = vmul.f32 0.5, %v3161
    %v3163 = vsub.f32 1.5, %v3162
    %v3164 = vmul.f32 %v3159, %v3163
    %vm3165 = vweird.f32 %v3128
    %vm3166 = vweird.f32 %v3159
    %vm3167 = vmor %vm3165, %vm3166
    %v3168 = vsel %vm3167, %v3159, %v3164
    %v3173 = vperm.slane %v3138, 0
    %v3174 = vperm.slane %v3138, 1
    %v3175 = vperm.slane %v3138, 2
    %v3176 = vperm.slane %v3138, 3
    %v3177 = vperm.slane %v3138, 4
    %v3178 = vperm.slane %v3138, 5
    %v3179 = vperm.slane %v3138, 6
    %v3180 = vperm.slane %v3138, 7
    %v3181 = vperm.slane %v3148, 0
    %v3182 = vperm.slane %v3158, 0
    %v3183 = vperm.slane %v3158, 1
    %v3184 = vperm.slane %v3158, 2
    %v3185 = vperm.slane %v3158, 3
    %v3186 = vperm.slane %v3158, 4
    %v3187 = vperm.slane %v3158, 5
    %v3188 = vperm.slane %v3158, 6
    %v3189 = vperm.slane %v3158, 7
    %v3190 = vperm.slane %v3168, 0
    %v3209 = vmul.f32 %v3022, %v3173
    %v3210 = vmul.f32 %v3023, %v3174
    %v3211 = vmul.f32 %v3024, %v3175
    %v3212 = vmul.f32 %v3025, %v3176
    %v3213 = vmul.f32 %v3026, %v3177
    %v3214 = vmul.f32 %v3027, %v3178
    %v3215 = vmul.f32 %v3028, %v3179
    %v3216 = vmul.f32 %v3029, %v3180
    %v3217 = vmul.f32 %v3030, %v3181
    %v3218 = vmul.f32 %v3031, %v3182
    %v3219 = vmul.f32 %v3032, %v3183
    %v3220 = vmul.f32 %v3033, %v3184
    %v3221 = vmul.f32 %v3034, %v3185
    %v3222 = vmul.f32 %v3035, %v3186
    %v3223 = vmul.f32 %v3036, %v3187
    %v3224 = vmul.f32 %v3037, %v3188
    %v3225 = vmul.f32 %v3038, %v3189
    %v3226 = vmul.f32 %v3039, %v3190
    %v3228 = vperm.slane %v2912, 0
    %v3230 = vrot.slane %v3228, 1
    %v3231 = vrot.slane %v3228, 2
    %v3232 = vrot.slane %v3228, 3
    %v3233 = vrot.slane %v3228, 4
    %v3234 = vrot.slane %v3228, 5
    %v3235 = vrot.slane %v3228, 6
    %v3236 = vrot.slane %v3228, 7
    %v3244 = vmul.f32 %v3209, %v3228
    %v3245 = vmul.f32 %v3210, %v3230
    %v3246 = vmul.f32 %v3211, %v3231
    %v3247 = vmul.f32 %v3212, %v3232
    %v3248 = vmul.f32 %v3213, %v3233
    %v3249 = vmul.f32 %v3214, %v3234
    %v3250 = vmul.f32 %v3215, %v3235
    %v3251 = vmul.f32 %v3216, %v3236
    %v3252 = vmul.f32 %v3217, %v3228
    %v3253 = vmul.f32 %v3218, %v3228
    %v3254 = vmul.f32 %v3219, %v3230
    %v3255 = vmul.f32 %v3220, %v3231
    %v3256 = vmul.f32 %v3221, %v3232
    %v3257 = vmul.f32 %v3222, %v3233
    %v3258 = vmul.f32 %v3223, %v3234
    %v3259 = vmul.f32 %v3224, %v3235
    %v3260 = vmul.f32 %v3225, %v3236
    %v3261 = vmul.f32 %v3226, %v3228
    %v3263 = vperm.slane %v2914, 0
    %v3265 = vrot.slane %v3263, 1
    %v3266 = vrot.slane %v3263, 2
    %v3267 = vrot.slane %v3263, 3
    %v3268 = vrot.slane %v3263, 4
    %v3269 = vrot.slane %v3263, 5
    %v3270 = vrot.slane %v3263, 6
    %v3271 = vrot.slane %v3263, 7
    %v3279 = vadd.f32 %v3244, %v3263
    %v3280 = vadd.f32 %v3245, %v3265
    %v3281 = vadd.f32 %v3246, %v3266
    %v3282 = vadd.f32 %v3247, %v3267
    %v3283 = vadd.f32 %v3248, %v3268
    %v3284 = vadd.f32 %v3249, %v3269
    %v3285 = vadd.f32 %v3250, %v3270
    %v3286 = vadd.f32 %v3251, %v3271
    %v3287 = vadd.f32 %v3252, %v3263
    %v3288 = vadd.f32 %v3253, %v3263
    %v3289 = vadd.f32 %v3254, %v3265
    %v3290 = vadd.f32 %v3255, %v3266
    %v3291 = vadd.f32 %v3256, %v3267
    %v3292 = vadd.f32 %v3257, %v3268
    %v3293 = vadd.f32 %v3258, %v3269
    %v3294 = vadd.f32 %v3259, %v3270
    %v3295 = vadd.f32 %v3260, %v3271
    %v3296 = vadd.f32 %v3261, %v3263
    %s3297 = scalar_lea.vmem %s11, 32
    %v3298 = vld [vmem:[%s3297] sm:$0xff]
    %v3299 = vld [vmem:[%s3297 + $0x8] sm:$0xff]
    %v3300 = vld [vmem:[%s3297 + $0x10] sm:$0xff]
    %v3301 = vld [vmem:[%s3297 + $0x18] sm:$0xff]
    %3320 = vst [vmem:[#allocation1] ss:$9 sm:$0xff] %v3279
    %s3321 = scalar_lea.vmem [#allocation1], 1
    %3322 = vst [vmem:[%s3321] ss:$9 sm:$0xff] %v3280
    %s3323 = scalar_lea.vmem [#allocation1], 2
    %3324 = vst [vmem:[%s3323] ss:$9 sm:$0xff] %v3281
    %s3325 = scalar_lea.vmem [#allocation1], 3
    %3326 = vst [vmem:[%s3325] ss:$9 sm:$0xff] %v3282
    %s3327 = scalar_lea.vmem [#allocation1], 4
    %3328 = vst [vmem:[%s3327] ss:$9 sm:$0xff] %v3283
    %s3329 = scalar_lea.vmem [#allocation1], 5
    %3330 = vst [vmem:[%s3329] ss:$9 sm:$0xff] %v3284
    %s3331 = scalar_lea.vmem [#allocation1], 6
    %3332 = vst [vmem:[%s3331] ss:$9 sm:$0xff] %v3285
    %s3333 = scalar_lea.vmem [#allocation1], 7
    %3334 = vst [vmem:[%s3333] ss:$9 sm:$0xff] %v3286
    %v3335 = vld [vmem:[#allocation1] sm:$0xff]
    %3336 = vst [vmem:[#allocation1] ss:$9 sm:$0xff] %v3287
    %3337 = vst [vmem:[%s3321] ss:$9 sm:$0xff] %v3288
    %3338 = vst [vmem:[%s3323] ss:$9 sm:$0xff] %v3289
    %3339 = vst [vmem:[%s3325] ss:$9 sm:$0xff] %v3290
    %3340 = vst [vmem:[%s3327] ss:$9 sm:$0xff] %v3291
    %3341 = vst [vmem:[%s3329] ss:$9 sm:$0xff] %v3292
    %3342 = vst [vmem:[%s3331] ss:$9 sm:$0xff] %v3293
    %3343 = vst [vmem:[%s3333] ss:$9 sm:$0xff] %v3294
    %v3344 = vld [vmem:[#allocation1] sm:$0xff]
    %3345 = vst [vmem:[#allocation1] ss:$9 sm:$0xff] %v3295
    %3346 = vst [vmem:[%s3321] ss:$9 sm:$0xff] %v3296
    %v3347 = vld [vmem:[#allocation1] sm:$0xff]
    %v3348 = vsel %vm79, %v3335, 0
    %v3350 = vsel %vm79, %v3344, 0
    %v3352 = vsel %vm79, %v3347, 0
    %3354 = vmatpush.msra.mxu0 0.0
    %3355 = vmatpush.msra.mxu0 0.0
    %3356 = vmatpush.msra.mxu0 0.0
    %3357 = vmatpush.msra.mxu0 0.0
    %3358 = vmatpush.msra.mxu0 0.0
    %3359 = vmatpush.msra.mxu0 0.0
    %3360 = vmatpush.msra.mxu0 0.0
    %3361 = vmatpush.msra.mxu0 0.0
    %3362 = vmatpush.msra.mxu0 0.0
    %3363 = vmatpush.msra.mxu0 0.0
    %3364 = vmatpush.msra.mxu0 0.0
    %3365 = vmatpush.msra.mxu0 0.0
    %3366 = vmatpush.msra.mxu0 %v3301
    %3367 = vmatpush.msra.mxu0 %v3300
    %3368 = vmatpush.msra.mxu0 %v3299
    %3369 = vmatpush.msra.mxu0 %v3298
    %3370 = vmatmul.f32.gmra.mxu0 %v3348
    %v3371 = vpop.f32.mrf.mxu0
    %v3372 = vadd.f32 0.0, %v3371
    %3373 = vmatmul.f32.gmra.mxu0 %v3350
    %v3374 = vpop.f32.mrf.mxu0
    %v3375 = vadd.f32 0.0, %v3374
    %3376 = vmatmul.f32.gmra.mxu0 %v3352
    %v3377 = vpop.f32.mrf.mxu0
    %v3378 = vadd.f32 0.0, %v3377
    %3379 = vdwg.mxu0
    %v3383 = vrot.slane %v3372, 1
    %v3384 = vrot.slane %v3372, 2
    %v3385 = vrot.slane %v3372, 3
    %v3386 = vrot.slane %v3372, 4
    %v3387 = vrot.slane %v3372, 5
    %v3388 = vrot.slane %v3372, 6
    %v3389 = vrot.slane %v3372, 7
    %v3390 = vrot.slane %v3375, 1
    %v3391 = vrot.slane %v3375, 2
    %v3392 = vrot.slane %v3375, 3
    %v3393 = vrot.slane %v3375, 4
    %v3394 = vrot.slane %v3375, 5
    %v3395 = vrot.slane %v3375, 6
    %v3396 = vrot.slane %v3375, 7
    %v3397 = vrot.slane %v3378, 1
    %s3398 = scalar_lea.vmem %s12, 32
    %v3399 = vld [vmem:[%s3398] sm:$0xff]
    %v3400 = vld [vmem:[%s3398 + $0x8] sm:$0xff]
    %v3401 = vld [vmem:[%s3398 + $0x10] sm:$0xff]
    %v3402 = vld [vmem:[%s3398 + $0x18] sm:$0xff]
    %3403 = vst [vmem:[#allocation1] ss:$9 sm:$0xff] %v3372
    %s3404 = scalar_lea.vmem [#allocation1], 1
    %3405 = vst [vmem:[%s3404] ss:$9 sm:$0xff] %v3383
    %s3406 = scalar_lea.vmem [#allocation1], 2
    %3407 = vst [vmem:[%s3406] ss:$9 sm:$0xff] %v3384
    %s3408 = scalar_lea.vmem [#allocation1], 3
    %3409 = vst [vmem:[%s3408] ss:$9 sm:$0xff] %v3385
    %s3410 = scalar_lea.vmem [#allocation1], 4
    %3411 = vst [vmem:[%s3410] ss:$9 sm:$0xff] %v3386
    %s3412 = scalar_lea.vmem [#allocation1], 5
    %3413 = vst [vmem:[%s3412] ss:$9 sm:$0xff] %v3387
    %s3414 = scalar_lea.vmem [#allocation1], 6
    %3415 = vst [vmem:[%s3414] ss:$9 sm:$0xff] %v3388
    %s3416 = scalar_lea.vmem [#allocation1], 7
    %3417 = vst [vmem:[%s3416] ss:$9 sm:$0xff] %v3389
    %v3418 = vld [vmem:[#allocation1] sm:$0xff]
    %3419 = vst [vmem:[#allocation1] ss:$9 sm:$0xff] %v3375
    %v3420 = vld [vmem:[#allocation1] sm:$0xff]
    %3421 = vst [vmem:[#allocation1] ss:$9 sm:$0xff] %v3372
    %s3422 = scalar_lea.vmem [#allocation1], 1
    %3423 = vst [vmem:[%s3422] ss:$9 sm:$0xff] %v3383
    %s3424 = scalar_lea.vmem [#allocation1], 2
    %3425 = vst [vmem:[%s3424] ss:$9 sm:$0xff] %v3384
    %s3426 = scalar_lea.vmem [#allocation1], 3
    %3427 = vst [vmem:[%s3426] ss:$9 sm:$0xff] %v3385
    %s3428 = scalar_lea.vmem [#allocation1], 4
    %3429 = vst [vmem:[%s3428] ss:$9 sm:$0xff] %v3386
    %s3430 = scalar_lea.vmem [#allocation1], 5
    %3431 = vst [vmem:[%s3430] ss:$9 sm:$0xff] %v3387
    %s3432 = scalar_lea.vmem [#allocation1], 6
    %3433 = vst [vmem:[%s3432] ss:$9 sm:$0xff] %v3388
    %s3434 = scalar_lea.vmem [#allocation1], 7
    %3435 = vst [vmem:[%s3434] ss:$9 sm:$0xff] %v3389
    %v3436 = vld [vmem:[#allocation1] sm:$0xff]
    %3437 = vst [vmem:[#allocation1] ss:$9 sm:$0xff] %v3375
    %v3438 = vld [vmem:[#allocation1] sm:$0xff]
    %v3439 = vsel %vm500, %v3418, 0
    %v3441 = vsel %vm500, %v3420, 0
    %v3443 = vsel %vm500, %v3436, 0
    %v3445 = vsel %vm500, %v3438, 0
    %3447 = vmatpush.xpose.msra.mxu0 0.0
    %3448 = vmatpush.xpose.msra.mxu0 0.0
    %3449 = vmatpush.xpose.msra.mxu0 0.0
    %3450 = vmatpush.xpose.msra.mxu0 0.0
    %3451 = vmatpush.xpose.msra.mxu0 0.0
    %3452 = vmatpush.xpose.msra.mxu0 0.0
    %3453 = vmatpush.xpose.msra.mxu0 0.0
    %3454 = vmatpush.xpose.msra.mxu0 0.0
    %3455 = vmatpush.xpose.msra.mxu0 0.0
    %3456 = vmatpush.xpose.msra.mxu0 0.0
    %3457 = vmatpush.xpose.msra.mxu0 0.0
    %3458 = vmatpush.xpose.msra.mxu0 0.0
    %3459 = vmatpush.xpose.msra.mxu0 0.0
    %3460 = vmatpush.xpose.msra.mxu0 0.0
    %3461 = vmatpush.xpose.msra.mxu0 %v3445
    %3462 = vmatpush.xpose.msra.mxu0 %v3443
    %3463 = vmatmul.f32.gmra.mxu0 %v3439
    %v3464 = vpop.f32.mrf.mxu0
    %v3465 = vadd.f32 0.0, %v3464
    %3466 = vmatmul.f32.gmra.mxu0 %v3441
    %v3467 = vpop.f32.mrf.mxu0
    %v3468 = vadd.f32 0.0, %v3467
    %3469 = vdwg.mxu0
    %3470 = vst [vmem:[#allocation1] ss:$9 sm:$0xff] %v3390
    %s3471 = scalar_lea.vmem [#allocation1], 1
    %3472 = vst [vmem:[%s3471] ss:$9 sm:$0xff] %v3391
    %s3473 = scalar_lea.vmem [#allocation1], 2
    %3474 = vst [vmem:[%s3473] ss:$9 sm:$0xff] %v3392
    %s3475 = scalar_lea.vmem [#allocation1], 3
    %3476 = vst [vmem:[%s3475] ss:$9 sm:$0xff] %v3393
    %s3477 = scalar_lea.vmem [#allocation1], 4
    %3478 = vst [vmem:[%s3477] ss:$9 sm:$0xff] %v3394
    %s3479 = scalar_lea.vmem [#allocation1], 5
    %3480 = vst [vmem:[%s3479] ss:$9 sm:$0xff] %v3395
    %s3481 = scalar_lea.vmem [#allocation1], 6
    %3482 = vst [vmem:[%s3481] ss:$9 sm:$0xff] %v3396
    %s3483 = scalar_lea.vmem [#allocation1], 7
    %3484 = vst [vmem:[%s3483] ss:$9 sm:$0xff] %v3378
    %v3485 = vld [vmem:[#allocation1] sm:$0xff]
    %3486 = vst [vmem:[#allocation1] ss:$9 sm:$0xff] %v3397
    %v3487 = vld [vmem:[#allocation1] sm:$0xff]
    %3488 = vst [vmem:[#allocation1] ss:$9 sm:$0xff] %v3390
    %s3489 = scalar_lea.vmem [#allocation1], 1
    %3490 = vst [vmem:[%s3489] ss:$9 sm:$0xff] %v3391
    %s3491 = scalar_lea.vmem [#allocation1], 2
    %3492 = vst [vmem:[%s3491] ss:$9 sm:$0xff] %v3392
    %s3493 = scalar_lea.vmem [#allocation1], 3
    %3494 = vst [vmem:[%s3493] ss:$9 sm:$0xff] %v3393
    %s3495 = scalar_lea.vmem [#allocation1], 4
    %3496 = vst [vmem:[%s3495] ss:$9 sm:$0xff] %v3394
    %s3497 = scalar_lea.vmem [#allocation1], 5
    %3498 = vst [vmem:[%s3497] ss:$9 sm:$0xff] %v3395
    %s3499 = scalar_lea.vmem [#allocation1], 6
    %3500 = vst [vmem:[%s3499] ss:$9 sm:$0xff] %v3396
    %s3501 = scalar_lea.vmem [#allocation1], 7
    %3502 = vst [vmem:[%s3501] ss:$9 sm:$0xff] %v3378
    %v3503 = vld [vmem:[#allocation1] sm:$0xff]
    %3504 = vst [vmem:[#allocation1] ss:$9 sm:$0xff] %v3397
    %v3505 = vld [vmem:[#allocation1] sm:$0xff]
    %v3506 = vsel %vm500, %v3485, 0
    %v3508 = vsel %vm500, %v3487, 0
    %v3510 = vsel %vm500, %v3503, 0
    %v3512 = vsel %vm500, %v3505, 0
    %3514 = vmatpush.xpose.msra.mxu0 0.0
    %3515 = vmatpush.xpose.msra.mxu0 0.0
    %3516 = vmatpush.xpose.msra.mxu0 0.0
    %3517 = vmatpush.xpose.msra.mxu0 0.0
    %3518 = vmatpush.xpose.msra.mxu0 0.0
    %3519 = vmatpush.xpose.msra.mxu0 0.0
    %3520 = vmatpush.xpose.msra.mxu0 0.0
    %3521 = vmatpush.xpose.msra.mxu0 0.0
    %3522 = vmatpush.xpose.msra.mxu0 0.0
    %3523 = vmatpush.xpose.msra.mxu0 0.0
    %3524 = vmatpush.xpose.msra.mxu0 0.0
    %3525 = vmatpush.xpose.msra.mxu0 0.0
    %3526 = vmatpush.xpose.msra.mxu0 0.0
    %3527 = vmatpush.xpose.msra.mxu0 0.0
    %3528 = vmatpush.xpose.msra.mxu0 %v3512
    %3529 = vmatpush.xpose.msra.mxu0 %v3510
    %3530 = vmatmul.f32.gmra.mxu0 %v3506
    %v3531 = vpop.f32.mrf.mxu0
    %v3532 = vadd.f32 0.0, %v3531
    %3533 = vmatmul.f32.gmra.mxu0 %v3508
    %v3534 = vpop.f32.mrf.mxu0
    %v3535 = vadd.f32 0.0, %v3534
    %3536 = vdwg.mxu0
    %v3537 = vmul.f32 %v3465, 0.35355338
    %v3538 = vmul.f32 %v3468, 0.35355338
    %v3539 = vmul.f32 %v3532, 0.35355338
    %v3540 = vmul.f32 %v3535, 0.35355338
    %v3541 = vsel %vm603, %v3537, -inf
    %3542 = vmax.xlane.f32.xlu0 %v3541
    %v3543 = vpop.xlane.xlu0 %3542
    %v3544 = vsel %vm607, %v3538, -inf
    %3545 = vmax.xlane.f32.xlu0 %v3544
    %v3546 = vpop.xlane.xlu0 %3545
    %v3547 = vsel %vm603, %v3539, -inf
    %3548 = vmax.xlane.f32.xlu0 %v3547
    %v3549 = vpop.xlane.xlu0 %3548
    %v3550 = vsel %vm607, %v3540, -inf
    %3551 = vmax.xlane.f32.xlu0 %v3550
    %v3552 = vpop.xlane.xlu0 %3551
    %v3553 = vsub.f32 %v3537, %v3543
    %v3554 = vsub.f32 %v3538, %v3546
    %v3555 = vsub.f32 %v3539, %v3549
    %v3556 = vsub.f32 %v3540, %v3552
    %v3557 = vmul.f32 %v3553, 1.442695
    %v3558 = vpow.pop %v3557
    %v3559 = vmul.f32 %v3554, 1.442695
    %v3560 = vpow.pop %v3559
    %v3561 = vmul.f32 %v3555, 1.442695
    %v3562 = vpow.pop %v3561
    %v3563 = vmul.f32 %v3556, 1.442695
    %v3564 = vpow.pop %v3563
    %v3565 = vsel %vm603, %v3558, 0.0
    %3566 = vadd.xlane.f32.xlu0 %v3565
    %v3567 = vpop.xlane.xlu0 %3566
    %v3568 = vsel %vm607, %v3560, 0.0
    %3569 = vadd.xlane.f32.xlu0 %v3568
    %v3570 = vpop.xlane.xlu0 %3569
    %v3571 = vsel %vm603, %v3562, 0.0
    %3572 = vadd.xlane.f32.xlu0 %v3571
    %v3573 = vpop.xlane.xlu0 %3572
    %v3574 = vsel %vm607, %v3564, 0.0
    %3575 = vadd.xlane.f32.xlu0 %v3574
    %v3576 = vpop.xlane.xlu0 %3575
    %v3577 = vrcp.pop %v3567
    %v3578 = vrcp.pop %v3570
    %v3579 = vrcp.pop %v3573
    %v3580 = vrcp.pop %v3576
    %v3581 = vmul.f32 %v3558, %v3577
    %v3582 = vmul.f32 %v3560, %v3578
    %v3583 = vmul.f32 %v3562, %v3579
    %v3584 = vmul.f32 %v3564, %v3580
    %3585 = vst [vmem:[#allocation1] ss:$9 sm:$0xff] %v3372
    %s3586 = scalar_lea.vmem [#allocation1], 1
    %3587 = vst [vmem:[%s3586] ss:$9 sm:$0xff] %v3383
    %s3588 = scalar_lea.vmem [#allocation1], 2
    %3589 = vst [vmem:[%s3588] ss:$9 sm:$0xff] %v3384
    %s3590 = scalar_lea.vmem [#allocation1], 3
    %3591 = vst [vmem:[%s3590] ss:$9 sm:$0xff] %v3385
    %s3592 = scalar_lea.vmem [#allocation1], 4
    %3593 = vst [vmem:[%s3592] ss:$9 sm:$0xff] %v3386
    %s3594 = scalar_lea.vmem [#allocation1], 5
    %3595 = vst [vmem:[%s3594] ss:$9 sm:$0xff] %v3387
    %s3596 = scalar_lea.vmem [#allocation1], 6
    %3597 = vst [vmem:[%s3596] ss:$9 sm:$0xff] %v3388
    %s3598 = scalar_lea.vmem [#allocation1], 7
    %3599 = vst [vmem:[%s3598] ss:$9 sm:$0xff] %v3389
    %v3600 = vld [vmem:[#allocation1] sm:$0xff]
    %3601 = vst [vmem:[#allocation1] ss:$9 sm:$0xff] %v3375
    %v3602 = vld [vmem:[#allocation1] sm:$0xff]
    %v3605 = vsel %vm603, %v3581, 0
    %v3608 = vsel %vm603, %v3582, 0
    %v3610 = vsel %vm674, %v3602, 0
    %3612 = vmatpush.msra.mxu0 0.0
    %3613 = vmatpush.msra.mxu0 0.0
    %3614 = vmatpush.msra.mxu0 0.0
    %3615 = vmatpush.msra.mxu0 0.0
    %3616 = vmatpush.msra.mxu0 0.0
    %3617 = vmatpush.msra.mxu0 0.0
    %3618 = vmatpush.msra.mxu0 0.0
    %3619 = vmatpush.msra.mxu0 0.0
    %3620 = vmatpush.msra.mxu0 0.0
    %3621 = vmatpush.msra.mxu0 0.0
    %3622 = vmatpush.msra.mxu0 0.0
    %3623 = vmatpush.msra.mxu0 0.0
    %3624 = vmatpush.msra.mxu0 0.0
    %3625 = vmatpush.msra.mxu0 0.0
    %3626 = vmatpush.msra.mxu0 %v3610
    %3627 = vmatpush.msra.mxu0 %v3600
    %3628 = vmatmul.f32.gmra.mxu0 %v3605
    %v3629 = vpop.f32.mrf.mxu0
    %v3630 = vadd.f32 0.0, %v3629
    %3631 = vmatmul.f32.gmra.mxu0 %v3608
    %v3632 = vpop.f32.mrf.mxu0
    %v3633 = vadd.f32 0.0, %v3632
    %3634 = vdwg.mxu0
    %3635 = vst [vmem:[#allocation1] ss:$9 sm:$0xff] %v3390
    %s3636 = scalar_lea.vmem [#allocation1], 1
    %3637 = vst [vmem:[%s3636] ss:$9 sm:$0xff] %v3391
    %s3638 = scalar_lea.vmem [#allocation1], 2
    %3639 = vst [vmem:[%s3638] ss:$9 sm:$0xff] %v3392
    %s3640 = scalar_lea.vmem [#allocation1], 3
    %3641 = vst [vmem:[%s3640] ss:$9 sm:$0xff] %v3393
    %s3642 = scalar_lea.vmem [#allocation1], 4
    %3643 = vst [vmem:[%s3642] ss:$9 sm:$0xff] %v3394
    %s3644 = scalar_lea.vmem [#allocation1], 5
    %3645 = vst [vmem:[%s3644] ss:$9 sm:$0xff] %v3395
    %s3646 = scalar_lea.vmem [#allocation1], 6
    %3647 = vst [vmem:[%s3646] ss:$9 sm:$0xff] %v3396
    %s3648 = scalar_lea.vmem [#allocation1], 7
    %3649 = vst [vmem:[%s3648] ss:$9 sm:$0xff] %v3378
    %v3650 = vld [vmem:[#allocation1] sm:$0xff]
    %3651 = vst [vmem:[#allocation1] ss:$9 sm:$0xff] %v3397
    %v3652 = vld [vmem:[#allocation1] sm:$0xff]
    %v3655 = vsel %vm603, %v3583, 0
    %v3658 = vsel %vm603, %v3584, 0
    %v3660 = vsel %vm674, %v3652, 0
    %3662 = vmatpush.msra.mxu0 0.0
    %3663 = vmatpush.msra.mxu0 0.0
    %3664 = vmatpush.msra.mxu0 0.0
    %3665 = vmatpush.msra.mxu0 0.0
    %3666 = vmatpush.msra.mxu0 0.0
    %3667 = vmatpush.msra.mxu0 0.0
    %3668 = vmatpush.msra.mxu0 0.0
    %3669 = vmatpush.msra.mxu0 0.0
    %3670 = vmatpush.msra.mxu0 0.0
    %3671 = vmatpush.msra.mxu0 0.0
    %3672 = vmatpush.msra.mxu0 0.0
    %3673 = vmatpush.msra.mxu0 0.0
    %3674 = vmatpush.msra.mxu0 0.0
    %3675 = vmatpush.msra.mxu0 0.0
    %3676 = vmatpush.msra.mxu0 %v3660
    %3677 = vmatpush.msra.mxu0 %v3650
    %3678 = vmatmul.f32.gmra.mxu0 %v3655
    %v3679 = vpop.f32.mrf.mxu0
    %v3680 = vadd.f32 0.0, %v3679
    %3681 = vmatmul.f32.gmra.mxu0 %v3658
    %v3682 = vpop.f32.mrf.mxu0
    %v3683 = vadd.f32 0.0, %v3682
    %3684 = vdwg.mxu0
    %3685 = vst [vmem:[#allocation1] ss:$9 sm:$0xff] %v3372
    %s3686 = scalar_lea.vmem [#allocation1], 1
    %3687 = vst [vmem:[%s3686] ss:$9 sm:$0xff] %v3383
    %s3688 = scalar_lea.vmem [#allocation1], 2
    %3689 = vst [vmem:[%s3688] ss:$9 sm:$0xff] %v3384
    %s3690 = scalar_lea.vmem [#allocation1], 3
    %3691 = vst [vmem:[%s3690] ss:$9 sm:$0xff] %v3385
    %s3692 = scalar_lea.vmem [#allocation1], 4
    %3693 = vst [vmem:[%s3692] ss:$9 sm:$0xff] %v3386
    %s3694 = scalar_lea.vmem [#allocation1], 5
    %3695 = vst [vmem:[%s3694] ss:$9 sm:$0xff] %v3387
    %s3696 = scalar_lea.vmem [#allocation1], 6
    %3697 = vst [vmem:[%s3696] ss:$9 sm:$0xff] %v3388
    %s3698 = scalar_lea.vmem [#allocation1], 7
    %3699 = vst [vmem:[%s3698] ss:$9 sm:$0xff] %v3389
    %v3700 = vld [vmem:[#allocation1] sm:$0xff]
    %3701 = vst [vmem:[#allocation1] ss:$9 sm:$0xff] %v3375
    %v3702 = vld [vmem:[#allocation1] sm:$0xff]
    %3703 = vrot.lane.b32.xlu0 %v3700, 120
    %v3704 = vpop.permute.xlu0 %3703
    %3705 = vrot.lane.b32.xlu0 %v3702, 120
    %v3706 = vpop.permute.xlu0 %3705
    %3707 = vst [vmem:[#allocation1] ss:$9 sm:$0xff] %v3372
    %s3708 = scalar_lea.vmem [#allocation1], 1
    %3709 = vst [vmem:[%s3708] ss:$9 sm:$0xff] %v3383
    %s3710 = scalar_lea.vmem [#allocation1], 2
    %3711 = vst [vmem:[%s3710] ss:$9 sm:$0xff] %v3384
    %s3712 = scalar_lea.vmem [#allocation1], 3
    %3713 = vst [vmem:[%s3712] ss:$9 sm:$0xff] %v3385
    %s3714 = scalar_lea.vmem [#allocation1], 4
    %3715 = vst [vmem:[%s3714] ss:$9 sm:$0xff] %v3386
    %s3716 = scalar_lea.vmem [#allocation1], 5
    %3717 = vst [vmem:[%s3716] ss:$9 sm:$0xff] %v3387
    %s3718 = scalar_lea.vmem [#allocation1], 6
    %3719 = vst [vmem:[%s3718] ss:$9 sm:$0xff] %v3388
    %s3720 = scalar_lea.vmem [#allocation1], 7
    %3721 = vst [vmem:[%s3720] ss:$9 sm:$0xff] %v3389
    %v3722 = vld [vmem:[#allocation1] sm:$0xff]
    %3723 = vst [vmem:[#allocation1] ss:$9 sm:$0xff] %v3375
    %v3724 = vld [vmem:[#allocation1] sm:$0xff]
    %3725 = vrot.lane.b32.xlu0 %v3722, 120
    %v3726 = vpop.permute.xlu0 %3725
    %3727 = vrot.lane.b32.xlu0 %v3724, 120
    %v3728 = vpop.permute.xlu0 %3727
    %v3729 = vsel %vm500, %v3704, 0
    %v3731 = vsel %vm500, %v3706, 0
    %v3733 = vsel %vm500, %v3726, 0
    %v3735 = vsel %vm500, %v3728, 0
    %3737 = vmatpush.xpose.msra.mxu0 0.0
    %3738 = vmatpush.xpose.msra.mxu0 0.0
    %3739 = vmatpush.xpose.msra.mxu0 0.0
    %3740 = vmatpush.xpose.msra.mxu0 0.0
    %3741 = vmatpush.xpose.msra.mxu0 0.0
    %3742 = vmatpush.xpose.msra.mxu0 0.0
    %3743 = vmatpush.xpose.msra.mxu0 0.0
    %3744 = vmatpush.xpose.msra.mxu0 0.0
    %3745 = vmatpush.xpose.msra.mxu0 0.0
    %3746 = vmatpush.xpose.msra.mxu0 0.0
    %3747 = vmatpush.xpose.msra.mxu0 0.0
    %3748 = vmatpush.xpose.msra.mxu0 0.0
    %3749 = vmatpush.xpose.msra.mxu0 0.0
    %3750 = vmatpush.xpose.msra.mxu0 0.0
    %3751 = vmatpush.xpose.msra.mxu0 %v3735
    %3752 = vmatpush.xpose.msra.mxu0 %v3733
    %3753 = vmatmul.f32.gmra.mxu0 %v3729
    %v3754 = vpop.f32.mrf.mxu0
    %v3755 = vadd.f32 0.0, %v3754
    %3756 = vmatmul.f32.gmra.mxu0 %v3731
    %v3757 = vpop.f32.mrf.mxu0
    %v3758 = vadd.f32 0.0, %v3757
    %3759 = vdwg.mxu0
    %3760 = vst [vmem:[#allocation1] ss:$9 sm:$0xff] %v3390
    %s3761 = scalar_lea.vmem [#allocation1], 1
    %3762 = vst [vmem:[%s3761] ss:$9 sm:$0xff] %v3391
    %s3763 = scalar_lea.vmem [#allocation1], 2
    %3764 = vst [vmem:[%s3763] ss:$9 sm:$0xff] %v3392
    %s3765 = scalar_lea.vmem [#allocation1], 3
    %3766 = vst [vmem:[%s3765] ss:$9 sm:$0xff] %v3393
    %s3767 = scalar_lea.vmem [#allocation1], 4
    %3768 = vst [vmem:[%s3767] ss:$9 sm:$0xff] %v3394
    %s3769 = scalar_lea.vmem [#allocation1], 5
    %3770 = vst [vmem:[%s3769] ss:$9 sm:$0xff] %v3395
    %s3771 = scalar_lea.vmem [#allocation1], 6
    %3772 = vst [vmem:[%s3771] ss:$9 sm:$0xff] %v3396
    %s3773 = scalar_lea.vmem [#allocation1], 7
    %3774 = vst [vmem:[%s3773] ss:$9 sm:$0xff] %v3378
    %v3775 = vld [vmem:[#allocation1] sm:$0xff]
    %3776 = vst [vmem:[#allocation1] ss:$9 sm:$0xff] %v3397
    %v3777 = vld [vmem:[#allocation1] sm:$0xff]
    %3778 = vrot.lane.b32.xlu0 %v3775, 120
    %v3779 = vpop.permute.xlu0 %3778
    %3780 = vrot.lane.b32.xlu0 %v3777, 120
    %v3781 = vpop.permute.xlu0 %3780
    %3782 = vst [vmem:[#allocation1] ss:$9 sm:$0xff] %v3390
    %s3783 = scalar_lea.vmem [#allocation1], 1
    %3784 = vst [vmem:[%s3783] ss:$9 sm:$0xff] %v3391
    %s3785 = scalar_lea.vmem [#allocation1], 2
    %3786 = vst [vmem:[%s3785] ss:$9 sm:$0xff] %v3392
    %s3787 = scalar_lea.vmem [#allocation1], 3
    %3788 = vst [vmem:[%s3787] ss:$9 sm:$0xff] %v3393
    %s3789 = scalar_lea.vmem [#allocation1], 4
    %3790 = vst [vmem:[%s3789] ss:$9 sm:$0xff] %v3394
    %s3791 = scalar_lea.vmem [#allocation1], 5
    %3792 = vst [vmem:[%s3791] ss:$9 sm:$0xff] %v3395
    %s3793 = scalar_lea.vmem [#allocation1], 6
    %3794 = vst [vmem:[%s3793] ss:$9 sm:$0xff] %v3396
    %s3795 = scalar_lea.vmem [#allocation1], 7
    %3796 = vst [vmem:[%s3795] ss:$9 sm:$0xff] %v3378
    %v3797 = vld [vmem:[#allocation1] sm:$0xff]
    %3798 = vst [vmem:[#allocation1] ss:$9 sm:$0xff] %v3397
    %v3799 = vld [vmem:[#allocation1] sm:$0xff]
    %3800 = vrot.lane.b32.xlu0 %v3797, 120
    %v3801 = vpop.permute.xlu0 %3800
    %3802 = vrot.lane.b32.xlu0 %v3799, 120
    %v3803 = vpop.permute.xlu0 %3802
    %v3804 = vsel %vm500, %v3779, 0
    %v3806 = vsel %vm500, %v3781, 0
    %v3808 = vsel %vm500, %v3801, 0
    %v3810 = vsel %vm500, %v3803, 0
    %3812 = vmatpush.xpose.msra.mxu0 0.0
    %3813 = vmatpush.xpose.msra.mxu0 0.0
    %3814 = vmatpush.xpose.msra.mxu0 0.0
    %3815 = vmatpush.xpose.msra.mxu0 0.0
    %3816 = vmatpush.xpose.msra.mxu0 0.0
    %3817 = vmatpush.xpose.msra.mxu0 0.0
    %3818 = vmatpush.xpose.msra.mxu0 0.0
    %3819 = vmatpush.xpose.msra.mxu0 0.0
    %3820 = vmatpush.xpose.msra.mxu0 0.0
    %3821 = vmatpush.xpose.msra.mxu0 0.0
    %3822 = vmatpush.xpose.msra.mxu0 0.0
    %3823 = vmatpush.xpose.msra.mxu0 0.0
    %3824 = vmatpush.xpose.msra.mxu0 0.0
    %3825 = vmatpush.xpose.msra.mxu0 0.0
    %3826 = vmatpush.xpose.msra.mxu0 %v3810
    %3827 = vmatpush.xpose.msra.mxu0 %v3808
    %3828 = vmatmul.f32.gmra.mxu0 %v3804
    %v3829 = vpop.f32.mrf.mxu0
    %v3830 = vadd.f32 0.0, %v3829
    %3831 = vmatmul.f32.gmra.mxu0 %v3806
    %v3832 = vpop.f32.mrf.mxu0
    %v3833 = vadd.f32 0.0, %v3832
    %3834 = vdwg.mxu0
    %v3835 = vmul.f32 %v3755, 0.35355338
    %v3836 = vmul.f32 %v3758, 0.35355338
    %v3837 = vmul.f32 %v3830, 0.35355338
    %v3838 = vmul.f32 %v3833, 0.35355338
    %v3839 = vsel %vm603, %v3835, -inf
    %3840 = vmax.xlane.f32.xlu0 %v3839
    %v3841 = vpop.xlane.xlu0 %3840
    %v3842 = vsel %vm607, %v3836, -inf
    %3843 = vmax.xlane.f32.xlu0 %v3842
    %v3844 = vpop.xlane.xlu0 %3843
    %v3845 = vsel %vm603, %v3837, -inf
    %3846 = vmax.xlane.f32.xlu0 %v3845
    %v3847 = vpop.xlane.xlu0 %3846
    %v3848 = vsel %vm607, %v3838, -inf
    %3849 = vmax.xlane.f32.xlu0 %v3848
    %v3850 = vpop.xlane.xlu0 %3849
    %v3851 = vsub.f32 %v3835, %v3841
    %v3852 = vsub.f32 %v3836, %v3844
    %v3853 = vsub.f32 %v3837, %v3847
    %v3854 = vsub.f32 %v3838, %v3850
    %v3855 = vmul.f32 %v3851, 1.442695
    %v3856 = vpow.pop %v3855
    %v3857 = vmul.f32 %v3852, 1.442695
    %v3858 = vpow.pop %v3857
    %v3859 = vmul.f32 %v3853, 1.442695
    %v3860 = vpow.pop %v3859
    %v3861 = vmul.f32 %v3854, 1.442695
    %v3862 = vpow.pop %v3861
    %v3863 = vsel %vm603, %v3856, 0.0
    %3864 = vadd.xlane.f32.xlu0 %v3863
    %v3865 = vpop.xlane.xlu0 %3864
    %v3866 = vsel %vm607, %v3858, 0.0
    %3867 = vadd.xlane.f32.xlu0 %v3866
    %v3868 = vpop.xlane.xlu0 %3867
    %v3869 = vsel %vm603, %v3860, 0.0
    %3870 = vadd.xlane.f32.xlu0 %v3869
    %v3871 = vpop.xlane.xlu0 %3870
    %v3872 = vsel %vm607, %v3862, 0.0
    %3873 = vadd.xlane.f32.xlu0 %v3872
    %v3874 = vpop.xlane.xlu0 %3873
    %v3875 = vrcp.pop %v3865
    %v3876 = vrcp.pop %v3868
    %v3877 = vrcp.pop %v3871
    %v3878 = vrcp.pop %v3874
    %v3879 = vmul.f32 %v3856, %v3875
    %v3880 = vmul.f32 %v3858, %v3876
    %v3881 = vmul.f32 %v3860, %v3877
    %v3882 = vmul.f32 %v3862, %v3878
    %3883 = vst [vmem:[#allocation1] ss:$9 sm:$0xff] %v3372
    %s3884 = scalar_lea.vmem [#allocation1], 1
    %3885 = vst [vmem:[%s3884] ss:$9 sm:$0xff] %v3383
    %s3886 = scalar_lea.vmem [#allocation1], 2
    %3887 = vst [vmem:[%s3886] ss:$9 sm:$0xff] %v3384
    %s3888 = scalar_lea.vmem [#allocation1], 3
    %3889 = vst [vmem:[%s3888] ss:$9 sm:$0xff] %v3385
    %s3890 = scalar_lea.vmem [#allocation1], 4
    %3891 = vst [vmem:[%s3890] ss:$9 sm:$0xff] %v3386
    %s3892 = scalar_lea.vmem [#allocation1], 5
    %3893 = vst [vmem:[%s3892] ss:$9 sm:$0xff] %v3387
    %s3894 = scalar_lea.vmem [#allocation1], 6
    %3895 = vst [vmem:[%s3894] ss:$9 sm:$0xff] %v3388
    %s3896 = scalar_lea.vmem [#allocation1], 7
    %3897 = vst [vmem:[%s3896] ss:$9 sm:$0xff] %v3389
    %v3898 = vld [vmem:[#allocation1] sm:$0xff]
    %3899 = vst [vmem:[#allocation1] ss:$9 sm:$0xff] %v3375
    %v3900 = vld [vmem:[#allocation1] sm:$0xff]
    %3901 = vrot.lane.b32.xlu0 %v3898, 120
    %v3902 = vpop.permute.xlu0 %3901
    %3903 = vrot.lane.b32.xlu0 %v3900, 120
    %v3904 = vpop.permute.xlu0 %3903
    %v3907 = vsel %vm603, %v3879, 0
    %v3910 = vsel %vm603, %v3880, 0
    %v3912 = vsel %vm674, %v3904, 0
    %3914 = vmatpush.msra.mxu0 0.0
    %3915 = vmatpush.msra.mxu0 0.0
    %3916 = vmatpush.msra.mxu0 0.0
    %3917 = vmatpush.msra.mxu0 0.0
    %3918 = vmatpush.msra.mxu0 0.0
    %3919 = vmatpush.msra.mxu0 0.0
    %3920 = vmatpush.msra.mxu0 0.0
    %3921 = vmatpush.msra.mxu0 0.0
    %3922 = vmatpush.msra.mxu0 0.0
    %3923 = vmatpush.msra.mxu0 0.0
    %3924 = vmatpush.msra.mxu0 0.0
    %3925 = vmatpush.msra.mxu0 0.0
    %3926 = vmatpush.msra.mxu0 0.0
    %3927 = vmatpush.msra.mxu0 0.0
    %3928 = vmatpush.msra.mxu0 %v3912
    %3929 = vmatpush.msra.mxu0 %v3902
    %3930 = vmatmul.f32.gmra.mxu0 %v3907
    %v3931 = vpop.f32.mrf.mxu0
    %v3932 = vadd.f32 0.0, %v3931
    %3933 = vmatmul.f32.gmra.mxu0 %v3910
    %v3934 = vpop.f32.mrf.mxu0
    %v3935 = vadd.f32 0.0, %v3934
    %3936 = vdwg.mxu0
    %3937 = vst [vmem:[#allocation1] ss:$9 sm:$0xff] %v3390
    %s3938 = scalar_lea.vmem [#allocation1], 1
    %3939 = vst [vmem:[%s3938] ss:$9 sm:$0xff] %v3391
    %s3940 = scalar_lea.vmem [#allocation1], 2
    %3941 = vst [vmem:[%s3940] ss:$9 sm:$0xff] %v3392
    %s3942 = scalar_lea.vmem [#allocation1], 3
    %3943 = vst [vmem:[%s3942] ss:$9 sm:$0xff] %v3393
    %s3944 = scalar_lea.vmem [#allocation1], 4
    %3945 = vst [vmem:[%s3944] ss:$9 sm:$0xff] %v3394
    %s3946 = scalar_lea.vmem [#allocation1], 5
    %3947 = vst [vmem:[%s3946] ss:$9 sm:$0xff] %v3395
    %s3948 = scalar_lea.vmem [#allocation1], 6
    %3949 = vst [vmem:[%s3948] ss:$9 sm:$0xff] %v3396
    %s3950 = scalar_lea.vmem [#allocation1], 7
    %3951 = vst [vmem:[%s3950] ss:$9 sm:$0xff] %v3378
    %v3952 = vld [vmem:[#allocation1] sm:$0xff]
    %3953 = vst [vmem:[#allocation1] ss:$9 sm:$0xff] %v3397
    %v3954 = vld [vmem:[#allocation1] sm:$0xff]
    %3955 = vrot.lane.b32.xlu0 %v3952, 120
    %v3956 = vpop.permute.xlu0 %3955
    %3957 = vrot.lane.b32.xlu0 %v3954, 120
    %v3958 = vpop.permute.xlu0 %3957
    %v3961 = vsel %vm603, %v3881, 0
    %v3964 = vsel %vm603, %v3882, 0
    %v3966 = vsel %vm674, %v3958, 0
    %3968 = vmatpush.msra.mxu0 0.0
    %3969 = vmatpush.msra.mxu0 0.0
    %3970 = vmatpush.msra.mxu0 0.0
    %3971 = vmatpush.msra.mxu0 0.0
    %3972 = vmatpush.msra.mxu0 0.0
    %3973 = vmatpush.msra.mxu0 0.0
    %3974 = vmatpush.msra.mxu0 0.0
    %3975 = vmatpush.msra.mxu0 0.0
    %3976 = vmatpush.msra.mxu0 0.0
    %3977 = vmatpush.msra.mxu0 0.0
    %3978 = vmatpush.msra.mxu0 0.0
    %3979 = vmatpush.msra.mxu0 0.0
    %3980 = vmatpush.msra.mxu0 0.0
    %3981 = vmatpush.msra.mxu0 0.0
    %3982 = vmatpush.msra.mxu0 %v3966
    %3983 = vmatpush.msra.mxu0 %v3956
    %3984 = vmatmul.f32.gmra.mxu0 %v3961
    %v3985 = vpop.f32.mrf.mxu0
    %v3986 = vadd.f32 0.0, %v3985
    %3987 = vmatmul.f32.gmra.mxu0 %v3964
    %v3988 = vpop.f32.mrf.mxu0
    %v3989 = vadd.f32 0.0, %v3988
    %3990 = vdwg.mxu0
    %v3995 = vrot.slane %v3932, 1
    %v3996 = vrot.slane %v3932, 2
    %v3997 = vrot.slane %v3932, 3
    %v3998 = vrot.slane %v3932, 4
    %v3999 = vrot.slane %v3932, 5
    %v4000 = vrot.slane %v3932, 6
    %v4001 = vrot.slane %v3932, 7
    %v4002 = vrot.slane %v3986, 1
    %v4003 = vrot.slane %v3986, 2
    %v4004 = vrot.slane %v3986, 3
    %v4005 = vrot.slane %v3986, 4
    %v4006 = vrot.slane %v3986, 5
    %v4007 = vrot.slane %v3986, 6
    %v4008 = vrot.slane %v3986, 7
    %4009 = vst [vmem:[#allocation1] ss:$9 sm:$0xff] %v3932
    %s4010 = scalar_lea.vmem [#allocation1], 1
    %4011 = vst [vmem:[%s4010] ss:$9 sm:$0xff] %v3995
    %s4012 = scalar_lea.vmem [#allocation1], 2
    %4013 = vst [vmem:[%s4012] ss:$9 sm:$0xff] %v3996
    %s4014 = scalar_lea.vmem [#allocation1], 3
    %4015 = vst [vmem:[%s4014] ss:$9 sm:$0xff] %v3997
    %s4016 = scalar_lea.vmem [#allocation1], 4
    %4017 = vst [vmem:[%s4016] ss:$9 sm:$0xff] %v3998
    %s4018 = scalar_lea.vmem [#allocation1], 5
    %4019 = vst [vmem:[%s4018] ss:$9 sm:$0xff] %v3999
    %s4020 = scalar_lea.vmem [#allocation1], 6
    %4021 = vst [vmem:[%s4020] ss:$9 sm:$0xff] %v4000
    %s4022 = scalar_lea.vmem [#allocation1], 7
    %4023 = vst [vmem:[%s4022] ss:$9 sm:$0xff] %v4001
    %v4024 = vld [vmem:[#allocation1] sm:$0xff]
    %4025 = vst [vmem:[#allocation1] ss:$9 sm:$0xff] %v3935
    %4026 = vst [vmem:[%s4010] ss:$9 sm:$0xff] %v3986
    %4027 = vst [vmem:[%s4012] ss:$9 sm:$0xff] %v4002
    %4028 = vst [vmem:[%s4014] ss:$9 sm:$0xff] %v4003
    %4029 = vst [vmem:[%s4016] ss:$9 sm:$0xff] %v4004
    %4030 = vst [vmem:[%s4018] ss:$9 sm:$0xff] %v4005
    %4031 = vst [vmem:[%s4020] ss:$9 sm:$0xff] %v4006
    %4032 = vst [vmem:[%s4022] ss:$9 sm:$0xff] %v4007
    %v4033 = vld [vmem:[#allocation1] sm:$0xff]
    %4034 = vst [vmem:[#allocation1] ss:$9 sm:$0xff] %v4008
    %4035 = vst [vmem:[%s4010] ss:$9 sm:$0xff] %v3989
    %v4036 = vld [vmem:[#allocation1] sm:$0xff]
    %v4037 = vsel %vm500, %v4024, 0
    %v4039 = vsel %vm500, %v4033, 0
    %v4041 = vsel %vm500, %v4036, 0
    %4043 = vmatpush.msra.mxu0 0.0
    %4044 = vmatpush.msra.mxu0 0.0
    %4045 = vmatpush.msra.mxu0 0.0
    %4046 = vmatpush.msra.mxu0 0.0
    %4047 = vmatpush.msra.mxu0 0.0
    %4048 = vmatpush.msra.mxu0 0.0
    %4049 = vmatpush.msra.mxu0 0.0
    %4050 = vmatpush.msra.mxu0 0.0
    %4051 = vmatpush.msra.mxu0 0.0
    %4052 = vmatpush.msra.mxu0 0.0
    %4053 = vmatpush.msra.mxu0 0.0
    %4054 = vmatpush.msra.mxu0 0.0
    %4055 = vmatpush.msra.mxu0 0.0
    %4056 = vmatpush.msra.mxu0 0.0
    %4057 = vmatpush.msra.mxu0 0.0
    %4058 = vmatpush.msra.mxu0 %v3400
    %4059 = vmatmul.f32.gmra.mxu0 %v4037
    %v4060 = vpop.f32.mrf.mxu0
    %v4061 = vadd.f32 0.0, %v4060
    %4062 = vmatmul.f32.gmra.mxu0 %v4039
    %v4063 = vpop.f32.mrf.mxu0
    %v4064 = vadd.f32 0.0, %v4063
    %4065 = vmatmul.f32.gmra.mxu0 %v4041
    %v4066 = vpop.f32.mrf.mxu0
    %v4067 = vadd.f32 0.0, %v4066
    %4068 = vdwg.mxu0
    %v4073 = vrot.slane %v3630, 1
    %v4074 = vrot.slane %v3630, 2
    %v4075 = vrot.slane %v3630, 3
    %v4076 = vrot.slane %v3630, 4
    %v4077 = vrot.slane %v3630, 5
    %v4078 = vrot.slane %v3630, 6
    %v4079 = vrot.slane %v3630, 7
    %v4080 = vrot.slane %v3680, 1
    %v4081 = vrot.slane %v3680, 2
    %v4082 = vrot.slane %v3680, 3
    %v4083 = vrot.slane %v3680, 4
    %v4084 = vrot.slane %v3680, 5
    %v4085 = vrot.slane %v3680, 6
    %v4086 = vrot.slane %v3680, 7
    %4087 = vst [vmem:[#allocation1] ss:$9 sm:$0xff] %v3630
    %s4088 = scalar_lea.vmem [#allocation1], 1
    %4089 = vst [vmem:[%s4088] ss:$9 sm:$0xff] %v4073
    %s4090 = scalar_lea.vmem [#allocation1], 2
    %4091 = vst [vmem:[%s4090] ss:$9 sm:$0xff] %v4074
    %s4092 = scalar_lea.vmem [#allocation1], 3
    %4093 = vst [vmem:[%s4092] ss:$9 sm:$0xff] %v4075
    %s4094 = scalar_lea.vmem [#allocation1], 4
    %4095 = vst [vmem:[%s4094] ss:$9 sm:$0xff] %v4076
    %s4096 = scalar_lea.vmem [#allocation1], 5
    %4097 = vst [vmem:[%s4096] ss:$9 sm:$0xff] %v4077
    %s4098 = scalar_lea.vmem [#allocation1], 6
    %4099 = vst [vmem:[%s4098] ss:$9 sm:$0xff] %v4078
    %s4100 = scalar_lea.vmem [#allocation1], 7
    %4101 = vst [vmem:[%s4100] ss:$9 sm:$0xff] %v4079
    %v4102 = vld [vmem:[#allocation1] sm:$0xff]
    %4103 = vst [vmem:[#allocation1] ss:$9 sm:$0xff] %v3633
    %4104 = vst [vmem:[%s4088] ss:$9 sm:$0xff] %v3680
    %4105 = vst [vmem:[%s4090] ss:$9 sm:$0xff] %v4080
    %4106 = vst [vmem:[%s4092] ss:$9 sm:$0xff] %v4081
    %4107 = vst [vmem:[%s4094] ss:$9 sm:$0xff] %v4082
    %4108 = vst [vmem:[%s4096] ss:$9 sm:$0xff] %v4083
    %4109 = vst [vmem:[%s4098] ss:$9 sm:$0xff] %v4084
    %4110 = vst [vmem:[%s4100] ss:$9 sm:$0xff] %v4085
    %v4111 = vld [vmem:[#allocation1] sm:$0xff]
    %4112 = vst [vmem:[#allocation1] ss:$9 sm:$0xff] %v4086
    %4113 = vst [vmem:[%s4088] ss:$9 sm:$0xff] %v3683
    %v4114 = vld [vmem:[#allocation1] sm:$0xff]
    %v4115 = vsel %vm500, %v4102, 0
    %v4117 = vsel %vm500, %v4111, 0
    %v4119 = vsel %vm500, %v4114, 0
    %4121 = vmatpush.msra.mxu0 0.0
    %4122 = vmatpush.msra.mxu0 0.0
    %4123 = vmatpush.msra.mxu0 0.0
    %4124 = vmatpush.msra.mxu0 0.0
    %4125 = vmatpush.msra.mxu0 0.0
    %4126 = vmatpush.msra.mxu0 0.0
    %4127 = vmatpush.msra.mxu0 0.0
    %4128 = vmatpush.msra.mxu0 0.0
    %4129 = vmatpush.msra.mxu0 0.0
    %4130 = vmatpush.msra.mxu0 0.0
    %4131 = vmatpush.msra.mxu0 0.0
    %4132 = vmatpush.msra.mxu0 0.0
    %4133 = vmatpush.msra.mxu0 0.0
    %4134 = vmatpush.msra.mxu0 0.0
    %4135 = vmatpush.msra.mxu0 0.0
    %4136 = vmatpush.msra.mxu0 %v3399
    %4137 = vmatmul.f32.gmra.mxu0 %v4115
    %v4138 = vpop.f32.mrf.mxu0
    %v4139 = vadd.f32 %v4061, %v4138
    %4140 = vmatmul.f32.gmra.mxu0 %v4117
    %v4141 = vpop.f32.mrf.mxu0
    %v4142 = vadd.f32 %v4064, %v4141
    %4143 = vmatmul.f32.gmra.mxu0 %v4119
    %v4144 = vpop.f32.mrf.mxu0
    %v4145 = vadd.f32 %v4067, %v4144
    %4146 = vdwg.mxu0
    %v4150 = vrot.slane %v4139, 1
    %v4151 = vrot.slane %v4139, 2
    %v4152 = vrot.slane %v4139, 3
    %v4153 = vrot.slane %v4139, 4
    %v4154 = vrot.slane %v4139, 5
    %v4155 = vrot.slane %v4139, 6
    %v4156 = vrot.slane %v4139, 7
    %v4157 = vrot.slane %v4142, 1
    %v4158 = vrot.slane %v4142, 2
    %v4159 = vrot.slane %v4142, 3
    %v4160 = vrot.slane %v4142, 4
    %v4161 = vrot.slane %v4142, 5
    %v4162 = vrot.slane %v4142, 6
    %v4163 = vrot.slane %v4142, 7
    %v4164 = vrot.slane %v4145, 1
    %4180 = vst [vmem:[#allocation1] ss:$9 sm:$0xff] %v3372
    %s4181 = scalar_lea.vmem [#allocation1], 1
    %4182 = vst [vmem:[%s4181] ss:$9 sm:$0xff] %v3383
    %s4183 = scalar_lea.vmem [#allocation1], 2
    %4184 = vst [vmem:[%s4183] ss:$9 sm:$0xff] %v3384
    %s4185 = scalar_lea.vmem [#allocation1], 3
    %4186 = vst [vmem:[%s4185] ss:$9 sm:$0xff] %v3385
    %s4187 = scalar_lea.vmem [#allocation1], 4
    %4188 = vst [vmem:[%s4187] ss:$9 sm:$0xff] %v3386
    %s4189 = scalar_lea.vmem [#allocation1], 5
    %4190 = vst [vmem:[%s4189] ss:$9 sm:$0xff] %v3387
    %s4191 = scalar_lea.vmem [#allocation1], 6
    %4192 = vst [vmem:[%s4191] ss:$9 sm:$0xff] %v3388
    %s4193 = scalar_lea.vmem [#allocation1], 7
    %4194 = vst [vmem:[%s4193] ss:$9 sm:$0xff] %v3389
    %v4195 = vld [vmem:[#allocation1] sm:$0xff]
    %4196 = vst [vmem:[#allocation1] ss:$9 sm:$0xff] %v3375
    %v4197 = vld [vmem:[#allocation1] sm:$0xff]
    %4198 = vrot.lane.b32.xlu0 %v4195, 112
    %v4199 = vpop.permute.xlu0 %4198
    %4200 = vrot.lane.b32.xlu0 %v4197, 112
    %v4201 = vpop.permute.xlu0 %4200
    %4202 = vst [vmem:[#allocation1] ss:$9 sm:$0xff] %v3372
    %s4203 = scalar_lea.vmem [#allocation1], 1
    %4204 = vst [vmem:[%s4203] ss:$9 sm:$0xff] %v3383
    %s4205 = scalar_lea.vmem [#allocation1], 2
    %4206 = vst [vmem:[%s4205] ss:$9 sm:$0xff] %v3384
    %s4207 = scalar_lea.vmem [#allocation1], 3
    %4208 = vst [vmem:[%s4207] ss:$9 sm:$0xff] %v3385
    %s4209 = scalar_lea.vmem [#allocation1], 4
    %4210 = vst [vmem:[%s4209] ss:$9 sm:$0xff] %v3386
    %s4211 = scalar_lea.vmem [#allocation1], 5
    %4212 = vst [vmem:[%s4211] ss:$9 sm:$0xff] %v3387
    %s4213 = scalar_lea.vmem [#allocation1], 6
    %4214 = vst [vmem:[%s4213] ss:$9 sm:$0xff] %v3388
    %s4215 = scalar_lea.vmem [#allocation1], 7
    %4216 = vst [vmem:[%s4215] ss:$9 sm:$0xff] %v3389
    %v4217 = vld [vmem:[#allocation1] sm:$0xff]
    %4218 = vst [vmem:[#allocation1] ss:$9 sm:$0xff] %v3375
    %v4219 = vld [vmem:[#allocation1] sm:$0xff]
    %4220 = vrot.lane.b32.xlu0 %v4217, 112
    %v4221 = vpop.permute.xlu0 %4220
    %4222 = vrot.lane.b32.xlu0 %v4219, 112
    %v4223 = vpop.permute.xlu0 %4222
    %v4224 = vsel %vm500, %v4199, 0
    %v4226 = vsel %vm500, %v4201, 0
    %v4228 = vsel %vm500, %v4221, 0
    %v4230 = vsel %vm500, %v4223, 0
    %4232 = vmatpush.xpose.msra.mxu0 0.0
    %4233 = vmatpush.xpose.msra.mxu0 0.0
    %4234 = vmatpush.xpose.msra.mxu0 0.0
    %4235 = vmatpush.xpose.msra.mxu0 0.0
    %4236 = vmatpush.xpose.msra.mxu0 0.0
    %4237 = vmatpush.xpose.msra.mxu0 0.0
    %4238 = vmatpush.xpose.msra.mxu0 0.0
    %4239 = vmatpush.xpose.msra.mxu0 0.0
    %4240 = vmatpush.xpose.msra.mxu0 0.0
    %4241 = vmatpush.xpose.msra.mxu0 0.0
    %4242 = vmatpush.xpose.msra.mxu0 0.0
    %4243 = vmatpush.xpose.msra.mxu0 0.0
    %4244 = vmatpush.xpose.msra.mxu0 0.0
    %4245 = vmatpush.xpose.msra.mxu0 0.0
    %4246 = vmatpush.xpose.msra.mxu0 %v4230
    %4247 = vmatpush.xpose.msra.mxu0 %v4228
    %4248 = vmatmul.f32.gmra.mxu0 %v4224
    %v4249 = vpop.f32.mrf.mxu0
    %v4250 = vadd.f32 0.0, %v4249
    %4251 = vmatmul.f32.gmra.mxu0 %v4226
    %v4252 = vpop.f32.mrf.mxu0
    %v4253 = vadd.f32 0.0, %v4252
    %4254 = vdwg.mxu0
    %4255 = vst [vmem:[#allocation1] ss:$9 sm:$0xff] %v3390
    %s4256 = scalar_lea.vmem [#allocation1], 1
    %4257 = vst [vmem:[%s4256] ss:$9 sm:$0xff] %v3391
    %s4258 = scalar_lea.vmem [#allocation1], 2
    %4259 = vst [vmem:[%s4258] ss:$9 sm:$0xff] %v3392
    %s4260 = scalar_lea.vmem [#allocation1], 3
    %4261 = vst [vmem:[%s4260] ss:$9 sm:$0xff] %v3393
    %s4262 = scalar_lea.vmem [#allocation1], 4
    %4263 = vst [vmem:[%s4262] ss:$9 sm:$0xff] %v3394
    %s4264 = scalar_lea.vmem [#allocation1], 5
    %4265 = vst [vmem:[%s4264] ss:$9 sm:$0xff] %v3395
    %s4266 = scalar_lea.vmem [#allocation1], 6
    %4267 = vst [vmem:[%s4266] ss:$9 sm:$0xff] %v3396
    %s4268 = scalar_lea.vmem [#allocation1], 7
    %4269 = vst [vmem:[%s4268] ss:$9 sm:$0xff] %v3378
    %v4270 = vld [vmem:[#allocation1] sm:$0xff]
    %4271 = vst [vmem:[#allocation1] ss:$9 sm:$0xff] %v3397
    %v4272 = vld [vmem:[#allocation1] sm:$0xff]
    %4273 = vrot.lane.b32.xlu0 %v4270, 112
    %v4274 = vpop.permute.xlu0 %4273
    %4275 = vrot.lane.b32.xlu0 %v4272, 112
    %v4276 = vpop.permute.xlu0 %4275
    %4277 = vst [vmem:[#allocation1] ss:$9 sm:$0xff] %v3390
    %s4278 = scalar_lea.vmem [#allocation1], 1
    %4279 = vst [vmem:[%s4278] ss:$9 sm:$0xff] %v3391
    %s4280 = scalar_lea.vmem [#allocation1], 2
    %4281 = vst [vmem:[%s4280] ss:$9 sm:$0xff] %v3392
    %s4282 = scalar_lea.vmem [#allocation1], 3
    %4283 = vst [vmem:[%s4282] ss:$9 sm:$0xff] %v3393
    %s4284 = scalar_lea.vmem [#allocation1], 4
    %4285 = vst [vmem:[%s4284] ss:$9 sm:$0xff] %v3394
    %s4286 = scalar_lea.vmem [#allocation1], 5
    %4287 = vst [vmem:[%s4286] ss:$9 sm:$0xff] %v3395
    %s4288 = scalar_lea.vmem [#allocation1], 6
    %4289 = vst [vmem:[%s4288] ss:$9 sm:$0xff] %v3396
    %s4290 = scalar_lea.vmem [#allocation1], 7
    %4291 = vst [vmem:[%s4290] ss:$9 sm:$0xff] %v3378
    %v4292 = vld [vmem:[#allocation1] sm:$0xff]
    %4293 = vst [vmem:[#allocation1] ss:$9 sm:$0xff] %v3397
    %v4294 = vld [vmem:[#allocation1] sm:$0xff]
    %4295 = vrot.lane.b32.xlu0 %v4292, 112
    %v4296 = vpop.permute.xlu0 %4295
    %4297 = vrot.lane.b32.xlu0 %v4294, 112
    %v4298 = vpop.permute.xlu0 %4297
    %v4299 = vsel %vm500, %v4274, 0
    %v4301 = vsel %vm500, %v4276, 0
    %v4303 = vsel %vm500, %v4296, 0
    %v4305 = vsel %vm500, %v4298, 0
    %4307 = vmatpush.xpose.msra.mxu0 0.0
    %4308 = vmatpush.xpose.msra.mxu0 0.0
    %4309 = vmatpush.xpose.msra.mxu0 0.0
    %4310 = vmatpush.xpose.msra.mxu0 0.0
    %4311 = vmatpush.xpose.msra.mxu0 0.0
    %4312 = vmatpush.xpose.msra.mxu0 0.0
    %4313 = vmatpush.xpose.msra.mxu0 0.0
    %4314 = vmatpush.xpose.msra.mxu0 0.0
    %4315 = vmatpush.xpose.msra.mxu0 0.0
    %4316 = vmatpush.xpose.msra.mxu0 0.0
    %4317 = vmatpush.xpose.msra.mxu0 0.0
    %4318 = vmatpush.xpose.msra.mxu0 0.0
    %4319 = vmatpush.xpose.msra.mxu0 0.0
    %4320 = vmatpush.xpose.msra.mxu0 0.0
    %4321 = vmatpush.xpose.msra.mxu0 %v4305
    %4322 = vmatpush.xpose.msra.mxu0 %v4303
    %4323 = vmatmul.f32.gmra.mxu0 %v4299
    %v4324 = vpop.f32.mrf.mxu0
    %v4325 = vadd.f32 0.0, %v4324
    %4326 = vmatmul.f32.gmra.mxu0 %v4301
    %v4327 = vpop.f32.mrf.mxu0
    %v4328 = vadd.f32 0.0, %v4327
    %4329 = vdwg.mxu0
    %v4330 = vmul.f32 %v4250, 0.35355338
    %v4331 = vmul.f32 %v4253, 0.35355338
    %v4332 = vmul.f32 %v4325, 0.35355338
    %v4333 = vmul.f32 %v4328, 0.35355338
    %v4334 = vsel %vm603, %v4330, -inf
    %4335 = vmax.xlane.f32.xlu0 %v4334
    %v4336 = vpop.xlane.xlu0 %4335
    %v4337 = vsel %vm607, %v4331, -inf
    %4338 = vmax.xlane.f32.xlu0 %v4337
    %v4339 = vpop.xlane.xlu0 %4338
    %v4340 = vsel %vm603, %v4332, -inf
    %4341 = vmax.xlane.f32.xlu0 %v4340
    %v4342 = vpop.xlane.xlu0 %4341
    %v4343 = vsel %vm607, %v4333, -inf
    %4344 = vmax.xlane.f32.xlu0 %v4343
    %v4345 = vpop.xlane.xlu0 %4344
    %v4346 = vsub.f32 %v4330, %v4336
    %v4347 = vsub.f32 %v4331, %v4339
    %v4348 = vsub.f32 %v4332, %v4342
    %v4349 = vsub.f32 %v4333, %v4345
    %v4350 = vmul.f32 %v4346, 1.442695
    %v4351 = vpow.pop %v4350
    %v4352 = vmul.f32 %v4347, 1.442695
    %v4353 = vpow.pop %v4352
    %v4354 = vmul.f32 %v4348, 1.442695
    %v4355 = vpow.pop %v4354
    %v4356 = vmul.f32 %v4349, 1.442695
    %v4357 = vpow.pop %v4356
    %v4358 = vsel %vm603, %v4351, 0.0
    %4359 = vadd.xlane.f32.xlu0 %v4358
    %v4360 = vpop.xlane.xlu0 %4359
    %v4361 = vsel %vm607, %v4353, 0.0
    %4362 = vadd.xlane.f32.xlu0 %v4361
    %v4363 = vpop.xlane.xlu0 %4362
    %v4364 = vsel %vm603, %v4355, 0.0
    %4365 = vadd.xlane.f32.xlu0 %v4364
    %v4366 = vpop.xlane.xlu0 %4365
    %v4367 = vsel %vm607, %v4357, 0.0
    %4368 = vadd.xlane.f32.xlu0 %v4367
    %v4369 = vpop.xlane.xlu0 %4368
    %v4370 = vrcp.pop %v4360
    %v4371 = vrcp.pop %v4363
    %v4372 = vrcp.pop %v4366
    %v4373 = vrcp.pop %v4369
    %v4374 = vmul.f32 %v4351, %v4370
    %v4375 = vmul.f32 %v4353, %v4371
    %v4376 = vmul.f32 %v4355, %v4372
    %v4377 = vmul.f32 %v4357, %v4373
    %4378 = vst [vmem:[#allocation1] ss:$9 sm:$0xff] %v3372
    %s4379 = scalar_lea.vmem [#allocation1], 1
    %4380 = vst [vmem:[%s4379] ss:$9 sm:$0xff] %v3383
    %s4381 = scalar_lea.vmem [#allocation1], 2
    %4382 = vst [vmem:[%s4381] ss:$9 sm:$0xff] %v3384
    %s4383 = scalar_lea.vmem [#allocation1], 3
    %4384 = vst [vmem:[%s4383] ss:$9 sm:$0xff] %v3385
    %s4385 = scalar_lea.vmem [#allocation1], 4
    %4386 = vst [vmem:[%s4385] ss:$9 sm:$0xff] %v3386
    %s4387 = scalar_lea.vmem [#allocation1], 5
    %4388 = vst [vmem:[%s4387] ss:$9 sm:$0xff] %v3387
    %s4389 = scalar_lea.vmem [#allocation1], 6
    %4390 = vst [vmem:[%s4389] ss:$9 sm:$0xff] %v3388
    %s4391 = scalar_lea.vmem [#allocation1], 7
    %4392 = vst [vmem:[%s4391] ss:$9 sm:$0xff] %v3389
    %v4393 = vld [vmem:[#allocation1] sm:$0xff]
    %4394 = vst [vmem:[#allocation1] ss:$9 sm:$0xff] %v3375
    %v4395 = vld [vmem:[#allocation1] sm:$0xff]
    %4396 = vrot.lane.b32.xlu0 %v4393, 112
    %v4397 = vpop.permute.xlu0 %4396
    %4398 = vrot.lane.b32.xlu0 %v4395, 112
    %v4399 = vpop.permute.xlu0 %4398
    %v4402 = vsel %vm603, %v4374, 0
    %v4405 = vsel %vm603, %v4375, 0
    %v4407 = vsel %vm674, %v4399, 0
    %4409 = vmatpush.msra.mxu0 0.0
    %4410 = vmatpush.msra.mxu0 0.0
    %4411 = vmatpush.msra.mxu0 0.0
    %4412 = vmatpush.msra.mxu0 0.0
    %4413 = vmatpush.msra.mxu0 0.0
    %4414 = vmatpush.msra.mxu0 0.0
    %4415 = vmatpush.msra.mxu0 0.0
    %4416 = vmatpush.msra.mxu0 0.0
    %4417 = vmatpush.msra.mxu0 0.0
    %4418 = vmatpush.msra.mxu0 0.0
    %4419 = vmatpush.msra.mxu0 0.0
    %4420 = vmatpush.msra.mxu0 0.0
    %4421 = vmatpush.msra.mxu0 0.0
    %4422 = vmatpush.msra.mxu0 0.0
    %4423 = vmatpush.msra.mxu0 %v4407
    %4424 = vmatpush.msra.mxu0 %v4397
    %4425 = vmatmul.f32.gmra.mxu0 %v4402
    %v4426 = vpop.f32.mrf.mxu0
    %v4427 = vadd.f32 0.0, %v4426
    %4428 = vmatmul.f32.gmra.mxu0 %v4405
    %v4429 = vpop.f32.mrf.mxu0
    %v4430 = vadd.f32 0.0, %v4429
    %4431 = vdwg.mxu0
    %4432 = vst [vmem:[#allocation1] ss:$9 sm:$0xff] %v3390
    %s4433 = scalar_lea.vmem [#allocation1], 1
    %4434 = vst [vmem:[%s4433] ss:$9 sm:$0xff] %v3391
    %s4435 = scalar_lea.vmem [#allocation1], 2
    %4436 = vst [vmem:[%s4435] ss:$9 sm:$0xff] %v3392
    %s4437 = scalar_lea.vmem [#allocation1], 3
    %4438 = vst [vmem:[%s4437] ss:$9 sm:$0xff] %v3393
    %s4439 = scalar_lea.vmem [#allocation1], 4
    %4440 = vst [vmem:[%s4439] ss:$9 sm:$0xff] %v3394
    %s4441 = scalar_lea.vmem [#allocation1], 5
    %4442 = vst [vmem:[%s4441] ss:$9 sm:$0xff] %v3395
    %s4443 = scalar_lea.vmem [#allocation1], 6
    %4444 = vst [vmem:[%s4443] ss:$9 sm:$0xff] %v3396
    %s4445 = scalar_lea.vmem [#allocation1], 7
    %4446 = vst [vmem:[%s4445] ss:$9 sm:$0xff] %v3378
    %v4447 = vld [vmem:[#allocation1] sm:$0xff]
    %4448 = vst [vmem:[#allocation1] ss:$9 sm:$0xff] %v3397
    %v4449 = vld [vmem:[#allocation1] sm:$0xff]
    %4450 = vrot.lane.b32.xlu0 %v4447, 112
    %v4451 = vpop.permute.xlu0 %4450
    %4452 = vrot.lane.b32.xlu0 %v4449, 112
    %v4453 = vpop.permute.xlu0 %4452
    %v4456 = vsel %vm603, %v4376, 0
    %v4459 = vsel %vm603, %v4377, 0
    %v4461 = vsel %vm674, %v4453, 0
    %4463 = vmatpush.msra.mxu0 0.0
    %4464 = vmatpush.msra.mxu0 0.0
    %4465 = vmatpush.msra.mxu0 0.0
    %4466 = vmatpush.msra.mxu0 0.0
    %4467 = vmatpush.msra.mxu0 0.0
    %4468 = vmatpush.msra.mxu0 0.0
    %4469 = vmatpush.msra.mxu0 0.0
    %4470 = vmatpush.msra.mxu0 0.0
    %4471 = vmatpush.msra.mxu0 0.0
    %4472 = vmatpush.msra.mxu0 0.0
    %4473 = vmatpush.msra.mxu0 0.0
    %4474 = vmatpush.msra.mxu0 0.0
    %4475 = vmatpush.msra.mxu0 0.0
    %4476 = vmatpush.msra.mxu0 0.0
    %4477 = vmatpush.msra.mxu0 %v4461
    %4478 = vmatpush.msra.mxu0 %v4451
    %4479 = vmatmul.f32.gmra.mxu0 %v4456
    %v4480 = vpop.f32.mrf.mxu0
    %v4481 = vadd.f32 0.0, %v4480
    %4482 = vmatmul.f32.gmra.mxu0 %v4459
    %v4483 = vpop.f32.mrf.mxu0
    %v4484 = vadd.f32 0.0, %v4483
    %4485 = vdwg.mxu0
    %v4490 = vrot.slane %v4427, 1
    %v4491 = vrot.slane %v4427, 2
    %v4492 = vrot.slane %v4427, 3
    %v4493 = vrot.slane %v4427, 4
    %v4494 = vrot.slane %v4427, 5
    %v4495 = vrot.slane %v4427, 6
    %v4496 = vrot.slane %v4427, 7
    %v4497 = vrot.slane %v4481, 1
    %v4498 = vrot.slane %v4481, 2
    %v4499 = vrot.slane %v4481, 3
    %v4500 = vrot.slane %v4481, 4
    %v4501 = vrot.slane %v4481, 5
    %v4502 = vrot.slane %v4481, 6
    %v4503 = vrot.slane %v4481, 7
    %4504 = vst [vmem:[#allocation1] ss:$9 sm:$0xff] %v4427
    %s4505 = scalar_lea.vmem [#allocation1], 1
    %4506 = vst [vmem:[%s4505] ss:$9 sm:$0xff] %v4490
    %s4507 = scalar_lea.vmem [#allocation1], 2
    %4508 = vst [vmem:[%s4507] ss:$9 sm:$0xff] %v4491
    %s4509 = scalar_lea.vmem [#allocation1], 3
    %4510 = vst [vmem:[%s4509] ss:$9 sm:$0xff] %v4492
    %s4511 = scalar_lea.vmem [#allocation1], 4
    %4512 = vst [vmem:[%s4511] ss:$9 sm:$0xff] %v4493
    %s4513 = scalar_lea.vmem [#allocation1], 5
    %4514 = vst [vmem:[%s4513] ss:$9 sm:$0xff] %v4494
    %s4515 = scalar_lea.vmem [#allocation1], 6
    %4516 = vst [vmem:[%s4515] ss:$9 sm:$0xff] %v4495
    %s4517 = scalar_lea.vmem [#allocation1], 7
    %4518 = vst [vmem:[%s4517] ss:$9 sm:$0xff] %v4496
    %v4519 = vld [vmem:[#allocation1] sm:$0xff]
    %4520 = vst [vmem:[#allocation1] ss:$9 sm:$0xff] %v4430
    %4521 = vst [vmem:[%s4505] ss:$9 sm:$0xff] %v4481
    %4522 = vst [vmem:[%s4507] ss:$9 sm:$0xff] %v4497
    %4523 = vst [vmem:[%s4509] ss:$9 sm:$0xff] %v4498
    %4524 = vst [vmem:[%s4511] ss:$9 sm:$0xff] %v4499
    %4525 = vst [vmem:[%s4513] ss:$9 sm:$0xff] %v4500
    %4526 = vst [vmem:[%s4515] ss:$9 sm:$0xff] %v4501
    %4527 = vst [vmem:[%s4517] ss:$9 sm:$0xff] %v4502
    %v4528 = vld [vmem:[#allocation1] sm:$0xff]
    %4529 = vst [vmem:[#allocation1] ss:$9 sm:$0xff] %v4503
    %4530 = vst [vmem:[%s4505] ss:$9 sm:$0xff] %v4484
    %v4531 = vld [vmem:[#allocation1] sm:$0xff]
    %v4532 = vsel %vm500, %v4519, 0
    %v4534 = vsel %vm500, %v4528, 0
    %v4536 = vsel %vm500, %v4531, 0
    %4538 = vmatpush.msra.mxu0 0.0
    %4539 = vmatpush.msra.mxu0 0.0
    %4540 = vmatpush.msra.mxu0 0.0
    %4541 = vmatpush.msra.mxu0 0.0
    %4542 = vmatpush.msra.mxu0 0.0
    %4543 = vmatpush.msra.mxu0 0.0
    %4544 = vmatpush.msra.mxu0 0.0
    %4545 = vmatpush.msra.mxu0 0.0
    %4546 = vmatpush.msra.mxu0 0.0
    %4547 = vmatpush.msra.mxu0 0.0
    %4548 = vmatpush.msra.mxu0 0.0
    %4549 = vmatpush.msra.mxu0 0.0
    %4550 = vmatpush.msra.mxu0 0.0
    %4551 = vmatpush.msra.mxu0 0.0
    %4552 = vmatpush.msra.mxu0 0.0
    %4553 = vmatpush.msra.mxu0 %v3401
    %4554 = vmatmul.f32.gmra.mxu0 %v4532
    %v4555 = vpop.f32.mrf.mxu0
    %v4556 = vadd.f32 0.0, %v4555
    %4557 = vmatmul.f32.gmra.mxu0 %v4534
    %v4558 = vpop.f32.mrf.mxu0
    %v4559 = vadd.f32 0.0, %v4558
    %4560 = vmatmul.f32.gmra.mxu0 %v4536
    %v4561 = vpop.f32.mrf.mxu0
    %v4562 = vadd.f32 0.0, %v4561
    %4563 = vdwg.mxu0
    %v4567 = vrot.slane %v4556, 1
    %v4568 = vrot.slane %v4556, 2
    %v4569 = vrot.slane %v4556, 3
    %v4570 = vrot.slane %v4556, 4
    %v4571 = vrot.slane %v4556, 5
    %v4572 = vrot.slane %v4556, 6
    %v4573 = vrot.slane %v4556, 7
    %v4574 = vrot.slane %v4559, 1
    %v4575 = vrot.slane %v4559, 2
    %v4576 = vrot.slane %v4559, 3
    %v4577 = vrot.slane %v4559, 4
    %v4578 = vrot.slane %v4559, 5
    %v4579 = vrot.slane %v4559, 6
    %v4580 = vrot.slane %v4559, 7
    %v4581 = vrot.slane %v4562, 1
    %v4597 = vadd.f32 %v4139, %v4556
    %v4598 = vadd.f32 %v4150, %v4567
    %v4599 = vadd.f32 %v4151, %v4568
    %v4600 = vadd.f32 %v4152, %v4569
    %v4601 = vadd.f32 %v4153, %v4570
    %v4602 = vadd.f32 %v4154, %v4571
    %v4603 = vadd.f32 %v4155, %v4572
    %v4604 = vadd.f32 %v4156, %v4573
    %v4605 = vadd.f32 %v4142, %v4559
    %v4606 = vadd.f32 %v4157, %v4574
    %v4607 = vadd.f32 %v4158, %v4575
    %v4608 = vadd.f32 %v4159, %v4576
    %v4609 = vadd.f32 %v4160, %v4577
    %v4610 = vadd.f32 %v4161, %v4578
    %v4611 = vadd.f32 %v4162, %v4579
    %v4612 = vadd.f32 %v4163, %v4580
    %v4613 = vadd.f32 %v4145, %v4562
    %v4614 = vadd.f32 %v4164, %v4581
    %4615 = vst [vmem:[#allocation1] ss:$9 sm:$0xff] %v3372
    %s4616 = scalar_lea.vmem [#allocation1], 1
    %4617 = vst [vmem:[%s4616] ss:$9 sm:$0xff] %v3383
    %s4618 = scalar_lea.vmem [#allocation1], 2
    %4619 = vst [vmem:[%s4618] ss:$9 sm:$0xff] %v3384
    %s4620 = scalar_lea.vmem [#allocation1], 3
    %4621 = vst [vmem:[%s4620] ss:$9 sm:$0xff] %v3385
    %s4622 = scalar_lea.vmem [#allocation1], 4
    %4623 = vst [vmem:[%s4622] ss:$9 sm:$0xff] %v3386
    %s4624 = scalar_lea.vmem [#allocation1], 5
    %4625 = vst [vmem:[%s4624] ss:$9 sm:$0xff] %v3387
    %s4626 = scalar_lea.vmem [#allocation1], 6
    %4627 = vst [vmem:[%s4626] ss:$9 sm:$0xff] %v3388
    %s4628 = scalar_lea.vmem [#allocation1], 7
    %4629 = vst [vmem:[%s4628] ss:$9 sm:$0xff] %v3389
    %v4630 = vld [vmem:[#allocation1] sm:$0xff]
    %4631 = vst [vmem:[#allocation1] ss:$9 sm:$0xff] %v3375
    %v4632 = vld [vmem:[#allocation1] sm:$0xff]
    %4633 = vrot.lane.b32.xlu0 %v4630, 104
    %v4634 = vpop.permute.xlu0 %4633
    %4635 = vrot.lane.b32.xlu0 %v4632, 104
    %v4636 = vpop.permute.xlu0 %4635
    %4637 = vst [vmem:[#allocation1] ss:$9 sm:$0xff] %v3372
    %s4638 = scalar_lea.vmem [#allocation1], 1
    %4639 = vst [vmem:[%s4638] ss:$9 sm:$0xff] %v3383
    %s4640 = scalar_lea.vmem [#allocation1], 2
    %4641 = vst [vmem:[%s4640] ss:$9 sm:$0xff] %v3384
    %s4642 = scalar_lea.vmem [#allocation1], 3
    %4643 = vst [vmem:[%s4642] ss:$9 sm:$0xff] %v3385
    %s4644 = scalar_lea.vmem [#allocation1], 4
    %4645 = vst [vmem:[%s4644] ss:$9 sm:$0xff] %v3386
    %s4646 = scalar_lea.vmem [#allocation1], 5
    %4647 = vst [vmem:[%s4646] ss:$9 sm:$0xff] %v3387
    %s4648 = scalar_lea.vmem [#allocation1], 6
    %4649 = vst [vmem:[%s4648] ss:$9 sm:$0xff] %v3388
    %s4650 = scalar_lea.vmem [#allocation1], 7
    %4651 = vst [vmem:[%s4650] ss:$9 sm:$0xff] %v3389
    %v4652 = vld [vmem:[#allocation1] sm:$0xff]
    %4653 = vst [vmem:[#allocation1] ss:$9 sm:$0xff] %v3375
    %v4654 = vld [vmem:[#allocation1] sm:$0xff]
    %4655 = vrot.lane.b32.xlu0 %v4652, 104
    %v4656 = vpop.permute.xlu0 %4655
    %4657 = vrot.lane.b32.xlu0 %v4654, 104
    %v4658 = vpop.permute.xlu0 %4657
    %v4659 = vsel %vm500, %v4634, 0
    %v4661 = vsel %vm500, %v4636, 0
    %v4663 = vsel %vm500, %v4656, 0
    %v4665 = vsel %vm500, %v4658, 0
    %4667 = vmatpush.xpose.msra.mxu0 0.0
    %4668 = vmatpush.xpose.msra.mxu0 0.0
    %4669 = vmatpush.xpose.msra.mxu0 0.0
    %4670 = vmatpush.xpose.msra.mxu0 0.0
    %4671 = vmatpush.xpose.msra.mxu0 0.0
    %4672 = vmatpush.xpose.msra.mxu0 0.0
    %4673 = vmatpush.xpose.msra.mxu0 0.0
    %4674 = vmatpush.xpose.msra.mxu0 0.0
    %4675 = vmatpush.xpose.msra.mxu0 0.0
    %4676 = vmatpush.xpose.msra.mxu0 0.0
    %4677 = vmatpush.xpose.msra.mxu0 0.0
    %4678 = vmatpush.xpose.msra.mxu0 0.0
    %4679 = vmatpush.xpose.msra.mxu0 0.0
    %4680 = vmatpush.xpose.msra.mxu0 0.0
    %4681 = vmatpush.xpose.msra.mxu0 %v4665
    %4682 = vmatpush.xpose.msra.mxu0 %v4663
    %4683 = vmatmul.f32.gmra.mxu0 %v4659
    %v4684 = vpop.f32.mrf.mxu0
    %v4685 = vadd.f32 0.0, %v4684
    %4686 = vmatmul.f32.gmra.mxu0 %v4661
    %v4687 = vpop.f32.mrf.mxu0
    %v4688 = vadd.f32 0.0, %v4687
    %4689 = vdwg.mxu0
    %4690 = vst [vmem:[#allocation1] ss:$9 sm:$0xff] %v3390
    %s4691 = scalar_lea.vmem [#allocation1], 1
    %4692 = vst [vmem:[%s4691] ss:$9 sm:$0xff] %v3391
    %s4693 = scalar_lea.vmem [#allocation1], 2
    %4694 = vst [vmem:[%s4693] ss:$9 sm:$0xff] %v3392
    %s4695 = scalar_lea.vmem [#allocation1], 3
    %4696 = vst [vmem:[%s4695] ss:$9 sm:$0xff] %v3393
    %s4697 = scalar_lea.vmem [#allocation1], 4
    %4698 = vst [vmem:[%s4697] ss:$9 sm:$0xff] %v3394
    %s4699 = scalar_lea.vmem [#allocation1], 5
    %4700 = vst [vmem:[%s4699] ss:$9 sm:$0xff] %v3395
    %s4701 = scalar_lea.vmem [#allocation1], 6
    %4702 = vst [vmem:[%s4701] ss:$9 sm:$0xff] %v3396
    %s4703 = scalar_lea.vmem [#allocation1], 7
    %4704 = vst [vmem:[%s4703] ss:$9 sm:$0xff] %v3378
    %v4705 = vld [vmem:[#allocation1] sm:$0xff]
    %4706 = vst [vmem:[#allocation1] ss:$9 sm:$0xff] %v3397
    %v4707 = vld [vmem:[#allocation1] sm:$0xff]
    %4708 = vrot.lane.b32.xlu0 %v4705, 104
    %v4709 = vpop.permute.xlu0 %4708
    %4710 = vrot.lane.b32.xlu0 %v4707, 104
    %v4711 = vpop.permute.xlu0 %4710
    %4712 = vst [vmem:[#allocation1] ss:$9 sm:$0xff] %v3390
    %s4713 = scalar_lea.vmem [#allocation1], 1
    %4714 = vst [vmem:[%s4713] ss:$9 sm:$0xff] %v3391
    %s4715 = scalar_lea.vmem [#allocation1], 2
    %4716 = vst [vmem:[%s4715] ss:$9 sm:$0xff] %v3392
    %s4717 = scalar_lea.vmem [#allocation1], 3
    %4718 = vst [vmem:[%s4717] ss:$9 sm:$0xff] %v3393
    %s4719 = scalar_lea.vmem [#allocation1], 4
    %4720 = vst [vmem:[%s4719] ss:$9 sm:$0xff] %v3394
    %s4721 = scalar_lea.vmem [#allocation1], 5
    %4722 = vst [vmem:[%s4721] ss:$9 sm:$0xff] %v3395
    %s4723 = scalar_lea.vmem [#allocation1], 6
    %4724 = vst [vmem:[%s4723] ss:$9 sm:$0xff] %v3396
    %s4725 = scalar_lea.vmem [#allocation1], 7
    %4726 = vst [vmem:[%s4725] ss:$9 sm:$0xff] %v3378
    %v4727 = vld [vmem:[#allocation1] sm:$0xff]
    %4728 = vst [vmem:[#allocation1] ss:$9 sm:$0xff] %v3397
    %v4729 = vld [vmem:[#allocation1] sm:$0xff]
    %4730 = vrot.lane.b32.xlu0 %v4727, 104
    %v4731 = vpop.permute.xlu0 %4730
    %4732 = vrot.lane.b32.xlu0 %v4729, 104
    %v4733 = vpop.permute.xlu0 %4732
    %v4734 = vsel %vm500, %v4709, 0
    %v4736 = vsel %vm500, %v4711, 0
    %v4738 = vsel %vm500, %v4731, 0
    %v4740 = vsel %vm500, %v4733, 0
    %4742 = vmatpush.xpose.msra.mxu0 0.0
    %4743 = vmatpush.xpose.msra.mxu0 0.0
    %4744 = vmatpush.xpose.msra.mxu0 0.0
    %4745 = vmatpush.xpose.msra.mxu0 0.0
    %4746 = vmatpush.xpose.msra.mxu0 0.0
    %4747 = vmatpush.xpose.msra.mxu0 0.0
    %4748 = vmatpush.xpose.msra.mxu0 0.0
    %4749 = vmatpush.xpose.msra.mxu0 0.0
    %4750 = vmatpush.xpose.msra.mxu0 0.0
    %4751 = vmatpush.xpose.msra.mxu0 0.0
    %4752 = vmatpush.xpose.msra.mxu0 0.0
    %4753 = vmatpush.xpose.msra.mxu0 0.0
    %4754 = vmatpush.xpose.msra.mxu0 0.0
    %4755 = vmatpush.xpose.msra.mxu0 0.0
    %4756 = vmatpush.xpose.msra.mxu0 %v4740
    %4757 = vmatpush.xpose.msra.mxu0 %v4738
    %4758 = vmatmul.f32.gmra.mxu0 %v4734
    %v4759 = vpop.f32.mrf.mxu0
    %v4760 = vadd.f32 0.0, %v4759
    %4761 = vmatmul.f32.gmra.mxu0 %v4736
    %v4762 = vpop.f32.mrf.mxu0
    %v4763 = vadd.f32 0.0, %v4762
    %4764 = vdwg.mxu0
    %v4765 = vmul.f32 %v4685, 0.35355338
    %v4766 = vmul.f32 %v4688, 0.35355338
    %v4767 = vmul.f32 %v4760, 0.35355338
    %v4768 = vmul.f32 %v4763, 0.35355338
    %v4769 = vsel %vm603, %v4765, -inf
    %4770 = vmax.xlane.f32.xlu0 %v4769
    %v4771 = vpop.xlane.xlu0 %4770
    %v4772 = vsel %vm607, %v4766, -inf
    %4773 = vmax.xlane.f32.xlu0 %v4772
    %v4774 = vpop.xlane.xlu0 %4773
    %v4775 = vsel %vm603, %v4767, -inf
    %4776 = vmax.xlane.f32.xlu0 %v4775
    %v4777 = vpop.xlane.xlu0 %4776
    %v4778 = vsel %vm607, %v4768, -inf
    %4779 = vmax.xlane.f32.xlu0 %v4778
    %v4780 = vpop.xlane.xlu0 %4779
    %v4781 = vsub.f32 %v4765, %v4771
    %v4782 = vsub.f32 %v4766, %v4774
    %v4783 = vsub.f32 %v4767, %v4777
    %v4784 = vsub.f32 %v4768, %v4780
    %v4785 = vmul.f32 %v4781, 1.442695
    %v4786 = vpow.pop %v4785
    %v4787 = vmul.f32 %v4782, 1.442695
    %v4788 = vpow.pop %v4787
    %v4789 = vmul.f32 %v4783, 1.442695
    %v4790 = vpow.pop %v4789
    %v4791 = vmul.f32 %v4784, 1.442695
    %v4792 = vpow.pop %v4791
    %v4793 = vsel %vm603, %v4786, 0.0
    %4794 = vadd.xlane.f32.xlu0 %v4793
    %v4795 = vpop.xlane.xlu0 %4794
    %v4796 = vsel %vm607, %v4788, 0.0
    %4797 = vadd.xlane.f32.xlu0 %v4796
    %v4798 = vpop.xlane.xlu0 %4797
    %v4799 = vsel %vm603, %v4790, 0.0
    %4800 = vadd.xlane.f32.xlu0 %v4799
    %v4801 = vpop.xlane.xlu0 %4800
    %v4802 = vsel %vm607, %v4792, 0.0
    %4803 = vadd.xlane.f32.xlu0 %v4802
    %v4804 = vpop.xlane.xlu0 %4803
    %v4805 = vrcp.pop %v4795
    %v4806 = vrcp.pop %v4798
    %v4807 = vrcp.pop %v4801
    %v4808 = vrcp.pop %v4804
    %v4809 = vmul.f32 %v4786, %v4805
    %v4810 = vmul.f32 %v4788, %v4806
    %v4811 = vmul.f32 %v4790, %v4807
    %v4812 = vmul.f32 %v4792, %v4808
    %4813 = vst [vmem:[#allocation1] ss:$9 sm:$0xff] %v3372
    %s4814 = scalar_lea.vmem [#allocation1], 1
    %4815 = vst [vmem:[%s4814] ss:$9 sm:$0xff] %v3383
    %s4816 = scalar_lea.vmem [#allocation1], 2
    %4817 = vst [vmem:[%s4816] ss:$9 sm:$0xff] %v3384
    %s4818 = scalar_lea.vmem [#allocation1], 3
    %4819 = vst [vmem:[%s4818] ss:$9 sm:$0xff] %v3385
    %s4820 = scalar_lea.vmem [#allocation1], 4
    %4821 = vst [vmem:[%s4820] ss:$9 sm:$0xff] %v3386
    %s4822 = scalar_lea.vmem [#allocation1], 5
    %4823 = vst [vmem:[%s4822] ss:$9 sm:$0xff] %v3387
    %s4824 = scalar_lea.vmem [#allocation1], 6
    %4825 = vst [vmem:[%s4824] ss:$9 sm:$0xff] %v3388
    %s4826 = scalar_lea.vmem [#allocation1], 7
    %4827 = vst [vmem:[%s4826] ss:$9 sm:$0xff] %v3389
    %v4828 = vld [vmem:[#allocation1] sm:$0xff]
    %4829 = vst [vmem:[#allocation1] ss:$9 sm:$0xff] %v3375
    %v4830 = vld [vmem:[#allocation1] sm:$0xff]
    %4831 = vrot.lane.b32.xlu0 %v4828, 104
    %v4832 = vpop.permute.xlu0 %4831
    %4833 = vrot.lane.b32.xlu0 %v4830, 104
    %v4834 = vpop.permute.xlu0 %4833
    %v4837 = vsel %vm603, %v4809, 0
    %v4840 = vsel %vm603, %v4810, 0
    %v4842 = vsel %vm674, %v4834, 0
    %4844 = vmatpush.msra.mxu0 0.0
    %4845 = vmatpush.msra.mxu0 0.0
    %4846 = vmatpush.msra.mxu0 0.0
    %4847 = vmatpush.msra.mxu0 0.0
    %4848 = vmatpush.msra.mxu0 0.0
    %4849 = vmatpush.msra.mxu0 0.0
    %4850 = vmatpush.msra.mxu0 0.0
    %4851 = vmatpush.msra.mxu0 0.0
    %4852 = vmatpush.msra.mxu0 0.0
    %4853 = vmatpush.msra.mxu0 0.0
    %4854 = vmatpush.msra.mxu0 0.0
    %4855 = vmatpush.msra.mxu0 0.0
    %4856 = vmatpush.msra.mxu0 0.0
    %4857 = vmatpush.msra.mxu0 0.0
    %4858 = vmatpush.msra.mxu0 %v4842
    %4859 = vmatpush.msra.mxu0 %v4832
    %4860 = vmatmul.f32.gmra.mxu0 %v4837
    %v4861 = vpop.f32.mrf.mxu0
    %v4862 = vadd.f32 0.0, %v4861
    %4863 = vmatmul.f32.gmra.mxu0 %v4840
    %v4864 = vpop.f32.mrf.mxu0
    %v4865 = vadd.f32 0.0, %v4864
    %4866 = vdwg.mxu0
    %4867 = vst [vmem:[#allocation1] ss:$9 sm:$0xff] %v3390
    %s4868 = scalar_lea.vmem [#allocation1], 1
    %4869 = vst [vmem:[%s4868] ss:$9 sm:$0xff] %v3391
    %s4870 = scalar_lea.vmem [#allocation1], 2
    %4871 = vst [vmem:[%s4870] ss:$9 sm:$0xff] %v3392
    %s4872 = scalar_lea.vmem [#allocation1], 3
    %4873 = vst [vmem:[%s4872] ss:$9 sm:$0xff] %v3393
    %s4874 = scalar_lea.vmem [#allocation1], 4
    %4875 = vst [vmem:[%s4874] ss:$9 sm:$0xff] %v3394
    %s4876 = scalar_lea.vmem [#allocation1], 5
    %4877 = vst [vmem:[%s4876] ss:$9 sm:$0xff] %v3395
    %s4878 = scalar_lea.vmem [#allocation1], 6
    %4879 = vst [vmem:[%s4878] ss:$9 sm:$0xff] %v3396
    %s4880 = scalar_lea.vmem [#allocation1], 7
    %4881 = vst [vmem:[%s4880] ss:$9 sm:$0xff] %v3378
    %v4882 = vld [vmem:[#allocation1] sm:$0xff]
    %4883 = vst [vmem:[#allocation1] ss:$9 sm:$0xff] %v3397
    %v4884 = vld [vmem:[#allocation1] sm:$0xff]
    %4885 = vrot.lane.b32.xlu0 %v4882, 104
    %v4886 = vpop.permute.xlu0 %4885
    %4887 = vrot.lane.b32.xlu0 %v4884, 104
    %v4888 = vpop.permute.xlu0 %4887
    %v4891 = vsel %vm603, %v4811, 0
    %v4894 = vsel %vm603, %v4812, 0
    %v4896 = vsel %vm674, %v4888, 0
    %4898 = vmatpush.msra.mxu0 0.0
    %4899 = vmatpush.msra.mxu0 0.0
    %4900 = vmatpush.msra.mxu0 0.0
    %4901 = vmatpush.msra.mxu0 0.0
    %4902 = vmatpush.msra.mxu0 0.0
    %4903 = vmatpush.msra.mxu0 0.0
    %4904 = vmatpush.msra.mxu0 0.0
    %4905 = vmatpush.msra.mxu0 0.0
    %4906 = vmatpush.msra.mxu0 0.0
    %4907 = vmatpush.msra.mxu0 0.0
    %4908 = vmatpush.msra.mxu0 0.0
    %4909 = vmatpush.msra.mxu0 0.0
    %4910 = vmatpush.msra.mxu0 0.0
    %4911 = vmatpush.msra.mxu0 0.0
    %4912 = vmatpush.msra.mxu0 %v4896
    %4913 = vmatpush.msra.mxu0 %v4886
    %4914 = vmatmul.f32.gmra.mxu0 %v4891
    %v4915 = vpop.f32.mrf.mxu0
    %v4916 = vadd.f32 0.0, %v4915
    %4917 = vmatmul.f32.gmra.mxu0 %v4894
    %v4918 = vpop.f32.mrf.mxu0
    %v4919 = vadd.f32 0.0, %v4918
    %4920 = vdwg.mxu0
    %v4925 = vrot.slane %v4862, 1
    %v4926 = vrot.slane %v4862, 2
    %v4927 = vrot.slane %v4862, 3
    %v4928 = vrot.slane %v4862, 4
    %v4929 = vrot.slane %v4862, 5
    %v4930 = vrot.slane %v4862, 6
    %v4931 = vrot.slane %v4862, 7
    %v4932 = vrot.slane %v4916, 1
    %v4933 = vrot.slane %v4916, 2
    %v4934 = vrot.slane %v4916, 3
    %v4935 = vrot.slane %v4916, 4
    %v4936 = vrot.slane %v4916, 5
    %v4937 = vrot.slane %v4916, 6
    %v4938 = vrot.slane %v4916, 7
    %4939 = vst [vmem:[#allocation1] ss:$9 sm:$0xff] %v4862
    %s4940 = scalar_lea.vmem [#allocation1], 1
    %4941 = vst [vmem:[%s4940] ss:$9 sm:$0xff] %v4925
    %s4942 = scalar_lea.vmem [#allocation1], 2
    %4943 = vst [vmem:[%s4942] ss:$9 sm:$0xff] %v4926
    %s4944 = scalar_lea.vmem [#allocation1], 3
    %4945 = vst [vmem:[%s4944] ss:$9 sm:$0xff] %v4927
    %s4946 = scalar_lea.vmem [#allocation1], 4
    %4947 = vst [vmem:[%s4946] ss:$9 sm:$0xff] %v4928
    %s4948 = scalar_lea.vmem [#allocation1], 5
    %4949 = vst [vmem:[%s4948] ss:$9 sm:$0xff] %v4929
    %s4950 = scalar_lea.vmem [#allocation1], 6
    %4951 = vst [vmem:[%s4950] ss:$9 sm:$0xff] %v4930
    %s4952 = scalar_lea.vmem [#allocation1], 7
    %4953 = vst [vmem:[%s4952] ss:$9 sm:$0xff] %v4931
    %v4954 = vld [vmem:[#allocation1] sm:$0xff]
    %4955 = vst [vmem:[#allocation1] ss:$9 sm:$0xff] %v4865
    %4956 = vst [vmem:[%s4940] ss:$9 sm:$0xff] %v4916
    %4957 = vst [vmem:[%s4942] ss:$9 sm:$0xff] %v4932
    %4958 = vst [vmem:[%s4944] ss:$9 sm:$0xff] %v4933
    %4959 = vst [vmem:[%s4946] ss:$9 sm:$0xff] %v4934
    %4960 = vst [vmem:[%s4948] ss:$9 sm:$0xff] %v4935
    %4961 = vst [vmem:[%s4950] ss:$9 sm:$0xff] %v4936
    %4962 = vst [vmem:[%s4952] ss:$9 sm:$0xff] %v4937
    %v4963 = vld [vmem:[#allocation1] sm:$0xff]
    %4964 = vst [vmem:[#allocation1] ss:$9 sm:$0xff] %v4938
    %4965 = vst [vmem:[%s4940] ss:$9 sm:$0xff] %v4919
    %v4966 = vld [vmem:[#allocation1] sm:$0xff]
    %v4967 = vsel %vm500, %v4954, 0
    %v4969 = vsel %vm500, %v4963, 0
    %v4971 = vsel %vm500, %v4966, 0
    %4973 = vmatpush.msra.mxu0 0.0
    %4974 = vmatpush.msra.mxu0 0.0
    %4975 = vmatpush.msra.mxu0 0.0
    %4976 = vmatpush.msra.mxu0 0.0
    %4977 = vmatpush.msra.mxu0 0.0
    %4978 = vmatpush.msra.mxu0 0.0
    %4979 = vmatpush.msra.mxu0 0.0
    %4980 = vmatpush.msra.mxu0 0.0
    %4981 = vmatpush.msra.mxu0 0.0
    %4982 = vmatpush.msra.mxu0 0.0
    %4983 = vmatpush.msra.mxu0 0.0
    %4984 = vmatpush.msra.mxu0 0.0
    %4985 = vmatpush.msra.mxu0 0.0
    %4986 = vmatpush.msra.mxu0 0.0
    %4987 = vmatpush.msra.mxu0 0.0
    %4988 = vmatpush.msra.mxu0 %v3402
    %4989 = vmatmul.f32.gmra.mxu0 %v4967
    %v4990 = vpop.f32.mrf.mxu0
    %v4991 = vadd.f32 0.0, %v4990
    %4992 = vmatmul.f32.gmra.mxu0 %v4969
    %v4993 = vpop.f32.mrf.mxu0
    %v4994 = vadd.f32 0.0, %v4993
    %4995 = vmatmul.f32.gmra.mxu0 %v4971
    %v4996 = vpop.f32.mrf.mxu0
    %v4997 = vadd.f32 0.0, %v4996
    %4998 = vdwg.mxu0
    %v5002 = vrot.slane %v4991, 1
    %v5003 = vrot.slane %v4991, 2
    %v5004 = vrot.slane %v4991, 3
    %v5005 = vrot.slane %v4991, 4
    %v5006 = vrot.slane %v4991, 5
    %v5007 = vrot.slane %v4991, 6
    %v5008 = vrot.slane %v4991, 7
    %v5009 = vrot.slane %v4994, 1
    %v5010 = vrot.slane %v4994, 2
    %v5011 = vrot.slane %v4994, 3
    %v5012 = vrot.slane %v4994, 4
    %v5013 = vrot.slane %v4994, 5
    %v5014 = vrot.slane %v4994, 6
    %v5015 = vrot.slane %v4994, 7
    %v5016 = vrot.slane %v4997, 1
    %v5032 = vadd.f32 %v4597, %v4991
    %v5033 = vadd.f32 %v4598, %v5002
    %v5034 = vadd.f32 %v4599, %v5003
    %v5035 = vadd.f32 %v4600, %v5004
    %v5036 = vadd.f32 %v4601, %v5005
    %v5037 = vadd.f32 %v4602, %v5006
    %v5038 = vadd.f32 %v4603, %v5007
    %v5039 = vadd.f32 %v4604, %v5008
    %v5040 = vadd.f32 %v4605, %v4994
    %v5041 = vadd.f32 %v4606, %v5009
    %v5042 = vadd.f32 %v4607, %v5010
    %v5043 = vadd.f32 %v4608, %v5011
    %v5044 = vadd.f32 %v4609, %v5012
    %v5045 = vadd.f32 %v4610, %v5013
    %v5046 = vadd.f32 %v4611, %v5014
    %v5047 = vadd.f32 %v4612, %v5015
    %v5048 = vadd.f32 %v4613, %v4997
    %v5049 = vadd.f32 %v4614, %v5016
    %s5050 = scalar_lea.vmem %s13, 1
    %v5051 = vld [vmem:[%s5050] sm:$0x1]
    %v5053 = vperm.slane %v5051, 0
    %v5055 = vrot.slane %v5053, 1
    %v5056 = vrot.slane %v5053, 2
    %v5057 = vrot.slane %v5053, 3
    %v5058 = vrot.slane %v5053, 4
    %v5059 = vrot.slane %v5053, 5
    %v5060 = vrot.slane %v5053, 6
    %v5061 = vrot.slane %v5053, 7
    %v5069 = vadd.f32 %v5032, %v5053
    %v5070 = vadd.f32 %v5033, %v5055
    %v5071 = vadd.f32 %v5034, %v5056
    %v5072 = vadd.f32 %v5035, %v5057
    %v5073 = vadd.f32 %v5036, %v5058
    %v5074 = vadd.f32 %v5037, %v5059
    %v5075 = vadd.f32 %v5038, %v5060
    %v5076 = vadd.f32 %v5039, %v5061
    %v5077 = vadd.f32 %v5040, %v5053
    %v5078 = vadd.f32 %v5041, %v5053
    %v5079 = vadd.f32 %v5042, %v5055
    %v5080 = vadd.f32 %v5043, %v5056
    %v5081 = vadd.f32 %v5044, %v5057
    %v5082 = vadd.f32 %v5045, %v5058
    %v5083 = vadd.f32 %v5046, %v5059
    %v5084 = vadd.f32 %v5047, %v5060
    %v5085 = vadd.f32 %v5048, %v5061
    %v5086 = vadd.f32 %v5049, %v5053
    %v5087 = vadd.f32 %v5069, %v2893
    %v5088 = vadd.f32 %v5070, %v2894
    %v5089 = vadd.f32 %v5071, %v2895
    %v5090 = vadd.f32 %v5072, %v2896
    %v5091 = vadd.f32 %v5073, %v2897
    %v5092 = vadd.f32 %v5074, %v2898
    %v5093 = vadd.f32 %v5075, %v2899
    %v5094 = vadd.f32 %v5076, %v2900
    %v5095 = vadd.f32 %v5077, %v2901
    %v5096 = vadd.f32 %v5078, %v2902
    %v5097 = vadd.f32 %v5079, %v2903
    %v5098 = vadd.f32 %v5080, %v2904
    %v5099 = vadd.f32 %v5081, %v2905
    %v5100 = vadd.f32 %v5082, %v2906
    %v5101 = vadd.f32 %v5083, %v2907
    %v5102 = vadd.f32 %v5084, %v2908
    %v5103 = vadd.f32 %v5085, %v2909
    %v5104 = vadd.f32 %v5086, %v2910
    %s5105 = scalar_lea.vmem %s14, 1
    %v5106 = vld [vmem:[%s5105] sm:$0x1]
    %s5107 = scalar_lea.vmem %s15, 1
    %v5108 = vld [vmem:[%s5107] sm:$0x1]
    %5127 = vst [vmem:[#allocation1] ss:$9 sm:$0xff] %v5087
    %s5128 = scalar_lea.vmem [#allocation1], 1
    %5129 = vst [vmem:[%s5128] ss:$9 sm:$0xff] %v5088
    %s5130 = scalar_lea.vmem [#allocation1], 2
    %5131 = vst [vmem:[%s5130] ss:$9 sm:$0xff] %v5089
    %s5132 = scalar_lea.vmem [#allocation1], 3
    %5133 = vst [vmem:[%s5132] ss:$9 sm:$0xff] %v5090
    %s5134 = scalar_lea.vmem [#allocation1], 4
    %5135 = vst [vmem:[%s5134] ss:$9 sm:$0xff] %v5091
    %s5136 = scalar_lea.vmem [#allocation1], 5
    %5137 = vst [vmem:[%s5136] ss:$9 sm:$0xff] %v5092
    %s5138 = scalar_lea.vmem [#allocation1], 6
    %5139 = vst [vmem:[%s5138] ss:$9 sm:$0xff] %v5093
    %s5140 = scalar_lea.vmem [#allocation1], 7
    %5141 = vst [vmem:[%s5140] ss:$9 sm:$0xff] %v5094
    %v5142 = vld [vmem:[#allocation1] sm:$0xff]
    %5143 = vst [vmem:[#allocation1] ss:$9 sm:$0xff] %v5095
    %v5144 = vld [vmem:[#allocation1] sm:$0xff]
    %5145 = vst [vmem:[#allocation1] ss:$9 sm:$0xff] %v5096
    %5146 = vst [vmem:[%s5128] ss:$9 sm:$0xff] %v5097
    %5147 = vst [vmem:[%s5130] ss:$9 sm:$0xff] %v5098
    %5148 = vst [vmem:[%s5132] ss:$9 sm:$0xff] %v5099
    %5149 = vst [vmem:[%s5134] ss:$9 sm:$0xff] %v5100
    %5150 = vst [vmem:[%s5136] ss:$9 sm:$0xff] %v5101
    %5151 = vst [vmem:[%s5138] ss:$9 sm:$0xff] %v5102
    %5152 = vst [vmem:[%s5140] ss:$9 sm:$0xff] %v5103
    %v5153 = vld [vmem:[#allocation1] sm:$0xff]
    %5154 = vst [vmem:[#allocation1] ss:$9 sm:$0xff] %v5104
    %v5155 = vld [vmem:[#allocation1] sm:$0xff]
    %v5160 = vsel %vm79, %v5142, 0.0
    %5161 = vadd.xlane.f32.xlu0 %v5160
    %v5162 = vpop.xlane.xlu0 %5161
    %v5163 = vsel %vm238, %v5144, 0.0
    %5164 = vadd.xlane.f32.xlu0 %v5163
    %v5165 = vpop.xlane.xlu0 %5164
    %v5166 = vsel %vm79, %v5153, 0.0
    %5167 = vadd.xlane.f32.xlu0 %v5166
    %v5168 = vpop.xlane.xlu0 %5167
    %v5169 = vsel %vm238, %v5155, 0.0
    %5170 = vadd.xlane.f32.xlu0 %v5169
    %v5171 = vpop.xlane.xlu0 %5170
    %v5172 = vmul.f32 %v5162, %v92
    %v5173 = vmul.f32 %v5165, %v92
    %v5174 = vmul.f32 %v5168, %v92
    %v5175 = vmul.f32 %v5171, %v92
    %v5180 = vperm.slane %v5172, 0
    %v5181 = vperm.slane %v5172, 1
    %v5182 = vperm.slane %v5172, 2
    %v5183 = vperm.slane %v5172, 3
    %v5184 = vperm.slane %v5172, 4
    %v5185 = vperm.slane %v5172, 5
    %v5186 = vperm.slane %v5172, 6
    %v5187 = vperm.slane %v5172, 7
    %v5188 = vperm.slane %v5173, 0
    %v5189 = vperm.slane %v5174, 0
    %v5190 = vperm.slane %v5174, 1
    %v5191 = vperm.slane %v5174, 2
    %v5192 = vperm.slane %v5174, 3
    %v5193 = vperm.slane %v5174, 4
    %v5194 = vperm.slane %v5174, 5
    %v5195 = vperm.slane %v5174, 6
    %v5196 = vperm.slane %v5174, 7
    %v5197 = vperm.slane %v5175, 0
    %v5216 = vsub.f32 %v5087, %v5180
    %v5217 = vsub.f32 %v5088, %v5181
    %v5218 = vsub.f32 %v5089, %v5182
    %v5219 = vsub.f32 %v5090, %v5183
    %v5220 = vsub.f32 %v5091, %v5184
    %v5221 = vsub.f32 %v5092, %v5185
    %v5222 = vsub.f32 %v5093, %v5186
    %v5223 = vsub.f32 %v5094, %v5187
    %v5224 = vsub.f32 %v5095, %v5188
    %v5225 = vsub.f32 %v5096, %v5189
    %v5226 = vsub.f32 %v5097, %v5190
    %v5227 = vsub.f32 %v5098, %v5191
    %v5228 = vsub.f32 %v5099, %v5192
    %v5229 = vsub.f32 %v5100, %v5193
    %v5230 = vsub.f32 %v5101, %v5194
    %v5231 = vsub.f32 %v5102, %v5195
    %v5232 = vsub.f32 %v5103, %v5196
    %v5233 = vsub.f32 %v5104, %v5197
    %v5234 = vmul.f32 %v5216, %v5216
    %v5235 = vmul.f32 %v5217, %v5217
    %v5236 = vmul.f32 %v5218, %v5218
    %v5237 = vmul.f32 %v5219, %v5219
    %v5238 = vmul.f32 %v5220, %v5220
    %v5239 = vmul.f32 %v5221, %v5221
    %v5240 = vmul.f32 %v5222, %v5222
    %v5241 = vmul.f32 %v5223, %v5223
    %v5242 = vmul.f32 %v5224, %v5224
    %v5243 = vmul.f32 %v5225, %v5225
    %v5244 = vmul.f32 %v5226, %v5226
    %v5245 = vmul.f32 %v5227, %v5227
    %v5246 = vmul.f32 %v5228, %v5228
    %v5247 = vmul.f32 %v5229, %v5229
    %v5248 = vmul.f32 %v5230, %v5230
    %v5249 = vmul.f32 %v5231, %v5231
    %v5250 = vmul.f32 %v5232, %v5232
    %v5251 = vmul.f32 %v5233, %v5233
    %5270 = vst [vmem:[#allocation1] ss:$9 sm:$0xff] %v5234
    %s5271 = scalar_lea.vmem [#allocation1], 1
    %5272 = vst [vmem:[%s5271] ss:$9 sm:$0xff] %v5235
    %s5273 = scalar_lea.vmem [#allocation1], 2
    %5274 = vst [vmem:[%s5273] ss:$9 sm:$0xff] %v5236
    %s5275 = scalar_lea.vmem [#allocation1], 3
    %5276 = vst [vmem:[%s5275] ss:$9 sm:$0xff] %v5237
    %s5277 = scalar_lea.vmem [#allocation1], 4
    %5278 = vst [vmem:[%s5277] ss:$9 sm:$0xff] %v5238
    %s5279 = scalar_lea.vmem [#allocation1], 5
    %5280 = vst [vmem:[%s5279] ss:$9 sm:$0xff] %v5239
    %s5281 = scalar_lea.vmem [#allocation1], 6
    %5282 = vst [vmem:[%s5281] ss:$9 sm:$0xff] %v5240
    %s5283 = scalar_lea.vmem [#allocation1], 7
    %5284 = vst [vmem:[%s5283] ss:$9 sm:$0xff] %v5241
    %v5285 = vld [vmem:[#allocation1] sm:$0xff]
    %5286 = vst [vmem:[#allocation1] ss:$9 sm:$0xff] %v5242
    %v5287 = vld [vmem:[#allocation1] sm:$0xff]
    %5288 = vst [vmem:[#allocation1] ss:$9 sm:$0xff] %v5243
    %5289 = vst [vmem:[%s5271] ss:$9 sm:$0xff] %v5244
    %5290 = vst [vmem:[%s5273] ss:$9 sm:$0xff] %v5245
    %5291 = vst [vmem:[%s5275] ss:$9 sm:$0xff] %v5246
    %5292 = vst [vmem:[%s5277] ss:$9 sm:$0xff] %v5247
    %5293 = vst [vmem:[%s5279] ss:$9 sm:$0xff] %v5248
    %5294 = vst [vmem:[%s5281] ss:$9 sm:$0xff] %v5249
    %5295 = vst [vmem:[%s5283] ss:$9 sm:$0xff] %v5250
    %v5296 = vld [vmem:[#allocation1] sm:$0xff]
    %5297 = vst [vmem:[#allocation1] ss:$9 sm:$0xff] %v5251
    %v5298 = vld [vmem:[#allocation1] sm:$0xff]
    %v5303 = vsel %vm79, %v5285, 0.0
    %5304 = vadd.xlane.f32.xlu0 %v5303
    %v5305 = vpop.xlane.xlu0 %5304
    %v5306 = vsel %vm238, %v5287, 0.0
    %5307 = vadd.xlane.f32.xlu0 %v5306
    %v5308 = vpop.xlane.xlu0 %5307
    %v5309 = vsel %vm79, %v5296, 0.0
    %5310 = vadd.xlane.f32.xlu0 %v5309
    %v5311 = vpop.xlane.xlu0 %5310
    %v5312 = vsel %vm238, %v5298, 0.0
    %5313 = vadd.xlane.f32.xlu0 %v5312
    %v5314 = vpop.xlane.xlu0 %5313
    %v5315 = vmul.f32 %v5305, %v92
    %v5316 = vmul.f32 %v5308, %v92
    %v5317 = vmul.f32 %v5311, %v92
    %v5318 = vmul.f32 %v5314, %v92
    %v5319 = vadd.f32 %v5315, 1e-05
    %v5320 = vadd.f32 %v5316, 1e-05
    %v5321 = vadd.f32 %v5317, 1e-05
    %v5322 = vadd.f32 %v5318, 1e-05
    %v5323 = vrsqrt.pop %v5319
    %v5324 = vmul.f32 %v5323, %v5319
    %v5325 = vmul.f32 %v5324, %v5323
    %v5326 = vmul.f32 0.5, %v5325
    %v5327 = vsub.f32 1.5, %v5326
    %v5328 = vmul.f32 %v5323, %v5327
    %vm5329 = vweird.f32 %v5319
    %vm5330 = vweird.f32 %v5323
    %vm5331 = vmor %vm5329, %vm5330
    %v5332 = vsel %vm5331, %v5323, %v5328
    %v5333 = vrsqrt.pop %v5320
    %v5334 = vmul.f32 %v5333, %v5320
    %v5335 = vmul.f32 %v5334, %v5333
    %v5336 = vmul.f32 0.5, %v5335
    %v5337 = vsub.f32 1.5, %v5336
    %v5338 = vmul.f32 %v5333, %v5337
    %vm5339 = vweird.f32 %v5320
    %vm5340 = vweird.f32 %v5333
    %vm5341 = vmor %vm5339, %vm5340
    %v5342 = vsel %vm5341, %v5333, %v5338
    %v5343 = vrsqrt.pop %v5321
    %v5344 = vmul.f32 %v5343, %v5321
    %v5345 = vmul.f32 %v5344, %v5343
    %v5346 = vmul.f32 0.5, %v5345
    %v5347 = vsub.f32 1.5, %v5346
    %v5348 = vmul.f32 %v5343, %v5347
    %vm5349 = vweird.f32 %v5321
    %vm5350 = vweird.f32 %v5343
    %vm5351 = vmor %vm5349, %vm5350
    %v5352 = vsel %vm5351, %v5343, %v5348
    %v5353 = vrsqrt.pop %v5322
    %v5354 = vmul.f32 %v5353, %v5322
    %v5355 = vmul.f32 %v5354, %v5353
    %v5356 = vmul.f32 0.5, %v5355
    %v5357 = vsub.f32 1.5, %v5356
    %v5358 = vmul.f32 %v5353, %v5357
    %vm5359 = vweird.f32 %v5322
    %vm5360 = vweird.f32 %v5353
    %vm5361 = vmor %vm5359, %vm5360
    %v5362 = vsel %vm5361, %v5353, %v5358
    %v5367 = vperm.slane %v5332, 0
    %v5368 = vperm.slane %v5332, 1
    %v5369 = vperm.slane %v5332, 2
    %v5370 = vperm.slane %v5332, 3
    %v5371 = vperm.slane %v5332, 4
    %v5372 = vperm.slane %v5332, 5
    %v5373 = vperm.slane %v5332, 6
    %v5374 = vperm.slane %v5332, 7
    %v5375 = vperm.slane %v5342, 0
    %v5376 = vperm.slane %v5352, 0
    %v5377 = vperm.slane %v5352, 1
    %v5378 = vperm.slane %v5352, 2
    %v5379 = vperm.slane %v5352, 3
    %v5380 = vperm.slane %v5352, 4
    %v5381 = vperm.slane %v5352, 5
    %v5382 = vperm.slane %v5352, 6
    %v5383 = vperm.slane %v5352, 7
    %v5384 = vperm.slane %v5362, 0
    %v5403 = vmul.f32 %v5216, %v5367
    %v5404 = vmul.f32 %v5217, %v5368
    %v5405 = vmul.f32 %v5218, %v5369
    %v5406 = vmul.f32 %v5219, %v5370
    %v5407 = vmul.f32 %v5220, %v5371
    %v5408 = vmul.f32 %v5221, %v5372
    %v5409 = vmul.f32 %v5222, %v5373
    %v5410 = vmul.f32 %v5223, %v5374
    %v5411 = vmul.f32 %v5224, %v5375
    %v5412 = vmul.f32 %v5225, %v5376
    %v5413 = vmul.f32 %v5226, %v5377
    %v5414 = vmul.f32 %v5227, %v5378
    %v5415 = vmul.f32 %v5228, %v5379
    %v5416 = vmul.f32 %v5229, %v5380
    %v5417 = vmul.f32 %v5230, %v5381
    %v5418 = vmul.f32 %v5231, %v5382
    %v5419 = vmul.f32 %v5232, %v5383
    %v5420 = vmul.f32 %v5233, %v5384
    %v5422 = vperm.slane %v5106, 0
    %v5424 = vrot.slane %v5422, 1
    %v5425 = vrot.slane %v5422, 2
    %v5426 = vrot.slane %v5422, 3
    %v5427 = vrot.slane %v5422, 4
    %v5428 = vrot.slane %v5422, 5
    %v5429 = vrot.slane %v5422, 6
    %v5430 = vrot.slane %v5422, 7
    %v5438 = vmul.f32 %v5403, %v5422
    %v5439 = vmul.f32 %v5404, %v5424
    %v5440 = vmul.f32 %v5405, %v5425
    %v5441 = vmul.f32 %v5406, %v5426
    %v5442 = vmul.f32 %v5407, %v5427
    %v5443 = vmul.f32 %v5408, %v5428
    %v5444 = vmul.f32 %v5409, %v5429
    %v5445 = vmul.f32 %v5410, %v5430
    %v5446 = vmul.f32 %v5411, %v5422
    %v5447 = vmul.f32 %v5412, %v5422
    %v5448 = vmul.f32 %v5413, %v5424
    %v5449 = vmul.f32 %v5414, %v5425
    %v5450 = vmul.f32 %v5415, %v5426
    %v5451 = vmul.f32 %v5416, %v5427
    %v5452 = vmul.f32 %v5417, %v5428
    %v5453 = vmul.f32 %v5418, %v5429
    %v5454 = vmul.f32 %v5419, %v5430
    %v5455 = vmul.f32 %v5420, %v5422
    %v5457 = vperm.slane %v5108, 0
    %v5459 = vrot.slane %v5457, 1
    %v5460 = vrot.slane %v5457, 2
    %v5461 = vrot.slane %v5457, 3
    %v5462 = vrot.slane %v5457, 4
    %v5463 = vrot.slane %v5457, 5
    %v5464 = vrot.slane %v5457, 6
    %v5465 = vrot.slane %v5457, 7
    %v5473 = vadd.f32 %v5438, %v5457
    %v5474 = vadd.f32 %v5439, %v5459
    %v5475 = vadd.f32 %v5440, %v5460
    %v5476 = vadd.f32 %v5441, %v5461
    %v5477 = vadd.f32 %v5442, %v5462
    %v5478 = vadd.f32 %v5443, %v5463
    %v5479 = vadd.f32 %v5444, %v5464
    %v5480 = vadd.f32 %v5445, %v5465
    %v5481 = vadd.f32 %v5446, %v5457
    %v5482 = vadd.f32 %v5447, %v5457
    %v5483 = vadd.f32 %v5448, %v5459
    %v5484 = vadd.f32 %v5449, %v5460
    %v5485 = vadd.f32 %v5450, %v5461
    %v5486 = vadd.f32 %v5451, %v5462
    %v5487 = vadd.f32 %v5452, %v5463
    %v5488 = vadd.f32 %v5453, %v5464
    %v5489 = vadd.f32 %v5454, %v5465
    %v5490 = vadd.f32 %v5455, %v5457
    %s5491 = scalar_lea.vmem %s16, 32
    %v5492 = vld [vmem:[%s5491] sm:$0xff]
    %v5493 = vld [vmem:[%s5491 + $0x8] sm:$0xff]
    %v5494 = vld [vmem:[%s5491 + $0x10] sm:$0xff]
    %v5495 = vld [vmem:[%s5491 + $0x18] sm:$0xff]
    %5514 = vst [vmem:[#allocation1] ss:$9 sm:$0xff] %v5473
    %s5515 = scalar_lea.vmem [#allocation1], 1
    %5516 = vst [vmem:[%s5515] ss:$9 sm:$0xff] %v5474
    %s5517 = scalar_lea.vmem [#allocation1], 2
    %5518 = vst [vmem:[%s5517] ss:$9 sm:$0xff] %v5475
    %s5519 = scalar_lea.vmem [#allocation1], 3
    %5520 = vst [vmem:[%s5519] ss:$9 sm:$0xff] %v5476
    %s5521 = scalar_lea.vmem [#allocation1], 4
    %5522 = vst [vmem:[%s5521] ss:$9 sm:$0xff] %v5477
    %s5523 = scalar_lea.vmem [#allocation1], 5
    %5524 = vst [vmem:[%s5523] ss:$9 sm:$0xff] %v5478
    %s5525 = scalar_lea.vmem [#allocation1], 6
    %5526 = vst [vmem:[%s5525] ss:$9 sm:$0xff] %v5479
    %s5527 = scalar_lea.vmem [#allocation1], 7
    %5528 = vst [vmem:[%s5527] ss:$9 sm:$0xff] %v5480
    %v5529 = vld [vmem:[#allocation1] sm:$0xff]
    %5530 = vst [vmem:[#allocation1] ss:$9 sm:$0xff] %v5481
    %5531 = vst [vmem:[%s5515] ss:$9 sm:$0xff] %v5482
    %5532 = vst [vmem:[%s5517] ss:$9 sm:$0xff] %v5483
    %5533 = vst [vmem:[%s5519] ss:$9 sm:$0xff] %v5484
    %5534 = vst [vmem:[%s5521] ss:$9 sm:$0xff] %v5485
    %5535 = vst [vmem:[%s5523] ss:$9 sm:$0xff] %v5486
    %5536 = vst [vmem:[%s5525] ss:$9 sm:$0xff] %v5487
    %5537 = vst [vmem:[%s5527] ss:$9 sm:$0xff] %v5488
    %v5538 = vld [vmem:[#allocation1] sm:$0xff]
    %5539 = vst [vmem:[#allocation1] ss:$9 sm:$0xff] %v5489
    %5540 = vst [vmem:[%s5515] ss:$9 sm:$0xff] %v5490
    %v5541 = vld [vmem:[#allocation1] sm:$0xff]
    %v5542 = vsel %vm79, %v5529, 0
    %v5544 = vsel %vm79, %v5538, 0
    %v5546 = vsel %vm79, %v5541, 0
    %v5549 = vsel %vm79, %v5492, 0
    %v5552 = vsel %vm79, %v5493, 0
    %v5555 = vsel %vm79, %v5494, 0
    %v5558 = vsel %vm79, %v5495, 0
    %5560 = vmatpush.xpose.msra.mxu0 0.0
    %5561 = vmatpush.xpose.msra.mxu0 0.0
    %5562 = vmatpush.xpose.msra.mxu0 0.0
    %5563 = vmatpush.xpose.msra.mxu0 0.0
    %5564 = vmatpush.xpose.msra.mxu0 0.0
    %5565 = vmatpush.xpose.msra.mxu0 0.0
    %5566 = vmatpush.xpose.msra.mxu0 0.0
    %5567 = vmatpush.xpose.msra.mxu0 0.0
    %5568 = vmatpush.xpose.msra.mxu0 0.0
    %5569 = vmatpush.xpose.msra.mxu0 0.0
    %5570 = vmatpush.xpose.msra.mxu0 0.0
    %5571 = vmatpush.xpose.msra.mxu0 0.0
    %5572 = vmatpush.xpose.msra.mxu0 %v5558
    %5573 = vmatpush.xpose.msra.mxu0 %v5555
    %5574 = vmatpush.xpose.msra.mxu0 %v5552
    %5575 = vmatpush.xpose.msra.mxu0 %v5549
    %5576 = vmatmul.f32.gmra.mxu0 %v5542
    %v5577 = vpop.f32.mrf.mxu0
    %v5578 = vadd.f32 0.0, %v5577
    %5579 = vmatmul.f32.gmra.mxu0 %v5544
    %v5580 = vpop.f32.mrf.mxu0
    %v5581 = vadd.f32 0.0, %v5580
    %5582 = vmatmul.f32.gmra.mxu0 %v5546
    %v5583 = vpop.f32.mrf.mxu0
    %v5584 = vadd.f32 0.0, %v5583
    %5585 = vdwg.mxu0
    %v5589 = vrot.slane %v5578, 1
    %v5590 = vrot.slane %v5578, 2
    %v5591 = vrot.slane %v5578, 3
    %v5592 = vrot.slane %v5578, 4
    %v5593 = vrot.slane %v5578, 5
    %v5594 = vrot.slane %v5578, 6
    %v5595 = vrot.slane %v5578, 7
    %v5596 = vrot.slane %v5581, 1
    %v5597 = vrot.slane %v5581, 2
    %v5598 = vrot.slane %v5581, 3
    %v5599 = vrot.slane %v5581, 4
    %v5600 = vrot.slane %v5581, 5
    %v5601 = vrot.slane %v5581, 6
    %v5602 = vrot.slane %v5581, 7
    %v5603 = vrot.slane %v5584, 1
    %v5619 = vsub.f32 %v5473, %v5578
    %v5620 = vsub.f32 %v5474, %v5589
    %v5621 = vsub.f32 %v5475, %v5590
    %v5622 = vsub.f32 %v5476, %v5591
    %v5623 = vsub.f32 %v5477, %v5592
    %v5624 = vsub.f32 %v5478, %v5593
    %v5625 = vsub.f32 %v5479, %v5594
    %v5626 = vsub.f32 %v5480, %v5595
    %v5627 = vsub.f32 %v5481, %v5581
    %v5628 = vsub.f32 %v5482, %v5596
    %v5629 = vsub.f32 %v5483, %v5597
    %v5630 = vsub.f32 %v5484, %v5598
    %v5631 = vsub.f32 %v5485, %v5599
    %v5632 = vsub.f32 %v5486, %v5600
    %v5633 = vsub.f32 %v5487, %v5601
    %v5634 = vsub.f32 %v5488, %v5602
    %v5635 = vsub.f32 %v5489, %v5584
    %v5636 = vsub.f32 %v5490, %v5603
    %5655 = vst [vmem:[#allocation1] ss:$9 sm:$0xff] %v5619
    %s5656 = scalar_lea.vmem [#allocation1], 1
    %5657 = vst [vmem:[%s5656] ss:$9 sm:$0xff] %v5620
    %s5658 = scalar_lea.vmem [#allocation1], 2
    %5659 = vst [vmem:[%s5658] ss:$9 sm:$0xff] %v5621
    %s5660 = scalar_lea.vmem [#allocation1], 3
    %5661 = vst [vmem:[%s5660] ss:$9 sm:$0xff] %v5622
    %s5662 = scalar_lea.vmem [#allocation1], 4
    %5663 = vst [vmem:[%s5662] ss:$9 sm:$0xff] %v5623
    %s5664 = scalar_lea.vmem [#allocation1], 5
    %5665 = vst [vmem:[%s5664] ss:$9 sm:$0xff] %v5624
    %s5666 = scalar_lea.vmem [#allocation1], 6
    %5667 = vst [vmem:[%s5666] ss:$9 sm:$0xff] %v5625
    %s5668 = scalar_lea.vmem [#allocation1], 7
    %5669 = vst [vmem:[%s5668] ss:$9 sm:$0xff] %v5626
    %v5670 = vld [vmem:[#allocation1] sm:$0xff]
    %5671 = vst [vmem:[#allocation1] ss:$9 sm:$0xff] %v5627
    %5672 = vst [vmem:[%s5656] ss:$9 sm:$0xff] %v5628
    %5673 = vst [vmem:[%s5658] ss:$9 sm:$0xff] %v5629
    %5674 = vst [vmem:[%s5660] ss:$9 sm:$0xff] %v5630
    %5675 = vst [vmem:[%s5662] ss:$9 sm:$0xff] %v5631
    %5676 = vst [vmem:[%s5664] ss:$9 sm:$0xff] %v5632
    %5677 = vst [vmem:[%s5666] ss:$9 sm:$0xff] %v5633
    %5678 = vst [vmem:[%s5668] ss:$9 sm:$0xff] %v5634
    %v5679 = vld [vmem:[#allocation1] sm:$0xff]
    %5680 = vst [vmem:[#allocation1] ss:$9 sm:$0xff] %v5635
    %5681 = vst [vmem:[%s5656] ss:$9 sm:$0xff] %v5636
    %v5682 = vld [vmem:[#allocation1] sm:$0xff]
    %v5683 = vsel %vm79, %v5670, 0
    %v5685 = vsel %vm79, %v5679, 0
    %v5687 = vsel %vm79, %v5682, 0
    %5689 = vmatpush.msra.mxu0 0.0
    %5690 = vmatpush.msra.mxu0 0.0
    %5691 = vmatpush.msra.mxu0 0.0
    %5692 = vmatpush.msra.mxu0 0.0
    %5693 = vmatpush.msra.mxu0 0.0
    %5694 = vmatpush.msra.mxu0 0.0
    %5695 = vmatpush.msra.mxu0 0.0
    %5696 = vmatpush.msra.mxu0 0.0
    %5697 = vmatpush.msra.mxu0 0.0
    %5698 = vmatpush.msra.mxu0 0.0
    %5699 = vmatpush.msra.mxu0 0.0
    %5700 = vmatpush.msra.mxu0 0.0
    %5701 = vmatpush.msra.mxu0 %v5495
    %5702 = vmatpush.msra.mxu0 %v5494
    %5703 = vmatpush.msra.mxu0 %v5493
    %5704 = vmatpush.msra.mxu0 %v5492
    %5705 = vmatmul.f32.gmra.mxu0 %v5683
    %v5706 = vpop.f32.mrf.mxu0
    %v5707 = vadd.f32 0.0, %v5706
    %5708 = vmatmul.f32.gmra.mxu0 %v5685
    %v5709 = vpop.f32.mrf.mxu0
    %v5710 = vadd.f32 0.0, %v5709
    %5711 = vmatmul.f32.gmra.mxu0 %v5687
    %v5712 = vpop.f32.mrf.mxu0
    %5713 = vdwg.mxu0
    %v5715 = vrot.slane %v5710, 1
    %v5717 = vmul.f32 %v5707, 0.1
    %v5718 = vmul.f32 %v5715, 0.1
    %v5719 = vsub.f32 %v5717, 0.01
    %v5720 = vsub.f32 %v5718, 0.01
    %v5721 = vadd.f32 %v5473, %v5719
    %v5722 = vadd.f32 %v5482, %v5720
    %v5723 = vmax.f32 %v5721, 0.0
    %v5724 = vmax.f32 %v5722, 0.0
    %v5725 = vld [vmem:[%s17] sm:$0x1]
    %v5726 = vld [vmem:[%s18] sm:$0x1]
    %5729 = vst [vmem:[#allocation1] ss:$9 sm:$0xff] %v5723
    %s5730 = scalar_lea.vmem [#allocation1], 1
    %5731 = vst [vmem:[%s5730] ss:$9 sm:$0xff] %v5724
    %v5732 = vld [vmem:[#allocation1] sm:$0xff]
    %vm5734 = vcmask 254976
    %v5735 = vsel %vm5734, %v5732, 0.0
    %5736 = vadd.xlane.f32.xlu0 %v5735
    %v5737 = vpop.xlane.xlu0 %5736
    %v5738 = vmul.f32 %v5737, %v92
    %v5740 = vperm.slane %v5738, 0
    %v5741 = vperm.slane %v5738, 1
    %v5744 = vsub.f32 %v5723, %v5740
    %v5745 = vsub.f32 %v5724, %v5741
    %v5746 = vmul.f32 %v5744, %v5744
    %v5747 = vmul.f32 %v5745, %v5745
    %5750 = vst [vmem:[#allocation1] ss:$9 sm:$0xff] %v5746
    %s5751 = scalar_lea.vmem [#allocation1], 1
    %5752 = vst [vmem:[%s5751] ss:$9 sm:$0xff] %v5747
    %v5753 = vld [vmem:[#allocation1] sm:$0xff]
    %v5755 = vsel %vm5734, %v5753, 0.0
    %5756 = vadd.xlane.f32.xlu0 %v5755
    %v5757 = vpop.xlane.xlu0 %5756
    %v5758 = vmul.f32 %v5757, %v92
    %v5759 = vadd.f32 %v5758, 1e-05
    %v5760 = vrsqrt.pop %v5759
    %v5761 = vmul.f32 %v5760, %v5759
    %v5762 = vmul.f32 %v5761, %v5760
    %v5763 = vmul.f32 0.5, %v5762
    %v5764 = vsub.f32 1.5, %v5763
    %v5765 = vmul.f32 %v5760, %v5764
    %vm5766 = vweird.f32 %v5759
    %vm5767 = vweird.f32 %v5760
    %vm5768 = vmor %vm5766, %vm5767
    %v5769 = vsel %vm5768, %v5760, %v5765
    %v5771 = vperm.slane %v5769, 0
    %v5772 = vperm.slane %v5769, 1
    %v5775 = vmul.f32 %v5744, %v5771
    %v5776 = vmul.f32 %v5745, %v5772
    %v5778 = vperm.slane %v5725, 0
    %v5780 = vrot.slane %v5778, 1
    %v5782 = vmul.f32 %v5775, %v5778
    %v5783 = vmul.f32 %v5776, %v5780
    %v5785 = vperm.slane %v5726, 0
    %v5787 = vrot.slane %v5785, 1
    %v5789 = vadd.f32 %v5782, %v5785
    %v5790 = vadd.f32 %v5783, %v5787
    %v5791 = vld [vmem:[%s19] sm:$0xff]
    %v5792 = vld [vmem:[%s19 + $0x8] sm:$0xff]
    %v5793 = vld [vmem:[%s19 + $0x10] sm:$0xff]
    %v5794 = vld [vmem:[%s19 + $0x18] sm:$0xff]
    %v5795 = vld [vmem:[%s19 + $0x20] sm:$0xff]
    %v5796 = vld [vmem:[%s19 + $0x28] sm:$0xff]
    %v5797 = vld [vmem:[%s19 + $0x30] sm:$0xff]
    %v5798 = vld [vmem:[%s19 + $0x38] sm:$0xff]
    %v5799 = vld [vmem:[%s19 + $0x40] sm:$0xff]
    %v5800 = vld [vmem:[%s19 + $0x48] sm:$0xff]
    %v5801 = vld [vmem:[%s19 + $0x50] sm:$0xff]
    %v5802 = vld [vmem:[%s19 + $0x58] sm:$0xff]
    %v5803 = vld [vmem:[%s19 + $0x60] sm:$0xff]
    %v5804 = vld [vmem:[%s19 + $0x68] sm:$0xff]
    %v5805 = vld [vmem:[%s19 + $0x70] sm:$0xff]
    %v5806 = vld [vmem:[%s19 + $0x78] sm:$0xff]
    %v5807 = vld [vmem:[%s19 + $0x80] sm:$0xff]
    %v5808 = vld [vmem:[%s19 + $0x88] sm:$0xff]
    %v5809 = vld [vmem:[%s19 + $0x90] sm:$0xff]
    %v5810 = vld [vmem:[%s19 + $0x98] sm:$0xff]
    %v5811 = vld [vmem:[%s19 + $0xa0] sm:$0xff]
    %v5812 = vld [vmem:[%s19 + $0xa8] sm:$0xff]
    %v5813 = vld [vmem:[%s19 + $0xb0] sm:$0xff]
    %v5814 = vld [vmem:[%s19 + $0xb8] sm:$0xff]
    %v5815 = vld [vmem:[%s19 + $0xc0] sm:$0xff]
    %v5816 = vld [vmem:[%s19 + $0xc8] sm:$0xff]
    %v5817 = vld [vmem:[%s19 + $0xd0] sm:$0xff]
    %v5818 = vld [vmem:[%s19 + $0xd8] sm:$0xff]
    %v5819 = vld [vmem:[%s19 + $0xe0] sm:$0xff]
    %v5820 = vld [vmem:[%s19 + $0xe8] sm:$0xff]
    %v5821 = vld [vmem:[%s19 + $0xf0] sm:$0xff]
    %v5822 = vld [vmem:[%s19 + $0xf8] sm:$0xff]
    %v5823 = vld [vmem:[%s20] sm:$0xff]
    %v5825 = vperm.slane %v5823, 0
    %v5826 = vperm.slane %v5823, 1
    %v5827 = vperm.slane %v5823, 2
    %v5828 = vperm.slane %v5823, 3
    %v5829 = vperm.slane %v5823, 4
    %v5830 = vperm.slane %v5823, 5
    %v5831 = vperm.slane %v5823, 6
    %v5832 = vperm.slane %v5823, 7
    %5843 = vst [vmem:[#allocation1] ss:$9 sm:$0xff] %v5789
    %s5844 = scalar_lea.vmem [#allocation1], 1
    %5845 = vst [vmem:[%s5844] ss:$9 sm:$0xff] %v5790
    %v5846 = vld [vmem:[#allocation1] sm:$0xff]
    %v5847 = vsel %vm79, %v5846, 0
    %5849 = vmatpush.msra.mxu0 0.0
    %5850 = vmatpush.msra.mxu0 0.0
    %5851 = vmatpush.msra.mxu0 0.0
    %5852 = vmatpush.msra.mxu0 0.0
    %5853 = vmatpush.msra.mxu0 0.0
    %5854 = vmatpush.msra.mxu0 0.0
    %5855 = vmatpush.msra.mxu0 0.0
    %5856 = vmatpush.msra.mxu0 0.0
    %5857 = vmatpush.msra.mxu0 0.0
    %5858 = vmatpush.msra.mxu0 0.0
    %5859 = vmatpush.msra.mxu0 0.0
    %5860 = vmatpush.msra.mxu0 0.0
    %5861 = vmatpush.msra.mxu0 %v5815
    %5862 = vmatpush.msra.mxu0 %v5807
    %5863 = vmatpush.msra.mxu0 %v5799
    %5864 = vmatpush.msra.mxu0 %v5791
    %5865 = vmatmul.f32.gmra.mxu0 %v5847
    %v5866 = vpop.f32.mrf.mxu0
    %v5867 = vadd.f32 %v5825, %v5866
    %5868 = vdwg.mxu0
    %5869 = vmatpush.msra.mxu0 0.0
    %5870 = vmatpush.msra.mxu0 0.0
    %5871 = vmatpush.msra.mxu0 0.0
    %5872 = vmatpush.msra.mxu0 0.0
    %5873 = vmatpush.msra.mxu0 0.0
    %5874 = vmatpush.msra.mxu0 0.0
    %5875 = vmatpush.msra.mxu0 0.0
    %5876 = vmatpush.msra.mxu0 0.0
    %5877 = vmatpush.msra.mxu0 0.0
    %5878 = vmatpush.msra.mxu0 0.0
    %5879 = vmatpush.msra.mxu0 0.0
    %5880 = vmatpush.msra.mxu0 0.0
    %5881 = vmatpush.msra.mxu0 %v5816
    %5882 = vmatpush.msra.mxu0 %v5808
    %5883 = vmatpush.msra.mxu0 %v5800
    %5884 = vmatpush.msra.mxu0 %v5792
    %5885 = vmatmul.f32.gmra.mxu0 %v5847
    %v5886 = vpop.f32.mrf.mxu0
    %v5887 = vadd.f32 %v5826, %v5886
    %5888 = vdwg.mxu0
    %5889 = vmatpush.msra.mxu0 0.0
    %5890 = vmatpush.msra.mxu0 0.0
    %5891 = vmatpush.msra.mxu0 0.0
    %5892 = vmatpush.msra.mxu0 0.0
    %5893 = vmatpush.msra.mxu0 0.0
    %5894 = vmatpush.msra.mxu0 0.0
    %5895 = vmatpush.msra.mxu0 0.0
    %5896 = vmatpush.msra.mxu0 0.0
    %5897 = vmatpush.msra.mxu0 0.0
    %5898 = vmatpush.msra.mxu0 0.0
    %5899 = vmatpush.msra.mxu0 0.0
    %5900 = vmatpush.msra.mxu0 0.0
    %5901 = vmatpush.msra.mxu0 %v5817
    %5902 = vmatpush.msra.mxu0 %v5809
    %5903 = vmatpush.msra.mxu0 %v5801
    %5904 = vmatpush.msra.mxu0 %v5793
    %5905 = vmatmul.f32.gmra.mxu0 %v5847
    %v5906 = vpop.f32.mrf.mxu0
    %v5907 = vadd.f32 %v5827, %v5906
    %5908 = vdwg.mxu0
    %5909 = vmatpush.msra.mxu0 0.0
    %5910 = vmatpush.msra.mxu0 0.0
    %5911 = vmatpush.msra.mxu0 0.0
    %5912 = vmatpush.msra.mxu0 0.0
    %5913 = vmatpush.msra.mxu0 0.0
    %5914 = vmatpush.msra.mxu0 0.0
    %5915 = vmatpush.msra.mxu0 0.0
    %5916 = vmatpush.msra.mxu0 0.0
    %5917 = vmatpush.msra.mxu0 0.0
    %5918 = vmatpush.msra.mxu0 0.0
    %5919 = vmatpush.msra.mxu0 0.0
    %5920 = vmatpush.msra.mxu0 0.0
    %5921 = vmatpush.msra.mxu0 %v5818
    %5922 = vmatpush.msra.mxu0 %v5810
    %5923 = vmatpush.msra.mxu0 %v5802
    %5924 = vmatpush.msra.mxu0 %v5794
    %5925 = vmatmul.f32.gmra.mxu0 %v5847
    %v5926 = vpop.f32.mrf.mxu0
    %v5927 = vadd.f32 %v5828, %v5926
    %5928 = vdwg.mxu0
    %5929 = vmatpush.msra.mxu0 0.0
    %5930 = vmatpush.msra.mxu0 0.0
    %5931 = vmatpush.msra.mxu0 0.0
    %5932 = vmatpush.msra.mxu0 0.0
    %5933 = vmatpush.msra.mxu0 0.0
    %5934 = vmatpush.msra.mxu0 0.0
    %5935 = vmatpush.msra.mxu0 0.0
    %5936 = vmatpush.msra.mxu0 0.0
    %5937 = vmatpush.msra.mxu0 0.0
    %5938 = vmatpush.msra.mxu0 0.0
    %5939 = vmatpush.msra.mxu0 0.0
    %5940 = vmatpush.msra.mxu0 0.0
    %5941 = vmatpush.msra.mxu0 %v5819
    %5942 = vmatpush.msra.mxu0 %v5811
    %5943 = vmatpush.msra.mxu0 %v5803
    %5944 = vmatpush.msra.mxu0 %v5795
    %5945 = vmatmul.f32.gmra.mxu0 %v5847
    %v5946 = vpop.f32.mrf.mxu0
    %v5947 = vadd.f32 %v5829, %v5946
    %5948 = vdwg.mxu0
    %5949 = vmatpush.msra.mxu0 0.0
    %5950 = vmatpush.msra.mxu0 0.0
    %5951 = vmatpush.msra.mxu0 0.0
    %5952 = vmatpush.msra.mxu0 0.0
    %5953 = vmatpush.msra.mxu0 0.0
    %5954 = vmatpush.msra.mxu0 0.0
    %5955 = vmatpush.msra.mxu0 0.0
    %5956 = vmatpush.msra.mxu0 0.0
    %5957 = vmatpush.msra.mxu0 0.0
    %5958 = vmatpush.msra.mxu0 0.0
    %5959 = vmatpush.msra.mxu0 0.0
    %5960 = vmatpush.msra.mxu0 0.0
    %5961 = vmatpush.msra.mxu0 %v5820
    %5962 = vmatpush.msra.mxu0 %v5812
    %5963 = vmatpush.msra.mxu0 %v5804
    %5964 = vmatpush.msra.mxu0 %v5796
    %5965 = vmatmul.f32.gmra.mxu0 %v5847
    %v5966 = vpop.f32.mrf.mxu0
    %v5967 = vadd.f32 %v5830, %v5966
    %5968 = vdwg.mxu0
    %5969 = vmatpush.msra.mxu0 0.0
    %5970 = vmatpush.msra.mxu0 0.0
    %5971 = vmatpush.msra.mxu0 0.0
    %5972 = vmatpush.msra.mxu0 0.0
    %5973 = vmatpush.msra.mxu0 0.0
    %5974 = vmatpush.msra.mxu0 0.0
    %5975 = vmatpush.msra.mxu0 0.0
    %5976 = vmatpush.msra.mxu0 0.0
    %5977 = vmatpush.msra.mxu0 0.0
    %5978 = vmatpush.msra.mxu0 0.0
    %5979 = vmatpush.msra.mxu0 0.0
    %5980 = vmatpush.msra.mxu0 0.0
    %5981 = vmatpush.msra.mxu0 %v5821
    %5982 = vmatpush.msra.mxu0 %v5813
    %5983 = vmatpush.msra.mxu0 %v5805
    %5984 = vmatpush.msra.mxu0 %v5797
    %5985 = vmatmul.f32.gmra.mxu0 %v5847
    %v5986 = vpop.f32.mrf.mxu0
    %v5987 = vadd.f32 %v5831, %v5986
    %5988 = vdwg.mxu0
    %5989 = vmatpush.msra.mxu0 0.0
    %5990 = vmatpush.msra.mxu0 0.0
    %5991 = vmatpush.msra.mxu0 0.0
    %5992 = vmatpush.msra.mxu0 0.0
    %5993 = vmatpush.msra.mxu0 0.0
    %5994 = vmatpush.msra.mxu0 0.0
    %5995 = vmatpush.msra.mxu0 0.0
    %5996 = vmatpush.msra.mxu0 0.0
    %5997 = vmatpush.msra.mxu0 0.0
    %5998 = vmatpush.msra.mxu0 0.0
    %5999 = vmatpush.msra.mxu0 0.0
    %6000 = vmatpush.msra.mxu0 0.0
    %6001 = vmatpush.msra.mxu0 %v5822
    %6002 = vmatpush.msra.mxu0 %v5814
    %6003 = vmatpush.msra.mxu0 %v5806
    %6004 = vmatpush.msra.mxu0 %v5798
    %6005 = vmatmul.f32.gmra.mxu0 %v5847
    %v6006 = vpop.f32.mrf.mxu0
    %v6007 = vadd.f32 %v5832, %v6006
    %6008 = vdwg.mxu0
    %v6009 = vld [vmem:[%s21] sm:$0xff]
    %v6010 = vld [vmem:[%s21 + $0x8] sm:$0xff]
    %v6011 = vld [vmem:[%s21 + $0x10] sm:$0xff]
    %v6012 = vld [vmem:[%s21 + $0x18] sm:$0xff]
    %v6013 = vld [vmem:[%s21 + $0x20] sm:$0xff]
    %v6014 = vld [vmem:[%s21 + $0x28] sm:$0xff]
    %v6015 = vld [vmem:[%s21 + $0x30] sm:$0xff]
    %v6016 = vld [vmem:[%s21 + $0x38] sm:$0xff]
    %v6017 = vld [vmem:[%s21 + $0x40] sm:$0xff]
    %v6018 = vld [vmem:[%s21 + $0x48] sm:$0xff]
    %v6019 = vld [vmem:[%s21 + $0x50] sm:$0xff]
    %v6020 = vld [vmem:[%s21 + $0x58] sm:$0xff]
    %v6021 = vld [vmem:[%s21 + $0x60] sm:$0xff]
    %v6022 = vld [vmem:[%s21 + $0x68] sm:$0xff]
    %v6023 = vld [vmem:[%s21 + $0x70] sm:$0xff]
    %v6024 = vld [vmem:[%s21 + $0x78] sm:$0xff]
    %v6025 = vld [vmem:[%s21 + $0x80] sm:$0xff]
    %v6026 = vld [vmem:[%s21 + $0x88] sm:$0xff]
    %v6027 = vld [vmem:[%s21 + $0x90] sm:$0xff]
    %v6028 = vld [vmem:[%s21 + $0x98] sm:$0xff]
    %v6029 = vld [vmem:[%s21 + $0xa0] sm:$0xff]
    %v6030 = vld [vmem:[%s21 + $0xa8] sm:$0xff]
    %v6031 = vld [vmem:[%s21 + $0xb0] sm:$0xff]
    %v6032 = vld [vmem:[%s21 + $0xb8] sm:$0xff]
    %v6033 = vld [vmem:[%s21 + $0xc0] sm:$0xff]
    %v6034 = vld [vmem:[%s21 + $0xc8] sm:$0xff]
    %v6035 = vld [vmem:[%s21 + $0xd0] sm:$0xff]
    %v6036 = vld [vmem:[%s21 + $0xd8] sm:$0xff]
    %v6037 = vld [vmem:[%s21 + $0xe0] sm:$0xff]
    %v6038 = vld [vmem:[%s21 + $0xe8] sm:$0xff]
    %v6039 = vld [vmem:[%s21 + $0xf0] sm:$0xff]
    %v6040 = vld [vmem:[%s21 + $0xf8] sm:$0xff]
    %v6041 = vld [vmem:[%s21 + $0x100] sm:$0xff]
    %v6042 = vld [vmem:[%s21 + $0x108] sm:$0xff]
    %v6043 = vld [vmem:[%s21 + $0x110] sm:$0xff]
    %v6044 = vld [vmem:[%s21 + $0x118] sm:$0xff]
    %v6045 = vld [vmem:[%s21 + $0x120] sm:$0xff]
    %v6046 = vld [vmem:[%s21 + $0x128] sm:$0xff]
    %v6047 = vld [vmem:[%s21 + $0x130] sm:$0xff]
    %v6048 = vld [vmem:[%s21 + $0x138] sm:$0xff]
    %v6049 = vld [vmem:[%s21 + $0x140] sm:$0xff]
    %v6050 = vld [vmem:[%s21 + $0x148] sm:$0xff]
    %v6051 = vld [vmem:[%s21 + $0x150] sm:$0xff]
    %v6052 = vld [vmem:[%s21 + $0x158] sm:$0xff]
    %v6053 = vld [vmem:[%s21 + $0x160] sm:$0xff]
    %v6054 = vld [vmem:[%s21 + $0x168] sm:$0xff]
    %v6055 = vld [vmem:[%s21 + $0x170] sm:$0xff]
    %v6056 = vld [vmem:[%s21 + $0x178] sm:$0xff]
    %v6057 = vld [vmem:[%s21 + $0x180] sm:$0xff]
    %v6058 = vld [vmem:[%s21 + $0x188] sm:$0xff]
    %v6059 = vld [vmem:[%s21 + $0x190] sm:$0xff]
    %v6060 = vld [vmem:[%s21 + $0x198] sm:$0xff]
    %v6061 = vld [vmem:[%s21 + $0x1a0] sm:$0xff]
    %v6062 = vld [vmem:[%s21 + $0x1a8] sm:$0xff]
    %v6063 = vld [vmem:[%s21 + $0x1b0] sm:$0xff]
    %v6064 = vld [vmem:[%s21 + $0x1b8] sm:$0xff]
    %v6065 = vld [vmem:[%s21 + $0x1c0] sm:$0xff]
    %v6066 = vld [vmem:[%s21 + $0x1c8] sm:$0xff]
    %v6067 = vld [vmem:[%s21 + $0x1d0] sm:$0xff]
    %v6068 = vld [vmem:[%s21 + $0x1d8] sm:$0xff]
    %v6069 = vld [vmem:[%s21 + $0x1e0] sm:$0xff]
    %v6070 = vld [vmem:[%s21 + $0x1e8] sm:$0xff]
    %v6071 = vld [vmem:[%s21 + $0x1f0] sm:$0xff]
    %v6072 = vld [vmem:[%s21 + $0x1f8] sm:$0xff]
    %v6073 = vld [vmem:[%s21 + $0x200] sm:$0xff]
    %v6074 = vld [vmem:[%s21 + $0x208] sm:$0xff]
    %v6075 = vld [vmem:[%s21 + $0x210] sm:$0xff]
    %v6076 = vld [vmem:[%s21 + $0x218] sm:$0xff]
    %v6077 = vld [vmem:[%s21 + $0x220] sm:$0xff]
    %v6078 = vld [vmem:[%s21 + $0x228] sm:$0xff]
    %v6079 = vld [vmem:[%s21 + $0x230] sm:$0xff]
    %v6080 = vld [vmem:[%s21 + $0x238] sm:$0xff]
    %v6081 = vld [vmem:[%s21 + $0x240] sm:$0xff]
    %v6082 = vld [vmem:[%s21 + $0x248] sm:$0xff]
    %v6083 = vld [vmem:[%s21 + $0x250] sm:$0xff]
    %v6084 = vld [vmem:[%s21 + $0x258] sm:$0xff]
    %v6085 = vld [vmem:[%s21 + $0x260] sm:$0xff]
    %v6086 = vld [vmem:[%s21 + $0x268] sm:$0xff]
    %v6087 = vld [vmem:[%s21 + $0x270] sm:$0xff]
    %v6088 = vld [vmem:[%s21 + $0x278] sm:$0xff]
    %v6089 = vld [vmem:[%s21 + $0x280] sm:$0xff]
    %v6090 = vld [vmem:[%s21 + $0x288] sm:$0xff]
    %v6091 = vld [vmem:[%s21 + $0x290] sm:$0xff]
    %v6092 = vld [vmem:[%s21 + $0x298] sm:$0xff]
    %v6093 = vld [vmem:[%s21 + $0x2a0] sm:$0xff]
    %v6094 = vld [vmem:[%s21 + $0x2a8] sm:$0xff]
    %v6095 = vld [vmem:[%s21 + $0x2b0] sm:$0xff]
    %v6096 = vld [vmem:[%s21 + $0x2b8] sm:$0xff]
    %v6097 = vld [vmem:[%s21 + $0x2c0] sm:$0xff]
    %v6098 = vld [vmem:[%s21 + $0x2c8] sm:$0xff]
    %v6099 = vld [vmem:[%s21 + $0x2d0] sm:$0xff]
    %v6100 = vld [vmem:[%s21 + $0x2d8] sm:$0xff]
    %v6101 = vld [vmem:[%s21 + $0x2e0] sm:$0xff]
    %v6102 = vld [vmem:[%s21 + $0x2e8] sm:$0xff]
    %v6103 = vld [vmem:[%s21 + $0x2f0] sm:$0xff]
    %v6104 = vld [vmem:[%s21 + $0x2f8] sm:$0xff]
    %v6105 = vld [vmem:[%s21 + $0x300] sm:$0xff]
    %v6106 = vld [vmem:[%s21 + $0x308] sm:$0xff]
    %v6107 = vld [vmem:[%s21 + $0x310] sm:$0xff]
    %v6108 = vld [vmem:[%s21 + $0x318] sm:$0xff]
    %v6109 = vld [vmem:[%s21 + $0x320] sm:$0xff]
    %v6110 = vld [vmem:[%s21 + $0x328] sm:$0xff]
    %v6111 = vld [vmem:[%s21 + $0x330] sm:$0xff]
    %v6112 = vld [vmem:[%s21 + $0x338] sm:$0xff]
    %v6113 = vld [vmem:[%s21 + $0x340] sm:$0xff]
    %v6114 = vld [vmem:[%s21 + $0x348] sm:$0xff]
    %v6115 = vld [vmem:[%s21 + $0x350] sm:$0xff]
    %v6116 = vld [vmem:[%s21 + $0x358] sm:$0xff]
    %v6117 = vld [vmem:[%s21 + $0x360] sm:$0xff]
    %v6118 = vld [vmem:[%s21 + $0x368] sm:$0xff]
    %v6119 = vld [vmem:[%s21 + $0x370] sm:$0xff]
    %v6120 = vld [vmem:[%s21 + $0x378] sm:$0xff]
    %v6121 = vld [vmem:[%s21 + $0x380] sm:$0xff]
    %v6122 = vld [vmem:[%s21 + $0x388] sm:$0xff]
    %v6123 = vld [vmem:[%s21 + $0x390] sm:$0xff]
    %v6124 = vld [vmem:[%s21 + $0x398] sm:$0xff]
    %v6125 = vld [vmem:[%s21 + $0x3a0] sm:$0xff]
    %v6126 = vld [vmem:[%s21 + $0x3a8] sm:$0xff]
    %v6127 = vld [vmem:[%s21 + $0x3b0] sm:$0xff]
    %v6128 = vld [vmem:[%s21 + $0x3b8] sm:$0xff]
    %v6129 = vld [vmem:[%s21 + $0x3c0] sm:$0xff]
    %v6130 = vld [vmem:[%s21 + $0x3c8] sm:$0xff]
    %v6131 = vld [vmem:[%s21 + $0x3d0] sm:$0xff]
    %v6132 = vld [vmem:[%s21 + $0x3d8] sm:$0xff]
    %v6133 = vld [vmem:[%s21 + $0x3e0] sm:$0xff]
    %v6134 = vld [vmem:[%s22] sm:$0x1]
    %v6136 = vperm.slane %v6134, 0
    %vm6138 = vcmask 850944
    %v6140 = vsel %vm6138, %v6007, 0
    %6142 = vmatpush.msra.mxu0 %v6024
    %6143 = vmatpush.msra.mxu0 %v6023
    %6144 = vmatpush.msra.mxu0 %v6022
    %6145 = vmatpush.msra.mxu0 %v6021
    %6146 = vmatpush.msra.mxu0 %v6020
    %6147 = vmatpush.msra.mxu0 %v6019
    %6148 = vmatpush.msra.mxu0 %v6018
    %6149 = vmatpush.msra.mxu0 %v6017
    %6150 = vmatpush.msra.mxu0 %v6016
    %6151 = vmatpush.msra.mxu0 %v6015
    %6152 = vmatpush.msra.mxu0 %v6014
    %6153 = vmatpush.msra.mxu0 %v6013
    %6154 = vmatpush.msra.mxu0 %v6012
    %6155 = vmatpush.msra.mxu0 %v6011
    %6156 = vmatpush.msra.mxu0 %v6010
    %6157 = vmatpush.msra.mxu0 %v6009
    %6158 = vmatmul.f32.gmra.mxu0 %v5867
    %v6159 = vpop.f32.mrf.mxu0
    %v6160 = vadd.f32 %v6136, %v6159
    %6161 = vdwg.mxu0
    %6162 = vmatpush.msra.mxu0 %v6040
    %6163 = vmatpush.msra.mxu0 %v6039
    %6164 = vmatpush.msra.mxu0 %v6038
    %6165 = vmatpush.msra.mxu0 %v6037
    %6166 = vmatpush.msra.mxu0 %v6036
    %6167 = vmatpush.msra.mxu0 %v6035
    %6168 = vmatpush.msra.mxu0 %v6034
    %6169 = vmatpush.msra.mxu0 %v6033
    %6170 = vmatpush.msra.mxu0 %v6032
    %6171 = vmatpush.msra.mxu0 %v6031
    %6172 = vmatpush.msra.mxu0 %v6030
    %6173 = vmatpush.msra.mxu0 %v6029
    %6174 = vmatpush.msra.mxu0 %v6028
    %6175 = vmatpush.msra.mxu0 %v6027
    %6176 = vmatpush.msra.mxu0 %v6026
    %6177 = vmatpush.msra.mxu0 %v6025
    %6178 = vmatmul.f32.gmra.mxu0 %v5887
    %v6179 = vpop.f32.mrf.mxu0
    %v6180 = vadd.f32 %v6160, %v6179
    %6181 = vdwg.mxu0
    %6182 = vmatpush.msra.mxu0 %v6056
    %6183 = vmatpush.msra.mxu0 %v6055
    %6184 = vmatpush.msra.mxu0 %v6054
    %6185 = vmatpush.msra.mxu0 %v6053
    %6186 = vmatpush.msra.mxu0 %v6052
    %6187 = vmatpush.msra.mxu0 %v6051
    %6188 = vmatpush.msra.mxu0 %v6050
    %6189 = vmatpush.msra.mxu0 %v6049
    %6190 = vmatpush.msra.mxu0 %v6048
    %6191 = vmatpush.msra.mxu0 %v6047
    %6192 = vmatpush.msra.mxu0 %v6046
    %6193 = vmatpush.msra.mxu0 %v6045
    %6194 = vmatpush.msra.mxu0 %v6044
    %6195 = vmatpush.msra.mxu0 %v6043
    %6196 = vmatpush.msra.mxu0 %v6042
    %6197 = vmatpush.msra.mxu0 %v6041
    %6198 = vmatmul.f32.gmra.mxu0 %v5907
    %v6199 = vpop.f32.mrf.mxu0
    %v6200 = vadd.f32 %v6180, %v6199
    %6201 = vdwg.mxu0
    %6202 = vmatpush.msra.mxu0 %v6072
    %6203 = vmatpush.msra.mxu0 %v6071
    %6204 = vmatpush.msra.mxu0 %v6070
    %6205 = vmatpush.msra.mxu0 %v6069
    %6206 = vmatpush.msra.mxu0 %v6068
    %6207 = vmatpush.msra.mxu0 %v6067
    %6208 = vmatpush.msra.mxu0 %v6066
    %6209 = vmatpush.msra.mxu0 %v6065
    %6210 = vmatpush.msra.mxu0 %v6064
    %6211 = vmatpush.msra.mxu0 %v6063
    %6212 = vmatpush.msra.mxu0 %v6062
    %6213 = vmatpush.msra.mxu0 %v6061
    %6214 = vmatpush.msra.mxu0 %v6060
    %6215 = vmatpush.msra.mxu0 %v6059
    %6216 = vmatpush.msra.mxu0 %v6058
    %6217 = vmatpush.msra.mxu0 %v6057
    %6218 = vmatmul.f32.gmra.mxu0 %v5927
    %v6219 = vpop.f32.mrf.mxu0
    %v6220 = vadd.f32 %v6200, %v6219
    %6221 = vdwg.mxu0
    %6222 = vmatpush.msra.mxu0 %v6088
    %6223 = vmatpush.msra.mxu0 %v6087
    %6224 = vmatpush.msra.mxu0 %v6086
    %6225 = vmatpush.msra.mxu0 %v6085
    %6226 = vmatpush.msra.mxu0 %v6084
    %6227 = vmatpush.msra.mxu0 %v6083
    %6228 = vmatpush.msra.mxu0 %v6082
    %6229 = vmatpush.msra.mxu0 %v6081
    %6230 = vmatpush.msra.mxu0 %v6080
    %6231 = vmatpush.msra.mxu0 %v6079
    %6232 = vmatpush.msra.mxu0 %v6078
    %6233 = vmatpush.msra.mxu0 %v6077
    %6234 = vmatpush.msra.mxu0 %v6076
    %6235 = vmatpush.msra.mxu0 %v6075
    %6236 = vmatpush.msra.mxu0 %v6074
    %6237 = vmatpush.msra.mxu0 %v6073
    %6238 = vmatmul.f32.gmra.mxu0 %v5947
    %v6239 = vpop.f32.mrf.mxu0
    %v6240 = vadd.f32 %v6220, %v6239
    %6241 = vdwg.mxu0
    %6242 = vmatpush.msra.mxu0 %v6104
    %6243 = vmatpush.msra.mxu0 %v6103
    %6244 = vmatpush.msra.mxu0 %v6102
    %6245 = vmatpush.msra.mxu0 %v6101
    %6246 = vmatpush.msra.mxu0 %v6100
    %6247 = vmatpush.msra.mxu0 %v6099
    %6248 = vmatpush.msra.mxu0 %v6098
    %6249 = vmatpush.msra.mxu0 %v6097
    %6250 = vmatpush.msra.mxu0 %v6096
    %6251 = vmatpush.msra.mxu0 %v6095
    %6252 = vmatpush.msra.mxu0 %v6094
    %6253 = vmatpush.msra.mxu0 %v6093
    %6254 = vmatpush.msra.mxu0 %v6092
    %6255 = vmatpush.msra.mxu0 %v6091
    %6256 = vmatpush.msra.mxu0 %v6090
    %6257 = vmatpush.msra.mxu0 %v6089
    %6258 = vmatmul.f32.gmra.mxu0 %v5967
    %v6259 = vpop.f32.mrf.mxu0
    %v6260 = vadd.f32 %v6240, %v6259
    %6261 = vdwg.mxu0
    %6262 = vmatpush.msra.mxu0 %v6120
    %6263 = vmatpush.msra.mxu0 %v6119
    %6264 = vmatpush.msra.mxu0 %v6118
    %6265 = vmatpush.msra.mxu0 %v6117
    %6266 = vmatpush.msra.mxu0 %v6116
    %6267 = vmatpush.msra.mxu0 %v6115
    %6268 = vmatpush.msra.mxu0 %v6114
    %6269 = vmatpush.msra.mxu0 %v6113
    %6270 = vmatpush.msra.mxu0 %v6112
    %6271 = vmatpush.msra.mxu0 %v6111
    %6272 = vmatpush.msra.mxu0 %v6110
    %6273 = vmatpush.msra.mxu0 %v6109
    %6274 = vmatpush.msra.mxu0 %v6108
    %6275 = vmatpush.msra.mxu0 %v6107
    %6276 = vmatpush.msra.mxu0 %v6106
    %6277 = vmatpush.msra.mxu0 %v6105
    %6278 = vmatmul.f32.gmra.mxu0 %v5987
    %v6279 = vpop.f32.mrf.mxu0
    %v6280 = vadd.f32 %v6260, %v6279
    %6281 = vdwg.mxu0
    %6282 = vmatpush.msra.mxu0 0.0
    %6283 = vmatpush.msra.mxu0 0.0
    %6284 = vmatpush.msra.mxu0 0.0
    %6285 = vmatpush.msra.mxu0 %v6133
    %6286 = vmatpush.msra.mxu0 %v6132
    %6287 = vmatpush.msra.mxu0 %v6131
    %6288 = vmatpush.msra.mxu0 %v6130
    %6289 = vmatpush.msra.mxu0 %v6129
    %6290 = vmatpush.msra.mxu0 %v6128
    %6291 = vmatpush.msra.mxu0 %v6127
    %6292 = vmatpush.msra.mxu0 %v6126
    %6293 = vmatpush.msra.mxu0 %v6125
    %6294 = vmatpush.msra.mxu0 %v6124
    %6295 = vmatpush.msra.mxu0 %v6123
    %6296 = vmatpush.msra.mxu0 %v6122
    %6297 = vmatpush.msra.mxu0 %v6121
    %6298 = vmatmul.f32.gmra.mxu0 %v6140
    %v6299 = vpop.f32.mrf.mxu0
    %v6300 = vadd.f32 %v6280, %v6299
    %6301 = vdwg.mxu0
    %v6302 = vxor.u32 %v6300, 2147483648
    %v6303 = vmul.f32 %v6302, 1.442695
    %v6304 = vpow.pop %v6303
    %v6305 = vadd.f32 %v6304, 1.0
    %v6306 = vrcp.pop %v6305
    %v6307 = vmul.f32 %v6305, %v6306
    %v6308 = vsub.f32 1.0, %v6307
    %v6309 = vmul.f32 %v6306, %v6308
    %v6310 = vadd.f32 %v6306, %v6309
    %vm6311 = vweird.f32 %v6305
    %vm6312 = vweird.f32 %v6306
    %vm6313 = vmor %vm6311, %vm6312
    %v6314 = vsel %vm6313, %v6306, %v6310
    %v6315 = vand.u32 2147483647, %v6305
    %vm6316 = vcmp.eq.f32.partialorder %v6315, 8.507059e+37
    %v6317 = vand.u32 %v6305, 2147483648
    %v6318 = vor.u32 1.1754944e-38, %v6317
    %v6319 = vsel %vm6316, %v6318, %v6314
    %v6320 = vmul.f32 1.0, %v6319
    %6321 = vst [vmem:[#allocation3] sm:$0x3] %v6320
    // Predicated region
    $region94: #{crate_forward.1} parent=1 // pred_check
      _
    $region95: #{crate_forward.1} parent=1 // pred_check_branch
      %6323 = sbr.rel (0) target = $region97
    $region96: #{crate_forward.1} parent=1 // pred_region
      %6325 = vsyncadd [#allocation4], 0
      %s6327 = sshll.u32 [#allocation3], 4
      %s6328 = int_to_ptr.vmem [resolvable:$true] %s6327
      %s6329 = sshll.u32 %s23, 4
      %s6330 = int_to_ptr.hbm [resolvable:$true] %s6329
      %6332 = dma.vmem_to_hbm [thread:$0]  %s6328, 32, %s6330, [#allocation4]
    $region97: #{crate_forward.1} parent=1 // pred_fallthru
      _
    // Predicated region
    $region98: #{crate_forward.1} parent=1 // pred_check
      _
    $region99: #{crate_forward.1} parent=1 // pred_check_branch
      %6334 = sbr.rel (0) target = $region101
    $region100: #{crate_forward.1} parent=1 // pred_region
      %6336 = dma.done [#allocation4], 32
    $region101: #{crate_forward.1} parent=1 // pred_fallthru
      _
    %6337 = vsyncpa [#allocation4], 1

</llo_original>
